<compile_context>
chip_gen: v7x
topology: tpu7x:2x2x1
jax: 0.10.0
libtpu: 0.0.40
codegen_flags: <defaults>
</compile_context>

<pallas_src>
import jax
import jax.numpy as jnp
import numpy as np
from jax.experimental import pallas as pl
from jax.experimental.pallas import tpu as pltpu

# ---- model hyper-parameters (small, consistent with Transformer(dim, hidden_dim)) ----
B = 2            # batch
N = 8            # sequence length (tokens)
DIM = 16         # model dim
HIDDEN = 32      # MLP hidden dim
DEPTH = 5        # Transformer depth (module default)
HEADS = 8
DIM_HEAD = 64                       # PyTorch default arg (only used for scale & inner_dim)
INNER = DIM_HEAD * DIM              # inner_dim = dim_head * dim  (faithful to the reference code)
HEAD_DIM = INNER // HEADS           # per-head dim after .view(b, n, heads, -1)
SCALE = DIM_HEAD ** (-0.5)
EPS = 1e-5

NUM_ATTN = 3 * DEPTH                # 3 attention blocks per layer
NUM_MLP = 2 * DEPTH                 # 2 MLP blocks per layer

BF16 = jnp.bfloat16
F32 = jnp.float32


# ---------------- fused per-layer kernel (grid = (batch, depth)) ----------------
def fused_layer_kernel(x_ref, attn_g_ref, wqkv_ref, wo_ref,
                       mlp_g_ref, w1_ref, b1_ref, w2_ref, b2_ref,
                       ln_g_ref, fin_g_ref, o_ref, x_sc):
    layer = pl.program_id(1)

    # load the batch element into the residual-stream scratch at the first layer
    @pl.when(layer == 0)
    def _():
        x_sc[...] = x_ref[0]

    x = x_sc[...]                                         # (N, DIM) f32 residual stream

    def layernorm(y, g1):
        # single reduction pass: mean and E[x^2] together, biased variance (torch LayerNorm)
        mean = jnp.mean(y, axis=-1, keepdims=True)
        meansq = jnp.mean(y * y, axis=-1, keepdims=True)
        var = meansq - mean * mean
        return (y - mean) * jax.lax.rsqrt(var + EPS) * g1

    def attn_block(y, a):
        # out = Attention(y) + y ; pre-norm because reuse_attention=True
        xn = layernorm(y, attn_g_ref[a])                  # (N, DIM) f32
        # fused QKV projection (bf16 operands, f32 accumulation); attention scale folded into wq
        qkv = jnp.dot(xn.astype(BF16), wqkv_ref[a],
                      preferred_element_type=F32)         # (N, 3*INNER) f32
        ho_parts = []
        for h in range(HEADS):                            # static unroll over heads
            lo = h * HEAD_DIM
            qh = qkv[:, lo:lo + HEAD_DIM].astype(BF16)                     # (N, HEAD_DIM)
            kh = qkv[:, INNER + lo:INNER + lo + HEAD_DIM].astype(BF16)
            vh = qkv[:, 2 * INNER + lo:2 * INNER + lo + HEAD_DIM].astype(BF16)
            # q @ k^T without an explicit transpose (contract both dim-1s on the MXU)
            s = jax.lax.dot_general(qh, kh, (((1,), (1,)), ((), ())),
                                    preferred_element_type=F32)            # (N, N) f32
            mx = jnp.max(s, axis=-1, keepdims=True)
            e = jnp.exp(s - mx)
            inv = pl.reciprocal(jnp.sum(e, axis=-1, keepdims=True), approx=True)
            probs = e * inv                                                 # softmax(-1)
            ho_parts.append(jnp.dot(probs.astype(BF16), vh,
                                    preferred_element_type=F32))            # (N, HEAD_DIM)
        # lane-aligned concat of per-head outputs -> single fused output projection
        ho = jnp.concatenate(ho_parts, axis=1)            # (N, INNER) f32
        # wo is stored lane-dense/transposed as (DIM, INNER); contract both dim-1s
        out = jax.lax.dot_general(ho.astype(BF16), wo_ref[a], (((1,), (1,)), ((), ())),
                                  preferred_element_type=F32)               # (N, DIM)
        return out + y                                     # residual with the pre-norm input

    def mlp_block(y, m):
        # out = MLP(y) + y ; MLP = LN -> Linear -> exact GELU -> Linear
        xn = layernorm(y, mlp_g_ref[m])
        h = jnp.dot(xn.astype(BF16), w1_ref[m], preferred_element_type=F32) + b1_ref[m]
        h = 0.5 * h * (1.0 + jax.lax.erf(h * 0.7071067811865476))           # exact GELU
        z = jnp.dot(h.astype(BF16), w2_ref[m], preferred_element_type=F32) + b2_ref[m]
        return z + y

    # one Transformer layer: Attn, MLP, Attn, Attn, LN (no residual), MLP
    x = attn_block(x, 0)
    x = mlp_block(x, 0)
    x = attn_block(x, 1)
    x = attn_block(x, 2)
    x = layernorm(x, ln_g_ref[0])
    x = mlp_block(x, 1)

    x_sc[...] = x                                          # carry residual stream to next layer

    @pl.when(layer == DEPTH - 1)
    def _():
        o_ref[0] = layernorm(x, fin_g_ref[...])            # final LayerNorm, write once


# ---------------- pallas_call wrapper ----------------
def transformer_forward(x, p):
    # grid = (batch, depth): batch "parallel" (2 TCs on v7x), depth "arbitrary" (weight pipelining)
    act_spec = pl.BlockSpec((1, N, DIM), lambda b, l: (b, 0, 0))
    return pl.pallas_call(
        fused_layer_kernel,
        out_shape=jax.ShapeDtypeStruct((B, N, DIM), x.dtype),
        grid=(B, DEPTH),
        in_specs=[
            act_spec,                                                       # activation
            pl.BlockSpec((3, 1, DIM), lambda b, l: (l, 0, 0)),              # attention LN gamma+1
            pl.BlockSpec((3, DIM, 3 * INNER), lambda b, l: (l, 0, 0)),      # fused [wq*scale|wk|wv] bf16
            pl.BlockSpec((3, DIM, INNER), lambda b, l: (l, 0, 0)),          # wo transposed (lane-dense) bf16
            pl.BlockSpec((2, 1, DIM), lambda b, l: (l, 0, 0)),              # MLP LN gamma+1
            pl.BlockSpec((2, DIM, HIDDEN), lambda b, l: (l, 0, 0)),         # w1 bf16
            pl.BlockSpec((2, 1, HIDDEN), lambda b, l: (l, 0, 0)),           # b1
            pl.BlockSpec((2, HIDDEN, DIM), lambda b, l: (l, 0, 0)),         # w2 bf16
            pl.BlockSpec((2, 1, DIM), lambda b, l: (l, 0, 0)),              # b2
            pl.BlockSpec((1, 1, DIM), lambda b, l: (l, 0, 0)),              # per-layer LN gamma+1
            pl.BlockSpec((1, DIM), lambda b, l: (0, 0)),                    # final LN gamma+1
        ],
        out_specs=pl.BlockSpec((1, N, DIM), lambda b, l: (b, 0, 0)),
        scratch_shapes=[pltpu.VMEM((N, DIM), jnp.float32)],                 # residual-stream carry
        compiler_params=pltpu.CompilerParams(
            dimension_semantics=("parallel", "arbitrary"),
        ),
    )(x, p["attn_gamma1"], p["wqkv"], p["wo_t"], p["mlp_gamma1"],
      p["w1"], p["b1"], p["w2"], p["b2"], p["ln_gamma1"], p["final_gamma1"])


# ---------------- deterministic parameter init (stacked, kernel-ready layout) ----------------
def init_params(key):
    n_keys = NUM_ATTN * 4 + NUM_MLP * 4
    keys = jax.random.split(key, n_keys)
    kit = iter(range(n_keys))

    def uniform(fan_in, shape):
        bound = 1.0 / (fan_in ** 0.5)
        return jax.random.uniform(keys[next(kit)], shape, minval=-bound, maxval=bound,
                                  dtype=jnp.float32)

    wqkv, wo_t = [], []
    for _ in range(NUM_ATTN):
        wq = uniform(DIM, (DIM, INNER)) * SCALE      # fold attention scale into wq (linear, bias-free)
        wk = uniform(DIM, (DIM, INNER))
        wv = uniform(DIM, (DIM, INNER))
        wqkv.append(jnp.concatenate([wq, wk, wv], axis=1))
        wo_t.append(uniform(INNER, (DIM, INNER)))    # stored transposed / lane-dense

    w1, b1, w2, b2 = [], [], [], []
    for _ in range(NUM_MLP):
        w1.append(uniform(DIM, (DIM, HIDDEN)))
        b1.append(uniform(DIM, (1, HIDDEN)))
        w2.append(uniform(HIDDEN, (HIDDEN, DIM)))
        b2.append(uniform(HIDDEN, (1, DIM)))

    # All LayerNorm gammas initialize to 0 in the PyTorch module -> gamma + 1 == 1.
    return {
        "attn_gamma1": jnp.ones((NUM_ATTN, 1, DIM), jnp.float32),
        "wqkv": jnp.stack(wqkv).astype(BF16),        # bf16 weights (halve weight DMA / VMEM)
        "wo_t": jnp.stack(wo_t).astype(BF16),
        "mlp_gamma1": jnp.ones((NUM_MLP, 1, DIM), jnp.float32),
        "w1": jnp.stack(w1).astype(BF16),
        "b1": jnp.stack(b1),
        "w2": jnp.stack(w2).astype(BF16),
        "b2": jnp.stack(b2),
        "ln_gamma1": jnp.ones((DEPTH, 1, DIM), jnp.float32),
        "final_gamma1": jnp.ones((1, DIM), jnp.float32),
    }


# ---------------- pure-JAX reference (same bf16 weights / operand precision) ----------------
def transformer_reference(x, p):
    def layernorm(y, g1):
        mean = jnp.mean(y, axis=-1, keepdims=True)
        var = jnp.mean((y - mean) ** 2, axis=-1, keepdims=True)
        return (y - mean) * jax.lax.rsqrt(var + EPS) * g1

    def attn(y, a):
        xn = layernorm(y, p["attn_gamma1"][a])
        qkv = jnp.dot(xn.astype(BF16), p["wqkv"][a], preferred_element_type=F32)  # (B,N,3*INNER)
        q, k, v = jnp.split(qkv, 3, axis=-1)
        q = q.reshape(B, N, HEADS, HEAD_DIM).transpose(0, 2, 1, 3).astype(BF16)
        k = k.reshape(B, N, HEADS, HEAD_DIM).transpose(0, 2, 1, 3).astype(BF16)
        v = v.reshape(B, N, HEADS, HEAD_DIM).transpose(0, 2, 1, 3).astype(BF16)
        s = jnp.einsum("bhqd,bhkd->bhqk", q, k, preferred_element_type=F32)
        probs = jax.nn.softmax(s, axis=-1)
        o = jnp.einsum("bhqk,bhkd->bhqd", probs.astype(BF16), v, preferred_element_type=F32)
        o = o.transpose(0, 2, 1, 3).reshape(B, N, INNER)
        out = jnp.einsum("bni,di->bnd", o.astype(BF16), p["wo_t"][a],
                         preferred_element_type=F32)
        return out + y

    def mlp(y, m):
        xn = layernorm(y, p["mlp_gamma1"][m])
        h = jnp.dot(xn.astype(BF16), p["w1"][m], preferred_element_type=F32) + p["b1"][m]
        h = 0.5 * h * (1.0 + jax.lax.erf(h * 0.7071067811865476))
        z = jnp.dot(h.astype(BF16), p["w2"][m], preferred_element_type=F32) + p["b2"][m]
        return z + y

    for layer in range(DEPTH):
        x = attn(x, 3 * layer + 0)
        x = mlp(x, 2 * layer + 0)
        x = attn(x, 3 * layer + 1)
        x = attn(x, 3 * layer + 2)
        x = layernorm(x, p["ln_gamma1"][layer])
        x = mlp(x, 2 * layer + 1)
    return layernorm(x, p["final_gamma1"])


if __name__ == "__main__":
    key = jax.random.PRNGKey(0)
    kx, kp = jax.random.split(key)
    x = jax.random.normal(kx, (B, N, DIM), dtype=jnp.float32)
    params = init_params(kp)

    fwd = jax.jit(transformer_forward)
    out = fwd(x, params)
    jax.block_until_ready(out)

    assert out.shape == (B, N, DIM) and out.dtype == jnp.float32

    ref = np.asarray(transformer_reference(x, params))
    got = np.asarray(out)
    # Tolerance: kernel uses the EUP approx reciprocal for the softmax denominator (the only
    # op-level difference vs. the reference, which uses the same bf16 matmul precision).
    assert np.allclose(got, ref, rtol=2e-2, atol=1e-2), float(np.max(np.abs(got - ref)))

    print("KERNEL_OK")
</pallas_src>

<mosaic_0001>
module attributes {stable_mosaic.version = 11 : i64} {
  func.func @fused_layer_kernel(%arg0: i32, %arg1: i32, %arg2: memref<1x8x16xf32, #tpu.memory_space<vmem>>, %arg3: memref<3x1x16xf32, #tpu.memory_space<vmem>>, %arg4: memref<3x16x3072xbf16, #tpu.memory_space<vmem>>, %arg5: memref<3x16x1024xbf16, #tpu.memory_space<vmem>>, %arg6: memref<2x1x16xf32, #tpu.memory_space<vmem>>, %arg7: memref<2x16x32xbf16, #tpu.memory_space<vmem>>, %arg8: memref<2x1x32xf32, #tpu.memory_space<vmem>>, %arg9: memref<2x32x16xbf16, #tpu.memory_space<vmem>>, %arg10: memref<2x1x16xf32, #tpu.memory_space<vmem>>, %arg11: memref<1x1x16xf32, #tpu.memory_space<vmem>>, %arg12: memref<1x16xf32, #tpu.memory_space<vmem>>, %arg13: memref<1x8x16xf32, #tpu.memory_space<vmem>>, %arg14: memref<8x16xf32, #tpu.memory_space<vmem>>) attributes {dimension_semantics = [#tpu.dimension_semantics<parallel>, #tpu.dimension_semantics<arbitrary>], iteration_bounds = array<i64: 2, 5>, scalar_prefetch = 0 : i64, scratch_operands = 1 : i64, tpu.core_type = #tpu.core_type<tc>, window_params = [{transform_indices = @transform_0, window_bounds = array<i64: 1, 8, 16>}, {transform_indices = @transform_1, window_bounds = array<i64: 3, 1, 16>}, {transform_indices = @transform_2, window_bounds = array<i64: 3, 16, 3072>}, {transform_indices = @transform_3, window_bounds = array<i64: 3, 16, 1024>}, {transform_indices = @transform_4, window_bounds = array<i64: 2, 1, 16>}, {transform_indices = @transform_5, window_bounds = array<i64: 2, 16, 32>}, {transform_indices = @transform_6, window_bounds = array<i64: 2, 1, 32>}, {transform_indices = @transform_7, window_bounds = array<i64: 2, 32, 16>}, {transform_indices = @transform_8, window_bounds = array<i64: 2, 1, 16>}, {transform_indices = @transform_9, window_bounds = array<i64: 1, 1, 16>}, {pipeline_mode = #tpu.pipeline_mode<synchronous>, transform_indices = @transform_10, window_bounds = array<i64: 1, 16>}, {transform_indices = @transform_11, window_bounds = array<i64: 1, 8, 16>}]} {
    %c0_i32 = arith.constant 0 : i32
    %0 = arith.cmpi eq, %arg1, %c0_i32 : i32
    %1 = arith.extui %0 : i1 to i32
    %c0_i32_0 = arith.constant 0 : i32
    %2 = arith.cmpi ne, %1, %c0_i32_0 : i32
    scf.if %2 {
      %c0_204 = arith.constant 0 : index
      %c0_205 = arith.constant 0 : index
      %c0_206 = arith.constant 0 : index
      %676 = vector.load %arg2[%c0_204, %c0_205, %c0_206] : memref<1x8x16xf32, #tpu.memory_space<vmem>>, vector<1x8x16xf32>
      %677 = vector.shape_cast %676 : vector<1x8x16xf32> to vector<8x16xf32>
      %c0_207 = arith.constant 0 : index
      %c0_208 = arith.constant 0 : index
      %678 = vector.load %arg14[%c0_207, %c0_208] : memref<8x16xf32, #tpu.memory_space<vmem>>, vector<8x16xf32>
      tpu.vector_store %arg14[%c0_207, %c0_208], %677 {strides = array<i32>} : memref<8x16xf32, #tpu.memory_space<vmem>>, vector<8x16xf32>,
    } else {
    }
    %c0 = arith.constant 0 : index
    %c0_1 = arith.constant 0 : index
    %3 = vector.load %arg14[%c0, %c0_1] : memref<8x16xf32, #tpu.memory_space<vmem>>, vector<8x16xf32>
    %c0_2 = arith.constant 0 : index
    %c0_3 = arith.constant 0 : index
    %c0_4 = arith.constant 0 : index
    %4 = vector.load %arg3[%c0_2, %c0_3, %c0_4] : memref<3x1x16xf32, #tpu.memory_space<vmem>>, vector<1x1x16xf32>
    %5 = vector.shape_cast %4 : vector<1x1x16xf32> to vector<1x16xf32>
    %cst = arith.constant dense<0.000000e+00> : vector<8xf32>
    %6 = vector.multi_reduction <add>, %3, %cst [1] : vector<8x16xf32> to vector<8xf32>
    %7 = vector.shape_cast %6 : vector<8xf32> to vector<8x1xf32>
    %cst_5 = arith.constant 1.600000e+01 : f32
    %8 = vector.broadcast %cst_5 : f32 to vector<8x1xf32>
    %9 = arith.divf %7, %8 : vector<8x1xf32>
    %10 = arith.mulf %3, %3 : vector<8x16xf32>
    %cst_6 = arith.constant dense<0.000000e+00> : vector<8xf32>
    %11 = vector.multi_reduction <add>, %10, %cst_6 [1] : vector<8x16xf32> to vector<8xf32>
    %12 = vector.shape_cast %11 : vector<8xf32> to vector<8x1xf32>
    %cst_7 = arith.constant 1.600000e+01 : f32
    %13 = vector.broadcast %cst_7 : f32 to vector<8x1xf32>
    %14 = arith.divf %12, %13 : vector<8x1xf32>
    %15 = arith.mulf %9, %9 : vector<8x1xf32>
    %16 = arith.subf %14, %15 : vector<8x1xf32>
    %17 = vector.broadcast %9 : vector<8x1xf32> to vector<8x16xf32>
    %18 = arith.subf %3, %17 : vector<8x16xf32>
    %cst_8 = arith.constant 9.99999974E-6 : f32
    %19 = vector.broadcast %cst_8 : f32 to vector<8x1xf32>
    %20 = arith.addf %16, %19 : vector<8x1xf32>
    %21 = math.rsqrt %20 : vector<8x1xf32>
    %22 = vector.broadcast %21 : vector<8x1xf32> to vector<8x16xf32>
    %23 = arith.mulf %18, %22 : vector<8x16xf32>
    %24 = vector.broadcast %5 : vector<1x16xf32> to vector<8x16xf32>
    %25 = arith.mulf %23, %24 : vector<8x16xf32>
    %26 = arith.truncf %25 : vector<8x16xf32> to vector<8x16xbf16>
    %c0_9 = arith.constant 0 : index
    %c0_10 = arith.constant 0 : index
    %c0_11 = arith.constant 0 : index
    %27 = vector.load %arg4[%c0_9, %c0_10, %c0_11] : memref<3x16x3072xbf16, #tpu.memory_space<vmem>>, vector<1x16x3072xbf16>
    %28 = vector.shape_cast %27 : vector<1x16x3072xbf16> to vector<16x3072xbf16>
    %cst_12 = arith.constant dense<0.000000e+00> : vector<8x3072xf32>
    %29 = tpu.matmul %26, %28, %cst_12 {dimension_numbers = #tpu.dot_dimension_numbers<[1], [0], [0], [1], [0, 0, 1, 1], [], []>} : vector<8x16xbf16>, vector<16x3072xbf16>, vector<8x3072xf32> -> vector<8x3072xf32>
    %30 = vector.extract_strided_slice %29 {offsets = [0, 0], sizes = [8, 128], strides = [1, 1]} : vector<8x3072xf32> to vector<8x128xf32>
    %31 = arith.truncf %30 : vector<8x128xf32> to vector<8x128xbf16>
    %32 = vector.extract_strided_slice %29 {offsets = [0, 1024], sizes = [8, 128], strides = [1, 1]} : vector<8x3072xf32> to vector<8x128xf32>
    %33 = arith.truncf %32 : vector<8x128xf32> to vector<8x128xbf16>
    %34 = vector.extract_strided_slice %29 {offsets = [0, 2048], sizes = [8, 128], strides = [1, 1]} : vector<8x3072xf32> to vector<8x128xf32>
    %35 = arith.truncf %34 : vector<8x128xf32> to vector<8x128xbf16>
    %cst_13 = arith.constant dense<0.000000e+00> : vector<8x8xf32>
    %36 = tpu.matmul %31, %33, %cst_13 {dimension_numbers = #tpu.dot_dimension_numbers<[1], [1], [0], [0], [0, 0, 1, 0], [], []>} : vector<8x128xbf16>, vector<8x128xbf16>, vector<8x8xf32> -> vector<8x8xf32>
    %cst_14 = arith.constant dense<0xFF800000> : vector<8xf32>
    %37 = vector.multi_reduction <maximumf>, %36, %cst_14 [1] : vector<8x8xf32> to vector<8xf32>
    %38 = vector.shape_cast %37 : vector<8xf32> to vector<8x1xf32>
    %39 = vector.broadcast %38 : vector<8x1xf32> to vector<8x8xf32>
    %40 = arith.subf %36, %39 : vector<8x8xf32>
    %41 = math.exp %40 : vector<8x8xf32>
    %cst_15 = arith.constant dense<0.000000e+00> : vector<8xf32>
    %42 = vector.multi_reduction <add>, %41, %cst_15 [1] : vector<8x8xf32> to vector<8xf32>
    %43 = vector.shape_cast %42 : vector<8xf32> to vector<8x1xf32>
    %44 = tpu.reciprocal %43 {approx = true} : vector<8x1xf32> -> vector<8x1xf32>
    %45 = vector.broadcast %44 : vector<8x1xf32> to vector<8x8xf32>
    %46 = arith.mulf %41, %45 : vector<8x8xf32>
    %47 = arith.truncf %46 : vector<8x8xf32> to vector<8x8xbf16>
    %cst_16 = arith.constant dense<0.000000e+00> : vector<8x128xf32>
    %48 = tpu.matmul %47, %35, %cst_16 {dimension_numbers = #tpu.dot_dimension_numbers<[1], [0], [0], [1], [0, 0, 1, 1], [], []>} : vector<8x8xbf16>, vector<8x128xbf16>, vector<8x128xf32> -> vector<8x128xf32>
    %49 = vector.extract_strided_slice %29 {offsets = [0, 128], sizes = [8, 128], strides = [1, 1]} : vector<8x3072xf32> to vector<8x128xf32>
    %50 = arith.truncf %49 : vector<8x128xf32> to vector<8x128xbf16>
    %51 = vector.extract_strided_slice %29 {offsets = [0, 1152], sizes = [8, 128], strides = [1, 1]} : vector<8x3072xf32> to vector<8x128xf32>
    %52 = arith.truncf %51 : vector<8x128xf32> to vector<8x128xbf16>
    %53 = vector.extract_strided_slice %29 {offsets = [0, 2176], sizes = [8, 128], strides = [1, 1]} : vector<8x3072xf32> to vector<8x128xf32>
    %54 = arith.truncf %53 : vector<8x128xf32> to vector<8x128xbf16>
    %cst_17 = arith.constant dense<0.000000e+00> : vector<8x8xf32>
    %55 = tpu.matmul %50, %52, %cst_17 {dimension_numbers = #tpu.dot_dimension_numbers<[1], [1], [0], [0], [0, 0, 1, 0], [], []>} : vector<8x128xbf16>, vector<8x128xbf16>, vector<8x8xf32> -> vector<8x8xf32>
    %cst_18 = arith.constant dense<0xFF800000> : vector<8xf32>
    %56 = vector.multi_reduction <maximumf>, %55, %cst_18 [1] : vector<8x8xf32> to vector<8xf32>
    %57 = vector.shape_cast %56 : vector<8xf32> to vector<8x1xf32>
    %58 = vector.broadcast %57 : vector<8x1xf32> to vector<8x8xf32>
    %59 = arith.subf %55, %58 : vector<8x8xf32>
    %60 = math.exp %59 : vector<8x8xf32>
    %cst_19 = arith.constant dense<0.000000e+00> : vector<8xf32>
    %61 = vector.multi_reduction <add>, %60, %cst_19 [1] : vector<8x8xf32> to vector<8xf32>
    %62 = vector.shape_cast %61 : vector<8xf32> to vector<8x1xf32>
    %63 = tpu.reciprocal %62 {approx = true} : vector<8x1xf32> -> vector<8x1xf32>
    %64 = vector.broadcast %63 : vector<8x1xf32> to vector<8x8xf32>
    %65 = arith.mulf %60, %64 : vector<8x8xf32>
    %66 = arith.truncf %65 : vector<8x8xf32> to vector<8x8xbf16>
    %cst_20 = arith.constant dense<0.000000e+00> : vector<8x128xf32>
    %67 = tpu.matmul %66, %54, %cst_20 {dimension_numbers = #tpu.dot_dimension_numbers<[1], [0], [0], [1], [0, 0, 1, 1], [], []>} : vector<8x8xbf16>, vector<8x128xbf16>, vector<8x128xf32> -> vector<8x128xf32>
    %68 = vector.extract_strided_slice %29 {offsets = [0, 256], sizes = [8, 128], strides = [1, 1]} : vector<8x3072xf32> to vector<8x128xf32>
    %69 = arith.truncf %68 : vector<8x128xf32> to vector<8x128xbf16>
    %70 = vector.extract_strided_slice %29 {offsets = [0, 1280], sizes = [8, 128], strides = [1, 1]} : vector<8x3072xf32> to vector<8x128xf32>
    %71 = arith.truncf %70 : vector<8x128xf32> to vector<8x128xbf16>
    %72 = vector.extract_strided_slice %29 {offsets = [0, 2304], sizes = [8, 128], strides = [1, 1]} : vector<8x3072xf32> to vector<8x128xf32>
    %73 = arith.truncf %72 : vector<8x128xf32> to vector<8x128xbf16>
    %cst_21 = arith.constant dense<0.000000e+00> : vector<8x8xf32>
    %74 = tpu.matmul %69, %71, %cst_21 {dimension_numbers = #tpu.dot_dimension_numbers<[1], [1], [0], [0], [0, 0, 1, 0], [], []>} : vector<8x128xbf16>, vector<8x128xbf16>, vector<8x8xf32> -> vector<8x8xf32>
    %cst_22 = arith.constant dense<0xFF800000> : vector<8xf32>
    %75 = vector.multi_reduction <maximumf>, %74, %cst_22 [1] : vector<8x8xf32> to vector<8xf32>
    %76 = vector.shape_cast %75 : vector<8xf32> to vector<8x1xf32>
    %77 = vector.broadcast %76 : vector<8x1xf32> to vector<8x8xf32>
    %78 = arith.subf %74, %77 : vector<8x8xf32>
    %79 = math.exp %78 : vector<8x8xf32>
    %cst_23 = arith.constant dense<0.000000e+00> : vector<8xf32>
    %80 = vector.multi_reduction <add>, %79, %cst_23 [1] : vector<8x8xf32> to vector<8xf32>
    %81 = vector.shape_cast %80 : vector<8xf32> to vector<8x1xf32>
    %82 = tpu.reciprocal %81 {approx = true} : vector<8x1xf32> -> vector<8x1xf32>
    %83 = vector.broadcast %82 : vector<8x1xf32> to vector<8x8xf32>
    %84 = arith.mulf %79, %83 : vector<8x8xf32>
    %85 = arith.truncf %84 : vector<8x8xf32> to vector<8x8xbf16>
    %cst_24 = arith.constant dense<0.000000e+00> : vector<8x128xf32>
    %86 = tpu.matmul %85, %73, %cst_24 {dimension_numbers = #tpu.dot_dimension_numbers<[1], [0], [0], [1], [0, 0, 1, 1], [], []>} : vector<8x8xbf16>, vector<8x128xbf16>, vector<8x128xf32> -> vector<8x128xf32>
    %87 = vector.extract_strided_slice %29 {offsets = [0, 384], sizes = [8, 128], strides = [1, 1]} : vector<8x3072xf32> to vector<8x128xf32>
    %88 = arith.truncf %87 : vector<8x128xf32> to vector<8x128xbf16>
    %89 = vector.extract_strided_slice %29 {offsets = [0, 1408], sizes = [8, 128], strides = [1, 1]} : vector<8x3072xf32> to vector<8x128xf32>
    %90 = arith.truncf %89 : vector<8x128xf32> to vector<8x128xbf16>
    %91 = vector.extract_strided_slice %29 {offsets = [0, 2432], sizes = [8, 128], strides = [1, 1]} : vector<8x3072xf32> to vector<8x128xf32>
    %92 = arith.truncf %91 : vector<8x128xf32> to vector<8x128xbf16>
    %cst_25 = arith.constant dense<0.000000e+00> : vector<8x8xf32>
    %93 = tpu.matmul %88, %90, %cst_25 {dimension_numbers = #tpu.dot_dimension_numbers<[1], [1], [0], [0], [0, 0, 1, 0], [], []>} : vector<8x128xbf16>, vector<8x128xbf16>, vector<8x8xf32> -> vector<8x8xf32>
    %cst_26 = arith.constant dense<0xFF800000> : vector<8xf32>
    %94 = vector.multi_reduction <maximumf>, %93, %cst_26 [1] : vector<8x8xf32> to vector<8xf32>
    %95 = vector.shape_cast %94 : vector<8xf32> to vector<8x1xf32>
    %96 = vector.broadcast %95 : vector<8x1xf32> to vector<8x8xf32>
    %97 = arith.subf %93, %96 : vector<8x8xf32>
    %98 = math.exp %97 : vector<8x8xf32>
    %cst_27 = arith.constant dense<0.000000e+00> : vector<8xf32>
    %99 = vector.multi_reduction <add>, %98, %cst_27 [1] : vector<8x8xf32> to vector<8xf32>
    %100 = vector.shape_cast %99 : vector<8xf32> to vector<8x1xf32>
    %101 = tpu.reciprocal %100 {approx = true} : vector<8x1xf32> -> vector<8x1xf32>
    %102 = vector.broadcast %101 : vector<8x1xf32> to vector<8x8xf32>
    %103 = arith.mulf %98, %102 : vector<8x8xf32>
    %104 = arith.truncf %103 : vector<8x8xf32> to vector<8x8xbf16>
    %cst_28 = arith.constant dense<0.000000e+00> : vector<8x128xf32>
    %105 = tpu.matmul %104, %92, %cst_28 {dimension_numbers = #tpu.dot_dimension_numbers<[1], [0], [0], [1], [0, 0, 1, 1], [], []>} : vector<8x8xbf16>, vector<8x128xbf16>, vector<8x128xf32> -> vector<8x128xf32>
    %106 = vector.extract_strided_slice %29 {offsets = [0, 512], sizes = [8, 128], strides = [1, 1]} : vector<8x3072xf32> to vector<8x128xf32>
    %107 = arith.truncf %106 : vector<8x128xf32> to vector<8x128xbf16>
    %108 = vector.extract_strided_slice %29 {offsets = [0, 1536], sizes = [8, 128], strides = [1, 1]} : vector<8x3072xf32> to vector<8x128xf32>
    %109 = arith.truncf %108 : vector<8x128xf32> to vector<8x128xbf16>
    %110 = vector.extract_strided_slice %29 {offsets = [0, 2560], sizes = [8, 128], strides = [1, 1]} : vector<8x3072xf32> to vector<8x128xf32>
    %111 = arith.truncf %110 : vector<8x128xf32> to vector<8x128xbf16>
    %cst_29 = arith.constant dense<0.000000e+00> : vector<8x8xf32>
    %112 = tpu.matmul %107, %109, %cst_29 {dimension_numbers = #tpu.dot_dimension_numbers<[1], [1], [0], [0], [0, 0, 1, 0], [], []>} : vector<8x128xbf16>, vector<8x128xbf16>, vector<8x8xf32> -> vector<8x8xf32>
    %cst_30 = arith.constant dense<0xFF800000> : vector<8xf32>
    %113 = vector.multi_reduction <maximumf>, %112, %cst_30 [1] : vector<8x8xf32> to vector<8xf32>
    %114 = vector.shape_cast %113 : vector<8xf32> to vector<8x1xf32>
    %115 = vector.broadcast %114 : vector<8x1xf32> to vector<8x8xf32>
    %116 = arith.subf %112, %115 : vector<8x8xf32>
    %117 = math.exp %116 : vector<8x8xf32>
    %cst_31 = arith.constant dense<0.000000e+00> : vector<8xf32>
    %118 = vector.multi_reduction <add>, %117, %cst_31 [1] : vector<8x8xf32> to vector<8xf32>
    %119 = vector.shape_cast %118 : vector<8xf32> to vector<8x1xf32>
    %120 = tpu.reciprocal %119 {approx = true} : vector<8x1xf32> -> vector<8x1xf32>
    %121 = vector.broadcast %120 : vector<8x1xf32> to vector<8x8xf32>
    %122 = arith.mulf %117, %121 : vector<8x8xf32>
    %123 = arith.truncf %122 : vector<8x8xf32> to vector<8x8xbf16>
    %cst_32 = arith.constant dense<0.000000e+00> : vector<8x128xf32>
    %124 = tpu.matmul %123, %111, %cst_32 {dimension_numbers = #tpu.dot_dimension_numbers<[1], [0], [0], [1], [0, 0, 1, 1], [], []>} : vector<8x8xbf16>, vector<8x128xbf16>, vector<8x128xf32> -> vector<8x128xf32>
    %125 = vector.extract_strided_slice %29 {offsets = [0, 640], sizes = [8, 128], strides = [1, 1]} : vector<8x3072xf32> to vector<8x128xf32>
    %126 = arith.truncf %125 : vector<8x128xf32> to vector<8x128xbf16>
    %127 = vector.extract_strided_slice %29 {offsets = [0, 1664], sizes = [8, 128], strides = [1, 1]} : vector<8x3072xf32> to vector<8x128xf32>
    %128 = arith.truncf %127 : vector<8x128xf32> to vector<8x128xbf16>
    %129 = vector.extract_strided_slice %29 {offsets = [0, 2688], sizes = [8, 128], strides = [1, 1]} : vector<8x3072xf32> to vector<8x128xf32>
    %130 = arith.truncf %129 : vector<8x128xf32> to vector<8x128xbf16>
    %cst_33 = arith.constant dense<0.000000e+00> : vector<8x8xf32>
    %131 = tpu.matmul %126, %128, %cst_33 {dimension_numbers = #tpu.dot_dimension_numbers<[1], [1], [0], [0], [0, 0, 1, 0], [], []>} : vector<8x128xbf16>, vector<8x128xbf16>, vector<8x8xf32> -> vector<8x8xf32>
    %cst_34 = arith.constant dense<0xFF800000> : vector<8xf32>
    %132 = vector.multi_reduction <maximumf>, %131, %cst_34 [1] : vector<8x8xf32> to vector<8xf32>
    %133 = vector.shape_cast %132 : vector<8xf32> to vector<8x1xf32>
    %134 = vector.broadcast %133 : vector<8x1xf32> to vector<8x8xf32>
    %135 = arith.subf %131, %134 : vector<8x8xf32>
    %136 = math.exp %135 : vector<8x8xf32>
    %cst_35 = arith.constant dense<0.000000e+00> : vector<8xf32>
    %137 = vector.multi_reduction <add>, %136, %cst_35 [1] : vector<8x8xf32> to vector<8xf32>
    %138 = vector.shape_cast %137 : vector<8xf32> to vector<8x1xf32>
    %139 = tpu.reciprocal %138 {approx = true} : vector<8x1xf32> -> vector<8x1xf32>
    %140 = vector.broadcast %139 : vector<8x1xf32> to vector<8x8xf32>
    %141 = arith.mulf %136, %140 : vector<8x8xf32>
    %142 = arith.truncf %141 : vector<8x8xf32> to vector<8x8xbf16>
    %cst_36 = arith.constant dense<0.000000e+00> : vector<8x128xf32>
    %143 = tpu.matmul %142, %130, %cst_36 {dimension_numbers = #tpu.dot_dimension_numbers<[1], [0], [0], [1], [0, 0, 1, 1], [], []>} : vector<8x8xbf16>, vector<8x128xbf16>, vector<8x128xf32> -> vector<8x128xf32>
    %144 = vector.extract_strided_slice %29 {offsets = [0, 768], sizes = [8, 128], strides = [1, 1]} : vector<8x3072xf32> to vector<8x128xf32>
    %145 = arith.truncf %144 : vector<8x128xf32> to vector<8x128xbf16>
    %146 = vector.extract_strided_slice %29 {offsets = [0, 1792], sizes = [8, 128], strides = [1, 1]} : vector<8x3072xf32> to vector<8x128xf32>
    %147 = arith.truncf %146 : vector<8x128xf32> to vector<8x128xbf16>
    %148 = vector.extract_strided_slice %29 {offsets = [0, 2816], sizes = [8, 128], strides = [1, 1]} : vector<8x3072xf32> to vector<8x128xf32>
    %149 = arith.truncf %148 : vector<8x128xf32> to vector<8x128xbf16>
    %cst_37 = arith.constant dense<0.000000e+00> : vector<8x8xf32>
    %150 = tpu.matmul %145, %147, %cst_37 {dimension_numbers = #tpu.dot_dimension_numbers<[1], [1], [0], [0], [0, 0, 1, 0], [], []>} : vector<8x128xbf16>, vector<8x128xbf16>, vector<8x8xf32> -> vector<8x8xf32>
    %cst_38 = arith.constant dense<0xFF800000> : vector<8xf32>
    %151 = vector.multi_reduction <maximumf>, %150, %cst_38 [1] : vector<8x8xf32> to vector<8xf32>
    %152 = vector.shape_cast %151 : vector<8xf32> to vector<8x1xf32>
    %153 = vector.broadcast %152 : vector<8x1xf32> to vector<8x8xf32>
    %154 = arith.subf %150, %153 : vector<8x8xf32>
    %155 = math.exp %154 : vector<8x8xf32>
    %cst_39 = arith.constant dense<0.000000e+00> : vector<8xf32>
    %156 = vector.multi_reduction <add>, %155, %cst_39 [1] : vector<8x8xf32> to vector<8xf32>
    %157 = vector.shape_cast %156 : vector<8xf32> to vector<8x1xf32>
    %158 = tpu.reciprocal %157 {approx = true} : vector<8x1xf32> -> vector<8x1xf32>
    %159 = vector.broadcast %158 : vector<8x1xf32> to vector<8x8xf32>
    %160 = arith.mulf %155, %159 : vector<8x8xf32>
    %161 = arith.truncf %160 : vector<8x8xf32> to vector<8x8xbf16>
    %cst_40 = arith.constant dense<0.000000e+00> : vector<8x128xf32>
    %162 = tpu.matmul %161, %149, %cst_40 {dimension_numbers = #tpu.dot_dimension_numbers<[1], [0], [0], [1], [0, 0, 1, 1], [], []>} : vector<8x8xbf16>, vector<8x128xbf16>, vector<8x128xf32> -> vector<8x128xf32>
    %163 = vector.extract_strided_slice %29 {offsets = [0, 896], sizes = [8, 128], strides = [1, 1]} : vector<8x3072xf32> to vector<8x128xf32>
    %164 = arith.truncf %163 : vector<8x128xf32> to vector<8x128xbf16>
    %165 = vector.extract_strided_slice %29 {offsets = [0, 1920], sizes = [8, 128], strides = [1, 1]} : vector<8x3072xf32> to vector<8x128xf32>
    %166 = arith.truncf %165 : vector<8x128xf32> to vector<8x128xbf16>
    %167 = vector.extract_strided_slice %29 {offsets = [0, 2944], sizes = [8, 128], strides = [1, 1]} : vector<8x3072xf32> to vector<8x128xf32>
    %168 = arith.truncf %167 : vector<8x128xf32> to vector<8x128xbf16>
    %cst_41 = arith.constant dense<0.000000e+00> : vector<8x8xf32>
    %169 = tpu.matmul %164, %166, %cst_41 {dimension_numbers = #tpu.dot_dimension_numbers<[1], [1], [0], [0], [0, 0, 1, 0], [], []>} : vector<8x128xbf16>, vector<8x128xbf16>, vector<8x8xf32> -> vector<8x8xf32>
    %cst_42 = arith.constant dense<0xFF800000> : vector<8xf32>
    %170 = vector.multi_reduction <maximumf>, %169, %cst_42 [1] : vector<8x8xf32> to vector<8xf32>
    %171 = vector.shape_cast %170 : vector<8xf32> to vector<8x1xf32>
    %172 = vector.broadcast %171 : vector<8x1xf32> to vector<8x8xf32>
    %173 = arith.subf %169, %172 : vector<8x8xf32>
    %174 = math.exp %173 : vector<8x8xf32>
    %cst_43 = arith.constant dense<0.000000e+00> : vector<8xf32>
    %175 = vector.multi_reduction <add>, %174, %cst_43 [1] : vector<8x8xf32> to vector<8xf32>
    %176 = vector.shape_cast %175 : vector<8xf32> to vector<8x1xf32>
    %177 = tpu.reciprocal %176 {approx = true} : vector<8x1xf32> -> vector<8x1xf32>
    %178 = vector.broadcast %177 : vector<8x1xf32> to vector<8x8xf32>
    %179 = arith.mulf %174, %178 : vector<8x8xf32>
    %180 = arith.truncf %179 : vector<8x8xf32> to vector<8x8xbf16>
    %cst_44 = arith.constant dense<0.000000e+00> : vector<8x128xf32>
    %181 = tpu.matmul %180, %168, %cst_44 {dimension_numbers = #tpu.dot_dimension_numbers<[1], [0], [0], [1], [0, 0, 1, 1], [], []>} : vector<8x8xbf16>, vector<8x128xbf16>, vector<8x128xf32> -> vector<8x128xf32>
    %182 = tpu.concatenate %48, %67, %86, %105, %124, %143, %162, %181 in 1 : vector<8x128xf32>, vector<8x128xf32>, vector<8x128xf32>, vector<8x128xf32>, vector<8x128xf32>, vector<8x128xf32>, vector<8x128xf32>, vector<8x128xf32> -> vector<8x1024xf32>
    %183 = arith.truncf %182 : vector<8x1024xf32> to vector<8x1024xbf16>
    %c0_45 = arith.constant 0 : index
    %c0_46 = arith.constant 0 : index
    %c0_47 = arith.constant 0 : index
    %184 = vector.load %arg5[%c0_45, %c0_46, %c0_47] : memref<3x16x1024xbf16, #tpu.memory_space<vmem>>, vector<1x16x1024xbf16>
    %185 = vector.shape_cast %184 : vector<1x16x1024xbf16> to vector<16x1024xbf16>
    %cst_48 = arith.constant dense<0.000000e+00> : vector<8x16xf32>
    %186 = tpu.matmul %183, %185, %cst_48 {dimension_numbers = #tpu.dot_dimension_numbers<[1], [1], [0], [0], [0, 0, 1, 0], [], []>} : vector<8x1024xbf16>, vector<16x1024xbf16>, vector<8x16xf32> -> vector<8x16xf32>
    %187 = arith.addf %186, %3 : vector<8x16xf32>
    %c0_49 = arith.constant 0 : index
    %c0_50 = arith.constant 0 : index
    %c0_51 = arith.constant 0 : index
    %188 = vector.load %arg6[%c0_49, %c0_50, %c0_51] : memref<2x1x16xf32, #tpu.memory_space<vmem>>, vector<1x1x16xf32>
    %189 = vector.shape_cast %188 : vector<1x1x16xf32> to vector<1x16xf32>
    %cst_52 = arith.constant dense<0.000000e+00> : vector<8xf32>
    %190 = vector.multi_reduction <add>, %187, %cst_52 [1] : vector<8x16xf32> to vector<8xf32>
    %191 = vector.shape_cast %190 : vector<8xf32> to vector<8x1xf32>
    %cst_53 = arith.constant 1.600000e+01 : f32
    %192 = vector.broadcast %cst_53 : f32 to vector<8x1xf32>
    %193 = arith.divf %191, %192 : vector<8x1xf32>
    %194 = arith.mulf %187, %187 : vector<8x16xf32>
    %cst_54 = arith.constant dense<0.000000e+00> : vector<8xf32>
    %195 = vector.multi_reduction <add>, %194, %cst_54 [1] : vector<8x16xf32> to vector<8xf32>
    %196 = vector.shape_cast %195 : vector<8xf32> to vector<8x1xf32>
    %cst_55 = arith.constant 1.600000e+01 : f32
    %197 = vector.broadcast %cst_55 : f32 to vector<8x1xf32>
    %198 = arith.divf %196, %197 : vector<8x1xf32>
    %199 = arith.mulf %193, %193 : vector<8x1xf32>
    %200 = arith.subf %198, %199 : vector<8x1xf32>
    %201 = vector.broadcast %193 : vector<8x1xf32> to vector<8x16xf32>
    %202 = arith.subf %187, %201 : vector<8x16xf32>
    %cst_56 = arith.constant 9.99999974E-6 : f32
    %203 = vector.broadcast %cst_56 : f32 to vector<8x1xf32>
    %204 = arith.addf %200, %203 : vector<8x1xf32>
    %205 = math.rsqrt %204 : vector<8x1xf32>
    %206 = vector.broadcast %205 : vector<8x1xf32> to vector<8x16xf32>
    %207 = arith.mulf %202, %206 : vector<8x16xf32>
    %208 = vector.broadcast %189 : vector<1x16xf32> to vector<8x16xf32>
    %209 = arith.mulf %207, %208 : vector<8x16xf32>
    %210 = arith.truncf %209 : vector<8x16xf32> to vector<8x16xbf16>
    %c0_57 = arith.constant 0 : index
    %c0_58 = arith.constant 0 : index
    %c0_59 = arith.constant 0 : index
    %211 = vector.load %arg7[%c0_57, %c0_58, %c0_59] : memref<2x16x32xbf16, #tpu.memory_space<vmem>>, vector<1x16x32xbf16>
    %212 = vector.shape_cast %211 : vector<1x16x32xbf16> to vector<16x32xbf16>
    %cst_60 = arith.constant dense<0.000000e+00> : vector<8x32xf32>
    %213 = tpu.matmul %210, %212, %cst_60 {dimension_numbers = #tpu.dot_dimension_numbers<[1], [0], [0], [1], [0, 0, 1, 1], [], []>} : vector<8x16xbf16>, vector<16x32xbf16>, vector<8x32xf32> -> vector<8x32xf32>
    %c0_61 = arith.constant 0 : index
    %c0_62 = arith.constant 0 : index
    %c0_63 = arith.constant 0 : index
    %214 = vector.load %arg8[%c0_61, %c0_62, %c0_63] : memref<2x1x32xf32, #tpu.memory_space<vmem>>, vector<1x1x32xf32>
    %215 = vector.shape_cast %214 : vector<1x1x32xf32> to vector<1x32xf32>
    %216 = vector.broadcast %215 : vector<1x32xf32> to vector<8x32xf32>
    %217 = arith.addf %213, %216 : vector<8x32xf32>
    %cst_64 = arith.constant 5.000000e-01 : f32
    %218 = vector.broadcast %cst_64 : f32 to vector<8x32xf32>
    %219 = arith.mulf %218, %217 : vector<8x32xf32>
    %cst_65 = arith.constant 0.707106769 : f32
    %220 = vector.broadcast %cst_65 : f32 to vector<8x32xf32>
    %221 = arith.mulf %217, %220 : vector<8x32xf32>
    %222 = math.erf %221 : vector<8x32xf32>
    %cst_66 = arith.constant 1.000000e+00 : f32
    %223 = vector.broadcast %cst_66 : f32 to vector<8x32xf32>
    %224 = arith.addf %223, %222 : vector<8x32xf32>
    %225 = arith.mulf %219, %224 : vector<8x32xf32>
    %226 = arith.truncf %225 : vector<8x32xf32> to vector<8x32xbf16>
    %c0_67 = arith.constant 0 : index
    %c0_68 = arith.constant 0 : index
    %c0_69 = arith.constant 0 : index
    %227 = vector.load %arg9[%c0_67, %c0_68, %c0_69] : memref<2x32x16xbf16, #tpu.memory_space<vmem>>, vector<1x32x16xbf16>
    %228 = vector.shape_cast %227 : vector<1x32x16xbf16> to vector<32x16xbf16>
    %cst_70 = arith.constant dense<0.000000e+00> : vector<8x16xf32>
    %229 = tpu.matmul %226, %228, %cst_70 {dimension_numbers = #tpu.dot_dimension_numbers<[1], [0], [0], [1], [0, 0, 1, 1], [], []>} : vector<8x32xbf16>, vector<32x16xbf16>, vector<8x16xf32> -> vector<8x16xf32>
    %c0_71 = arith.constant 0 : index
    %c0_72 = arith.constant 0 : index
    %c0_73 = arith.constant 0 : index
    %230 = vector.load %arg10[%c0_71, %c0_72, %c0_73] : memref<2x1x16xf32, #tpu.memory_space<vmem>>, vector<1x1x16xf32>
    %231 = vector.shape_cast %230 : vector<1x1x16xf32> to vector<1x16xf32>
    %232 = vector.broadcast %231 : vector<1x16xf32> to vector<8x16xf32>
    %233 = arith.addf %229, %232 : vector<8x16xf32>
    %234 = arith.addf %233, %187 : vector<8x16xf32>
    %c1 = arith.constant 1 : index
    %c0_74 = arith.constant 0 : index
    %c0_75 = arith.constant 0 : index
    %235 = vector.load %arg3[%c1, %c0_74, %c0_75] : memref<3x1x16xf32, #tpu.memory_space<vmem>>, vector<1x1x16xf32>
    %236 = vector.shape_cast %235 : vector<1x1x16xf32> to vector<1x16xf32>
    %cst_76 = arith.constant dense<0.000000e+00> : vector<8xf32>
    %237 = vector.multi_reduction <add>, %234, %cst_76 [1] : vector<8x16xf32> to vector<8xf32>
    %238 = vector.shape_cast %237 : vector<8xf32> to vector<8x1xf32>
    %cst_77 = arith.constant 1.600000e+01 : f32
    %239 = vector.broadcast %cst_77 : f32 to vector<8x1xf32>
    %240 = arith.divf %238, %239 : vector<8x1xf32>
    %241 = arith.mulf %234, %234 : vector<8x16xf32>
    %cst_78 = arith.constant dense<0.000000e+00> : vector<8xf32>
    %242 = vector.multi_reduction <add>, %241, %cst_78 [1] : vector<8x16xf32> to vector<8xf32>
    %243 = vector.shape_cast %242 : vector<8xf32> to vector<8x1xf32>
    %cst_79 = arith.constant 1.600000e+01 : f32
    %244 = vector.broadcast %cst_79 : f32 to vector<8x1xf32>
    %245 = arith.divf %243, %244 : vector<8x1xf32>
    %246 = arith.mulf %240, %240 : vector<8x1xf32>
    %247 = arith.subf %245, %246 : vector<8x1xf32>
    %248 = vector.broadcast %240 : vector<8x1xf32> to vector<8x16xf32>
    %249 = arith.subf %234, %248 : vector<8x16xf32>
    %cst_80 = arith.constant 9.99999974E-6 : f32
    %250 = vector.broadcast %cst_80 : f32 to vector<8x1xf32>
    %251 = arith.addf %247, %250 : vector<8x1xf32>
    %252 = math.rsqrt %251 : vector<8x1xf32>
    %253 = vector.broadcast %252 : vector<8x1xf32> to vector<8x16xf32>
    %254 = arith.mulf %249, %253 : vector<8x16xf32>
    %255 = vector.broadcast %236 : vector<1x16xf32> to vector<8x16xf32>
    %256 = arith.mulf %254, %255 : vector<8x16xf32>
    %257 = arith.truncf %256 : vector<8x16xf32> to vector<8x16xbf16>
    %c1_81 = arith.constant 1 : index
    %c0_82 = arith.constant 0 : index
    %c0_83 = arith.constant 0 : index
    %258 = vector.load %arg4[%c1_81, %c0_82, %c0_83] : memref<3x16x3072xbf16, #tpu.memory_space<vmem>>, vector<1x16x3072xbf16>
    %259 = vector.shape_cast %258 : vector<1x16x3072xbf16> to vector<16x3072xbf16>
    %cst_84 = arith.constant dense<0.000000e+00> : vector<8x3072xf32>
    %260 = tpu.matmul %257, %259, %cst_84 {dimension_numbers = #tpu.dot_dimension_numbers<[1], [0], [0], [1], [0, 0, 1, 1], [], []>} : vector<8x16xbf16>, vector<16x3072xbf16>, vector<8x3072xf32> -> vector<8x3072xf32>
    %261 = vector.extract_strided_slice %260 {offsets = [0, 0], sizes = [8, 128], strides = [1, 1]} : vector<8x3072xf32> to vector<8x128xf32>
    %262 = arith.truncf %261 : vector<8x128xf32> to vector<8x128xbf16>
    %263 = vector.extract_strided_slice %260 {offsets = [0, 1024], sizes = [8, 128], strides = [1, 1]} : vector<8x3072xf32> to vector<8x128xf32>
    %264 = arith.truncf %263 : vector<8x128xf32> to vector<8x128xbf16>
    %265 = vector.extract_strided_slice %260 {offsets = [0, 2048], sizes = [8, 128], strides = [1, 1]} : vector<8x3072xf32> to vector<8x128xf32>
    %266 = arith.truncf %265 : vector<8x128xf32> to vector<8x128xbf16>
    %cst_85 = arith.constant dense<0.000000e+00> : vector<8x8xf32>
    %267 = tpu.matmul %262, %264, %cst_85 {dimension_numbers = #tpu.dot_dimension_numbers<[1], [1], [0], [0], [0, 0, 1, 0], [], []>} : vector<8x128xbf16>, vector<8x128xbf16>, vector<8x8xf32> -> vector<8x8xf32>
    %cst_86 = arith.constant dense<0xFF800000> : vector<8xf32>
    %268 = vector.multi_reduction <maximumf>, %267, %cst_86 [1] : vector<8x8xf32> to vector<8xf32>
    %269 = vector.shape_cast %268 : vector<8xf32> to vector<8x1xf32>
    %270 = vector.broadcast %269 : vector<8x1xf32> to vector<8x8xf32>
    %271 = arith.subf %267, %270 : vector<8x8xf32>
    %272 = math.exp %271 : vector<8x8xf32>
    %cst_87 = arith.constant dense<0.000000e+00> : vector<8xf32>
    %273 = vector.multi_reduction <add>, %272, %cst_87 [1] : vector<8x8xf32> to vector<8xf32>
    %274 = vector.shape_cast %273 : vector<8xf32> to vector<8x1xf32>
    %275 = tpu.reciprocal %274 {approx = true} : vector<8x1xf32> -> vector<8x1xf32>
    %276 = vector.broadcast %275 : vector<8x1xf32> to vector<8x8xf32>
    %277 = arith.mulf %272, %276 : vector<8x8xf32>
    %278 = arith.truncf %277 : vector<8x8xf32> to vector<8x8xbf16>
    %cst_88 = arith.constant dense<0.000000e+00> : vector<8x128xf32>
    %279 = tpu.matmul %278, %266, %cst_88 {dimension_numbers = #tpu.dot_dimension_numbers<[1], [0], [0], [1], [0, 0, 1, 1], [], []>} : vector<8x8xbf16>, vector<8x128xbf16>, vector<8x128xf32> -> vector<8x128xf32>
    %280 = vector.extract_strided_slice %260 {offsets = [0, 128], sizes = [8, 128], strides = [1, 1]} : vector<8x3072xf32> to vector<8x128xf32>
    %281 = arith.truncf %280 : vector<8x128xf32> to vector<8x128xbf16>
    %282 = vector.extract_strided_slice %260 {offsets = [0, 1152], sizes = [8, 128], strides = [1, 1]} : vector<8x3072xf32> to vector<8x128xf32>
    %283 = arith.truncf %282 : vector<8x128xf32> to vector<8x128xbf16>
    %284 = vector.extract_strided_slice %260 {offsets = [0, 2176], sizes = [8, 128], strides = [1, 1]} : vector<8x3072xf32> to vector<8x128xf32>
    %285 = arith.truncf %284 : vector<8x128xf32> to vector<8x128xbf16>
    %cst_89 = arith.constant dense<0.000000e+00> : vector<8x8xf32>
    %286 = tpu.matmul %281, %283, %cst_89 {dimension_numbers = #tpu.dot_dimension_numbers<[1], [1], [0], [0], [0, 0, 1, 0], [], []>} : vector<8x128xbf16>, vector<8x128xbf16>, vector<8x8xf32> -> vector<8x8xf32>
    %cst_90 = arith.constant dense<0xFF800000> : vector<8xf32>
    %287 = vector.multi_reduction <maximumf>, %286, %cst_90 [1] : vector<8x8xf32> to vector<8xf32>
    %288 = vector.shape_cast %287 : vector<8xf32> to vector<8x1xf32>
    %289 = vector.broadcast %288 : vector<8x1xf32> to vector<8x8xf32>
    %290 = arith.subf %286, %289 : vector<8x8xf32>
    %291 = math.exp %290 : vector<8x8xf32>
    %cst_91 = arith.constant dense<0.000000e+00> : vector<8xf32>
    %292 = vector.multi_reduction <add>, %291, %cst_91 [1] : vector<8x8xf32> to vector<8xf32>
    %293 = vector.shape_cast %292 : vector<8xf32> to vector<8x1xf32>
    %294 = tpu.reciprocal %293 {approx = true} : vector<8x1xf32> -> vector<8x1xf32>
    %295 = vector.broadcast %294 : vector<8x1xf32> to vector<8x8xf32>
    %296 = arith.mulf %291, %295 : vector<8x8xf32>
    %297 = arith.truncf %296 : vector<8x8xf32> to vector<8x8xbf16>
    %cst_92 = arith.constant dense<0.000000e+00> : vector<8x128xf32>
    %298 = tpu.matmul %297, %285, %cst_92 {dimension_numbers = #tpu.dot_dimension_numbers<[1], [0], [0], [1], [0, 0, 1, 1], [], []>} : vector<8x8xbf16>, vector<8x128xbf16>, vector<8x128xf32> -> vector<8x128xf32>
    %299 = vector.extract_strided_slice %260 {offsets = [0, 256], sizes = [8, 128], strides = [1, 1]} : vector<8x3072xf32> to vector<8x128xf32>
    %300 = arith.truncf %299 : vector<8x128xf32> to vector<8x128xbf16>
    %301 = vector.extract_strided_slice %260 {offsets = [0, 1280], sizes = [8, 128], strides = [1, 1]} : vector<8x3072xf32> to vector<8x128xf32>
    %302 = arith.truncf %301 : vector<8x128xf32> to vector<8x128xbf16>
    %303 = vector.extract_strided_slice %260 {offsets = [0, 2304], sizes = [8, 128], strides = [1, 1]} : vector<8x3072xf32> to vector<8x128xf32>
    %304 = arith.truncf %303 : vector<8x128xf32> to vector<8x128xbf16>
    %cst_93 = arith.constant dense<0.000000e+00> : vector<8x8xf32>
    %305 = tpu.matmul %300, %302, %cst_93 {dimension_numbers = #tpu.dot_dimension_numbers<[1], [1], [0], [0], [0, 0, 1, 0], [], []>} : vector<8x128xbf16>, vector<8x128xbf16>, vector<8x8xf32> -> vector<8x8xf32>
    %cst_94 = arith.constant dense<0xFF800000> : vector<8xf32>
    %306 = vector.multi_reduction <maximumf>, %305, %cst_94 [1] : vector<8x8xf32> to vector<8xf32>
    %307 = vector.shape_cast %306 : vector<8xf32> to vector<8x1xf32>
    %308 = vector.broadcast %307 : vector<8x1xf32> to vector<8x8xf32>
    %309 = arith.subf %305, %308 : vector<8x8xf32>
    %310 = math.exp %309 : vector<8x8xf32>
    %cst_95 = arith.constant dense<0.000000e+00> : vector<8xf32>
    %311 = vector.multi_reduction <add>, %310, %cst_95 [1] : vector<8x8xf32> to vector<8xf32>
    %312 = vector.shape_cast %311 : vector<8xf32> to vector<8x1xf32>
    %313 = tpu.reciprocal %312 {approx = true} : vector<8x1xf32> -> vector<8x1xf32>
    %314 = vector.broadcast %313 : vector<8x1xf32> to vector<8x8xf32>
    %315 = arith.mulf %310, %314 : vector<8x8xf32>
    %316 = arith.truncf %315 : vector<8x8xf32> to vector<8x8xbf16>
    %cst_96 = arith.constant dense<0.000000e+00> : vector<8x128xf32>
    %317 = tpu.matmul %316, %304, %cst_96 {dimension_numbers = #tpu.dot_dimension_numbers<[1], [0], [0], [1], [0, 0, 1, 1], [], []>} : vector<8x8xbf16>, vector<8x128xbf16>, vector<8x128xf32> -> vector<8x128xf32>
    %318 = vector.extract_strided_slice %260 {offsets = [0, 384], sizes = [8, 128], strides = [1, 1]} : vector<8x3072xf32> to vector<8x128xf32>
    %319 = arith.truncf %318 : vector<8x128xf32> to vector<8x128xbf16>
    %320 = vector.extract_strided_slice %260 {offsets = [0, 1408], sizes = [8, 128], strides = [1, 1]} : vector<8x3072xf32> to vector<8x128xf32>
    %321 = arith.truncf %320 : vector<8x128xf32> to vector<8x128xbf16>
    %322 = vector.extract_strided_slice %260 {offsets = [0, 2432], sizes = [8, 128], strides = [1, 1]} : vector<8x3072xf32> to vector<8x128xf32>
    %323 = arith.truncf %322 : vector<8x128xf32> to vector<8x128xbf16>
    %cst_97 = arith.constant dense<0.000000e+00> : vector<8x8xf32>
    %324 = tpu.matmul %319, %321, %cst_97 {dimension_numbers = #tpu.dot_dimension_numbers<[1], [1], [0], [0], [0, 0, 1, 0], [], []>} : vector<8x128xbf16>, vector<8x128xbf16>, vector<8x8xf32> -> vector<8x8xf32>
    %cst_98 = arith.constant dense<0xFF800000> : vector<8xf32>
    %325 = vector.multi_reduction <maximumf>, %324, %cst_98 [1] : vector<8x8xf32> to vector<8xf32>
    %326 = vector.shape_cast %325 : vector<8xf32> to vector<8x1xf32>
    %327 = vector.broadcast %326 : vector<8x1xf32> to vector<8x8xf32>
    %328 = arith.subf %324, %327 : vector<8x8xf32>
    %329 = math.exp %328 : vector<8x8xf32>
    %cst_99 = arith.constant dense<0.000000e+00> : vector<8xf32>
    %330 = vector.multi_reduction <add>, %329, %cst_99 [1] : vector<8x8xf32> to vector<8xf32>
    %331 = vector.shape_cast %330 : vector<8xf32> to vector<8x1xf32>
    %332 = tpu.reciprocal %331 {approx = true} : vector<8x1xf32> -> vector<8x1xf32>
    %333 = vector.broadcast %332 : vector<8x1xf32> to vector<8x8xf32>
    %334 = arith.mulf %329, %333 : vector<8x8xf32>
    %335 = arith.truncf %334 : vector<8x8xf32> to vector<8x8xbf16>
    %cst_100 = arith.constant dense<0.000000e+00> : vector<8x128xf32>
    %336 = tpu.matmul %335, %323, %cst_100 {dimension_numbers = #tpu.dot_dimension_numbers<[1], [0], [0], [1], [0, 0, 1, 1], [], []>} : vector<8x8xbf16>, vector<8x128xbf16>, vector<8x128xf32> -> vector<8x128xf32>
    %337 = vector.extract_strided_slice %260 {offsets = [0, 512], sizes = [8, 128], strides = [1, 1]} : vector<8x3072xf32> to vector<8x128xf32>
    %338 = arith.truncf %337 : vector<8x128xf32> to vector<8x128xbf16>
    %339 = vector.extract_strided_slice %260 {offsets = [0, 1536], sizes = [8, 128], strides = [1, 1]} : vector<8x3072xf32> to vector<8x128xf32>
    %340 = arith.truncf %339 : vector<8x128xf32> to vector<8x128xbf16>
    %341 = vector.extract_strided_slice %260 {offsets = [0, 2560], sizes = [8, 128], strides = [1, 1]} : vector<8x3072xf32> to vector<8x128xf32>
    %342 = arith.truncf %341 : vector<8x128xf32> to vector<8x128xbf16>
    %cst_101 = arith.constant dense<0.000000e+00> : vector<8x8xf32>
    %343 = tpu.matmul %338, %340, %cst_101 {dimension_numbers = #tpu.dot_dimension_numbers<[1], [1], [0], [0], [0, 0, 1, 0], [], []>} : vector<8x128xbf16>, vector<8x128xbf16>, vector<8x8xf32> -> vector<8x8xf32>
    %cst_102 = arith.constant dense<0xFF800000> : vector<8xf32>
    %344 = vector.multi_reduction <maximumf>, %343, %cst_102 [1] : vector<8x8xf32> to vector<8xf32>
    %345 = vector.shape_cast %344 : vector<8xf32> to vector<8x1xf32>
    %346 = vector.broadcast %345 : vector<8x1xf32> to vector<8x8xf32>
    %347 = arith.subf %343, %346 : vector<8x8xf32>
    %348 = math.exp %347 : vector<8x8xf32>
    %cst_103 = arith.constant dense<0.000000e+00> : vector<8xf32>
    %349 = vector.multi_reduction <add>, %348, %cst_103 [1] : vector<8x8xf32> to vector<8xf32>
    %350 = vector.shape_cast %349 : vector<8xf32> to vector<8x1xf32>
    %351 = tpu.reciprocal %350 {approx = true} : vector<8x1xf32> -> vector<8x1xf32>
    %352 = vector.broadcast %351 : vector<8x1xf32> to vector<8x8xf32>
    %353 = arith.mulf %348, %352 : vector<8x8xf32>
    %354 = arith.truncf %353 : vector<8x8xf32> to vector<8x8xbf16>
    %cst_104 = arith.constant dense<0.000000e+00> : vector<8x128xf32>
    %355 = tpu.matmul %354, %342, %cst_104 {dimension_numbers = #tpu.dot_dimension_numbers<[1], [0], [0], [1], [0, 0, 1, 1], [], []>} : vector<8x8xbf16>, vector<8x128xbf16>, vector<8x128xf32> -> vector<8x128xf32>
    %356 = vector.extract_strided_slice %260 {offsets = [0, 640], sizes = [8, 128], strides = [1, 1]} : vector<8x3072xf32> to vector<8x128xf32>
    %357 = arith.truncf %356 : vector<8x128xf32> to vector<8x128xbf16>
    %358 = vector.extract_strided_slice %260 {offsets = [0, 1664], sizes = [8, 128], strides = [1, 1]} : vector<8x3072xf32> to vector<8x128xf32>
    %359 = arith.truncf %358 : vector<8x128xf32> to vector<8x128xbf16>
    %360 = vector.extract_strided_slice %260 {offsets = [0, 2688], sizes = [8, 128], strides = [1, 1]} : vector<8x3072xf32> to vector<8x128xf32>
    %361 = arith.truncf %360 : vector<8x128xf32> to vector<8x128xbf16>
    %cst_105 = arith.constant dense<0.000000e+00> : vector<8x8xf32>
    %362 = tpu.matmul %357, %359, %cst_105 {dimension_numbers = #tpu.dot_dimension_numbers<[1], [1], [0], [0], [0, 0, 1, 0], [], []>} : vector<8x128xbf16>, vector<8x128xbf16>, vector<8x8xf32> -> vector<8x8xf32>
    %cst_106 = arith.constant dense<0xFF800000> : vector<8xf32>
    %363 = vector.multi_reduction <maximumf>, %362, %cst_106 [1] : vector<8x8xf32> to vector<8xf32>
    %364 = vector.shape_cast %363 : vector<8xf32> to vector<8x1xf32>
    %365 = vector.broadcast %364 : vector<8x1xf32> to vector<8x8xf32>
    %366 = arith.subf %362, %365 : vector<8x8xf32>
    %367 = math.exp %366 : vector<8x8xf32>
    %cst_107 = arith.constant dense<0.000000e+00> : vector<8xf32>
    %368 = vector.multi_reduction <add>, %367, %cst_107 [1] : vector<8x8xf32> to vector<8xf32>
    %369 = vector.shape_cast %368 : vector<8xf32> to vector<8x1xf32>
    %370 = tpu.reciprocal %369 {approx = true} : vector<8x1xf32> -> vector<8x1xf32>
    %371 = vector.broadcast %370 : vector<8x1xf32> to vector<8x8xf32>
    %372 = arith.mulf %367, %371 : vector<8x8xf32>
    %373 = arith.truncf %372 : vector<8x8xf32> to vector<8x8xbf16>
    %cst_108 = arith.constant dense<0.000000e+00> : vector<8x128xf32>
    %374 = tpu.matmul %373, %361, %cst_108 {dimension_numbers = #tpu.dot_dimension_numbers<[1], [0], [0], [1], [0, 0, 1, 1], [], []>} : vector<8x8xbf16>, vector<8x128xbf16>, vector<8x128xf32> -> vector<8x128xf32>
    %375 = vector.extract_strided_slice %260 {offsets = [0, 768], sizes = [8, 128], strides = [1, 1]} : vector<8x3072xf32> to vector<8x128xf32>
    %376 = arith.truncf %375 : vector<8x128xf32> to vector<8x128xbf16>
    %377 = vector.extract_strided_slice %260 {offsets = [0, 1792], sizes = [8, 128], strides = [1, 1]} : vector<8x3072xf32> to vector<8x128xf32>
    %378 = arith.truncf %377 : vector<8x128xf32> to vector<8x128xbf16>
    %379 = vector.extract_strided_slice %260 {offsets = [0, 2816], sizes = [8, 128], strides = [1, 1]} : vector<8x3072xf32> to vector<8x128xf32>
    %380 = arith.truncf %379 : vector<8x128xf32> to vector<8x128xbf16>
    %cst_109 = arith.constant dense<0.000000e+00> : vector<8x8xf32>
    %381 = tpu.matmul %376, %378, %cst_109 {dimension_numbers = #tpu.dot_dimension_numbers<[1], [1], [0], [0], [0, 0, 1, 0], [], []>} : vector<8x128xbf16>, vector<8x128xbf16>, vector<8x8xf32> -> vector<8x8xf32>
    %cst_110 = arith.constant dense<0xFF800000> : vector<8xf32>
    %382 = vector.multi_reduction <maximumf>, %381, %cst_110 [1] : vector<8x8xf32> to vector<8xf32>
    %383 = vector.shape_cast %382 : vector<8xf32> to vector<8x1xf32>
    %384 = vector.broadcast %383 : vector<8x1xf32> to vector<8x8xf32>
    %385 = arith.subf %381, %384 : vector<8x8xf32>
    %386 = math.exp %385 : vector<8x8xf32>
    %cst_111 = arith.constant dense<0.000000e+00> : vector<8xf32>
    %387 = vector.multi_reduction <add>, %386, %cst_111 [1] : vector<8x8xf32> to vector<8xf32>
    %388 = vector.shape_cast %387 : vector<8xf32> to vector<8x1xf32>
    %389 = tpu.reciprocal %388 {approx = true} : vector<8x1xf32> -> vector<8x1xf32>
    %390 = vector.broadcast %389 : vector<8x1xf32> to vector<8x8xf32>
    %391 = arith.mulf %386, %390 : vector<8x8xf32>
    %392 = arith.truncf %391 : vector<8x8xf32> to vector<8x8xbf16>
    %cst_112 = arith.constant dense<0.000000e+00> : vector<8x128xf32>
    %393 = tpu.matmul %392, %380, %cst_112 {dimension_numbers = #tpu.dot_dimension_numbers<[1], [0], [0], [1], [0, 0, 1, 1], [], []>} : vector<8x8xbf16>, vector<8x128xbf16>, vector<8x128xf32> -> vector<8x128xf32>
    %394 = vector.extract_strided_slice %260 {offsets = [0, 896], sizes = [8, 128], strides = [1, 1]} : vector<8x3072xf32> to vector<8x128xf32>
    %395 = arith.truncf %394 : vector<8x128xf32> to vector<8x128xbf16>
    %396 = vector.extract_strided_slice %260 {offsets = [0, 1920], sizes = [8, 128], strides = [1, 1]} : vector<8x3072xf32> to vector<8x128xf32>
    %397 = arith.truncf %396 : vector<8x128xf32> to vector<8x128xbf16>
    %398 = vector.extract_strided_slice %260 {offsets = [0, 2944], sizes = [8, 128], strides = [1, 1]} : vector<8x3072xf32> to vector<8x128xf32>
    %399 = arith.truncf %398 : vector<8x128xf32> to vector<8x128xbf16>
    %cst_113 = arith.constant dense<0.000000e+00> : vector<8x8xf32>
    %400 = tpu.matmul %395, %397, %cst_113 {dimension_numbers = #tpu.dot_dimension_numbers<[1], [1], [0], [0], [0, 0, 1, 0], [], []>} : vector<8x128xbf16>, vector<8x128xbf16>, vector<8x8xf32> -> vector<8x8xf32>
    %cst_114 = arith.constant dense<0xFF800000> : vector<8xf32>
    %401 = vector.multi_reduction <maximumf>, %400, %cst_114 [1] : vector<8x8xf32> to vector<8xf32>
    %402 = vector.shape_cast %401 : vector<8xf32> to vector<8x1xf32>
    %403 = vector.broadcast %402 : vector<8x1xf32> to vector<8x8xf32>
    %404 = arith.subf %400, %403 : vector<8x8xf32>
    %405 = math.exp %404 : vector<8x8xf32>
    %cst_115 = arith.constant dense<0.000000e+00> : vector<8xf32>
    %406 = vector.multi_reduction <add>, %405, %cst_115 [1] : vector<8x8xf32> to vector<8xf32>
    %407 = vector.shape_cast %406 : vector<8xf32> to vector<8x1xf32>
    %408 = tpu.reciprocal %407 {approx = true} : vector<8x1xf32> -> vector<8x1xf32>
    %409 = vector.broadcast %408 : vector<8x1xf32> to vector<8x8xf32>
    %410 = arith.mulf %405, %409 : vector<8x8xf32>
    %411 = arith.truncf %410 : vector<8x8xf32> to vector<8x8xbf16>
    %cst_116 = arith.constant dense<0.000000e+00> : vector<8x128xf32>
    %412 = tpu.matmul %411, %399, %cst_116 {dimension_numbers = #tpu.dot_dimension_numbers<[1], [0], [0], [1], [0, 0, 1, 1], [], []>} : vector<8x8xbf16>, vector<8x128xbf16>, vector<8x128xf32> -> vector<8x128xf32>
    %413 = tpu.concatenate %279, %298, %317, %336, %355, %374, %393, %412 in 1 : vector<8x128xf32>, vector<8x128xf32>, vector<8x128xf32>, vector<8x128xf32>, vector<8x128xf32>, vector<8x128xf32>, vector<8x128xf32>, vector<8x128xf32> -> vector<8x1024xf32>
    %414 = arith.truncf %413 : vector<8x1024xf32> to vector<8x1024xbf16>
    %c1_117 = arith.constant 1 : index
    %c0_118 = arith.constant 0 : index
    %c0_119 = arith.constant 0 : index
    %415 = vector.load %arg5[%c1_117, %c0_118, %c0_119] : memref<3x16x1024xbf16, #tpu.memory_space<vmem>>, vector<1x16x1024xbf16>
    %416 = vector.shape_cast %415 : vector<1x16x1024xbf16> to vector<16x1024xbf16>
    %cst_120 = arith.constant dense<0.000000e+00> : vector<8x16xf32>
    %417 = tpu.matmul %414, %416, %cst_120 {dimension_numbers = #tpu.dot_dimension_numbers<[1], [1], [0], [0], [0, 0, 1, 0], [], []>} : vector<8x1024xbf16>, vector<16x1024xbf16>, vector<8x16xf32> -> vector<8x16xf32>
    %418 = arith.addf %417, %234 : vector<8x16xf32>
    %c2 = arith.constant 2 : index
    %c0_121 = arith.constant 0 : index
    %c0_122 = arith.constant 0 : index
    %419 = vector.load %arg3[%c2, %c0_121, %c0_122] : memref<3x1x16xf32, #tpu.memory_space<vmem>>, vector<1x1x16xf32>
    %420 = vector.shape_cast %419 : vector<1x1x16xf32> to vector<1x16xf32>
    %cst_123 = arith.constant dense<0.000000e+00> : vector<8xf32>
    %421 = vector.multi_reduction <add>, %418, %cst_123 [1] : vector<8x16xf32> to vector<8xf32>
    %422 = vector.shape_cast %421 : vector<8xf32> to vector<8x1xf32>
    %cst_124 = arith.constant 1.600000e+01 : f32
    %423 = vector.broadcast %cst_124 : f32 to vector<8x1xf32>
    %424 = arith.divf %422, %423 : vector<8x1xf32>
    %425 = arith.mulf %418, %418 : vector<8x16xf32>
    %cst_125 = arith.constant dense<0.000000e+00> : vector<8xf32>
    %426 = vector.multi_reduction <add>, %425, %cst_125 [1] : vector<8x16xf32> to vector<8xf32>
    %427 = vector.shape_cast %426 : vector<8xf32> to vector<8x1xf32>
    %cst_126 = arith.constant 1.600000e+01 : f32
    %428 = vector.broadcast %cst_126 : f32 to vector<8x1xf32>
    %429 = arith.divf %427, %428 : vector<8x1xf32>
    %430 = arith.mulf %424, %424 : vector<8x1xf32>
    %431 = arith.subf %429, %430 : vector<8x1xf32>
    %432 = vector.broadcast %424 : vector<8x1xf32> to vector<8x16xf32>
    %433 = arith.subf %418, %432 : vector<8x16xf32>
    %cst_127 = arith.constant 9.99999974E-6 : f32
    %434 = vector.broadcast %cst_127 : f32 to vector<8x1xf32>
    %435 = arith.addf %431, %434 : vector<8x1xf32>
    %436 = math.rsqrt %435 : vector<8x1xf32>
    %437 = vector.broadcast %436 : vector<8x1xf32> to vector<8x16xf32>
    %438 = arith.mulf %433, %437 : vector<8x16xf32>
    %439 = vector.broadcast %420 : vector<1x16xf32> to vector<8x16xf32>
    %440 = arith.mulf %438, %439 : vector<8x16xf32>
    %441 = arith.truncf %440 : vector<8x16xf32> to vector<8x16xbf16>
    %c2_128 = arith.constant 2 : index
    %c0_129 = arith.constant 0 : index
    %c0_130 = arith.constant 0 : index
    %442 = vector.load %arg4[%c2_128, %c0_129, %c0_130] : memref<3x16x3072xbf16, #tpu.memory_space<vmem>>, vector<1x16x3072xbf16>
    %443 = vector.shape_cast %442 : vector<1x16x3072xbf16> to vector<16x3072xbf16>
    %cst_131 = arith.constant dense<0.000000e+00> : vector<8x3072xf32>
    %444 = tpu.matmul %441, %443, %cst_131 {dimension_numbers = #tpu.dot_dimension_numbers<[1], [0], [0], [1], [0, 0, 1, 1], [], []>} : vector<8x16xbf16>, vector<16x3072xbf16>, vector<8x3072xf32> -> vector<8x3072xf32>
    %445 = vector.extract_strided_slice %444 {offsets = [0, 0], sizes = [8, 128], strides = [1, 1]} : vector<8x3072xf32> to vector<8x128xf32>
    %446 = arith.truncf %445 : vector<8x128xf32> to vector<8x128xbf16>
    %447 = vector.extract_strided_slice %444 {offsets = [0, 1024], sizes = [8, 128], strides = [1, 1]} : vector<8x3072xf32> to vector<8x128xf32>
    %448 = arith.truncf %447 : vector<8x128xf32> to vector<8x128xbf16>
    %449 = vector.extract_strided_slice %444 {offsets = [0, 2048], sizes = [8, 128], strides = [1, 1]} : vector<8x3072xf32> to vector<8x128xf32>
    %450 = arith.truncf %449 : vector<8x128xf32> to vector<8x128xbf16>
    %cst_132 = arith.constant dense<0.000000e+00> : vector<8x8xf32>
    %451 = tpu.matmul %446, %448, %cst_132 {dimension_numbers = #tpu.dot_dimension_numbers<[1], [1], [0], [0], [0, 0, 1, 0], [], []>} : vector<8x128xbf16>, vector<8x128xbf16>, vector<8x8xf32> -> vector<8x8xf32>
    %cst_133 = arith.constant dense<0xFF800000> : vector<8xf32>
    %452 = vector.multi_reduction <maximumf>, %451, %cst_133 [1] : vector<8x8xf32> to vector<8xf32>
    %453 = vector.shape_cast %452 : vector<8xf32> to vector<8x1xf32>
    %454 = vector.broadcast %453 : vector<8x1xf32> to vector<8x8xf32>
    %455 = arith.subf %451, %454 : vector<8x8xf32>
    %456 = math.exp %455 : vector<8x8xf32>
    %cst_134 = arith.constant dense<0.000000e+00> : vector<8xf32>
    %457 = vector.multi_reduction <add>, %456, %cst_134 [1] : vector<8x8xf32> to vector<8xf32>
    %458 = vector.shape_cast %457 : vector<8xf32> to vector<8x1xf32>
    %459 = tpu.reciprocal %458 {approx = true} : vector<8x1xf32> -> vector<8x1xf32>
    %460 = vector.broadcast %459 : vector<8x1xf32> to vector<8x8xf32>
    %461 = arith.mulf %456, %460 : vector<8x8xf32>
    %462 = arith.truncf %461 : vector<8x8xf32> to vector<8x8xbf16>
    %cst_135 = arith.constant dense<0.000000e+00> : vector<8x128xf32>
    %463 = tpu.matmul %462, %450, %cst_135 {dimension_numbers = #tpu.dot_dimension_numbers<[1], [0], [0], [1], [0, 0, 1, 1], [], []>} : vector<8x8xbf16>, vector<8x128xbf16>, vector<8x128xf32> -> vector<8x128xf32>
    %464 = vector.extract_strided_slice %444 {offsets = [0, 128], sizes = [8, 128], strides = [1, 1]} : vector<8x3072xf32> to vector<8x128xf32>
    %465 = arith.truncf %464 : vector<8x128xf32> to vector<8x128xbf16>
    %466 = vector.extract_strided_slice %444 {offsets = [0, 1152], sizes = [8, 128], strides = [1, 1]} : vector<8x3072xf32> to vector<8x128xf32>
    %467 = arith.truncf %466 : vector<8x128xf32> to vector<8x128xbf16>
    %468 = vector.extract_strided_slice %444 {offsets = [0, 2176], sizes = [8, 128], strides = [1, 1]} : vector<8x3072xf32> to vector<8x128xf32>
    %469 = arith.truncf %468 : vector<8x128xf32> to vector<8x128xbf16>
    %cst_136 = arith.constant dense<0.000000e+00> : vector<8x8xf32>
    %470 = tpu.matmul %465, %467, %cst_136 {dimension_numbers = #tpu.dot_dimension_numbers<[1], [1], [0], [0], [0, 0, 1, 0], [], []>} : vector<8x128xbf16>, vector<8x128xbf16>, vector<8x8xf32> -> vector<8x8xf32>
    %cst_137 = arith.constant dense<0xFF800000> : vector<8xf32>
    %471 = vector.multi_reduction <maximumf>, %470, %cst_137 [1] : vector<8x8xf32> to vector<8xf32>
    %472 = vector.shape_cast %471 : vector<8xf32> to vector<8x1xf32>
    %473 = vector.broadcast %472 : vector<8x1xf32> to vector<8x8xf32>
    %474 = arith.subf %470, %473 : vector<8x8xf32>
    %475 = math.exp %474 : vector<8x8xf32>
    %cst_138 = arith.constant dense<0.000000e+00> : vector<8xf32>
    %476 = vector.multi_reduction <add>, %475, %cst_138 [1] : vector<8x8xf32> to vector<8xf32>
    %477 = vector.shape_cast %476 : vector<8xf32> to vector<8x1xf32>
    %478 = tpu.reciprocal %477 {approx = true} : vector<8x1xf32> -> vector<8x1xf32>
    %479 = vector.broadcast %478 : vector<8x1xf32> to vector<8x8xf32>
    %480 = arith.mulf %475, %479 : vector<8x8xf32>
    %481 = arith.truncf %480 : vector<8x8xf32> to vector<8x8xbf16>
    %cst_139 = arith.constant dense<0.000000e+00> : vector<8x128xf32>
    %482 = tpu.matmul %481, %469, %cst_139 {dimension_numbers = #tpu.dot_dimension_numbers<[1], [0], [0], [1], [0, 0, 1, 1], [], []>} : vector<8x8xbf16>, vector<8x128xbf16>, vector<8x128xf32> -> vector<8x128xf32>
    %483 = vector.extract_strided_slice %444 {offsets = [0, 256], sizes = [8, 128], strides = [1, 1]} : vector<8x3072xf32> to vector<8x128xf32>
    %484 = arith.truncf %483 : vector<8x128xf32> to vector<8x128xbf16>
    %485 = vector.extract_strided_slice %444 {offsets = [0, 1280], sizes = [8, 128], strides = [1, 1]} : vector<8x3072xf32> to vector<8x128xf32>
    %486 = arith.truncf %485 : vector<8x128xf32> to vector<8x128xbf16>
    %487 = vector.extract_strided_slice %444 {offsets = [0, 2304], sizes = [8, 128], strides = [1, 1]} : vector<8x3072xf32> to vector<8x128xf32>
    %488 = arith.truncf %487 : vector<8x128xf32> to vector<8x128xbf16>
    %cst_140 = arith.constant dense<0.000000e+00> : vector<8x8xf32>
    %489 = tpu.matmul %484, %486, %cst_140 {dimension_numbers = #tpu.dot_dimension_numbers<[1], [1], [0], [0], [0, 0, 1, 0], [], []>} : vector<8x128xbf16>, vector<8x128xbf16>, vector<8x8xf32> -> vector<8x8xf32>
    %cst_141 = arith.constant dense<0xFF800000> : vector<8xf32>
    %490 = vector.multi_reduction <maximumf>, %489, %cst_141 [1] : vector<8x8xf32> to vector<8xf32>
    %491 = vector.shape_cast %490 : vector<8xf32> to vector<8x1xf32>
    %492 = vector.broadcast %491 : vector<8x1xf32> to vector<8x8xf32>
    %493 = arith.subf %489, %492 : vector<8x8xf32>
    %494 = math.exp %493 : vector<8x8xf32>
    %cst_142 = arith.constant dense<0.000000e+00> : vector<8xf32>
    %495 = vector.multi_reduction <add>, %494, %cst_142 [1] : vector<8x8xf32> to vector<8xf32>
    %496 = vector.shape_cast %495 : vector<8xf32> to vector<8x1xf32>
    %497 = tpu.reciprocal %496 {approx = true} : vector<8x1xf32> -> vector<8x1xf32>
    %498 = vector.broadcast %497 : vector<8x1xf32> to vector<8x8xf32>
    %499 = arith.mulf %494, %498 : vector<8x8xf32>
    %500 = arith.truncf %499 : vector<8x8xf32> to vector<8x8xbf16>
    %cst_143 = arith.constant dense<0.000000e+00> : vector<8x128xf32>
    %501 = tpu.matmul %500, %488, %cst_143 {dimension_numbers = #tpu.dot_dimension_numbers<[1], [0], [0], [1], [0, 0, 1, 1], [], []>} : vector<8x8xbf16>, vector<8x128xbf16>, vector<8x128xf32> -> vector<8x128xf32>
    %502 = vector.extract_strided_slice %444 {offsets = [0, 384], sizes = [8, 128], strides = [1, 1]} : vector<8x3072xf32> to vector<8x128xf32>
    %503 = arith.truncf %502 : vector<8x128xf32> to vector<8x128xbf16>
    %504 = vector.extract_strided_slice %444 {offsets = [0, 1408], sizes = [8, 128], strides = [1, 1]} : vector<8x3072xf32> to vector<8x128xf32>
    %505 = arith.truncf %504 : vector<8x128xf32> to vector<8x128xbf16>
    %506 = vector.extract_strided_slice %444 {offsets = [0, 2432], sizes = [8, 128], strides = [1, 1]} : vector<8x3072xf32> to vector<8x128xf32>
    %507 = arith.truncf %506 : vector<8x128xf32> to vector<8x128xbf16>
    %cst_144 = arith.constant dense<0.000000e+00> : vector<8x8xf32>
    %508 = tpu.matmul %503, %505, %cst_144 {dimension_numbers = #tpu.dot_dimension_numbers<[1], [1], [0], [0], [0, 0, 1, 0], [], []>} : vector<8x128xbf16>, vector<8x128xbf16>, vector<8x8xf32> -> vector<8x8xf32>
    %cst_145 = arith.constant dense<0xFF800000> : vector<8xf32>
    %509 = vector.multi_reduction <maximumf>, %508, %cst_145 [1] : vector<8x8xf32> to vector<8xf32>
    %510 = vector.shape_cast %509 : vector<8xf32> to vector<8x1xf32>
    %511 = vector.broadcast %510 : vector<8x1xf32> to vector<8x8xf32>
    %512 = arith.subf %508, %511 : vector<8x8xf32>
    %513 = math.exp %512 : vector<8x8xf32>
    %cst_146 = arith.constant dense<0.000000e+00> : vector<8xf32>
    %514 = vector.multi_reduction <add>, %513, %cst_146 [1] : vector<8x8xf32> to vector<8xf32>
    %515 = vector.shape_cast %514 : vector<8xf32> to vector<8x1xf32>
    %516 = tpu.reciprocal %515 {approx = true} : vector<8x1xf32> -> vector<8x1xf32>
    %517 = vector.broadcast %516 : vector<8x1xf32> to vector<8x8xf32>
    %518 = arith.mulf %513, %517 : vector<8x8xf32>
    %519 = arith.truncf %518 : vector<8x8xf32> to vector<8x8xbf16>
    %cst_147 = arith.constant dense<0.000000e+00> : vector<8x128xf32>
    %520 = tpu.matmul %519, %507, %cst_147 {dimension_numbers = #tpu.dot_dimension_numbers<[1], [0], [0], [1], [0, 0, 1, 1], [], []>} : vector<8x8xbf16>, vector<8x128xbf16>, vector<8x128xf32> -> vector<8x128xf32>
    %521 = vector.extract_strided_slice %444 {offsets = [0, 512], sizes = [8, 128], strides = [1, 1]} : vector<8x3072xf32> to vector<8x128xf32>
    %522 = arith.truncf %521 : vector<8x128xf32> to vector<8x128xbf16>
    %523 = vector.extract_strided_slice %444 {offsets = [0, 1536], sizes = [8, 128], strides = [1, 1]} : vector<8x3072xf32> to vector<8x128xf32>
    %524 = arith.truncf %523 : vector<8x128xf32> to vector<8x128xbf16>
    %525 = vector.extract_strided_slice %444 {offsets = [0, 2560], sizes = [8, 128], strides = [1, 1]} : vector<8x3072xf32> to vector<8x128xf32>
    %526 = arith.truncf %525 : vector<8x128xf32> to vector<8x128xbf16>
    %cst_148 = arith.constant dense<0.000000e+00> : vector<8x8xf32>
    %527 = tpu.matmul %522, %524, %cst_148 {dimension_numbers = #tpu.dot_dimension_numbers<[1], [1], [0], [0], [0, 0, 1, 0], [], []>} : vector<8x128xbf16>, vector<8x128xbf16>, vector<8x8xf32> -> vector<8x8xf32>
    %cst_149 = arith.constant dense<0xFF800000> : vector<8xf32>
    %528 = vector.multi_reduction <maximumf>, %527, %cst_149 [1] : vector<8x8xf32> to vector<8xf32>
    %529 = vector.shape_cast %528 : vector<8xf32> to vector<8x1xf32>
    %530 = vector.broadcast %529 : vector<8x1xf32> to vector<8x8xf32>
    %531 = arith.subf %527, %530 : vector<8x8xf32>
    %532 = math.exp %531 : vector<8x8xf32>
    %cst_150 = arith.constant dense<0.000000e+00> : vector<8xf32>
    %533 = vector.multi_reduction <add>, %532, %cst_150 [1] : vector<8x8xf32> to vector<8xf32>
    %534 = vector.shape_cast %533 : vector<8xf32> to vector<8x1xf32>
    %535 = tpu.reciprocal %534 {approx = true} : vector<8x1xf32> -> vector<8x1xf32>
    %536 = vector.broadcast %535 : vector<8x1xf32> to vector<8x8xf32>
    %537 = arith.mulf %532, %536 : vector<8x8xf32>
    %538 = arith.truncf %537 : vector<8x8xf32> to vector<8x8xbf16>
    %cst_151 = arith.constant dense<0.000000e+00> : vector<8x128xf32>
    %539 = tpu.matmul %538, %526, %cst_151 {dimension_numbers = #tpu.dot_dimension_numbers<[1], [0], [0], [1], [0, 0, 1, 1], [], []>} : vector<8x8xbf16>, vector<8x128xbf16>, vector<8x128xf32> -> vector<8x128xf32>
    %540 = vector.extract_strided_slice %444 {offsets = [0, 640], sizes = [8, 128], strides = [1, 1]} : vector<8x3072xf32> to vector<8x128xf32>
    %541 = arith.truncf %540 : vector<8x128xf32> to vector<8x128xbf16>
    %542 = vector.extract_strided_slice %444 {offsets = [0, 1664], sizes = [8, 128], strides = [1, 1]} : vector<8x3072xf32> to vector<8x128xf32>
    %543 = arith.truncf %542 : vector<8x128xf32> to vector<8x128xbf16>
    %544 = vector.extract_strided_slice %444 {offsets = [0, 2688], sizes = [8, 128], strides = [1, 1]} : vector<8x3072xf32> to vector<8x128xf32>
    %545 = arith.truncf %544 : vector<8x128xf32> to vector<8x128xbf16>
    %cst_152 = arith.constant dense<0.000000e+00> : vector<8x8xf32>
    %546 = tpu.matmul %541, %543, %cst_152 {dimension_numbers = #tpu.dot_dimension_numbers<[1], [1], [0], [0], [0, 0, 1, 0], [], []>} : vector<8x128xbf16>, vector<8x128xbf16>, vector<8x8xf32> -> vector<8x8xf32>
    %cst_153 = arith.constant dense<0xFF800000> : vector<8xf32>
    %547 = vector.multi_reduction <maximumf>, %546, %cst_153 [1] : vector<8x8xf32> to vector<8xf32>
    %548 = vector.shape_cast %547 : vector<8xf32> to vector<8x1xf32>
    %549 = vector.broadcast %548 : vector<8x1xf32> to vector<8x8xf32>
    %550 = arith.subf %546, %549 : vector<8x8xf32>
    %551 = math.exp %550 : vector<8x8xf32>
    %cst_154 = arith.constant dense<0.000000e+00> : vector<8xf32>
    %552 = vector.multi_reduction <add>, %551, %cst_154 [1] : vector<8x8xf32> to vector<8xf32>
    %553 = vector.shape_cast %552 : vector<8xf32> to vector<8x1xf32>
    %554 = tpu.reciprocal %553 {approx = true} : vector<8x1xf32> -> vector<8x1xf32>
    %555 = vector.broadcast %554 : vector<8x1xf32> to vector<8x8xf32>
    %556 = arith.mulf %551, %555 : vector<8x8xf32>
    %557 = arith.truncf %556 : vector<8x8xf32> to vector<8x8xbf16>
    %cst_155 = arith.constant dense<0.000000e+00> : vector<8x128xf32>
    %558 = tpu.matmul %557, %545, %cst_155 {dimension_numbers = #tpu.dot_dimension_numbers<[1], [0], [0], [1], [0, 0, 1, 1], [], []>} : vector<8x8xbf16>, vector<8x128xbf16>, vector<8x128xf32> -> vector<8x128xf32>
    %559 = vector.extract_strided_slice %444 {offsets = [0, 768], sizes = [8, 128], strides = [1, 1]} : vector<8x3072xf32> to vector<8x128xf32>
    %560 = arith.truncf %559 : vector<8x128xf32> to vector<8x128xbf16>
    %561 = vector.extract_strided_slice %444 {offsets = [0, 1792], sizes = [8, 128], strides = [1, 1]} : vector<8x3072xf32> to vector<8x128xf32>
    %562 = arith.truncf %561 : vector<8x128xf32> to vector<8x128xbf16>
    %563 = vector.extract_strided_slice %444 {offsets = [0, 2816], sizes = [8, 128], strides = [1, 1]} : vector<8x3072xf32> to vector<8x128xf32>
    %564 = arith.truncf %563 : vector<8x128xf32> to vector<8x128xbf16>
    %cst_156 = arith.constant dense<0.000000e+00> : vector<8x8xf32>
    %565 = tpu.matmul %560, %562, %cst_156 {dimension_numbers = #tpu.dot_dimension_numbers<[1], [1], [0], [0], [0, 0, 1, 0], [], []>} : vector<8x128xbf16>, vector<8x128xbf16>, vector<8x8xf32> -> vector<8x8xf32>
    %cst_157 = arith.constant dense<0xFF800000> : vector<8xf32>
    %566 = vector.multi_reduction <maximumf>, %565, %cst_157 [1] : vector<8x8xf32> to vector<8xf32>
    %567 = vector.shape_cast %566 : vector<8xf32> to vector<8x1xf32>
    %568 = vector.broadcast %567 : vector<8x1xf32> to vector<8x8xf32>
    %569 = arith.subf %565, %568 : vector<8x8xf32>
    %570 = math.exp %569 : vector<8x8xf32>
    %cst_158 = arith.constant dense<0.000000e+00> : vector<8xf32>
    %571 = vector.multi_reduction <add>, %570, %cst_158 [1] : vector<8x8xf32> to vector<8xf32>
    %572 = vector.shape_cast %571 : vector<8xf32> to vector<8x1xf32>
    %573 = tpu.reciprocal %572 {approx = true} : vector<8x1xf32> -> vector<8x1xf32>
    %574 = vector.broadcast %573 : vector<8x1xf32> to vector<8x8xf32>
    %575 = arith.mulf %570, %574 : vector<8x8xf32>
    %576 = arith.truncf %575 : vector<8x8xf32> to vector<8x8xbf16>
    %cst_159 = arith.constant dense<0.000000e+00> : vector<8x128xf32>
    %577 = tpu.matmul %576, %564, %cst_159 {dimension_numbers = #tpu.dot_dimension_numbers<[1], [0], [0], [1], [0, 0, 1, 1], [], []>} : vector<8x8xbf16>, vector<8x128xbf16>, vector<8x128xf32> -> vector<8x128xf32>
    %578 = vector.extract_strided_slice %444 {offsets = [0, 896], sizes = [8, 128], strides = [1, 1]} : vector<8x3072xf32> to vector<8x128xf32>
    %579 = arith.truncf %578 : vector<8x128xf32> to vector<8x128xbf16>
    %580 = vector.extract_strided_slice %444 {offsets = [0, 1920], sizes = [8, 128], strides = [1, 1]} : vector<8x3072xf32> to vector<8x128xf32>
    %581 = arith.truncf %580 : vector<8x128xf32> to vector<8x128xbf16>
    %582 = vector.extract_strided_slice %444 {offsets = [0, 2944], sizes = [8, 128], strides = [1, 1]} : vector<8x3072xf32> to vector<8x128xf32>
    %583 = arith.truncf %582 : vector<8x128xf32> to vector<8x128xbf16>
    %cst_160 = arith.constant dense<0.000000e+00> : vector<8x8xf32>
    %584 = tpu.matmul %579, %581, %cst_160 {dimension_numbers = #tpu.dot_dimension_numbers<[1], [1], [0], [0], [0, 0, 1, 0], [], []>} : vector<8x128xbf16>, vector<8x128xbf16>, vector<8x8xf32> -> vector<8x8xf32>
    %cst_161 = arith.constant dense<0xFF800000> : vector<8xf32>
    %585 = vector.multi_reduction <maximumf>, %584, %cst_161 [1] : vector<8x8xf32> to vector<8xf32>
    %586 = vector.shape_cast %585 : vector<8xf32> to vector<8x1xf32>
    %587 = vector.broadcast %586 : vector<8x1xf32> to vector<8x8xf32>
    %588 = arith.subf %584, %587 : vector<8x8xf32>
    %589 = math.exp %588 : vector<8x8xf32>
    %cst_162 = arith.constant dense<0.000000e+00> : vector<8xf32>
    %590 = vector.multi_reduction <add>, %589, %cst_162 [1] : vector<8x8xf32> to vector<8xf32>
    %591 = vector.shape_cast %590 : vector<8xf32> to vector<8x1xf32>
    %592 = tpu.reciprocal %591 {approx = true} : vector<8x1xf32> -> vector<8x1xf32>
    %593 = vector.broadcast %592 : vector<8x1xf32> to vector<8x8xf32>
    %594 = arith.mulf %589, %593 : vector<8x8xf32>
    %595 = arith.truncf %594 : vector<8x8xf32> to vector<8x8xbf16>
    %cst_163 = arith.constant dense<0.000000e+00> : vector<8x128xf32>
    %596 = tpu.matmul %595, %583, %cst_163 {dimension_numbers = #tpu.dot_dimension_numbers<[1], [0], [0], [1], [0, 0, 1, 1], [], []>} : vector<8x8xbf16>, vector<8x128xbf16>, vector<8x128xf32> -> vector<8x128xf32>
    %597 = tpu.concatenate %463, %482, %501, %520, %539, %558, %577, %596 in 1 : vector<8x128xf32>, vector<8x128xf32>, vector<8x128xf32>, vector<8x128xf32>, vector<8x128xf32>, vector<8x128xf32>, vector<8x128xf32>, vector<8x128xf32> -> vector<8x1024xf32>
    %598 = arith.truncf %597 : vector<8x1024xf32> to vector<8x1024xbf16>
    %c2_164 = arith.constant 2 : index
    %c0_165 = arith.constant 0 : index
    %c0_166 = arith.constant 0 : index
    %599 = vector.load %arg5[%c2_164, %c0_165, %c0_166] : memref<3x16x1024xbf16, #tpu.memory_space<vmem>>, vector<1x16x1024xbf16>
    %600 = vector.shape_cast %599 : vector<1x16x1024xbf16> to vector<16x1024xbf16>
    %cst_167 = arith.constant dense<0.000000e+00> : vector<8x16xf32>
    %601 = tpu.matmul %598, %600, %cst_167 {dimension_numbers = #tpu.dot_dimension_numbers<[1], [1], [0], [0], [0, 0, 1, 0], [], []>} : vector<8x1024xbf16>, vector<16x1024xbf16>, vector<8x16xf32> -> vector<8x16xf32>
    %602 = arith.addf %601, %418 : vector<8x16xf32>
    %c0_168 = arith.constant 0 : index
    %c0_169 = arith.constant 0 : index
    %c0_170 = arith.constant 0 : index
    %603 = vector.load %arg11[%c0_168, %c0_169, %c0_170] : memref<1x1x16xf32, #tpu.memory_space<vmem>>, vector<1x1x16xf32>
    %604 = vector.shape_cast %603 : vector<1x1x16xf32> to vector<1x16xf32>
    %cst_171 = arith.constant dense<0.000000e+00> : vector<8xf32>
    %605 = vector.multi_reduction <add>, %602, %cst_171 [1] : vector<8x16xf32> to vector<8xf32>
    %606 = vector.shape_cast %605 : vector<8xf32> to vector<8x1xf32>
    %cst_172 = arith.constant 1.600000e+01 : f32
    %607 = vector.broadcast %cst_172 : f32 to vector<8x1xf32>
    %608 = arith.divf %606, %607 : vector<8x1xf32>
    %609 = arith.mulf %602, %602 : vector<8x16xf32>
    %cst_173 = arith.constant dense<0.000000e+00> : vector<8xf32>
    %610 = vector.multi_reduction <add>, %609, %cst_173 [1] : vector<8x16xf32> to vector<8xf32>
    %611 = vector.shape_cast %610 : vector<8xf32> to vector<8x1xf32>
    %cst_174 = arith.constant 1.600000e+01 : f32
    %612 = vector.broadcast %cst_174 : f32 to vector<8x1xf32>
    %613 = arith.divf %611, %612 : vector<8x1xf32>
    %614 = arith.mulf %608, %608 : vector<8x1xf32>
    %615 = arith.subf %613, %614 : vector<8x1xf32>
    %616 = vector.broadcast %608 : vector<8x1xf32> to vector<8x16xf32>
    %617 = arith.subf %602, %616 : vector<8x16xf32>
    %cst_175 = arith.constant 9.99999974E-6 : f32
    %618 = vector.broadcast %cst_175 : f32 to vector<8x1xf32>
    %619 = arith.addf %615, %618 : vector<8x1xf32>
    %620 = math.rsqrt %619 : vector<8x1xf32>
    %621 = vector.broadcast %620 : vector<8x1xf32> to vector<8x16xf32>
    %622 = arith.mulf %617, %621 : vector<8x16xf32>
    %623 = vector.broadcast %604 : vector<1x16xf32> to vector<8x16xf32>
    %624 = arith.mulf %622, %623 : vector<8x16xf32>
    %c1_176 = arith.constant 1 : index
    %c0_177 = arith.constant 0 : index
    %c0_178 = arith.constant 0 : index
    %625 = vector.load %arg6[%c1_176, %c0_177, %c0_178] : memref<2x1x16xf32, #tpu.memory_space<vmem>>, vector<1x1x16xf32>
    %626 = vector.shape_cast %625 : vector<1x1x16xf32> to vector<1x16xf32>
    %cst_179 = arith.constant dense<0.000000e+00> : vector<8xf32>
    %627 = vector.multi_reduction <add>, %624, %cst_179 [1] : vector<8x16xf32> to vector<8xf32>
    %628 = vector.shape_cast %627 : vector<8xf32> to vector<8x1xf32>
    %cst_180 = arith.constant 1.600000e+01 : f32
    %629 = vector.broadcast %cst_180 : f32 to vector<8x1xf32>
    %630 = arith.divf %628, %629 : vector<8x1xf32>
    %631 = arith.mulf %624, %624 : vector<8x16xf32>
    %cst_181 = arith.constant dense<0.000000e+00> : vector<8xf32>
    %632 = vector.multi_reduction <add>, %631, %cst_181 [1] : vector<8x16xf32> to vector<8xf32>
    %633 = vector.shape_cast %632 : vector<8xf32> to vector<8x1xf32>
    %cst_182 = arith.constant 1.600000e+01 : f32
    %634 = vector.broadcast %cst_182 : f32 to vector<8x1xf32>
    %635 = arith.divf %633, %634 : vector<8x1xf32>
    %636 = arith.mulf %630, %630 : vector<8x1xf32>
    %637 = arith.subf %635, %636 : vector<8x1xf32>
    %638 = vector.broadcast %630 : vector<8x1xf32> to vector<8x16xf32>
    %639 = arith.subf %624, %638 : vector<8x16xf32>
    %cst_183 = arith.constant 9.99999974E-6 : f32
    %640 = vector.broadcast %cst_183 : f32 to vector<8x1xf32>
    %641 = arith.addf %637, %640 : vector<8x1xf32>
    %642 = math.rsqrt %641 : vector<8x1xf32>
    %643 = vector.broadcast %642 : vector<8x1xf32> to vector<8x16xf32>
    %644 = arith.mulf %639, %643 : vector<8x16xf32>
    %645 = vector.broadcast %626 : vector<1x16xf32> to vector<8x16xf32>
    %646 = arith.mulf %644, %645 : vector<8x16xf32>
    %647 = arith.truncf %646 : vector<8x16xf32> to vector<8x16xbf16>
    %c1_184 = arith.constant 1 : index
    %c0_185 = arith.constant 0 : index
    %c0_186 = arith.constant 0 : index
    %648 = vector.load %arg7[%c1_184, %c0_185, %c0_186] : memref<2x16x32xbf16, #tpu.memory_space<vmem>>, vector<1x16x32xbf16>
    %649 = vector.shape_cast %648 : vector<1x16x32xbf16> to vector<16x32xbf16>
    %cst_187 = arith.constant dense<0.000000e+00> : vector<8x32xf32>
    %650 = tpu.matmul %647, %649, %cst_187 {dimension_numbers = #tpu.dot_dimension_numbers<[1], [0], [0], [1], [0, 0, 1, 1], [], []>} : vector<8x16xbf16>, vector<16x32xbf16>, vector<8x32xf32> -> vector<8x32xf32>
    %c1_188 = arith.constant 1 : index
    %c0_189 = arith.constant 0 : index
    %c0_190 = arith.constant 0 : index
    %651 = vector.load %arg8[%c1_188, %c0_189, %c0_190] : memref<2x1x32xf32, #tpu.memory_space<vmem>>, vector<1x1x32xf32>
    %652 = vector.shape_cast %651 : vector<1x1x32xf32> to vector<1x32xf32>
    %653 = vector.broadcast %652 : vector<1x32xf32> to vector<8x32xf32>
    %654 = arith.addf %650, %653 : vector<8x32xf32>
    %cst_191 = arith.constant 5.000000e-01 : f32
    %655 = vector.broadcast %cst_191 : f32 to vector<8x32xf32>
    %656 = arith.mulf %655, %654 : vector<8x32xf32>
    %cst_192 = arith.constant 0.707106769 : f32
    %657 = vector.broadcast %cst_192 : f32 to vector<8x32xf32>
    %658 = arith.mulf %654, %657 : vector<8x32xf32>
    %659 = math.erf %658 : vector<8x32xf32>
    %cst_193 = arith.constant 1.000000e+00 : f32
    %660 = vector.broadcast %cst_193 : f32 to vector<8x32xf32>
    %661 = arith.addf %660, %659 : vector<8x32xf32>
    %662 = arith.mulf %656, %661 : vector<8x32xf32>
    %663 = arith.truncf %662 : vector<8x32xf32> to vector<8x32xbf16>
    %c1_194 = arith.constant 1 : index
    %c0_195 = arith.constant 0 : index
    %c0_196 = arith.constant 0 : index
    %664 = vector.load %arg9[%c1_194, %c0_195, %c0_196] : memref<2x32x16xbf16, #tpu.memory_space<vmem>>, vector<1x32x16xbf16>
    %665 = vector.shape_cast %664 : vector<1x32x16xbf16> to vector<32x16xbf16>
    %cst_197 = arith.constant dense<0.000000e+00> : vector<8x16xf32>
    %666 = tpu.matmul %663, %665, %cst_197 {dimension_numbers = #tpu.dot_dimension_numbers<[1], [0], [0], [1], [0, 0, 1, 1], [], []>} : vector<8x32xbf16>, vector<32x16xbf16>, vector<8x16xf32> -> vector<8x16xf32>
    %c1_198 = arith.constant 1 : index
    %c0_199 = arith.constant 0 : index
    %c0_200 = arith.constant 0 : index
    %667 = vector.load %arg10[%c1_198, %c0_199, %c0_200] : memref<2x1x16xf32, #tpu.memory_space<vmem>>, vector<1x1x16xf32>
    %668 = vector.shape_cast %667 : vector<1x1x16xf32> to vector<1x16xf32>
    %669 = vector.broadcast %668 : vector<1x16xf32> to vector<8x16xf32>
    %670 = arith.addf %666, %669 : vector<8x16xf32>
    %671 = arith.addf %670, %624 : vector<8x16xf32>
    %c0_201 = arith.constant 0 : index
    %c0_202 = arith.constant 0 : index
    %672 = vector.load %arg14[%c0_201, %c0_202] : memref<8x16xf32, #tpu.memory_space<vmem>>, vector<8x16xf32>
    tpu.vector_store %arg14[%c0_201, %c0_202], %671 {strides = array<i32>} : memref<8x16xf32, #tpu.memory_space<vmem>>, vector<8x16xf32>,
    %c4_i32 = arith.constant 4 : i32
    %673 = arith.cmpi eq, %arg1, %c4_i32 : i32
    %674 = arith.extui %673 : i1 to i32
    %c0_i32_203 = arith.constant 0 : i32
    %675 = arith.cmpi ne, %674, %c0_i32_203 : i32
    scf.if %675 {
      %c0_204 = arith.constant 0 : index
      %c0_205 = arith.constant 0 : index
      %676 = vector.load %arg12[%c0_204, %c0_205] : memref<1x16xf32, #tpu.memory_space<vmem>>, vector<1x16xf32>
      %cst_206 = arith.constant dense<0.000000e+00> : vector<8xf32>
      %677 = vector.multi_reduction <add>, %671, %cst_206 [1] : vector<8x16xf32> to vector<8xf32>
      %678 = vector.shape_cast %677 : vector<8xf32> to vector<8x1xf32>
      %cst_207 = arith.constant 1.600000e+01 : f32
      %679 = vector.broadcast %cst_207 : f32 to vector<8x1xf32>
      %680 = arith.divf %678, %679 : vector<8x1xf32>
      %681 = arith.mulf %671, %671 : vector<8x16xf32>
      %cst_208 = arith.constant dense<0.000000e+00> : vector<8xf32>
      %682 = vector.multi_reduction <add>, %681, %cst_208 [1] : vector<8x16xf32> to vector<8xf32>
      %683 = vector.shape_cast %682 : vector<8xf32> to vector<8x1xf32>
      %cst_209 = arith.constant 1.600000e+01 : f32
      %684 = vector.broadcast %cst_209 : f32 to vector<8x1xf32>
      %685 = arith.divf %683, %684 : vector<8x1xf32>
      %686 = arith.mulf %680, %680 : vector<8x1xf32>
      %687 = arith.subf %685, %686 : vector<8x1xf32>
      %688 = vector.broadcast %680 : vector<8x1xf32> to vector<8x16xf32>
      %689 = arith.subf %671, %688 : vector<8x16xf32>
      %cst_210 = arith.constant 9.99999974E-6 : f32
      %690 = vector.broadcast %cst_210 : f32 to vector<8x1xf32>
      %691 = arith.addf %687, %690 : vector<8x1xf32>
      %692 = math.rsqrt %691 : vector<8x1xf32>
      %693 = vector.broadcast %692 : vector<8x1xf32> to vector<8x16xf32>
      %694 = arith.mulf %689, %693 : vector<8x16xf32>
      %695 = vector.broadcast %676 : vector<1x16xf32> to vector<8x16xf32>
      %696 = arith.mulf %694, %695 : vector<8x16xf32>
      %c0_211 = arith.constant 0 : index
      %c0_212 = arith.constant 0 : index
      %c0_213 = arith.constant 0 : index
      %697 = vector.load %arg13[%c0_211, %c0_212, %c0_213] : memref<1x8x16xf32, #tpu.memory_space<vmem>>, vector<1x8x16xf32>
      %698 = vector.shape_cast %697 : vector<1x8x16xf32> to vector<8x16xf32>
      %699 = vector.shape_cast %696 : vector<8x16xf32> to vector<1x8x16xf32>
      tpu.vector_store %arg13[%c0_211, %c0_212, %c0_213], %699 {strides = array<i32>} : memref<1x8x16xf32, #tpu.memory_space<vmem>>, vector<1x8x16xf32>,
    } else {
    }
    return
  }
  func.func @transform_0(%arg0: i32, %arg1: i32) -> (i32, i32, i32) {
    %c0_i32 = arith.constant 0 : i32
    %c0_i32_0 = arith.constant 0 : i32
    %c0_i32_1 = arith.constant 0 : i32
    return %arg0, %c0_i32, %c0_i32_0 : i32, i32, i32
  }
  func.func @transform_1(%arg0: i32, %arg1: i32) -> (i32, i32, i32) {
    %c0_i32 = arith.constant 0 : i32
    %c0_i32_0 = arith.constant 0 : i32
    %c0_i32_1 = arith.constant 0 : i32
    return %arg1, %c0_i32, %c0_i32_0 : i32, i32, i32
  }
  func.func @transform_2(%arg0: i32, %arg1: i32) -> (i32, i32, i32) {
    %c0_i32 = arith.constant 0 : i32
    %c0_i32_0 = arith.constant 0 : i32
    %c0_i32_1 = arith.constant 0 : i32
    return %arg1, %c0_i32, %c0_i32_0 : i32, i32, i32
  }
  func.func @transform_3(%arg0: i32, %arg1: i32) -> (i32, i32, i32) {
    %c0_i32 = arith.constant 0 : i32
    %c0_i32_0 = arith.constant 0 : i32
    %c0_i32_1 = arith.constant 0 : i32
    return %arg1, %c0_i32, %c0_i32_0 : i32, i32, i32
  }
  func.func @transform_4(%arg0: i32, %arg1: i32) -> (i32, i32, i32) {
    %c0_i32 = arith.constant 0 : i32
    %c0_i32_0 = arith.constant 0 : i32
    %c0_i32_1 = arith.constant 0 : i32
    return %arg1, %c0_i32, %c0_i32_0 : i32, i32, i32
  }
  func.func @transform_5(%arg0: i32, %arg1: i32) -> (i32, i32, i32) {
    %c0_i32 = arith.constant 0 : i32
    %c0_i32_0 = arith.constant 0 : i32
    %c0_i32_1 = arith.constant 0 : i32
    return %arg1, %c0_i32, %c0_i32_0 : i32, i32, i32
  }
  func.func @transform_6(%arg0: i32, %arg1: i32) -> (i32, i32, i32) {
    %c0_i32 = arith.constant 0 : i32
    %c0_i32_0 = arith.constant 0 : i32
    %c0_i32_1 = arith.constant 0 : i32
    return %arg1, %c0_i32, %c0_i32_0 : i32, i32, i32
  }
  func.func @transform_7(%arg0: i32, %arg1: i32) -> (i32, i32, i32) {
    %c0_i32 = arith.constant 0 : i32
    %c0_i32_0 = arith.constant 0 : i32
    %c0_i32_1 = arith.constant 0 : i32
    return %arg1, %c0_i32, %c0_i32_0 : i32, i32, i32
  }
  func.func @transform_8(%arg0: i32, %arg1: i32) -> (i32, i32, i32) {
    %c0_i32 = arith.constant 0 : i32
    %c0_i32_0 = arith.constant 0 : i32
    %c0_i32_1 = arith.constant 0 : i32
    return %arg1, %c0_i32, %c0_i32_0 : i32, i32, i32
  }
  func.func @transform_9(%arg0: i32, %arg1: i32) -> (i32, i32, i32) {
    %c0_i32 = arith.constant 0 : i32
    %c0_i32_0 = arith.constant 0 : i32
    %c0_i32_1 = arith.constant 0 : i32
    return %arg1, %c0_i32, %c0_i32_0 : i32, i32, i32
  }
  func.func @transform_10(%arg0: i32, %arg1: i32) -> (i32, i32) {
    %c0_i32 = arith.constant 0 : i32
    %c0_i32_0 = arith.constant 0 : i32
    %c0_i32_1 = arith.constant 0 : i32
    return %c0_i32, %c0_i32_0 : i32, i32
  }
  func.func @transform_11(%arg0: i32, %arg1: i32) -> (i32, i32, i32) {
    %c0_i32 = arith.constant 0 : i32
    %c0_i32_0 = arith.constant 0 : i32
    %c0_i32_1 = arith.constant 0 : i32
    return %arg0, %c0_i32, %c0_i32_0 : i32, i32, i32
  }
}

</mosaic_0001>

<llo_original>
// kernel: transformer_forward.1
$region0: #{transformer_forward.1}
  #allocation0 [shape = 'u32[]', space=smem, size = 0x4, offset = 0x4, fixed_abs, tag = 'smem constant byte address 0x4 - core index']
  #allocation1 [shape = 'u32[144,128]{1,0:T(1,128)}', space=vmem, size = 0x12000, scoped, tag = 'internal scratch']
  #allocation2 [shape = 'f32[8,16]{1,0:T(8,128)}', space=vmem, size = 0x1000, scoped, tag = 'scratch operand']
  %s0 = inlined_call_operand.hbm [shape: f32[2,8,16], index: 0, kind: input, shape index: {}]
  %s1 = inlined_call_operand.hbm [shape: f32[15,1,16], index: 1, kind: input, shape index: {}]
  %s2 = inlined_call_operand.hbm [shape: bf16[15,16,3072], index: 2, kind: input, shape index: {}]
  %s3 = inlined_call_operand.hbm [shape: bf16[15,16,1024], index: 3, kind: input, shape index: {}]
  %s4 = inlined_call_operand.hbm [shape: f32[10,1,16], index: 4, kind: input, shape index: {}]
  %s5 = inlined_call_operand.hbm [shape: bf16[10,16,32], index: 5, kind: input, shape index: {}]
  %s6 = inlined_call_operand.hbm [shape: f32[10,1,32], index: 6, kind: input, shape index: {}]
  %s7 = inlined_call_operand.vmem [shape: bf16[10,32,16], index: 7, kind: input, shape index: {}]
  %s8 = inlined_call_operand.hbm [shape: f32[10,1,16], index: 8, kind: input, shape index: {}]
  %s9 = inlined_call_operand.hbm [shape: f32[5,1,16], index: 9, kind: input, shape index: {}]
  %s10 = inlined_call_operand.hbm [shape: f32[1,16], index: 10, kind: input, shape index: {}]
  %s11 = inlined_call_operand.hbm [shape: f32[2,8,16], index: 11, kind: output, shape index: {}]
  %s12 = sld [smem:[#allocation0]]
  $region125: #{transformer_forward.1} parent=0
    _
  %s14 = ssub.s32 1, %s12
  %s15 = scalar_select 0, %s14, %s12
  $region1: #{transformer_forward.1} parent=0
    #allocation3 [shape = 'u8[8192]{0}', space=vmem, size = 0x2000, scoped, tag = 'input window, operand 0']
    #allocation4 [shape = 's32[2]{0}', space=sflag, size = 0x8, scoped, tag = 'scoped memory for transformer_forward.1']
    #allocation5 [shape = 's32[2]{0}', space=sflag, size = 0x8, scoped, tag = 'scoped memory for transformer_forward.1']
    #allocation6 [shape = 'u8[3072]{0}', space=vmem, size = 0xc00, scoped, tag = 'input window, operand 1']
    #allocation7 [shape = 's32[2]{0}', space=sflag, size = 0x8, scoped, tag = 'scoped memory for transformer_forward.1']
    #allocation8 [shape = 'u8[589824]{0}', space=vmem, size = 0x90000, scoped, tag = 'input window, operand 2']
    #allocation9 [shape = 'u8[196608]{0}', space=vmem, size = 0x30000, scoped, tag = 'input window, operand 3']
    #allocation10 [shape = 's32[2]{0}', space=sflag, size = 0x8, scoped, tag = 'scoped memory for transformer_forward.1']
    #allocation11 [shape = 'u8[2048]{0}', space=vmem, size = 0x800, scoped, tag = 'input window, operand 4']
    #allocation12 [shape = 'u8[16384]{0}', space=vmem, size = 0x4000, scoped, tag = 'input window, operand 5']
    #allocation13 [shape = 's32[2]{0}', space=sflag, size = 0x8, scoped, tag = 'scoped memory for transformer_forward.1']
    #allocation14 [shape = 'u8[2048]{0}', space=vmem, size = 0x800, scoped, tag = 'input window, operand 6']
    #allocation15 [shape = 'u8[2048]{0}', space=vmem, size = 0x800, scoped, tag = 'input window, operand 8']
    #allocation16 [shape = 's32[2]{0}', space=sflag, size = 0x8, scoped, tag = 'scoped memory for transformer_forward.1']
    #allocation17 [shape = 'u8[1024]{0}', space=vmem, size = 0x400, scoped, tag = 'input window, operand 9']
    #allocation18 [shape = 'u8[512]{0}', space=vmem, size = 0x400, scoped, tag = 'input window, operand 10, single buffered']
    #allocation19 [shape = 's32[1]{0}', space=sflag, size = 0x4, scoped, tag = 'scoped memory for transformer_forward.1']
    #allocation20 [shape = 'u8[8192]{0}', space=vmem, size = 0x2000, scoped, tag = 'output window, operand 0']
    %16 = vsyncpa [#allocation4], 0
    %s17 = scalar_lea.sflag [#allocation4], 1
    %18 = vsyncpa %s17, 0
    %19 = vsyncpa [#allocation7], 0
    %s20 = scalar_lea.sflag [#allocation7], 1
    %21 = vsyncpa %s20, 0
    %22 = vsyncpa [#allocation10], 0
    %s23 = scalar_lea.sflag [#allocation10], 1
    %24 = vsyncpa %s23, 0
    %25 = vsyncpa [#allocation13], 0
    %s26 = scalar_lea.sflag [#allocation13], 1
    %27 = vsyncpa %s26, 0
    %28 = vsyncpa [#allocation16], 0
    %s29 = scalar_lea.sflag [#allocation16], 1
    %30 = vsyncpa %s29, 0
    %31 = vsyncpa [#allocation19], 0
    %32 = vsyncpa [#allocation5], 0
    %s33 = scalar_lea.sflag [#allocation5], 1
    %34 = vsyncpa %s33, 0
    loop: start=0, step=1, limit=12
    $region2: #{transformer_forward.1} parent=1 // loop_pre_header
      _
    $region3: #{transformer_forward.1} parent=1 // loop_header
      %s36 = sphi 0, %s40
      %p37 = scmp.ge.s32.totalorder %s36, 12
      %s43 = sphi 0, %s55
      %s44 = sphi 0, %s51
      %s45 = sphi 0, %s43
      %s46 = sphi 0, %s44
      %s47 = sphi 0, %s45
      %s48 = sphi 0, %s46
      %s58 = sphi 0, %s60
      %s61 = sphi 0, %s58
      %s62 = sphi 0, %s61
      %s78 = sphi 0, %s62
      %s84 = sphi 0, %s86
      %s87 = sphi 0, %s84
      %s88 = sphi 0, %s87
      %s104 = sphi 0, %s88
      %s110 = sphi 0, %s112
      %s113 = sphi 0, %s110
      %s114 = sphi 0, %s113
      %s130 = sphi 0, %s114
      %s136 = sphi 0, %s138
      %s139 = sphi 0, %s136
      %s140 = sphi 0, %s139
      %s156 = sphi 0, %s140
      %s162 = sphi 0, %s164
      %s165 = sphi 0, %s162
      %s166 = sphi 0, %s165
      %s182 = sphi 0, %s166
      %s188 = sphi 0, %s190
      %s191 = sphi 0, %s188
      %s192 = sphi 0, %s191
      %s208 = sphi 0, %s192
      %s214 = sphi 0, %s216
      %s217 = sphi 0, %s214
      %s218 = sphi 0, %s217
      %s234 = sphi 0, %s218
      %s240 = sphi 0, %s242
      %s243 = sphi 0, %s240
      %s244 = sphi 0, %s243
      %s260 = sphi 0, %s244
      %s266 = sphi 0, %s268
      %s269 = sphi 0, %s266
      %s270 = sphi 0, %s269
      %s286 = sphi 0, %s270
      %s292 = sphi 0, %s294
      %s295 = sphi 0, %s292
      %s296 = sphi 0, %s295
      %s312 = sphi 0, %s296
      %s316 = sphi 0, %s316
      %s318 = sphi 0, %s316
      %s319 = sphi 0, %s318
      %s333 = sphi 0, %s319
      %s339 = sphi 0, %s341
      %s342 = sphi 0, %s339
      %s343 = sphi 0, %s342
      %s359 = sphi 0, %s343
    $region4: #{transformer_forward.1} parent=1 // loop_header_branch
      %39 = sbr.rel (%p37) target = $region8
    $region5: #{transformer_forward.1} parent=1 // loop_body
      %s41 = ssub.s32 %s36, 1
      %s42 = ssub.s32 %s36, 2
      %s49 = sadd.s32 1, %s44
      %p50 = scmp.ge.s32.totalorder %s49, 5
      %s51 = scalar_select %p50, 0, %s49
      %s52 = sadd.s32 1, %s43
      %s53 = scalar_select %p50, %s52, %s43
      %p54 = scmp.ge.s32.totalorder %s53, 2
      %s55 = scalar_select %p54, 0, %s53
      %s56 = ssub.s32 %s43, %s55
      %p57 = scmp.eq.s32.totalorder %s56, 0
      %s59 = sadd.s32 %s58, 1
      %s60 = scalar_select %p57, %s58, %s59
      %p63 = pneg %p57
      %p64 = scmp.eq.s32.totalorder %s36, 9
      %p65 = por %p63, %p64
      %p66 = scmp.ne.s32.totalorder %s58, %s61
      %p67 = scmp.eq.s32.totalorder %s36, 0
      %p68 = por %p66, %p67
      %p69 = scmp.ne.s32.totalorder %s58, %s61
      %p70 = scmp.eq.s32.totalorder %s41, 9
      %p71 = por %p69, %p70
      %p72 = scmp.ne.s32.totalorder %s61, %s62
      %p73 = scmp.eq.s32.totalorder %s41, 0
      %p74 = por %p72, %p73
      %p75 = scmp.ne.s32.totalorder %s61, %s62
      %p76 = scmp.eq.s32.totalorder %s42, 9
      %p77 = por %p75, %p76
      %p79 = scmp.ne.s32.totalorder %s62, %s78
      %p80 = scmp.eq.s32.totalorder %s42, 0
      %p81 = por %p79, %p80
      %s82 = ssub.s32 %s44, %s51
      %p83 = scmp.eq.s32.totalorder %s82, 0
      %s85 = sadd.s32 %s84, 1
      %s86 = scalar_select %p83, %s84, %s85
      %p89 = pneg %p83
      %p90 = scmp.eq.s32.totalorder %s36, 9
      %p91 = por %p89, %p90
      %p92 = scmp.ne.s32.totalorder %s84, %s87
      %p93 = scmp.eq.s32.totalorder %s36, 0
      %p94 = por %p92, %p93
      %p95 = scmp.ne.s32.totalorder %s84, %s87
      %p96 = scmp.eq.s32.totalorder %s41, 9
      %p97 = por %p95, %p96
      %p98 = scmp.ne.s32.totalorder %s87, %s88
      %p99 = scmp.eq.s32.totalorder %s41, 0
      %p100 = por %p98, %p99
      %p101 = scmp.ne.s32.totalorder %s87, %s88
      %p102 = scmp.eq.s32.totalorder %s42, 9
      %p103 = por %p101, %p102
      %p105 = scmp.ne.s32.totalorder %s88, %s104
      %p106 = scmp.eq.s32.totalorder %s42, 0
      %p107 = por %p105, %p106
      %s108 = ssub.s32 %s44, %s51
      %p109 = scmp.eq.s32.totalorder %s108, 0
      %s111 = sadd.s32 %s110, 1
      %s112 = scalar_select %p109, %s110, %s111
      %p115 = pneg %p109
      %p116 = scmp.eq.s32.totalorder %s36, 9
      %p117 = por %p115, %p116
      %p118 = scmp.ne.s32.totalorder %s110, %s113
      %p119 = scmp.eq.s32.totalorder %s36, 0
      %p120 = por %p118, %p119
      %p121 = scmp.ne.s32.totalorder %s110, %s113
      %p122 = scmp.eq.s32.totalorder %s41, 9
      %p123 = por %p121, %p122
      %p124 = scmp.ne.s32.totalorder %s113, %s114
      %p125 = scmp.eq.s32.totalorder %s41, 0
      %p126 = por %p124, %p125
      %p127 = scmp.ne.s32.totalorder %s113, %s114
      %p128 = scmp.eq.s32.totalorder %s42, 9
      %p129 = por %p127, %p128
      %p131 = scmp.ne.s32.totalorder %s114, %s130
      %p132 = scmp.eq.s32.totalorder %s42, 0
      %p133 = por %p131, %p132
      %s134 = ssub.s32 %s44, %s51
      %p135 = scmp.eq.s32.totalorder %s134, 0
      %s137 = sadd.s32 %s136, 1
      %s138 = scalar_select %p135, %s136, %s137
      %p141 = pneg %p135
      %p142 = scmp.eq.s32.totalorder %s36, 9
      %p143 = por %p141, %p142
      %p144 = scmp.ne.s32.totalorder %s136, %s139
      %p145 = scmp.eq.s32.totalorder %s36, 0
      %p146 = por %p144, %p145
      %p147 = scmp.ne.s32.totalorder %s136, %s139
      %p148 = scmp.eq.s32.totalorder %s41, 9
      %p149 = por %p147, %p148
      %p150 = scmp.ne.s32.totalorder %s139, %s140
      %p151 = scmp.eq.s32.totalorder %s41, 0
      %p152 = por %p150, %p151
      %p153 = scmp.ne.s32.totalorder %s139, %s140
      %p154 = scmp.eq.s32.totalorder %s42, 9
      %p155 = por %p153, %p154
      %p157 = scmp.ne.s32.totalorder %s140, %s156
      %p158 = scmp.eq.s32.totalorder %s42, 0
      %p159 = por %p157, %p158
      %s160 = ssub.s32 %s44, %s51
      %p161 = scmp.eq.s32.totalorder %s160, 0
      %s163 = sadd.s32 %s162, 1
      %s164 = scalar_select %p161, %s162, %s163
      %p167 = pneg %p161
      %p168 = scmp.eq.s32.totalorder %s36, 9
      %p169 = por %p167, %p168
      %p170 = scmp.ne.s32.totalorder %s162, %s165
      %p171 = scmp.eq.s32.totalorder %s36, 0
      %p172 = por %p170, %p171
      %p173 = scmp.ne.s32.totalorder %s162, %s165
      %p174 = scmp.eq.s32.totalorder %s41, 9
      %p175 = por %p173, %p174
      %p176 = scmp.ne.s32.totalorder %s165, %s166
      %p177 = scmp.eq.s32.totalorder %s41, 0
      %p178 = por %p176, %p177
      %p179 = scmp.ne.s32.totalorder %s165, %s166
      %p180 = scmp.eq.s32.totalorder %s42, 9
      %p181 = por %p179, %p180
      %p183 = scmp.ne.s32.totalorder %s166, %s182
      %p184 = scmp.eq.s32.totalorder %s42, 0
      %p185 = por %p183, %p184
      %s186 = ssub.s32 %s44, %s51
      %p187 = scmp.eq.s32.totalorder %s186, 0
      %s189 = sadd.s32 %s188, 1
      %s190 = scalar_select %p187, %s188, %s189
      %p193 = pneg %p187
      %p194 = scmp.eq.s32.totalorder %s36, 9
      %p195 = por %p193, %p194
      %p196 = scmp.ne.s32.totalorder %s188, %s191
      %p197 = scmp.eq.s32.totalorder %s36, 0
      %p198 = por %p196, %p197
      %p199 = scmp.ne.s32.totalorder %s188, %s191
      %p200 = scmp.eq.s32.totalorder %s41, 9
      %p201 = por %p199, %p200
      %p202 = scmp.ne.s32.totalorder %s191, %s192
      %p203 = scmp.eq.s32.totalorder %s41, 0
      %p204 = por %p202, %p203
      %p205 = scmp.ne.s32.totalorder %s191, %s192
      %p206 = scmp.eq.s32.totalorder %s42, 9
      %p207 = por %p205, %p206
      %p209 = scmp.ne.s32.totalorder %s192, %s208
      %p210 = scmp.eq.s32.totalorder %s42, 0
      %p211 = por %p209, %p210
      %s212 = ssub.s32 %s44, %s51
      %p213 = scmp.eq.s32.totalorder %s212, 0
      %s215 = sadd.s32 %s214, 1
      %s216 = scalar_select %p213, %s214, %s215
      %p219 = pneg %p213
      %p220 = scmp.eq.s32.totalorder %s36, 9
      %p221 = por %p219, %p220
      %p222 = scmp.ne.s32.totalorder %s214, %s217
      %p223 = scmp.eq.s32.totalorder %s36, 0
      %p224 = por %p222, %p223
      %p225 = scmp.ne.s32.totalorder %s214, %s217
      %p226 = scmp.eq.s32.totalorder %s41, 9
      %p227 = por %p225, %p226
      %p228 = scmp.ne.s32.totalorder %s217, %s218
      %p229 = scmp.eq.s32.totalorder %s41, 0
      %p230 = por %p228, %p229
      %p231 = scmp.ne.s32.totalorder %s217, %s218
      %p232 = scmp.eq.s32.totalorder %s42, 9
      %p233 = por %p231, %p232
      %p235 = scmp.ne.s32.totalorder %s218, %s234
      %p236 = scmp.eq.s32.totalorder %s42, 0
      %p237 = por %p235, %p236
      %s238 = ssub.s32 %s44, %s51
      %p239 = scmp.eq.s32.totalorder %s238, 0
      %s241 = sadd.s32 %s240, 1
      %s242 = scalar_select %p239, %s240, %s241
      %p245 = pneg %p239
      %p246 = scmp.eq.s32.totalorder %s36, 9
      %p247 = por %p245, %p246
      %p248 = scmp.ne.s32.totalorder %s240, %s243
      %p249 = scmp.eq.s32.totalorder %s36, 0
      %p250 = por %p248, %p249
      %p251 = scmp.ne.s32.totalorder %s240, %s243
      %p252 = scmp.eq.s32.totalorder %s41, 9
      %p253 = por %p251, %p252
      %p254 = scmp.ne.s32.totalorder %s243, %s244
      %p255 = scmp.eq.s32.totalorder %s41, 0
      %p256 = por %p254, %p255
      %p257 = scmp.ne.s32.totalorder %s243, %s244
      %p258 = scmp.eq.s32.totalorder %s42, 9
      %p259 = por %p257, %p258
      %p261 = scmp.ne.s32.totalorder %s244, %s260
      %p262 = scmp.eq.s32.totalorder %s42, 0
      %p263 = por %p261, %p262
      %s264 = ssub.s32 %s44, %s51
      %p265 = scmp.eq.s32.totalorder %s264, 0
      %s267 = sadd.s32 %s266, 1
      %s268 = scalar_select %p265, %s266, %s267
      %p271 = pneg %p265
      %p272 = scmp.eq.s32.totalorder %s36, 9
      %p273 = por %p271, %p272
      %p274 = scmp.ne.s32.totalorder %s266, %s269
      %p275 = scmp.eq.s32.totalorder %s36, 0
      %p276 = por %p274, %p275
      %p277 = scmp.ne.s32.totalorder %s266, %s269
      %p278 = scmp.eq.s32.totalorder %s41, 9
      %p279 = por %p277, %p278
      %p280 = scmp.ne.s32.totalorder %s269, %s270
      %p281 = scmp.eq.s32.totalorder %s41, 0
      %p282 = por %p280, %p281
      %p283 = scmp.ne.s32.totalorder %s269, %s270
      %p284 = scmp.eq.s32.totalorder %s42, 9
      %p285 = por %p283, %p284
      %p287 = scmp.ne.s32.totalorder %s270, %s286
      %p288 = scmp.eq.s32.totalorder %s42, 0
      %p289 = por %p287, %p288
      %s290 = ssub.s32 %s44, %s51
      %p291 = scmp.eq.s32.totalorder %s290, 0
      %s293 = sadd.s32 %s292, 1
      %s294 = scalar_select %p291, %s292, %s293
      %p297 = pneg %p291
      %p298 = scmp.eq.s32.totalorder %s36, 9
      %p299 = por %p297, %p298
      %p300 = scmp.ne.s32.totalorder %s292, %s295
      %p301 = scmp.eq.s32.totalorder %s36, 0
      %p302 = por %p300, %p301
      %p303 = scmp.ne.s32.totalorder %s292, %s295
      %p304 = scmp.eq.s32.totalorder %s41, 9
      %p305 = por %p303, %p304
      %p306 = scmp.ne.s32.totalorder %s295, %s296
      %p307 = scmp.eq.s32.totalorder %s41, 0
      %p308 = por %p306, %p307
      %p309 = scmp.ne.s32.totalorder %s295, %s296
      %p310 = scmp.eq.s32.totalorder %s42, 9
      %p311 = por %p309, %p310
      %p313 = scmp.ne.s32.totalorder %s296, %s312
      %p314 = scmp.eq.s32.totalorder %s42, 0
      %p315 = por %p313, %p314
      %s317 = sadd.s32 %s316, 1
      %p320 = scmp.eq.s32.totalorder %s36, 9
      %p321 = scmp.ne.s32.totalorder %s316, %s318
      %p322 = scmp.eq.s32.totalorder %s36, 0
      %p323 = por %p321, %p322
      %p324 = scmp.ne.s32.totalorder %s316, %s318
      %p325 = scmp.eq.s32.totalorder %s41, 9
      %p326 = por %p324, %p325
      %p327 = scmp.ne.s32.totalorder %s318, %s319
      %p328 = scmp.eq.s32.totalorder %s41, 0
      %p329 = por %p327, %p328
      %p330 = scmp.ne.s32.totalorder %s318, %s319
      %p331 = scmp.eq.s32.totalorder %s42, 9
      %p332 = por %p330, %p331
      %p334 = scmp.ne.s32.totalorder %s319, %s333
      %p335 = scmp.eq.s32.totalorder %s42, 0
      %p336 = por %p334, %p335
      %s337 = ssub.s32 %s43, %s55
      %p338 = scmp.eq.s32.totalorder %s337, 0
      %s340 = sadd.s32 %s339, 1
      %s341 = scalar_select %p338, %s339, %s340
      %p344 = pneg %p338
      %p345 = scmp.eq.s32.totalorder %s36, 9
      %p346 = por %p344, %p345
      %p347 = scmp.ne.s32.totalorder %s339, %s342
      %p348 = scmp.eq.s32.totalorder %s36, 0
      %p349 = por %p347, %p348
      %p350 = scmp.ne.s32.totalorder %s339, %s342
      %p351 = scmp.eq.s32.totalorder %s41, 9
      %p352 = por %p350, %p351
      %p353 = scmp.ne.s32.totalorder %s342, %s343
      %p354 = scmp.eq.s32.totalorder %s41, 0
      %p355 = por %p353, %p354
      %p356 = scmp.ne.s32.totalorder %s342, %s343
      %p357 = scmp.eq.s32.totalorder %s42, 9
      %p358 = por %p356, %p357
      %p360 = scmp.ne.s32.totalorder %s343, %s359
      %p361 = scmp.eq.s32.totalorder %s42, 0
      %p362 = por %p360, %p361
      %p363 = scmp.le.s32.totalorder 1, %s36
      %p364 = scmp.lt.s32.totalorder %s36, 11
      %p365 = pnand %p363, %p364
      %p366 = pneg %p365
      // Predicated region
      $region9: #{transformer_forward.1} parent=5 // pred_check
        _
      $region10: #{transformer_forward.1} parent=5 // pred_check_branch
        %368 = sbr.rel (%p365) target = $region12
      $region11: #{transformer_forward.1} parent=5 // pred_region
        %s369 = ssub.s32 %s36, 1
        // Predicated region
        $region13: #{transformer_forward.1} parent=11 // pred_check
          %p370 = pneg %p329
        $region14: #{transformer_forward.1} parent=11 // pred_check_branch
          %372 = sbr.rel (%p370) target = $region16
        $region15: #{transformer_forward.1} parent=11 // pred_region
          %s374 = ssub.s32 16, 16
          %375 = vsyncadd [#allocation19], %s374
          %s377 = sshll.u32 [#allocation18], 4
          %s378 = int_to_ptr.vmem [resolvable:$true] %s377
          %380 = dma.hbm_to_vmem [thread:$0]  %s10, 16, %s378, [#allocation19]
        $region16: #{transformer_forward.1} parent=11 // pred_fallthru
          _
      $region12: #{transformer_forward.1} parent=5 // pred_fallthru
        _
      %p381 = scmp.lt.s32.totalorder %s36, 10
      // Predicated region
      $region17: #{transformer_forward.1} parent=5 // pred_check
        %p382 = pneg %p381
      $region18: #{transformer_forward.1} parent=5 // pred_check_branch
        %384 = sbr.rel (%p382) target = $region20
      $region19: #{transformer_forward.1} parent=5 // pred_region
        // Predicated region
        $region21: #{transformer_forward.1} parent=19 // pred_check
          %p385 = pneg %p68
        $region22: #{transformer_forward.1} parent=19 // pred_check_branch
          %387 = sbr.rel (%p385) target = $region24
        $region23: #{transformer_forward.1} parent=19 // pred_region
          %s388 = sand.u32 %s58, 1
          %s389 = scalar_lea.sflag [#allocation4], %s388
          %s390 = sand.u32 %s58, 1
          %s391 = smul.addr %s390, 8
          %s392 = scalar_lea.vmem [#allocation3], %s391
          %s394 = ssub.s32 128, 128
          %395 = vsyncadd %s389, %s394
          %s396 = smul.addr %s43, 128
          %s397 = scalar_lea.hbm %s0, %s396
          %s399 = sshll.u32 %s392, 4
          %s400 = int_to_ptr.vmem [resolvable:$true] %s399
          %402 = dma.hbm_to_vmem [thread:$0]  %s397, 128, %s400, %s389
        $region24: #{transformer_forward.1} parent=19 // pred_fallthru
          _
        // Predicated region
        $region25: #{transformer_forward.1} parent=19 // pred_check
          %p403 = pneg %p94
        $region26: #{transformer_forward.1} parent=19 // pred_check_branch
          %405 = sbr.rel (%p403) target = $region28
        $region27: #{transformer_forward.1} parent=19 // pred_region
          %s406 = sand.u32 %s36, 1
          %s407 = scalar_lea.sflag [#allocation7], %s406
          %s408 = sand.u32 %s84, 1
          %s409 = smul.addr %s408, 3
          %s410 = scalar_lea.vmem [#allocation6], %s409
          %s411 = smul.u32 3, %s44
          %s413 = ssub.s32 48, 48
          %414 = vsyncadd %s407, %s413
          %s415 = smul.addr %s411, 16
          %s416 = scalar_lea.hbm %s1, %s415
          %s417 = sshll.u32 %s410, 4
          %s418 = int_to_ptr.vmem [resolvable:$true] %s417
          %423 = dma.hbm_to_vmem [thread:$0]  %s416, 48, %s418, %s407, 16, 16, 1
        $region28: #{transformer_forward.1} parent=19 // pred_fallthru
          _
        // Predicated region
        $region29: #{transformer_forward.1} parent=19 // pred_check
          %p424 = pneg %p120
        $region30: #{transformer_forward.1} parent=19 // pred_check_branch
          %426 = sbr.rel (%p424) target = $region32
        $region31: #{transformer_forward.1} parent=19 // pred_region
          %s427 = sand.u32 %s36, 1
          %s428 = scalar_lea.sflag [#allocation7], %s427
          %s429 = sand.u32 %s110, 1
          %s430 = smul.addr %s429, 576
          %s431 = scalar_lea.vmem [#allocation8], %s430
          %s432 = smul.u32 3, %s44
          %s434 = ssub.s32 9216, 9216
          %435 = vsyncadd %s428, %s434
          %s436 = smul.addr %s432, 48
          %s437 = smul.addr %s436, 64
          %s438 = scalar_lea.hbm %s2, %s437
          %s439 = sshll.u32 %s431, 4
          %s440 = int_to_ptr.vmem [resolvable:$true] %s439
          %445 = dma.hbm_to_vmem [thread:$0]  %s438, 9216, %s440, %s428, 1536, 1536, 96
        $region32: #{transformer_forward.1} parent=19 // pred_fallthru
          _
        // Predicated region
        $region33: #{transformer_forward.1} parent=19 // pred_check
          %p446 = pneg %p146
        $region34: #{transformer_forward.1} parent=19 // pred_check_branch
          %448 = sbr.rel (%p446) target = $region36
        $region35: #{transformer_forward.1} parent=19 // pred_region
          %s449 = sand.u32 %s36, 1
          %s450 = scalar_lea.sflag [#allocation10], %s449
          %s451 = sand.u32 %s136, 1
          %s452 = smul.addr %s451, 192
          %s453 = scalar_lea.vmem [#allocation9], %s452
          %s454 = smul.u32 3, %s44
          %s456 = ssub.s32 3072, 3072
          %457 = vsyncadd %s450, %s456
          %s458 = smul.addr %s454, 16
          %s459 = smul.addr %s458, 64
          %s460 = scalar_lea.hbm %s3, %s459
          %s461 = sshll.u32 %s453, 4
          %s462 = int_to_ptr.vmem [resolvable:$true] %s461
          %467 = dma.hbm_to_vmem [thread:$0]  %s460, 3072, %s462, %s450, 512, 512, 32
        $region36: #{transformer_forward.1} parent=19 // pred_fallthru
          _
        // Predicated region
        $region37: #{transformer_forward.1} parent=19 // pred_check
          %p468 = pneg %p172
        $region38: #{transformer_forward.1} parent=19 // pred_check_branch
          %470 = sbr.rel (%p468) target = $region40
        $region39: #{transformer_forward.1} parent=19 // pred_region
          %s471 = sand.u32 %s36, 1
          %s472 = scalar_lea.sflag [#allocation10], %s471
          %s473 = sand.u32 %s162, 1
          %s474 = smul.addr %s473, 2
          %s475 = scalar_lea.vmem [#allocation11], %s474
          %s476 = smul.u32 2, %s44
          %s478 = ssub.s32 32, 32
          %479 = vsyncadd %s472, %s478
          %s480 = smul.addr %s476, 16
          %s481 = scalar_lea.hbm %s4, %s480
          %s482 = sshll.u32 %s475, 4
          %s483 = int_to_ptr.vmem [resolvable:$true] %s482
          %488 = dma.hbm_to_vmem [thread:$0]  %s481, 32, %s483, %s472, 16, 16, 1
        $region40: #{transformer_forward.1} parent=19 // pred_fallthru
          _
        // Predicated region
        $region41: #{transformer_forward.1} parent=19 // pred_check
          %p489 = pneg %p198
        $region42: #{transformer_forward.1} parent=19 // pred_check_branch
          %491 = sbr.rel (%p489) target = $region44
        $region43: #{transformer_forward.1} parent=19 // pred_region
          %s492 = sand.u32 %s36, 1
          %s493 = scalar_lea.sflag [#allocation13], %s492
          %s494 = sand.u32 %s188, 1
          %s495 = smul.addr %s494, 16
          %s496 = scalar_lea.vmem [#allocation12], %s495
          %s497 = smul.u32 2, %s44
          %s499 = ssub.s32 256, 256
          %500 = vsyncadd %s493, %s499
          %s501 = smul.addr %s497, 2
          %s502 = smul.addr %s501, 64
          %s503 = scalar_lea.hbm %s5, %s502
          %s504 = sshll.u32 %s496, 4
          %s505 = int_to_ptr.vmem [resolvable:$true] %s504
          %510 = dma.hbm_to_vmem [thread:$0]  %s503, 256, %s505, %s493, 64, 64, 4
        $region44: #{transformer_forward.1} parent=19 // pred_fallthru
          _
        // Predicated region
        $region45: #{transformer_forward.1} parent=19 // pred_check
          %p511 = pneg %p224
        $region46: #{transformer_forward.1} parent=19 // pred_check_branch
          %513 = sbr.rel (%p511) target = $region48
        $region47: #{transformer_forward.1} parent=19 // pred_region
          %s514 = sand.u32 %s36, 1
          %s515 = scalar_lea.sflag [#allocation13], %s514
          %s516 = sand.u32 %s214, 1
          %s517 = smul.addr %s516, 2
          %s518 = scalar_lea.vmem [#allocation14], %s517
          %s519 = smul.u32 2, %s44
          %s521 = ssub.s32 32, 32
          %522 = vsyncadd %s515, %s521
          %s523 = smul.addr %s519, 16
          %s524 = scalar_lea.hbm %s6, %s523
          %s525 = sshll.u32 %s518, 4
          %s526 = int_to_ptr.vmem [resolvable:$true] %s525
          %531 = dma.hbm_to_vmem [thread:$0]  %s524, 32, %s526, %s515, 16, 16, 1
        $region48: #{transformer_forward.1} parent=19 // pred_fallthru
          _
        // Predicated region
        $region49: #{transformer_forward.1} parent=19 // pred_check
          %p532 = pneg %p250
        $region50: #{transformer_forward.1} parent=19 // pred_check_branch
          %534 = sbr.rel (%p532) target = $region52
        $region51: #{transformer_forward.1} parent=19 // pred_region
          %s535 = smul.u32 2, %s44
          %p536 = scmp.lt.s32.totalorder %s535, 9
          %s537 = scalar_select %p536, %s535, 9
          %s538 = smul.addr %s537, 4
          %s539 = smul.addr %s538, 4
          %s540 = scalar_lea.vmem %s7, %s539
          %s541 = smul.u32 2, %s44
        $region52: #{transformer_forward.1} parent=19 // pred_fallthru
          _
        // Predicated region
        $region53: #{transformer_forward.1} parent=19 // pred_check
          %p542 = pneg %p276
        $region54: #{transformer_forward.1} parent=19 // pred_check_branch
          %544 = sbr.rel (%p542) target = $region56
        $region55: #{transformer_forward.1} parent=19 // pred_region
          %s545 = sand.u32 %s36, 1
          %s546 = scalar_lea.sflag [#allocation16], %s545
          %s547 = sand.u32 %s266, 1
          %s548 = smul.addr %s547, 2
          %s549 = scalar_lea.vmem [#allocation15], %s548
          %s550 = smul.u32 2, %s44
          %s552 = ssub.s32 32, 32
          %553 = vsyncadd %s546, %s552
          %s554 = smul.addr %s550, 16
          %s555 = scalar_lea.hbm %s8, %s554
          %s556 = sshll.u32 %s549, 4
          %s557 = int_to_ptr.vmem [resolvable:$true] %s556
          %562 = dma.hbm_to_vmem [thread:$0]  %s555, 32, %s557, %s546, 16, 16, 1
        $region56: #{transformer_forward.1} parent=19 // pred_fallthru
          _
        // Predicated region
        $region57: #{transformer_forward.1} parent=19 // pred_check
          %p563 = pneg %p302
        $region58: #{transformer_forward.1} parent=19 // pred_check_branch
          %565 = sbr.rel (%p563) target = $region60
        $region59: #{transformer_forward.1} parent=19 // pred_region
          %s566 = sand.u32 %s36, 1
          %s567 = scalar_lea.sflag [#allocation16], %s566
          %s568 = sand.u32 %s292, 1
          %s569 = scalar_lea.vmem [#allocation17], %s568
          %s571 = ssub.s32 16, 16
          %572 = vsyncadd %s567, %s571
          %s573 = smul.addr %s44, 16
          %s574 = scalar_lea.hbm %s9, %s573
          %s576 = sshll.u32 %s569, 4
          %s577 = int_to_ptr.vmem [resolvable:$true] %s576
          %579 = dma.hbm_to_vmem [thread:$0]  %s574, 16, %s577, %s567
        $region60: #{transformer_forward.1} parent=19 // pred_fallthru
          _
      $region20: #{transformer_forward.1} parent=5 // pred_fallthru
        _
      %p580 = scmp.le.s32.totalorder 1, %s36
      %p581 = scmp.lt.s32.totalorder %s36, 11
      %p582 = pnand %p580, %p581
      %p583 = pneg %p582
      // Predicated region
      $region61: #{transformer_forward.1} parent=5 // pred_check
        _
      $region62: #{transformer_forward.1} parent=5 // pred_check_branch
        %585 = sbr.rel (%p582) target = $region64
      $region63: #{transformer_forward.1} parent=5 // pred_region
        %s586 = ssub.s32 %s36, 1
        %s587 = sand.u32 %s61, 1
        %s588 = scalar_lea.sflag [#allocation4], %s587
        %s589 = sand.u32 %s61, 1
        %s590 = smul.addr %s589, 8
        %s591 = scalar_lea.vmem [#allocation3], %s590
        // Predicated region
        $region65: #{transformer_forward.1} parent=63 // pred_check
          %p592 = pneg %p74
        $region66: #{transformer_forward.1} parent=63 // pred_check_branch
          %594 = sbr.rel (%p592) target = $region68
        $region67: #{transformer_forward.1} parent=63 // pred_region
          %595 = dma.done %s588, 128
        $region68: #{transformer_forward.1} parent=63 // pred_fallthru
          _
        %s596 = sand.u32 %s41, 1
        %s597 = scalar_lea.sflag [#allocation7], %s596
        %s598 = sand.u32 %s87, 1
        %s599 = smul.addr %s598, 3
        %s600 = scalar_lea.vmem [#allocation6], %s599
        // Predicated region
        $region69: #{transformer_forward.1} parent=63 // pred_check
          %p601 = pneg %p100
        $region70: #{transformer_forward.1} parent=63 // pred_check_branch
          %603 = sbr.rel (%p601) target = $region72
        $region71: #{transformer_forward.1} parent=63 // pred_region
          %604 = dma.done %s597, 48
        $region72: #{transformer_forward.1} parent=63 // pred_fallthru
          _
        %s605 = sand.u32 %s41, 1
        %s606 = scalar_lea.sflag [#allocation7], %s605
        %s607 = sand.u32 %s113, 1
        %s608 = smul.addr %s607, 576
        %s609 = scalar_lea.vmem [#allocation8], %s608
        // Predicated region
        $region73: #{transformer_forward.1} parent=63 // pred_check
          %p610 = pneg %p126
        $region74: #{transformer_forward.1} parent=63 // pred_check_branch
          %612 = sbr.rel (%p610) target = $region76
        $region75: #{transformer_forward.1} parent=63 // pred_region
          %613 = dma.done %s606, 9216
        $region76: #{transformer_forward.1} parent=63 // pred_fallthru
          _
        %s614 = sand.u32 %s41, 1
        %s615 = scalar_lea.sflag [#allocation10], %s614
        %s616 = sand.u32 %s139, 1
        %s617 = smul.addr %s616, 192
        %s618 = scalar_lea.vmem [#allocation9], %s617
        // Predicated region
        $region77: #{transformer_forward.1} parent=63 // pred_check
          %p619 = pneg %p152
        $region78: #{transformer_forward.1} parent=63 // pred_check_branch
          %621 = sbr.rel (%p619) target = $region80
        $region79: #{transformer_forward.1} parent=63 // pred_region
          %622 = dma.done %s615, 3072
        $region80: #{transformer_forward.1} parent=63 // pred_fallthru
          _
        %s623 = sand.u32 %s41, 1
        %s624 = scalar_lea.sflag [#allocation10], %s623
        %s625 = sand.u32 %s165, 1
        %s626 = smul.addr %s625, 2
        %s627 = scalar_lea.vmem [#allocation11], %s626
        // Predicated region
        $region81: #{transformer_forward.1} parent=63 // pred_check
          %p628 = pneg %p178
        $region82: #{transformer_forward.1} parent=63 // pred_check_branch
          %630 = sbr.rel (%p628) target = $region84
        $region83: #{transformer_forward.1} parent=63 // pred_region
          %631 = dma.done %s624, 32
        $region84: #{transformer_forward.1} parent=63 // pred_fallthru
          _
        %s632 = sand.u32 %s41, 1
        %s633 = scalar_lea.sflag [#allocation13], %s632
        %s634 = sand.u32 %s191, 1
        %s635 = smul.addr %s634, 16
        %s636 = scalar_lea.vmem [#allocation12], %s635
        // Predicated region
        $region85: #{transformer_forward.1} parent=63 // pred_check
          %p637 = pneg %p204
        $region86: #{transformer_forward.1} parent=63 // pred_check_branch
          %639 = sbr.rel (%p637) target = $region88
        $region87: #{transformer_forward.1} parent=63 // pred_region
          %640 = dma.done %s633, 256
        $region88: #{transformer_forward.1} parent=63 // pred_fallthru
          _
        %s641 = sand.u32 %s41, 1
        %s642 = scalar_lea.sflag [#allocation13], %s641
        %s643 = sand.u32 %s217, 1
        %s644 = smul.addr %s643, 2
        %s645 = scalar_lea.vmem [#allocation14], %s644
        // Predicated region
        $region89: #{transformer_forward.1} parent=63 // pred_check
          %p646 = pneg %p230
        $region90: #{transformer_forward.1} parent=63 // pred_check_branch
          %648 = sbr.rel (%p646) target = $region92
        $region91: #{transformer_forward.1} parent=63 // pred_region
          %649 = dma.done %s642, 32
        $region92: #{transformer_forward.1} parent=63 // pred_fallthru
          _
        %s650 = sand.u32 %s41, 1
        %s651 = scalar_lea.sflag [#allocation16], %s650
        %s652 = sand.u32 %s269, 1
        %s653 = smul.addr %s652, 2
        %s654 = scalar_lea.vmem [#allocation15], %s653
        // Predicated region
        $region93: #{transformer_forward.1} parent=63 // pred_check
          %p655 = pneg %p282
        $region94: #{transformer_forward.1} parent=63 // pred_check_branch
          %657 = sbr.rel (%p655) target = $region96
        $region95: #{transformer_forward.1} parent=63 // pred_region
          %658 = dma.done %s651, 32
        $region96: #{transformer_forward.1} parent=63 // pred_fallthru
          _
        %s659 = sand.u32 %s41, 1
        %s660 = scalar_lea.sflag [#allocation16], %s659
        %s661 = sand.u32 %s295, 1
        %s662 = scalar_lea.vmem [#allocation17], %s661
        // Predicated region
        $region97: #{transformer_forward.1} parent=63 // pred_check
          %p663 = pneg %p308
        $region98: #{transformer_forward.1} parent=63 // pred_check_branch
          %665 = sbr.rel (%p663) target = $region100
        $region99: #{transformer_forward.1} parent=63 // pred_region
          %666 = dma.done %s660, 16
        $region100: #{transformer_forward.1} parent=63 // pred_fallthru
          _
        // Predicated region
        $region101: #{transformer_forward.1} parent=63 // pred_check
          %p667 = pneg %p329
        $region102: #{transformer_forward.1} parent=63 // pred_check_branch
          %669 = sbr.rel (%p667) target = $region104
        $region103: #{transformer_forward.1} parent=63 // pred_region
          %670 = dma.done [#allocation19], 16
        $region104: #{transformer_forward.1} parent=63 // pred_fallthru
          _
        %s671 = sand.u32 %s61, 1
        %s672 = scalar_lea.sflag [#allocation4], %s671
        %s673 = sand.u32 %s61, 1
        %s674 = smul.addr %s673, 8
        %s675 = scalar_lea.vmem [#allocation3], %s674
        %p676 = pneg %p74
        %p677 = pneg %p71
        %s678 = sand.u32 %s41, 1
        %s679 = scalar_lea.sflag [#allocation7], %s678
        %s680 = sand.u32 %s87, 1
        %s681 = smul.addr %s680, 3
        %s682 = scalar_lea.vmem [#allocation6], %s681
        %p683 = pneg %p100
        %p684 = pneg %p97
        %s685 = sand.u32 %s41, 1
        %s686 = scalar_lea.sflag [#allocation7], %s685
        %s687 = sand.u32 %s113, 1
        %s688 = smul.addr %s687, 576
        %s689 = scalar_lea.vmem [#allocation8], %s688
        %p690 = pneg %p126
        %p691 = pneg %p123
        %s692 = sand.u32 %s41, 1
        %s693 = scalar_lea.sflag [#allocation10], %s692
        %s694 = sand.u32 %s139, 1
        %s695 = smul.addr %s694, 192
        %s696 = scalar_lea.vmem [#allocation9], %s695
        %p697 = pneg %p152
        %p698 = pneg %p149
        %s699 = sand.u32 %s41, 1
        %s700 = scalar_lea.sflag [#allocation10], %s699
        %s701 = sand.u32 %s165, 1
        %s702 = smul.addr %s701, 2
        %s703 = scalar_lea.vmem [#allocation11], %s702
        %p704 = pneg %p178
        %p705 = pneg %p175
        %s706 = sand.u32 %s41, 1
        %s707 = scalar_lea.sflag [#allocation13], %s706
        %s708 = sand.u32 %s191, 1
        %s709 = smul.addr %s708, 16
        %s710 = scalar_lea.vmem [#allocation12], %s709
        %p711 = pneg %p204
        %p712 = pneg %p201
        %s713 = sand.u32 %s41, 1
        %s714 = scalar_lea.sflag [#allocation13], %s713
        %s715 = sand.u32 %s217, 1
        %s716 = smul.addr %s715, 2
        %s717 = scalar_lea.vmem [#allocation14], %s716
        %p718 = pneg %p230
        %p719 = pneg %p227
        %s720 = smul.u32 2, %s46
        %p721 = scmp.lt.s32.totalorder %s720, 9
        %s722 = scalar_select %p721, %s720, 9
        %s723 = smul.addr %s722, 4
        %s724 = smul.addr %s723, 4
        %s725 = scalar_lea.vmem %s7, %s724
        %p726 = pneg %p256
        %p727 = pneg %p253
        %s728 = sand.u32 %s41, 1
        %s729 = scalar_lea.sflag [#allocation16], %s728
        %s730 = sand.u32 %s269, 1
        %s731 = smul.addr %s730, 2
        %s732 = scalar_lea.vmem [#allocation15], %s731
        %p733 = pneg %p282
        %p734 = pneg %p279
        %s735 = sand.u32 %s41, 1
        %s736 = scalar_lea.sflag [#allocation16], %s735
        %s737 = sand.u32 %s295, 1
        %s738 = scalar_lea.vmem [#allocation17], %s737
        %p739 = pneg %p308
        %p740 = pneg %p305
        %p741 = pneg %p329
        %p742 = pneg %p326
        %p743 = pneg %p355
        %p744 = pneg %p352
        %s745 = sand.u32 %s342, 1
        %s746 = scalar_lea.sflag [#allocation5], %s745
        %s747 = sand.u32 %s342, 1
        %s748 = smul.addr %s747, 8
        %s749 = scalar_lea.vmem [#allocation20], %s748
        %s750 = smul.u32 3, %s46
        %s751 = smul.u32 3, %s46
        %s752 = smul.u32 3, %s46
        %s753 = smul.u32 2, %s46
        %s754 = smul.u32 2, %s46
        %s755 = smul.u32 2, %s46
        %s756 = smul.u32 2, %s46
        %p757 = scmp.lt.s32.totalorder %s756, 9
        %s758 = scalar_select %p757, %s756, 9
        %s759 = smul.addr %s758, 4
        %s760 = smul.addr %s759, 4
        %s761 = scalar_lea.vmem %s7, %s760
        %s762 = smul.u32 2, %s46
        %s763 = smul.u32 2, %s46
        %p765 = scmp.eq.s32.totalorder %s46, 0
        // Predicated region
        $region105: #{transformer_forward.1} parent=63 // pred_check
          %p766 = pneg %p765
        $region106: #{transformer_forward.1} parent=63 // pred_check_branch
          %768 = sbr.rel (%p766) target = $region108
        $region107: #{transformer_forward.1} parent=63 // pred_region
          %v769 = vld [vmem:[%s591] sm:$0xff]
          %vm770 = vcmask 130048
          %771 = vst.msk [vmem:[#allocation2] sm:$0xff] %vm770, %v769
        $region108: #{transformer_forward.1} parent=63 // pred_fallthru
          _
        %v772 = vld [vmem:[#allocation2] sm:$0xff]
        %v773 = vld [vmem:[%s600] sm:$0x1]
        %vm774 = vcmask 130048
        %v775 = vsel %vm774, %v772, 0.0
        %776 = vadd.xlane.f32.xlu0 %v775
        %v777 = vpop.xlane.xlu0 %776
        %v778 = vrcp.pop 16.0
        %v779 = vmul.f32 %v777, %v778
        %v780 = vmul.f32 %v772, %v772
        %v781 = vsel %vm774, %v780, 0.0
        %782 = vadd.xlane.f32.xlu0 %v781
        %v783 = vpop.xlane.xlu0 %782
        %v784 = vmul.f32 %v783, %v778
        %v785 = vmul.f32 %v779, %v779
        %v786 = vsub.f32 %v784, %v785
        %v787 = vsub.f32 %v772, %v779
        %v788 = vadd.f32 %v786, 1e-05
        %v789 = vrsqrt.pop %v788
        %v790 = vmul.f32 %v787, %v789
        %v792 = vlaneseq
        %v793 = vshrl.u32 %v792, 7
        %v794 = vsub.s32 0, %v793
        %v795 = vrot.slane %v773, %v794
        %v797 = vmul.f32 %v790, %v795
        %v798 = vpack.c.bf16 %v797, %v797
        %v799 = vld [vmem:[%s609] sm:$0xff]
        %v800 = vld [vmem:[%s609 + $0x8] sm:$0xff]
        %v801 = vld [vmem:[%s609 + $0x10] sm:$0xff]
        %v802 = vld [vmem:[%s609 + $0x18] sm:$0xff]
        %v803 = vld [vmem:[%s609 + $0x20] sm:$0xff]
        %v804 = vld [vmem:[%s609 + $0x28] sm:$0xff]
        %v805 = vld [vmem:[%s609 + $0x30] sm:$0xff]
        %v806 = vld [vmem:[%s609 + $0x38] sm:$0xff]
        %v807 = vld [vmem:[%s609 + $0x40] sm:$0xff]
        %v808 = vld [vmem:[%s609 + $0x48] sm:$0xff]
        %v809 = vld [vmem:[%s609 + $0x50] sm:$0xff]
        %v810 = vld [vmem:[%s609 + $0x58] sm:$0xff]
        %v811 = vld [vmem:[%s609 + $0x60] sm:$0xff]
        %v812 = vld [vmem:[%s609 + $0x68] sm:$0xff]
        %v813 = vld [vmem:[%s609 + $0x70] sm:$0xff]
        %v814 = vld [vmem:[%s609 + $0x78] sm:$0xff]
        %v815 = vld [vmem:[%s609 + $0x80] sm:$0xff]
        %v816 = vld [vmem:[%s609 + $0x88] sm:$0xff]
        %v817 = vld [vmem:[%s609 + $0x90] sm:$0xff]
        %v818 = vld [vmem:[%s609 + $0x98] sm:$0xff]
        %v819 = vld [vmem:[%s609 + $0xa0] sm:$0xff]
        %v820 = vld [vmem:[%s609 + $0xa8] sm:$0xff]
        %v821 = vld [vmem:[%s609 + $0xb0] sm:$0xff]
        %v822 = vld [vmem:[%s609 + $0xb8] sm:$0xff]
        %v847 = vunpack.c.l.b16 %v799
        %v848 = vunpack.c.h.b16 %v799
        %v849 = vunpack.c.l.b16 %v800
        %v850 = vunpack.c.h.b16 %v800
        %v851 = vunpack.c.l.b16 %v801
        %v852 = vunpack.c.h.b16 %v801
        %v853 = vunpack.c.l.b16 %v802
        %v854 = vunpack.c.h.b16 %v802
        %v855 = vunpack.c.l.b16 %v803
        %v856 = vunpack.c.h.b16 %v803
        %v857 = vunpack.c.l.b16 %v804
        %v858 = vunpack.c.h.b16 %v804
        %v859 = vunpack.c.l.b16 %v805
        %v860 = vunpack.c.h.b16 %v805
        %v861 = vunpack.c.l.b16 %v806
        %v862 = vunpack.c.h.b16 %v806
        %v863 = vunpack.c.l.b16 %v807
        %v864 = vunpack.c.h.b16 %v807
        %v865 = vunpack.c.l.b16 %v808
        %v866 = vunpack.c.h.b16 %v808
        %v867 = vunpack.c.l.b16 %v809
        %v868 = vunpack.c.h.b16 %v809
        %v869 = vunpack.c.l.b16 %v810
        %v870 = vunpack.c.h.b16 %v810
        %v871 = vunpack.c.l.b16 %v811
        %v872 = vunpack.c.h.b16 %v811
        %v873 = vunpack.c.l.b16 %v812
        %v874 = vunpack.c.h.b16 %v812
        %v875 = vunpack.c.l.b16 %v813
        %v876 = vunpack.c.h.b16 %v813
        %v877 = vunpack.c.l.b16 %v814
        %v878 = vunpack.c.h.b16 %v814
        %v879 = vunpack.c.l.b16 %v815
        %v880 = vunpack.c.h.b16 %v815
        %v881 = vunpack.c.l.b16 %v816
        %v882 = vunpack.c.h.b16 %v816
        %v883 = vunpack.c.l.b16 %v817
        %v884 = vunpack.c.h.b16 %v817
        %v885 = vunpack.c.l.b16 %v818
        %v886 = vunpack.c.h.b16 %v818
        %v887 = vunpack.c.l.b16 %v819
        %v888 = vunpack.c.h.b16 %v819
        %v889 = vunpack.c.l.b16 %v820
        %v890 = vunpack.c.h.b16 %v820
        %v891 = vunpack.c.l.b16 %v821
        %v892 = vunpack.c.h.b16 %v821
        %v893 = vunpack.c.l.b16 %v822
        %v894 = vunpack.c.h.b16 %v822
        %v895 = vpack.c.b16 %v871, %v847
        %v896 = vpack.c.b16 %v872, %v848
        %v897 = vpack.c.b16 %v873, %v849
        %v898 = vpack.c.b16 %v874, %v850
        %v899 = vpack.c.b16 %v875, %v851
        %v900 = vpack.c.b16 %v876, %v852
        %v901 = vpack.c.b16 %v877, %v853
        %v902 = vpack.c.b16 %v878, %v854
        %v903 = vpack.c.b16 %v879, %v855
        %v904 = vpack.c.b16 %v880, %v856
        %v905 = vpack.c.b16 %v881, %v857
        %v906 = vpack.c.b16 %v882, %v858
        %v907 = vpack.c.b16 %v883, %v859
        %v908 = vpack.c.b16 %v884, %v860
        %v909 = vpack.c.b16 %v885, %v861
        %v910 = vpack.c.b16 %v886, %v862
        %v911 = vpack.c.b16 %v887, %v863
        %v912 = vpack.c.b16 %v888, %v864
        %v913 = vpack.c.b16 %v889, %v865
        %v914 = vpack.c.b16 %v890, %v866
        %v915 = vpack.c.b16 %v891, %v867
        %v916 = vpack.c.b16 %v892, %v868
        %v917 = vpack.c.b16 %v893, %v869
        %v918 = vpack.c.b16 %v894, %v870
        %v944 = vsel %vm774, %v798, 0
        %946 = vmatprep.subr.bf16.mxu0 %v896
        %947 = vmatpush1.bf16.msra.mxu0 %v895
        %948 = vmatprep.subr.bf16.mxu0 0
        %949 = vmatpush1.bf16.msra.mxu0 0
        %950 = vmatprep.subr.bf16.mxu0 0
        %951 = vmatpush1.bf16.msra.mxu0 0
        %952 = vmatprep.subr.bf16.mxu0 0
        %953 = vmatpush1.bf16.msra.mxu0 0
        %954 = vmatprep.subr.bf16.mxu0 0
        %955 = vmatpush1.bf16.msra.mxu0 0
        %956 = vmatprep.subr.bf16.mxu0 0
        %957 = vmatpush1.bf16.msra.mxu0 0
        %958 = vmatprep.subr.bf16.mxu0 0
        %959 = vmatpush1.bf16.msra.mxu0 0
        %960 = vmatprep.subr.bf16.mxu0 0
        %961 = vmatpush1.bf16.msra.mxu0 0
        %962 = vmatprep.subr.bf16.mxu0 0
        %963 = vmatpush1.bf16.msra.mxu0 0
        %964 = vmatprep.subr.bf16.mxu0 0
        %965 = vmatpush1.bf16.msra.mxu0 0
        %966 = vmatprep.subr.bf16.mxu0 0
        %967 = vmatpush1.bf16.msra.mxu0 0
        %968 = vmatprep.subr.bf16.mxu0 0
        %969 = vmatpush1.bf16.msra.mxu0 0
        %970 = vmatprep.subr.bf16.mxu0 0
        %971 = vmatpush1.bf16.msra.mxu0 0
        %972 = vmatprep.subr.bf16.mxu0 0
        %973 = vmatpush1.bf16.msra.mxu0 0
        %974 = vmatprep.subr.bf16.mxu0 0
        %975 = vmatpush1.bf16.msra.mxu0 0
        %976 = vmatprep.subr.bf16.mxu0 0
        %977 = vmatpush1.bf16.msra.mxu0 0
        %978 = vmatprep.mubr.bf16.mxu0 0
        %979 = vmatmul.mubr.bf16.gmra.mrb[0].mxu0 %v944
        %v980 = vpop.f32.mrb[0].mxu0
        %v981 = vadd.f32 0.0, %v980
        %v982 = vpop.f32.mrb[0].mxu0
        %v983 = vadd.f32 0.0, %v982
        %v984 = vpop.f32.mrb[0].mxu0
        %v985 = vpop.f32.mrb[0].mxu0
        %986 = vdwg.mxu0
        %987 = vmatprep.subr.bf16.mxu0 %v898
        %988 = vmatpush1.bf16.msra.mxu0 %v897
        %989 = vmatprep.subr.bf16.mxu0 0
        %990 = vmatpush1.bf16.msra.mxu0 0
        %991 = vmatprep.subr.bf16.mxu0 0
        %992 = vmatpush1.bf16.msra.mxu0 0
        %993 = vmatprep.subr.bf16.mxu0 0
        %994 = vmatpush1.bf16.msra.mxu0 0
        %995 = vmatprep.subr.bf16.mxu0 0
        %996 = vmatpush1.bf16.msra.mxu0 0
        %997 = vmatprep.subr.bf16.mxu0 0
        %998 = vmatpush1.bf16.msra.mxu0 0
        %999 = vmatprep.subr.bf16.mxu0 0
        %1000 = vmatpush1.bf16.msra.mxu0 0
        %1001 = vmatprep.subr.bf16.mxu0 0
        %1002 = vmatpush1.bf16.msra.mxu0 0
        %1003 = vmatprep.subr.bf16.mxu0 0
        %1004 = vmatpush1.bf16.msra.mxu0 0
        %1005 = vmatprep.subr.bf16.mxu0 0
        %1006 = vmatpush1.bf16.msra.mxu0 0
        %1007 = vmatprep.subr.bf16.mxu0 0
        %1008 = vmatpush1.bf16.msra.mxu0 0
        %1009 = vmatprep.subr.bf16.mxu0 0
        %1010 = vmatpush1.bf16.msra.mxu0 0
        %1011 = vmatprep.subr.bf16.mxu0 0
        %1012 = vmatpush1.bf16.msra.mxu0 0
        %1013 = vmatprep.subr.bf16.mxu0 0
        %1014 = vmatpush1.bf16.msra.mxu0 0
        %1015 = vmatprep.subr.bf16.mxu0 0
        %1016 = vmatpush1.bf16.msra.mxu0 0
        %1017 = vmatprep.subr.bf16.mxu0 0
        %1018 = vmatpush1.bf16.msra.mxu0 0
        %1019 = vmatprep.mubr.bf16.mxu0 0
        %1020 = vmatmul.mubr.bf16.gmra.mrb[0].mxu0 %v944
        %v1021 = vpop.f32.mrb[0].mxu0
        %v1022 = vadd.f32 0.0, %v1021
        %v1023 = vpop.f32.mrb[0].mxu0
        %v1024 = vadd.f32 0.0, %v1023
        %v1025 = vpop.f32.mrb[0].mxu0
        %v1026 = vpop.f32.mrb[0].mxu0
        %1027 = vdwg.mxu0
        %1028 = vmatprep.subr.bf16.mxu0 %v900
        %1029 = vmatpush1.bf16.msra.mxu0 %v899
        %1030 = vmatprep.subr.bf16.mxu0 0
        %1031 = vmatpush1.bf16.msra.mxu0 0
        %1032 = vmatprep.subr.bf16.mxu0 0
        %1033 = vmatpush1.bf16.msra.mxu0 0
        %1034 = vmatprep.subr.bf16.mxu0 0
        %1035 = vmatpush1.bf16.msra.mxu0 0
        %1036 = vmatprep.subr.bf16.mxu0 0
        %1037 = vmatpush1.bf16.msra.mxu0 0
        %1038 = vmatprep.subr.bf16.mxu0 0
        %1039 = vmatpush1.bf16.msra.mxu0 0
        %1040 = vmatprep.subr.bf16.mxu0 0
        %1041 = vmatpush1.bf16.msra.mxu0 0
        %1042 = vmatprep.subr.bf16.mxu0 0
        %1043 = vmatpush1.bf16.msra.mxu0 0
        %1044 = vmatprep.subr.bf16.mxu0 0
        %1045 = vmatpush1.bf16.msra.mxu0 0
        %1046 = vmatprep.subr.bf16.mxu0 0
        %1047 = vmatpush1.bf16.msra.mxu0 0
        %1048 = vmatprep.subr.bf16.mxu0 0
        %1049 = vmatpush1.bf16.msra.mxu0 0
        %1050 = vmatprep.subr.bf16.mxu0 0
        %1051 = vmatpush1.bf16.msra.mxu0 0
        %1052 = vmatprep.subr.bf16.mxu0 0
        %1053 = vmatpush1.bf16.msra.mxu0 0
        %1054 = vmatprep.subr.bf16.mxu0 0
        %1055 = vmatpush1.bf16.msra.mxu0 0
        %1056 = vmatprep.subr.bf16.mxu0 0
        %1057 = vmatpush1.bf16.msra.mxu0 0
        %1058 = vmatprep.subr.bf16.mxu0 0
        %1059 = vmatpush1.bf16.msra.mxu0 0
        %1060 = vmatprep.mubr.bf16.mxu0 0
        %1061 = vmatmul.mubr.bf16.gmra.mrb[0].mxu0 %v944
        %v1062 = vpop.f32.mrb[0].mxu0
        %v1063 = vadd.f32 0.0, %v1062
        %v1064 = vpop.f32.mrb[0].mxu0
        %v1065 = vadd.f32 0.0, %v1064
        %v1066 = vpop.f32.mrb[0].mxu0
        %v1067 = vpop.f32.mrb[0].mxu0
        %1068 = vdwg.mxu0
        %1069 = vmatprep.subr.bf16.mxu0 %v902
        %1070 = vmatpush1.bf16.msra.mxu0 %v901
        %1071 = vmatprep.subr.bf16.mxu0 0
        %1072 = vmatpush1.bf16.msra.mxu0 0
        %1073 = vmatprep.subr.bf16.mxu0 0
        %1074 = vmatpush1.bf16.msra.mxu0 0
        %1075 = vmatprep.subr.bf16.mxu0 0
        %1076 = vmatpush1.bf16.msra.mxu0 0
        %1077 = vmatprep.subr.bf16.mxu0 0
        %1078 = vmatpush1.bf16.msra.mxu0 0
        %1079 = vmatprep.subr.bf16.mxu0 0
        %1080 = vmatpush1.bf16.msra.mxu0 0
        %1081 = vmatprep.subr.bf16.mxu0 0
        %1082 = vmatpush1.bf16.msra.mxu0 0
        %1083 = vmatprep.subr.bf16.mxu0 0
        %1084 = vmatpush1.bf16.msra.mxu0 0
        %1085 = vmatprep.subr.bf16.mxu0 0
        %1086 = vmatpush1.bf16.msra.mxu0 0
        %1087 = vmatprep.subr.bf16.mxu0 0
        %1088 = vmatpush1.bf16.msra.mxu0 0
        %1089 = vmatprep.subr.bf16.mxu0 0
        %1090 = vmatpush1.bf16.msra.mxu0 0
        %1091 = vmatprep.subr.bf16.mxu0 0
        %1092 = vmatpush1.bf16.msra.mxu0 0
        %1093 = vmatprep.subr.bf16.mxu0 0
        %1094 = vmatpush1.bf16.msra.mxu0 0
        %1095 = vmatprep.subr.bf16.mxu0 0
        %1096 = vmatpush1.bf16.msra.mxu0 0
        %1097 = vmatprep.subr.bf16.mxu0 0
        %1098 = vmatpush1.bf16.msra.mxu0 0
        %1099 = vmatprep.subr.bf16.mxu0 0
        %1100 = vmatpush1.bf16.msra.mxu0 0
        %1101 = vmatprep.mubr.bf16.mxu0 0
        %1102 = vmatmul.mubr.bf16.gmra.mrb[0].mxu0 %v944
        %v1103 = vpop.f32.mrb[0].mxu0
        %v1104 = vadd.f32 0.0, %v1103
        %v1105 = vpop.f32.mrb[0].mxu0
        %v1106 = vadd.f32 0.0, %v1105
        %v1107 = vpop.f32.mrb[0].mxu0
        %v1108 = vpop.f32.mrb[0].mxu0
        %1109 = vdwg.mxu0
        %1110 = vmatprep.subr.bf16.mxu0 %v904
        %1111 = vmatpush1.bf16.msra.mxu0 %v903
        %1112 = vmatprep.subr.bf16.mxu0 0
        %1113 = vmatpush1.bf16.msra.mxu0 0
        %1114 = vmatprep.subr.bf16.mxu0 0
        %1115 = vmatpush1.bf16.msra.mxu0 0
        %1116 = vmatprep.subr.bf16.mxu0 0
        %1117 = vmatpush1.bf16.msra.mxu0 0
        %1118 = vmatprep.subr.bf16.mxu0 0
        %1119 = vmatpush1.bf16.msra.mxu0 0
        %1120 = vmatprep.subr.bf16.mxu0 0
        %1121 = vmatpush1.bf16.msra.mxu0 0
        %1122 = vmatprep.subr.bf16.mxu0 0
        %1123 = vmatpush1.bf16.msra.mxu0 0
        %1124 = vmatprep.subr.bf16.mxu0 0
        %1125 = vmatpush1.bf16.msra.mxu0 0
        %1126 = vmatprep.subr.bf16.mxu0 0
        %1127 = vmatpush1.bf16.msra.mxu0 0
        %1128 = vmatprep.subr.bf16.mxu0 0
        %1129 = vmatpush1.bf16.msra.mxu0 0
        %1130 = vmatprep.subr.bf16.mxu0 0
        %1131 = vmatpush1.bf16.msra.mxu0 0
        %1132 = vmatprep.subr.bf16.mxu0 0
        %1133 = vmatpush1.bf16.msra.mxu0 0
        %1134 = vmatprep.subr.bf16.mxu0 0
        %1135 = vmatpush1.bf16.msra.mxu0 0
        %1136 = vmatprep.subr.bf16.mxu0 0
        %1137 = vmatpush1.bf16.msra.mxu0 0
        %1138 = vmatprep.subr.bf16.mxu0 0
        %1139 = vmatpush1.bf16.msra.mxu0 0
        %1140 = vmatprep.subr.bf16.mxu0 0
        %1141 = vmatpush1.bf16.msra.mxu0 0
        %1142 = vmatprep.mubr.bf16.mxu0 0
        %1143 = vmatmul.mubr.bf16.gmra.mrb[0].mxu0 %v944
        %v1144 = vpop.f32.mrb[0].mxu0
        %v1145 = vadd.f32 0.0, %v1144
        %v1146 = vpop.f32.mrb[0].mxu0
        %v1147 = vadd.f32 0.0, %v1146
        %v1148 = vpop.f32.mrb[0].mxu0
        %v1149 = vpop.f32.mrb[0].mxu0
        %1150 = vdwg.mxu0
        %1151 = vmatprep.subr.bf16.mxu0 %v906
        %1152 = vmatpush1.bf16.msra.mxu0 %v905
        %1153 = vmatprep.subr.bf16.mxu0 0
        %1154 = vmatpush1.bf16.msra.mxu0 0
        %1155 = vmatprep.subr.bf16.mxu0 0
        %1156 = vmatpush1.bf16.msra.mxu0 0
        %1157 = vmatprep.subr.bf16.mxu0 0
        %1158 = vmatpush1.bf16.msra.mxu0 0
        %1159 = vmatprep.subr.bf16.mxu0 0
        %1160 = vmatpush1.bf16.msra.mxu0 0
        %1161 = vmatprep.subr.bf16.mxu0 0
        %1162 = vmatpush1.bf16.msra.mxu0 0
        %1163 = vmatprep.subr.bf16.mxu0 0
        %1164 = vmatpush1.bf16.msra.mxu0 0
        %1165 = vmatprep.subr.bf16.mxu0 0
        %1166 = vmatpush1.bf16.msra.mxu0 0
        %1167 = vmatprep.subr.bf16.mxu0 0
        %1168 = vmatpush1.bf16.msra.mxu0 0
        %1169 = vmatprep.subr.bf16.mxu0 0
        %1170 = vmatpush1.bf16.msra.mxu0 0
        %1171 = vmatprep.subr.bf16.mxu0 0
        %1172 = vmatpush1.bf16.msra.mxu0 0
        %1173 = vmatprep.subr.bf16.mxu0 0
        %1174 = vmatpush1.bf16.msra.mxu0 0
        %1175 = vmatprep.subr.bf16.mxu0 0
        %1176 = vmatpush1.bf16.msra.mxu0 0
        %1177 = vmatprep.subr.bf16.mxu0 0
        %1178 = vmatpush1.bf16.msra.mxu0 0
        %1179 = vmatprep.subr.bf16.mxu0 0
        %1180 = vmatpush1.bf16.msra.mxu0 0
        %1181 = vmatprep.subr.bf16.mxu0 0
        %1182 = vmatpush1.bf16.msra.mxu0 0
        %1183 = vmatprep.mubr.bf16.mxu0 0
        %1184 = vmatmul.mubr.bf16.gmra.mrb[0].mxu0 %v944
        %v1185 = vpop.f32.mrb[0].mxu0
        %v1186 = vadd.f32 0.0, %v1185
        %v1187 = vpop.f32.mrb[0].mxu0
        %v1188 = vadd.f32 0.0, %v1187
        %v1189 = vpop.f32.mrb[0].mxu0
        %v1190 = vpop.f32.mrb[0].mxu0
        %1191 = vdwg.mxu0
        %1192 = vmatprep.subr.bf16.mxu0 %v908
        %1193 = vmatpush1.bf16.msra.mxu0 %v907
        %1194 = vmatprep.subr.bf16.mxu0 0
        %1195 = vmatpush1.bf16.msra.mxu0 0
        %1196 = vmatprep.subr.bf16.mxu0 0
        %1197 = vmatpush1.bf16.msra.mxu0 0
        %1198 = vmatprep.subr.bf16.mxu0 0
        %1199 = vmatpush1.bf16.msra.mxu0 0
        %1200 = vmatprep.subr.bf16.mxu0 0
        %1201 = vmatpush1.bf16.msra.mxu0 0
        %1202 = vmatprep.subr.bf16.mxu0 0
        %1203 = vmatpush1.bf16.msra.mxu0 0
        %1204 = vmatprep.subr.bf16.mxu0 0
        %1205 = vmatpush1.bf16.msra.mxu0 0
        %1206 = vmatprep.subr.bf16.mxu0 0
        %1207 = vmatpush1.bf16.msra.mxu0 0
        %1208 = vmatprep.subr.bf16.mxu0 0
        %1209 = vmatpush1.bf16.msra.mxu0 0
        %1210 = vmatprep.subr.bf16.mxu0 0
        %1211 = vmatpush1.bf16.msra.mxu0 0
        %1212 = vmatprep.subr.bf16.mxu0 0
        %1213 = vmatpush1.bf16.msra.mxu0 0
        %1214 = vmatprep.subr.bf16.mxu0 0
        %1215 = vmatpush1.bf16.msra.mxu0 0
        %1216 = vmatprep.subr.bf16.mxu0 0
        %1217 = vmatpush1.bf16.msra.mxu0 0
        %1218 = vmatprep.subr.bf16.mxu0 0
        %1219 = vmatpush1.bf16.msra.mxu0 0
        %1220 = vmatprep.subr.bf16.mxu0 0
        %1221 = vmatpush1.bf16.msra.mxu0 0
        %1222 = vmatprep.subr.bf16.mxu0 0
        %1223 = vmatpush1.bf16.msra.mxu0 0
        %1224 = vmatprep.mubr.bf16.mxu0 0
        %1225 = vmatmul.mubr.bf16.gmra.mrb[0].mxu0 %v944
        %v1226 = vpop.f32.mrb[0].mxu0
        %v1227 = vadd.f32 0.0, %v1226
        %v1228 = vpop.f32.mrb[0].mxu0
        %v1229 = vadd.f32 0.0, %v1228
        %v1230 = vpop.f32.mrb[0].mxu0
        %v1231 = vpop.f32.mrb[0].mxu0
        %1232 = vdwg.mxu0
        %1233 = vmatprep.subr.bf16.mxu0 %v910
        %1234 = vmatpush1.bf16.msra.mxu0 %v909
        %1235 = vmatprep.subr.bf16.mxu0 0
        %1236 = vmatpush1.bf16.msra.mxu0 0
        %1237 = vmatprep.subr.bf16.mxu0 0
        %1238 = vmatpush1.bf16.msra.mxu0 0
        %1239 = vmatprep.subr.bf16.mxu0 0
        %1240 = vmatpush1.bf16.msra.mxu0 0
        %1241 = vmatprep.subr.bf16.mxu0 0
        %1242 = vmatpush1.bf16.msra.mxu0 0
        %1243 = vmatprep.subr.bf16.mxu0 0
        %1244 = vmatpush1.bf16.msra.mxu0 0
        %1245 = vmatprep.subr.bf16.mxu0 0
        %1246 = vmatpush1.bf16.msra.mxu0 0
        %1247 = vmatprep.subr.bf16.mxu0 0
        %1248 = vmatpush1.bf16.msra.mxu0 0
        %1249 = vmatprep.subr.bf16.mxu0 0
        %1250 = vmatpush1.bf16.msra.mxu0 0
        %1251 = vmatprep.subr.bf16.mxu0 0
        %1252 = vmatpush1.bf16.msra.mxu0 0
        %1253 = vmatprep.subr.bf16.mxu0 0
        %1254 = vmatpush1.bf16.msra.mxu0 0
        %1255 = vmatprep.subr.bf16.mxu0 0
        %1256 = vmatpush1.bf16.msra.mxu0 0
        %1257 = vmatprep.subr.bf16.mxu0 0
        %1258 = vmatpush1.bf16.msra.mxu0 0
        %1259 = vmatprep.subr.bf16.mxu0 0
        %1260 = vmatpush1.bf16.msra.mxu0 0
        %1261 = vmatprep.subr.bf16.mxu0 0
        %1262 = vmatpush1.bf16.msra.mxu0 0
        %1263 = vmatprep.subr.bf16.mxu0 0
        %1264 = vmatpush1.bf16.msra.mxu0 0
        %1265 = vmatprep.mubr.bf16.mxu0 0
        %1266 = vmatmul.mubr.bf16.gmra.mrb[0].mxu0 %v944
        %v1267 = vpop.f32.mrb[0].mxu0
        %v1268 = vadd.f32 0.0, %v1267
        %v1269 = vpop.f32.mrb[0].mxu0
        %v1270 = vadd.f32 0.0, %v1269
        %v1271 = vpop.f32.mrb[0].mxu0
        %v1272 = vpop.f32.mrb[0].mxu0
        %1273 = vdwg.mxu0
        %1274 = vmatprep.subr.bf16.mxu0 %v912
        %1275 = vmatpush1.bf16.msra.mxu0 %v911
        %1276 = vmatprep.subr.bf16.mxu0 0
        %1277 = vmatpush1.bf16.msra.mxu0 0
        %1278 = vmatprep.subr.bf16.mxu0 0
        %1279 = vmatpush1.bf16.msra.mxu0 0
        %1280 = vmatprep.subr.bf16.mxu0 0
        %1281 = vmatpush1.bf16.msra.mxu0 0
        %1282 = vmatprep.subr.bf16.mxu0 0
        %1283 = vmatpush1.bf16.msra.mxu0 0
        %1284 = vmatprep.subr.bf16.mxu0 0
        %1285 = vmatpush1.bf16.msra.mxu0 0
        %1286 = vmatprep.subr.bf16.mxu0 0
        %1287 = vmatpush1.bf16.msra.mxu0 0
        %1288 = vmatprep.subr.bf16.mxu0 0
        %1289 = vmatpush1.bf16.msra.mxu0 0
        %1290 = vmatprep.subr.bf16.mxu0 0
        %1291 = vmatpush1.bf16.msra.mxu0 0
        %1292 = vmatprep.subr.bf16.mxu0 0
        %1293 = vmatpush1.bf16.msra.mxu0 0
        %1294 = vmatprep.subr.bf16.mxu0 0
        %1295 = vmatpush1.bf16.msra.mxu0 0
        %1296 = vmatprep.subr.bf16.mxu0 0
        %1297 = vmatpush1.bf16.msra.mxu0 0
        %1298 = vmatprep.subr.bf16.mxu0 0
        %1299 = vmatpush1.bf16.msra.mxu0 0
        %1300 = vmatprep.subr.bf16.mxu0 0
        %1301 = vmatpush1.bf16.msra.mxu0 0
        %1302 = vmatprep.subr.bf16.mxu0 0
        %1303 = vmatpush1.bf16.msra.mxu0 0
        %1304 = vmatprep.subr.bf16.mxu0 0
        %1305 = vmatpush1.bf16.msra.mxu0 0
        %1306 = vmatprep.mubr.bf16.mxu0 0
        %1307 = vmatmul.mubr.bf16.gmra.mrb[0].mxu0 %v944
        %v1308 = vpop.f32.mrb[0].mxu0
        %v1309 = vadd.f32 0.0, %v1308
        %v1310 = vpop.f32.mrb[0].mxu0
        %v1311 = vadd.f32 0.0, %v1310
        %v1312 = vpop.f32.mrb[0].mxu0
        %v1313 = vpop.f32.mrb[0].mxu0
        %1314 = vdwg.mxu0
        %1315 = vmatprep.subr.bf16.mxu0 %v914
        %1316 = vmatpush1.bf16.msra.mxu0 %v913
        %1317 = vmatprep.subr.bf16.mxu0 0
        %1318 = vmatpush1.bf16.msra.mxu0 0
        %1319 = vmatprep.subr.bf16.mxu0 0
        %1320 = vmatpush1.bf16.msra.mxu0 0
        %1321 = vmatprep.subr.bf16.mxu0 0
        %1322 = vmatpush1.bf16.msra.mxu0 0
        %1323 = vmatprep.subr.bf16.mxu0 0
        %1324 = vmatpush1.bf16.msra.mxu0 0
        %1325 = vmatprep.subr.bf16.mxu0 0
        %1326 = vmatpush1.bf16.msra.mxu0 0
        %1327 = vmatprep.subr.bf16.mxu0 0
        %1328 = vmatpush1.bf16.msra.mxu0 0
        %1329 = vmatprep.subr.bf16.mxu0 0
        %1330 = vmatpush1.bf16.msra.mxu0 0
        %1331 = vmatprep.subr.bf16.mxu0 0
        %1332 = vmatpush1.bf16.msra.mxu0 0
        %1333 = vmatprep.subr.bf16.mxu0 0
        %1334 = vmatpush1.bf16.msra.mxu0 0
        %1335 = vmatprep.subr.bf16.mxu0 0
        %1336 = vmatpush1.bf16.msra.mxu0 0
        %1337 = vmatprep.subr.bf16.mxu0 0
        %1338 = vmatpush1.bf16.msra.mxu0 0
        %1339 = vmatprep.subr.bf16.mxu0 0
        %1340 = vmatpush1.bf16.msra.mxu0 0
        %1341 = vmatprep.subr.bf16.mxu0 0
        %1342 = vmatpush1.bf16.msra.mxu0 0
        %1343 = vmatprep.subr.bf16.mxu0 0
        %1344 = vmatpush1.bf16.msra.mxu0 0
        %1345 = vmatprep.subr.bf16.mxu0 0
        %1346 = vmatpush1.bf16.msra.mxu0 0
        %1347 = vmatprep.mubr.bf16.mxu0 0
        %1348 = vmatmul.mubr.bf16.gmra.mrb[0].mxu0 %v944
        %v1349 = vpop.f32.mrb[0].mxu0
        %v1350 = vadd.f32 0.0, %v1349
        %v1351 = vpop.f32.mrb[0].mxu0
        %v1352 = vadd.f32 0.0, %v1351
        %v1353 = vpop.f32.mrb[0].mxu0
        %v1354 = vpop.f32.mrb[0].mxu0
        %1355 = vdwg.mxu0
        %1356 = vmatprep.subr.bf16.mxu0 %v916
        %1357 = vmatpush1.bf16.msra.mxu0 %v915
        %1358 = vmatprep.subr.bf16.mxu0 0
        %1359 = vmatpush1.bf16.msra.mxu0 0
        %1360 = vmatprep.subr.bf16.mxu0 0
        %1361 = vmatpush1.bf16.msra.mxu0 0
        %1362 = vmatprep.subr.bf16.mxu0 0
        %1363 = vmatpush1.bf16.msra.mxu0 0
        %1364 = vmatprep.subr.bf16.mxu0 0
        %1365 = vmatpush1.bf16.msra.mxu0 0
        %1366 = vmatprep.subr.bf16.mxu0 0
        %1367 = vmatpush1.bf16.msra.mxu0 0
        %1368 = vmatprep.subr.bf16.mxu0 0
        %1369 = vmatpush1.bf16.msra.mxu0 0
        %1370 = vmatprep.subr.bf16.mxu0 0
        %1371 = vmatpush1.bf16.msra.mxu0 0
        %1372 = vmatprep.subr.bf16.mxu0 0
        %1373 = vmatpush1.bf16.msra.mxu0 0
        %1374 = vmatprep.subr.bf16.mxu0 0
        %1375 = vmatpush1.bf16.msra.mxu0 0
        %1376 = vmatprep.subr.bf16.mxu0 0
        %1377 = vmatpush1.bf16.msra.mxu0 0
        %1378 = vmatprep.subr.bf16.mxu0 0
        %1379 = vmatpush1.bf16.msra.mxu0 0
        %1380 = vmatprep.subr.bf16.mxu0 0
        %1381 = vmatpush1.bf16.msra.mxu0 0
        %1382 = vmatprep.subr.bf16.mxu0 0
        %1383 = vmatpush1.bf16.msra.mxu0 0
        %1384 = vmatprep.subr.bf16.mxu0 0
        %1385 = vmatpush1.bf16.msra.mxu0 0
        %1386 = vmatprep.subr.bf16.mxu0 0
        %1387 = vmatpush1.bf16.msra.mxu0 0
        %1388 = vmatprep.mubr.bf16.mxu0 0
        %1389 = vmatmul.mubr.bf16.gmra.mrb[0].mxu0 %v944
        %v1390 = vpop.f32.mrb[0].mxu0
        %v1391 = vadd.f32 0.0, %v1390
        %v1392 = vpop.f32.mrb[0].mxu0
        %v1393 = vadd.f32 0.0, %v1392
        %v1394 = vpop.f32.mrb[0].mxu0
        %v1395 = vpop.f32.mrb[0].mxu0
        %1396 = vdwg.mxu0
        %1397 = vmatprep.subr.bf16.mxu0 %v918
        %1398 = vmatpush1.bf16.msra.mxu0 %v917
        %1399 = vmatprep.subr.bf16.mxu0 0
        %1400 = vmatpush1.bf16.msra.mxu0 0
        %1401 = vmatprep.subr.bf16.mxu0 0
        %1402 = vmatpush1.bf16.msra.mxu0 0
        %1403 = vmatprep.subr.bf16.mxu0 0
        %1404 = vmatpush1.bf16.msra.mxu0 0
        %1405 = vmatprep.subr.bf16.mxu0 0
        %1406 = vmatpush1.bf16.msra.mxu0 0
        %1407 = vmatprep.subr.bf16.mxu0 0
        %1408 = vmatpush1.bf16.msra.mxu0 0
        %1409 = vmatprep.subr.bf16.mxu0 0
        %1410 = vmatpush1.bf16.msra.mxu0 0
        %1411 = vmatprep.subr.bf16.mxu0 0
        %1412 = vmatpush1.bf16.msra.mxu0 0
        %1413 = vmatprep.subr.bf16.mxu0 0
        %1414 = vmatpush1.bf16.msra.mxu0 0
        %1415 = vmatprep.subr.bf16.mxu0 0
        %1416 = vmatpush1.bf16.msra.mxu0 0
        %1417 = vmatprep.subr.bf16.mxu0 0
        %1418 = vmatpush1.bf16.msra.mxu0 0
        %1419 = vmatprep.subr.bf16.mxu0 0
        %1420 = vmatpush1.bf16.msra.mxu0 0
        %1421 = vmatprep.subr.bf16.mxu0 0
        %1422 = vmatpush1.bf16.msra.mxu0 0
        %1423 = vmatprep.subr.bf16.mxu0 0
        %1424 = vmatpush1.bf16.msra.mxu0 0
        %1425 = vmatprep.subr.bf16.mxu0 0
        %1426 = vmatpush1.bf16.msra.mxu0 0
        %1427 = vmatprep.subr.bf16.mxu0 0
        %1428 = vmatpush1.bf16.msra.mxu0 0
        %1429 = vmatprep.mubr.bf16.mxu0 0
        %1430 = vmatmul.mubr.bf16.gmra.mrb[0].mxu0 %v944
        %v1431 = vpop.f32.mrb[0].mxu0
        %v1432 = vadd.f32 0.0, %v1431
        %v1433 = vpop.f32.mrb[0].mxu0
        %v1434 = vadd.f32 0.0, %v1433
        %v1435 = vpop.f32.mrb[0].mxu0
        %v1436 = vpop.f32.mrb[0].mxu0
        %1437 = vdwg.mxu0
        %v1438 = vpack.c.bf16 %v981, %v981
        %v1439 = vpack.c.bf16 %v1145, %v1145
        %v1440 = vpack.c.bf16 %v1309, %v1309
        %1441 = vmatprep.subr.bf16.mxu0 0
        %1442 = vmatpush1.bf16.xpose.msra.mxu0 %v1439
        %1443 = vmatprep.subr.bf16.mxu0 0
        %1444 = vmatpush1.bf16.xpose.msra.mxu0 0
        %1445 = vmatprep.subr.bf16.mxu0 0
        %1446 = vmatpush1.bf16.xpose.msra.mxu0 0
        %1447 = vmatprep.subr.bf16.mxu0 0
        %1448 = vmatpush1.bf16.xpose.msra.mxu0 0
        %1449 = vmatprep.subr.bf16.mxu0 0
        %1450 = vmatpush1.bf16.xpose.msra.mxu0 0
        %1451 = vmatprep.subr.bf16.mxu0 0
        %1452 = vmatpush1.bf16.xpose.msra.mxu0 0
        %1453 = vmatprep.subr.bf16.mxu0 0
        %1454 = vmatpush1.bf16.xpose.msra.mxu0 0
        %1455 = vmatprep.subr.bf16.mxu0 0
        %1456 = vmatpush1.bf16.xpose.msra.mxu0 0
        %1457 = vmatprep.subr.bf16.mxu0 0
        %1458 = vmatpush1.bf16.xpose.msra.mxu0 0
        %1459 = vmatprep.subr.bf16.mxu0 0
        %1460 = vmatpush1.bf16.xpose.msra.mxu0 0
        %1461 = vmatprep.subr.bf16.mxu0 0
        %1462 = vmatpush1.bf16.xpose.msra.mxu0 0
        %1463 = vmatprep.subr.bf16.mxu0 0
        %1464 = vmatpush1.bf16.xpose.msra.mxu0 0
        %1465 = vmatprep.subr.bf16.mxu0 0
        %1466 = vmatpush1.bf16.xpose.msra.mxu0 0
        %1467 = vmatprep.subr.bf16.mxu0 0
        %1468 = vmatpush1.bf16.xpose.msra.mxu0 0
        %1469 = vmatprep.subr.bf16.mxu0 0
        %1470 = vmatpush1.bf16.xpose.msra.mxu0 0
        %1471 = vmatprep.subr.bf16.mxu0 0
        %1472 = vmatpush1.bf16.xpose.msra.mxu0 0
        %1473 = vmatprep.mubr.bf16.mxu0 0
        %1474 = vmatmul.mubr.bf16.gmra.mrb[0].mxu0 %v1438
        %v1475 = vpop.f32.mrb[0].mxu0
        %v1476 = vadd.f32 0.0, %v1475
        %v1477 = vpop.f32.mrb[0].mxu0
        %v1478 = vpop.f32.mrb[0].mxu0
        %v1479 = vpop.f32.mrb[0].mxu0
        %1480 = vdwg.mxu0
        %vm1481 = vcmask 64512
        %v1482 = vsel %vm1481, %v1476, -inf
        %1483 = vmax.xlane.f32.xlu0 %v1482
        %v1484 = vpop.xlane.xlu0 %1483
        %v1485 = vsub.f32 %v1476, %v1484
        %v1486 = vmul.f32 %v1485, 1.442695
        %v1487 = vpow.pop %v1486
        %v1488 = vsel %vm1481, %v1487, 0.0
        %1489 = vadd.xlane.f32.xlu0 %v1488
        %v1490 = vpop.xlane.xlu0 %1489
        %v1491 = vrcp.pop %v1490
        %v1492 = vmul.f32 %v1487, %v1491
        %v1493 = vpack.c.bf16 %v1492, %v1492
        %v1495 = vsel %vm1481, %v1493, 0
        %vm1497 = vcmask 1043456
        %v1499 = vsel %vm1497, %v1440, 0
        %1501 = vmatprep.subr.bf16.mxu0 0
        %1502 = vmatpush1.bf16.msra.mxu0 %v1499
        %1503 = vmatprep.subr.bf16.mxu0 0
        %1504 = vmatpush1.bf16.msra.mxu0 0
        %1505 = vmatprep.subr.bf16.mxu0 0
        %1506 = vmatpush1.bf16.msra.mxu0 0
        %1507 = vmatprep.subr.bf16.mxu0 0
        %1508 = vmatpush1.bf16.msra.mxu0 0
        %1509 = vmatprep.subr.bf16.mxu0 0
        %1510 = vmatpush1.bf16.msra.mxu0 0
        %1511 = vmatprep.subr.bf16.mxu0 0
        %1512 = vmatpush1.bf16.msra.mxu0 0
        %1513 = vmatprep.subr.bf16.mxu0 0
        %1514 = vmatpush1.bf16.msra.mxu0 0
        %1515 = vmatprep.subr.bf16.mxu0 0
        %1516 = vmatpush1.bf16.msra.mxu0 0
        %1517 = vmatprep.subr.bf16.mxu0 0
        %1518 = vmatpush1.bf16.msra.mxu0 0
        %1519 = vmatprep.subr.bf16.mxu0 0
        %1520 = vmatpush1.bf16.msra.mxu0 0
        %1521 = vmatprep.subr.bf16.mxu0 0
        %1522 = vmatpush1.bf16.msra.mxu0 0
        %1523 = vmatprep.subr.bf16.mxu0 0
        %1524 = vmatpush1.bf16.msra.mxu0 0
        %1525 = vmatprep.subr.bf16.mxu0 0
        %1526 = vmatpush1.bf16.msra.mxu0 0
        %1527 = vmatprep.subr.bf16.mxu0 0
        %1528 = vmatpush1.bf16.msra.mxu0 0
        %1529 = vmatprep.subr.bf16.mxu0 0
        %1530 = vmatpush1.bf16.msra.mxu0 0
        %1531 = vmatprep.subr.bf16.mxu0 0
        %1532 = vmatpush1.bf16.msra.mxu0 0
        %1533 = vmatprep.mubr.bf16.mxu0 0
        %1534 = vmatmul.mubr.bf16.gmra.mrb[0].mxu0 %v1495
        %v1535 = vpop.f32.mrb[0].mxu0
        %v1536 = vadd.f32 0.0, %v1535
        %v1537 = vpop.f32.mrb[0].mxu0
        %v1538 = vpop.f32.mrb[0].mxu0
        %v1539 = vpop.f32.mrb[0].mxu0
        %1540 = vdwg.mxu0
        %v1541 = vpack.c.bf16 %v983, %v983
        %v1542 = vpack.c.bf16 %v1147, %v1147
        %v1543 = vpack.c.bf16 %v1311, %v1311
        %1544 = vmatprep.subr.bf16.mxu0 0
        %1545 = vmatpush1.bf16.xpose.msra.mxu0 %v1542
        %1546 = vmatprep.subr.bf16.mxu0 0
        %1547 = vmatpush1.bf16.xpose.msra.mxu0 0
        %1548 = vmatprep.subr.bf16.mxu0 0
        %1549 = vmatpush1.bf16.xpose.msra.mxu0 0
        %1550 = vmatprep.subr.bf16.mxu0 0
        %1551 = vmatpush1.bf16.xpose.msra.mxu0 0
        %1552 = vmatprep.subr.bf16.mxu0 0
        %1553 = vmatpush1.bf16.xpose.msra.mxu0 0
        %1554 = vmatprep.subr.bf16.mxu0 0
        %1555 = vmatpush1.bf16.xpose.msra.mxu0 0
        %1556 = vmatprep.subr.bf16.mxu0 0
        %1557 = vmatpush1.bf16.xpose.msra.mxu0 0
        %1558 = vmatprep.subr.bf16.mxu0 0
        %1559 = vmatpush1.bf16.xpose.msra.mxu0 0
        %1560 = vmatprep.subr.bf16.mxu0 0
        %1561 = vmatpush1.bf16.xpose.msra.mxu0 0
        %1562 = vmatprep.subr.bf16.mxu0 0
        %1563 = vmatpush1.bf16.xpose.msra.mxu0 0
        %1564 = vmatprep.subr.bf16.mxu0 0
        %1565 = vmatpush1.bf16.xpose.msra.mxu0 0
        %1566 = vmatprep.subr.bf16.mxu0 0
        %1567 = vmatpush1.bf16.xpose.msra.mxu0 0
        %1568 = vmatprep.subr.bf16.mxu0 0
        %1569 = vmatpush1.bf16.xpose.msra.mxu0 0
        %1570 = vmatprep.subr.bf16.mxu0 0
        %1571 = vmatpush1.bf16.xpose.msra.mxu0 0
        %1572 = vmatprep.subr.bf16.mxu0 0
        %1573 = vmatpush1.bf16.xpose.msra.mxu0 0
        %1574 = vmatprep.subr.bf16.mxu0 0
        %1575 = vmatpush1.bf16.xpose.msra.mxu0 0
        %1576 = vmatprep.mubr.bf16.mxu0 0
        %1577 = vmatmul.mubr.bf16.gmra.mrb[0].mxu0 %v1541
        %v1578 = vpop.f32.mrb[0].mxu0
        %v1579 = vadd.f32 0.0, %v1578
        %v1580 = vpop.f32.mrb[0].mxu0
        %v1581 = vpop.f32.mrb[0].mxu0
        %v1582 = vpop.f32.mrb[0].mxu0
        %1583 = vdwg.mxu0
        %v1584 = vsel %vm1481, %v1579, -inf
        %1585 = vmax.xlane.f32.xlu0 %v1584
        %v1586 = vpop.xlane.xlu0 %1585
        %v1587 = vsub.f32 %v1579, %v1586
        %v1588 = vmul.f32 %v1587, 1.442695
        %v1589 = vpow.pop %v1588
        %v1590 = vsel %vm1481, %v1589, 0.0
        %1591 = vadd.xlane.f32.xlu0 %v1590
        %v1592 = vpop.xlane.xlu0 %1591
        %v1593 = vrcp.pop %v1592
        %v1594 = vmul.f32 %v1589, %v1593
        %v1595 = vpack.c.bf16 %v1594, %v1594
        %v1597 = vsel %vm1481, %v1595, 0
        %v1600 = vsel %vm1497, %v1543, 0
        %1602 = vmatprep.subr.bf16.mxu0 0
        %1603 = vmatpush1.bf16.msra.mxu0 %v1600
        %1604 = vmatprep.subr.bf16.mxu0 0
        %1605 = vmatpush1.bf16.msra.mxu0 0
        %1606 = vmatprep.subr.bf16.mxu0 0
        %1607 = vmatpush1.bf16.msra.mxu0 0
        %1608 = vmatprep.subr.bf16.mxu0 0
        %1609 = vmatpush1.bf16.msra.mxu0 0
        %1610 = vmatprep.subr.bf16.mxu0 0
        %1611 = vmatpush1.bf16.msra.mxu0 0
        %1612 = vmatprep.subr.bf16.mxu0 0
        %1613 = vmatpush1.bf16.msra.mxu0 0
        %1614 = vmatprep.subr.bf16.mxu0 0
        %1615 = vmatpush1.bf16.msra.mxu0 0
        %1616 = vmatprep.subr.bf16.mxu0 0
        %1617 = vmatpush1.bf16.msra.mxu0 0
        %1618 = vmatprep.subr.bf16.mxu0 0
        %1619 = vmatpush1.bf16.msra.mxu0 0
        %1620 = vmatprep.subr.bf16.mxu0 0
        %1621 = vmatpush1.bf16.msra.mxu0 0
        %1622 = vmatprep.subr.bf16.mxu0 0
        %1623 = vmatpush1.bf16.msra.mxu0 0
        %1624 = vmatprep.subr.bf16.mxu0 0
        %1625 = vmatpush1.bf16.msra.mxu0 0
        %1626 = vmatprep.subr.bf16.mxu0 0
        %1627 = vmatpush1.bf16.msra.mxu0 0
        %1628 = vmatprep.subr.bf16.mxu0 0
        %1629 = vmatpush1.bf16.msra.mxu0 0
        %1630 = vmatprep.subr.bf16.mxu0 0
        %1631 = vmatpush1.bf16.msra.mxu0 0
        %1632 = vmatprep.subr.bf16.mxu0 0
        %1633 = vmatpush1.bf16.msra.mxu0 0
        %1634 = vmatprep.mubr.bf16.mxu0 0
        %1635 = vmatmul.mubr.bf16.gmra.mrb[0].mxu0 %v1597
        %v1636 = vpop.f32.mrb[0].mxu0
        %v1637 = vadd.f32 0.0, %v1636
        %v1638 = vpop.f32.mrb[0].mxu0
        %v1639 = vpop.f32.mrb[0].mxu0
        %v1640 = vpop.f32.mrb[0].mxu0
        %1641 = vdwg.mxu0
        %v1642 = vpack.c.bf16 %v1022, %v1022
        %v1643 = vpack.c.bf16 %v1186, %v1186
        %v1644 = vpack.c.bf16 %v1350, %v1350
        %1645 = vmatprep.subr.bf16.mxu0 0
        %1646 = vmatpush1.bf16.xpose.msra.mxu0 %v1643
        %1647 = vmatprep.subr.bf16.mxu0 0
        %1648 = vmatpush1.bf16.xpose.msra.mxu0 0
        %1649 = vmatprep.subr.bf16.mxu0 0
        %1650 = vmatpush1.bf16.xpose.msra.mxu0 0
        %1651 = vmatprep.subr.bf16.mxu0 0
        %1652 = vmatpush1.bf16.xpose.msra.mxu0 0
        %1653 = vmatprep.subr.bf16.mxu0 0
        %1654 = vmatpush1.bf16.xpose.msra.mxu0 0
        %1655 = vmatprep.subr.bf16.mxu0 0
        %1656 = vmatpush1.bf16.xpose.msra.mxu0 0
        %1657 = vmatprep.subr.bf16.mxu0 0
        %1658 = vmatpush1.bf16.xpose.msra.mxu0 0
        %1659 = vmatprep.subr.bf16.mxu0 0
        %1660 = vmatpush1.bf16.xpose.msra.mxu0 0
        %1661 = vmatprep.subr.bf16.mxu0 0
        %1662 = vmatpush1.bf16.xpose.msra.mxu0 0
        %1663 = vmatprep.subr.bf16.mxu0 0
        %1664 = vmatpush1.bf16.xpose.msra.mxu0 0
        %1665 = vmatprep.subr.bf16.mxu0 0
        %1666 = vmatpush1.bf16.xpose.msra.mxu0 0
        %1667 = vmatprep.subr.bf16.mxu0 0
        %1668 = vmatpush1.bf16.xpose.msra.mxu0 0
        %1669 = vmatprep.subr.bf16.mxu0 0
        %1670 = vmatpush1.bf16.xpose.msra.mxu0 0
        %1671 = vmatprep.subr.bf16.mxu0 0
        %1672 = vmatpush1.bf16.xpose.msra.mxu0 0
        %1673 = vmatprep.subr.bf16.mxu0 0
        %1674 = vmatpush1.bf16.xpose.msra.mxu0 0
        %1675 = vmatprep.subr.bf16.mxu0 0
        %1676 = vmatpush1.bf16.xpose.msra.mxu0 0
        %1677 = vmatprep.mubr.bf16.mxu0 0
        %1678 = vmatmul.mubr.bf16.gmra.mrb[0].mxu0 %v1642
        %v1679 = vpop.f32.mrb[0].mxu0
        %v1680 = vadd.f32 0.0, %v1679
        %v1681 = vpop.f32.mrb[0].mxu0
        %v1682 = vpop.f32.mrb[0].mxu0
        %v1683 = vpop.f32.mrb[0].mxu0
        %1684 = vdwg.mxu0
        %v1685 = vsel %vm1481, %v1680, -inf
        %1686 = vmax.xlane.f32.xlu0 %v1685
        %v1687 = vpop.xlane.xlu0 %1686
        %v1688 = vsub.f32 %v1680, %v1687
        %v1689 = vmul.f32 %v1688, 1.442695
        %v1690 = vpow.pop %v1689
        %v1691 = vsel %vm1481, %v1690, 0.0
        %1692 = vadd.xlane.f32.xlu0 %v1691
        %v1693 = vpop.xlane.xlu0 %1692
        %v1694 = vrcp.pop %v1693
        %v1695 = vmul.f32 %v1690, %v1694
        %v1696 = vpack.c.bf16 %v1695, %v1695
        %v1698 = vsel %vm1481, %v1696, 0
        %v1701 = vsel %vm1497, %v1644, 0
        %1703 = vmatprep.subr.bf16.mxu0 0
        %1704 = vmatpush1.bf16.msra.mxu0 %v1701
        %1705 = vmatprep.subr.bf16.mxu0 0
        %1706 = vmatpush1.bf16.msra.mxu0 0
        %1707 = vmatprep.subr.bf16.mxu0 0
        %1708 = vmatpush1.bf16.msra.mxu0 0
        %1709 = vmatprep.subr.bf16.mxu0 0
        %1710 = vmatpush1.bf16.msra.mxu0 0
        %1711 = vmatprep.subr.bf16.mxu0 0
        %1712 = vmatpush1.bf16.msra.mxu0 0
        %1713 = vmatprep.subr.bf16.mxu0 0
        %1714 = vmatpush1.bf16.msra.mxu0 0
        %1715 = vmatprep.subr.bf16.mxu0 0
        %1716 = vmatpush1.bf16.msra.mxu0 0
        %1717 = vmatprep.subr.bf16.mxu0 0
        %1718 = vmatpush1.bf16.msra.mxu0 0
        %1719 = vmatprep.subr.bf16.mxu0 0
        %1720 = vmatpush1.bf16.msra.mxu0 0
        %1721 = vmatprep.subr.bf16.mxu0 0
        %1722 = vmatpush1.bf16.msra.mxu0 0
        %1723 = vmatprep.subr.bf16.mxu0 0
        %1724 = vmatpush1.bf16.msra.mxu0 0
        %1725 = vmatprep.subr.bf16.mxu0 0
        %1726 = vmatpush1.bf16.msra.mxu0 0
        %1727 = vmatprep.subr.bf16.mxu0 0
        %1728 = vmatpush1.bf16.msra.mxu0 0
        %1729 = vmatprep.subr.bf16.mxu0 0
        %1730 = vmatpush1.bf16.msra.mxu0 0
        %1731 = vmatprep.subr.bf16.mxu0 0
        %1732 = vmatpush1.bf16.msra.mxu0 0
        %1733 = vmatprep.subr.bf16.mxu0 0
        %1734 = vmatpush1.bf16.msra.mxu0 0
        %1735 = vmatprep.mubr.bf16.mxu0 0
        %1736 = vmatmul.mubr.bf16.gmra.mrb[0].mxu0 %v1698
        %v1737 = vpop.f32.mrb[0].mxu0
        %v1738 = vadd.f32 0.0, %v1737
        %v1739 = vpop.f32.mrb[0].mxu0
        %v1740 = vpop.f32.mrb[0].mxu0
        %v1741 = vpop.f32.mrb[0].mxu0
        %1742 = vdwg.mxu0
        %v1743 = vpack.c.bf16 %v1024, %v1024
        %v1744 = vpack.c.bf16 %v1188, %v1188
        %v1745 = vpack.c.bf16 %v1352, %v1352
        %1746 = vmatprep.subr.bf16.mxu0 0
        %1747 = vmatpush1.bf16.xpose.msra.mxu0 %v1744
        %1748 = vmatprep.subr.bf16.mxu0 0
        %1749 = vmatpush1.bf16.xpose.msra.mxu0 0
        %1750 = vmatprep.subr.bf16.mxu0 0
        %1751 = vmatpush1.bf16.xpose.msra.mxu0 0
        %1752 = vmatprep.subr.bf16.mxu0 0
        %1753 = vmatpush1.bf16.xpose.msra.mxu0 0
        %1754 = vmatprep.subr.bf16.mxu0 0
        %1755 = vmatpush1.bf16.xpose.msra.mxu0 0
        %1756 = vmatprep.subr.bf16.mxu0 0
        %1757 = vmatpush1.bf16.xpose.msra.mxu0 0
        %1758 = vmatprep.subr.bf16.mxu0 0
        %1759 = vmatpush1.bf16.xpose.msra.mxu0 0
        %1760 = vmatprep.subr.bf16.mxu0 0
        %1761 = vmatpush1.bf16.xpose.msra.mxu0 0
        %1762 = vmatprep.subr.bf16.mxu0 0
        %1763 = vmatpush1.bf16.xpose.msra.mxu0 0
        %1764 = vmatprep.subr.bf16.mxu0 0
        %1765 = vmatpush1.bf16.xpose.msra.mxu0 0
        %1766 = vmatprep.subr.bf16.mxu0 0
        %1767 = vmatpush1.bf16.xpose.msra.mxu0 0
        %1768 = vmatprep.subr.bf16.mxu0 0
        %1769 = vmatpush1.bf16.xpose.msra.mxu0 0
        %1770 = vmatprep.subr.bf16.mxu0 0
        %1771 = vmatpush1.bf16.xpose.msra.mxu0 0
        %1772 = vmatprep.subr.bf16.mxu0 0
        %1773 = vmatpush1.bf16.xpose.msra.mxu0 0
        %1774 = vmatprep.subr.bf16.mxu0 0
        %1775 = vmatpush1.bf16.xpose.msra.mxu0 0
        %1776 = vmatprep.subr.bf16.mxu0 0
        %1777 = vmatpush1.bf16.xpose.msra.mxu0 0
        %1778 = vmatprep.mubr.bf16.mxu0 0
        %1779 = vmatmul.mubr.bf16.gmra.mrb[0].mxu0 %v1743
        %v1780 = vpop.f32.mrb[0].mxu0
        %v1781 = vadd.f32 0.0, %v1780
        %v1782 = vpop.f32.mrb[0].mxu0
        %v1783 = vpop.f32.mrb[0].mxu0
        %v1784 = vpop.f32.mrb[0].mxu0
        %1785 = vdwg.mxu0
        %v1786 = vsel %vm1481, %v1781, -inf
        %1787 = vmax.xlane.f32.xlu0 %v1786
        %v1788 = vpop.xlane.xlu0 %1787
        %v1789 = vsub.f32 %v1781, %v1788
        %v1790 = vmul.f32 %v1789, 1.442695
        %v1791 = vpow.pop %v1790
        %v1792 = vsel %vm1481, %v1791, 0.0
        %1793 = vadd.xlane.f32.xlu0 %v1792
        %v1794 = vpop.xlane.xlu0 %1793
        %v1795 = vrcp.pop %v1794
        %v1796 = vmul.f32 %v1791, %v1795
        %v1797 = vpack.c.bf16 %v1796, %v1796
        %v1799 = vsel %vm1481, %v1797, 0
        %v1802 = vsel %vm1497, %v1745, 0
        %1804 = vmatprep.subr.bf16.mxu0 0
        %1805 = vmatpush1.bf16.msra.mxu0 %v1802
        %1806 = vmatprep.subr.bf16.mxu0 0
        %1807 = vmatpush1.bf16.msra.mxu0 0
        %1808 = vmatprep.subr.bf16.mxu0 0
        %1809 = vmatpush1.bf16.msra.mxu0 0
        %1810 = vmatprep.subr.bf16.mxu0 0
        %1811 = vmatpush1.bf16.msra.mxu0 0
        %1812 = vmatprep.subr.bf16.mxu0 0
        %1813 = vmatpush1.bf16.msra.mxu0 0
        %1814 = vmatprep.subr.bf16.mxu0 0
        %1815 = vmatpush1.bf16.msra.mxu0 0
        %1816 = vmatprep.subr.bf16.mxu0 0
        %1817 = vmatpush1.bf16.msra.mxu0 0
        %1818 = vmatprep.subr.bf16.mxu0 0
        %1819 = vmatpush1.bf16.msra.mxu0 0
        %1820 = vmatprep.subr.bf16.mxu0 0
        %1821 = vmatpush1.bf16.msra.mxu0 0
        %1822 = vmatprep.subr.bf16.mxu0 0
        %1823 = vmatpush1.bf16.msra.mxu0 0
        %1824 = vmatprep.subr.bf16.mxu0 0
        %1825 = vmatpush1.bf16.msra.mxu0 0
        %1826 = vmatprep.subr.bf16.mxu0 0
        %1827 = vmatpush1.bf16.msra.mxu0 0
        %1828 = vmatprep.subr.bf16.mxu0 0
        %1829 = vmatpush1.bf16.msra.mxu0 0
        %1830 = vmatprep.subr.bf16.mxu0 0
        %1831 = vmatpush1.bf16.msra.mxu0 0
        %1832 = vmatprep.subr.bf16.mxu0 0
        %1833 = vmatpush1.bf16.msra.mxu0 0
        %1834 = vmatprep.subr.bf16.mxu0 0
        %1835 = vmatpush1.bf16.msra.mxu0 0
        %1836 = vmatprep.mubr.bf16.mxu0 0
        %1837 = vmatmul.mubr.bf16.gmra.mrb[0].mxu0 %v1799
        %v1838 = vpop.f32.mrb[0].mxu0
        %v1839 = vadd.f32 0.0, %v1838
        %v1840 = vpop.f32.mrb[0].mxu0
        %v1841 = vpop.f32.mrb[0].mxu0
        %v1842 = vpop.f32.mrb[0].mxu0
        %1843 = vdwg.mxu0
        %v1844 = vpack.c.bf16 %v1063, %v1063
        %v1845 = vpack.c.bf16 %v1227, %v1227
        %v1846 = vpack.c.bf16 %v1391, %v1391
        %1847 = vmatprep.subr.bf16.mxu0 0
        %1848 = vmatpush1.bf16.xpose.msra.mxu0 %v1845
        %1849 = vmatprep.subr.bf16.mxu0 0
        %1850 = vmatpush1.bf16.xpose.msra.mxu0 0
        %1851 = vmatprep.subr.bf16.mxu0 0
        %1852 = vmatpush1.bf16.xpose.msra.mxu0 0
        %1853 = vmatprep.subr.bf16.mxu0 0
        %1854 = vmatpush1.bf16.xpose.msra.mxu0 0
        %1855 = vmatprep.subr.bf16.mxu0 0
        %1856 = vmatpush1.bf16.xpose.msra.mxu0 0
        %1857 = vmatprep.subr.bf16.mxu0 0
        %1858 = vmatpush1.bf16.xpose.msra.mxu0 0
        %1859 = vmatprep.subr.bf16.mxu0 0
        %1860 = vmatpush1.bf16.xpose.msra.mxu0 0
        %1861 = vmatprep.subr.bf16.mxu0 0
        %1862 = vmatpush1.bf16.xpose.msra.mxu0 0
        %1863 = vmatprep.subr.bf16.mxu0 0
        %1864 = vmatpush1.bf16.xpose.msra.mxu0 0
        %1865 = vmatprep.subr.bf16.mxu0 0
        %1866 = vmatpush1.bf16.xpose.msra.mxu0 0
        %1867 = vmatprep.subr.bf16.mxu0 0
        %1868 = vmatpush1.bf16.xpose.msra.mxu0 0
        %1869 = vmatprep.subr.bf16.mxu0 0
        %1870 = vmatpush1.bf16.xpose.msra.mxu0 0
        %1871 = vmatprep.subr.bf16.mxu0 0
        %1872 = vmatpush1.bf16.xpose.msra.mxu0 0
        %1873 = vmatprep.subr.bf16.mxu0 0
        %1874 = vmatpush1.bf16.xpose.msra.mxu0 0
        %1875 = vmatprep.subr.bf16.mxu0 0
        %1876 = vmatpush1.bf16.xpose.msra.mxu0 0
        %1877 = vmatprep.subr.bf16.mxu0 0
        %1878 = vmatpush1.bf16.xpose.msra.mxu0 0
        %1879 = vmatprep.mubr.bf16.mxu0 0
        %1880 = vmatmul.mubr.bf16.gmra.mrb[0].mxu0 %v1844
        %v1881 = vpop.f32.mrb[0].mxu0
        %v1882 = vadd.f32 0.0, %v1881
        %v1883 = vpop.f32.mrb[0].mxu0
        %v1884 = vpop.f32.mrb[0].mxu0
        %v1885 = vpop.f32.mrb[0].mxu0
        %1886 = vdwg.mxu0
        %v1887 = vsel %vm1481, %v1882, -inf
        %1888 = vmax.xlane.f32.xlu0 %v1887
        %v1889 = vpop.xlane.xlu0 %1888
        %v1890 = vsub.f32 %v1882, %v1889
        %v1891 = vmul.f32 %v1890, 1.442695
        %v1892 = vpow.pop %v1891
        %v1893 = vsel %vm1481, %v1892, 0.0
        %1894 = vadd.xlane.f32.xlu0 %v1893
        %v1895 = vpop.xlane.xlu0 %1894
        %v1896 = vrcp.pop %v1895
        %v1897 = vmul.f32 %v1892, %v1896
        %v1898 = vpack.c.bf16 %v1897, %v1897
        %v1900 = vsel %vm1481, %v1898, 0
        %v1903 = vsel %vm1497, %v1846, 0
        %1905 = vmatprep.subr.bf16.mxu0 0
        %1906 = vmatpush1.bf16.msra.mxu0 %v1903
        %1907 = vmatprep.subr.bf16.mxu0 0
        %1908 = vmatpush1.bf16.msra.mxu0 0
        %1909 = vmatprep.subr.bf16.mxu0 0
        %1910 = vmatpush1.bf16.msra.mxu0 0
        %1911 = vmatprep.subr.bf16.mxu0 0
        %1912 = vmatpush1.bf16.msra.mxu0 0
        %1913 = vmatprep.subr.bf16.mxu0 0
        %1914 = vmatpush1.bf16.msra.mxu0 0
        %1915 = vmatprep.subr.bf16.mxu0 0
        %1916 = vmatpush1.bf16.msra.mxu0 0
        %1917 = vmatprep.subr.bf16.mxu0 0
        %1918 = vmatpush1.bf16.msra.mxu0 0
        %1919 = vmatprep.subr.bf16.mxu0 0
        %1920 = vmatpush1.bf16.msra.mxu0 0
        %1921 = vmatprep.subr.bf16.mxu0 0
        %1922 = vmatpush1.bf16.msra.mxu0 0
        %1923 = vmatprep.subr.bf16.mxu0 0
        %1924 = vmatpush1.bf16.msra.mxu0 0
        %1925 = vmatprep.subr.bf16.mxu0 0
        %1926 = vmatpush1.bf16.msra.mxu0 0
        %1927 = vmatprep.subr.bf16.mxu0 0
        %1928 = vmatpush1.bf16.msra.mxu0 0
        %1929 = vmatprep.subr.bf16.mxu0 0
        %1930 = vmatpush1.bf16.msra.mxu0 0
        %1931 = vmatprep.subr.bf16.mxu0 0
        %1932 = vmatpush1.bf16.msra.mxu0 0
        %1933 = vmatprep.subr.bf16.mxu0 0
        %1934 = vmatpush1.bf16.msra.mxu0 0
        %1935 = vmatprep.subr.bf16.mxu0 0
        %1936 = vmatpush1.bf16.msra.mxu0 0
        %1937 = vmatprep.mubr.bf16.mxu0 0
        %1938 = vmatmul.mubr.bf16.gmra.mrb[0].mxu0 %v1900
        %v1939 = vpop.f32.mrb[0].mxu0
        %v1940 = vadd.f32 0.0, %v1939
        %v1941 = vpop.f32.mrb[0].mxu0
        %v1942 = vpop.f32.mrb[0].mxu0
        %v1943 = vpop.f32.mrb[0].mxu0
        %1944 = vdwg.mxu0
        %v1945 = vpack.c.bf16 %v1065, %v1065
        %v1946 = vpack.c.bf16 %v1229, %v1229
        %v1947 = vpack.c.bf16 %v1393, %v1393
        %1948 = vmatprep.subr.bf16.mxu0 0
        %1949 = vmatpush1.bf16.xpose.msra.mxu0 %v1946
        %1950 = vmatprep.subr.bf16.mxu0 0
        %1951 = vmatpush1.bf16.xpose.msra.mxu0 0
        %1952 = vmatprep.subr.bf16.mxu0 0
        %1953 = vmatpush1.bf16.xpose.msra.mxu0 0
        %1954 = vmatprep.subr.bf16.mxu0 0
        %1955 = vmatpush1.bf16.xpose.msra.mxu0 0
        %1956 = vmatprep.subr.bf16.mxu0 0
        %1957 = vmatpush1.bf16.xpose.msra.mxu0 0
        %1958 = vmatprep.subr.bf16.mxu0 0
        %1959 = vmatpush1.bf16.xpose.msra.mxu0 0
        %1960 = vmatprep.subr.bf16.mxu0 0
        %1961 = vmatpush1.bf16.xpose.msra.mxu0 0
        %1962 = vmatprep.subr.bf16.mxu0 0
        %1963 = vmatpush1.bf16.xpose.msra.mxu0 0
        %1964 = vmatprep.subr.bf16.mxu0 0
        %1965 = vmatpush1.bf16.xpose.msra.mxu0 0
        %1966 = vmatprep.subr.bf16.mxu0 0
        %1967 = vmatpush1.bf16.xpose.msra.mxu0 0
        %1968 = vmatprep.subr.bf16.mxu0 0
        %1969 = vmatpush1.bf16.xpose.msra.mxu0 0
        %1970 = vmatprep.subr.bf16.mxu0 0
        %1971 = vmatpush1.bf16.xpose.msra.mxu0 0
        %1972 = vmatprep.subr.bf16.mxu0 0
        %1973 = vmatpush1.bf16.xpose.msra.mxu0 0
        %1974 = vmatprep.subr.bf16.mxu0 0
        %1975 = vmatpush1.bf16.xpose.msra.mxu0 0
        %1976 = vmatprep.subr.bf16.mxu0 0
        %1977 = vmatpush1.bf16.xpose.msra.mxu0 0
        %1978 = vmatprep.subr.bf16.mxu0 0
        %1979 = vmatpush1.bf16.xpose.msra.mxu0 0
        %1980 = vmatprep.mubr.bf16.mxu0 0
        %1981 = vmatmul.mubr.bf16.gmra.mrb[0].mxu0 %v1945
        %v1982 = vpop.f32.mrb[0].mxu0
        %v1983 = vadd.f32 0.0, %v1982
        %v1984 = vpop.f32.mrb[0].mxu0
        %v1985 = vpop.f32.mrb[0].mxu0
        %v1986 = vpop.f32.mrb[0].mxu0
        %1987 = vdwg.mxu0
        %v1988 = vsel %vm1481, %v1983, -inf
        %1989 = vmax.xlane.f32.xlu0 %v1988
        %v1990 = vpop.xlane.xlu0 %1989
        %v1991 = vsub.f32 %v1983, %v1990
        %v1992 = vmul.f32 %v1991, 1.442695
        %v1993 = vpow.pop %v1992
        %v1994 = vsel %vm1481, %v1993, 0.0
        %1995 = vadd.xlane.f32.xlu0 %v1994
        %v1996 = vpop.xlane.xlu0 %1995
        %v1997 = vrcp.pop %v1996
        %v1998 = vmul.f32 %v1993, %v1997
        %v1999 = vpack.c.bf16 %v1998, %v1998
        %v2001 = vsel %vm1481, %v1999, 0
        %v2004 = vsel %vm1497, %v1947, 0
        %2006 = vmatprep.subr.bf16.mxu0 0
        %2007 = vmatpush1.bf16.msra.mxu0 %v2004
        %2008 = vmatprep.subr.bf16.mxu0 0
        %2009 = vmatpush1.bf16.msra.mxu0 0
        %2010 = vmatprep.subr.bf16.mxu0 0
        %2011 = vmatpush1.bf16.msra.mxu0 0
        %2012 = vmatprep.subr.bf16.mxu0 0
        %2013 = vmatpush1.bf16.msra.mxu0 0
        %2014 = vmatprep.subr.bf16.mxu0 0
        %2015 = vmatpush1.bf16.msra.mxu0 0
        %2016 = vmatprep.subr.bf16.mxu0 0
        %2017 = vmatpush1.bf16.msra.mxu0 0
        %2018 = vmatprep.subr.bf16.mxu0 0
        %2019 = vmatpush1.bf16.msra.mxu0 0
        %2020 = vmatprep.subr.bf16.mxu0 0
        %2021 = vmatpush1.bf16.msra.mxu0 0
        %2022 = vmatprep.subr.bf16.mxu0 0
        %2023 = vmatpush1.bf16.msra.mxu0 0
        %2024 = vmatprep.subr.bf16.mxu0 0
        %2025 = vmatpush1.bf16.msra.mxu0 0
        %2026 = vmatprep.subr.bf16.mxu0 0
        %2027 = vmatpush1.bf16.msra.mxu0 0
        %2028 = vmatprep.subr.bf16.mxu0 0
        %2029 = vmatpush1.bf16.msra.mxu0 0
        %2030 = vmatprep.subr.bf16.mxu0 0
        %2031 = vmatpush1.bf16.msra.mxu0 0
        %2032 = vmatprep.subr.bf16.mxu0 0
        %2033 = vmatpush1.bf16.msra.mxu0 0
        %2034 = vmatprep.subr.bf16.mxu0 0
        %2035 = vmatpush1.bf16.msra.mxu0 0
        %2036 = vmatprep.subr.bf16.mxu0 0
        %2037 = vmatpush1.bf16.msra.mxu0 0
        %2038 = vmatprep.mubr.bf16.mxu0 0
        %2039 = vmatmul.mubr.bf16.gmra.mrb[0].mxu0 %v2001
        %v2040 = vpop.f32.mrb[0].mxu0
        %v2041 = vadd.f32 0.0, %v2040
        %v2042 = vpop.f32.mrb[0].mxu0
        %v2043 = vpop.f32.mrb[0].mxu0
        %v2044 = vpop.f32.mrb[0].mxu0
        %2045 = vdwg.mxu0
        %v2046 = vpack.c.bf16 %v1104, %v1104
        %v2047 = vpack.c.bf16 %v1268, %v1268
        %v2048 = vpack.c.bf16 %v1432, %v1432
        %2049 = vmatprep.subr.bf16.mxu0 0
        %2050 = vmatpush1.bf16.xpose.msra.mxu0 %v2047
        %2051 = vmatprep.subr.bf16.mxu0 0
        %2052 = vmatpush1.bf16.xpose.msra.mxu0 0
        %2053 = vmatprep.subr.bf16.mxu0 0
        %2054 = vmatpush1.bf16.xpose.msra.mxu0 0
        %2055 = vmatprep.subr.bf16.mxu0 0
        %2056 = vmatpush1.bf16.xpose.msra.mxu0 0
        %2057 = vmatprep.subr.bf16.mxu0 0
        %2058 = vmatpush1.bf16.xpose.msra.mxu0 0
        %2059 = vmatprep.subr.bf16.mxu0 0
        %2060 = vmatpush1.bf16.xpose.msra.mxu0 0
        %2061 = vmatprep.subr.bf16.mxu0 0
        %2062 = vmatpush1.bf16.xpose.msra.mxu0 0
        %2063 = vmatprep.subr.bf16.mxu0 0
        %2064 = vmatpush1.bf16.xpose.msra.mxu0 0
        %2065 = vmatprep.subr.bf16.mxu0 0
        %2066 = vmatpush1.bf16.xpose.msra.mxu0 0
        %2067 = vmatprep.subr.bf16.mxu0 0
        %2068 = vmatpush1.bf16.xpose.msra.mxu0 0
        %2069 = vmatprep.subr.bf16.mxu0 0
        %2070 = vmatpush1.bf16.xpose.msra.mxu0 0
        %2071 = vmatprep.subr.bf16.mxu0 0
        %2072 = vmatpush1.bf16.xpose.msra.mxu0 0
        %2073 = vmatprep.subr.bf16.mxu0 0
        %2074 = vmatpush1.bf16.xpose.msra.mxu0 0
        %2075 = vmatprep.subr.bf16.mxu0 0
        %2076 = vmatpush1.bf16.xpose.msra.mxu0 0
        %2077 = vmatprep.subr.bf16.mxu0 0
        %2078 = vmatpush1.bf16.xpose.msra.mxu0 0
        %2079 = vmatprep.subr.bf16.mxu0 0
        %2080 = vmatpush1.bf16.xpose.msra.mxu0 0
        %2081 = vmatprep.mubr.bf16.mxu0 0
        %2082 = vmatmul.mubr.bf16.gmra.mrb[0].mxu0 %v2046
        %v2083 = vpop.f32.mrb[0].mxu0
        %v2084 = vadd.f32 0.0, %v2083
        %v2085 = vpop.f32.mrb[0].mxu0
        %v2086 = vpop.f32.mrb[0].mxu0
        %v2087 = vpop.f32.mrb[0].mxu0
        %2088 = vdwg.mxu0
        %v2089 = vsel %vm1481, %v2084, -inf
        %2090 = vmax.xlane.f32.xlu0 %v2089
        %v2091 = vpop.xlane.xlu0 %2090
        %v2092 = vsub.f32 %v2084, %v2091
        %v2093 = vmul.f32 %v2092, 1.442695
        %v2094 = vpow.pop %v2093
        %v2095 = vsel %vm1481, %v2094, 0.0
        %2096 = vadd.xlane.f32.xlu0 %v2095
        %v2097 = vpop.xlane.xlu0 %2096
        %v2098 = vrcp.pop %v2097
        %v2099 = vmul.f32 %v2094, %v2098
        %v2100 = vpack.c.bf16 %v2099, %v2099
        %v2102 = vsel %vm1481, %v2100, 0
        %v2105 = vsel %vm1497, %v2048, 0
        %2107 = vmatprep.subr.bf16.mxu0 0
        %2108 = vmatpush1.bf16.msra.mxu0 %v2105
        %2109 = vmatprep.subr.bf16.mxu0 0
        %2110 = vmatpush1.bf16.msra.mxu0 0
        %2111 = vmatprep.subr.bf16.mxu0 0
        %2112 = vmatpush1.bf16.msra.mxu0 0
        %2113 = vmatprep.subr.bf16.mxu0 0
        %2114 = vmatpush1.bf16.msra.mxu0 0
        %2115 = vmatprep.subr.bf16.mxu0 0
        %2116 = vmatpush1.bf16.msra.mxu0 0
        %2117 = vmatprep.subr.bf16.mxu0 0
        %2118 = vmatpush1.bf16.msra.mxu0 0
        %2119 = vmatprep.subr.bf16.mxu0 0
        %2120 = vmatpush1.bf16.msra.mxu0 0
        %2121 = vmatprep.subr.bf16.mxu0 0
        %2122 = vmatpush1.bf16.msra.mxu0 0
        %2123 = vmatprep.subr.bf16.mxu0 0
        %2124 = vmatpush1.bf16.msra.mxu0 0
        %2125 = vmatprep.subr.bf16.mxu0 0
        %2126 = vmatpush1.bf16.msra.mxu0 0
        %2127 = vmatprep.subr.bf16.mxu0 0
        %2128 = vmatpush1.bf16.msra.mxu0 0
        %2129 = vmatprep.subr.bf16.mxu0 0
        %2130 = vmatpush1.bf16.msra.mxu0 0
        %2131 = vmatprep.subr.bf16.mxu0 0
        %2132 = vmatpush1.bf16.msra.mxu0 0
        %2133 = vmatprep.subr.bf16.mxu0 0
        %2134 = vmatpush1.bf16.msra.mxu0 0
        %2135 = vmatprep.subr.bf16.mxu0 0
        %2136 = vmatpush1.bf16.msra.mxu0 0
        %2137 = vmatprep.subr.bf16.mxu0 0
        %2138 = vmatpush1.bf16.msra.mxu0 0
        %2139 = vmatprep.mubr.bf16.mxu0 0
        %2140 = vmatmul.mubr.bf16.gmra.mrb[0].mxu0 %v2102
        %v2141 = vpop.f32.mrb[0].mxu0
        %v2142 = vadd.f32 0.0, %v2141
        %v2143 = vpop.f32.mrb[0].mxu0
        %v2144 = vpop.f32.mrb[0].mxu0
        %v2145 = vpop.f32.mrb[0].mxu0
        %2146 = vdwg.mxu0
        %v2147 = vpack.c.bf16 %v1106, %v1106
        %v2148 = vpack.c.bf16 %v1270, %v1270
        %v2149 = vpack.c.bf16 %v1434, %v1434
        %2150 = vmatprep.subr.bf16.mxu0 0
        %2151 = vmatpush1.bf16.xpose.msra.mxu0 %v2148
        %2152 = vmatprep.subr.bf16.mxu0 0
        %2153 = vmatpush1.bf16.xpose.msra.mxu0 0
        %2154 = vmatprep.subr.bf16.mxu0 0
        %2155 = vmatpush1.bf16.xpose.msra.mxu0 0
        %2156 = vmatprep.subr.bf16.mxu0 0
        %2157 = vmatpush1.bf16.xpose.msra.mxu0 0
        %2158 = vmatprep.subr.bf16.mxu0 0
        %2159 = vmatpush1.bf16.xpose.msra.mxu0 0
        %2160 = vmatprep.subr.bf16.mxu0 0
        %2161 = vmatpush1.bf16.xpose.msra.mxu0 0
        %2162 = vmatprep.subr.bf16.mxu0 0
        %2163 = vmatpush1.bf16.xpose.msra.mxu0 0
        %2164 = vmatprep.subr.bf16.mxu0 0
        %2165 = vmatpush1.bf16.xpose.msra.mxu0 0
        %2166 = vmatprep.subr.bf16.mxu0 0
        %2167 = vmatpush1.bf16.xpose.msra.mxu0 0
        %2168 = vmatprep.subr.bf16.mxu0 0
        %2169 = vmatpush1.bf16.xpose.msra.mxu0 0
        %2170 = vmatprep.subr.bf16.mxu0 0
        %2171 = vmatpush1.bf16.xpose.msra.mxu0 0
        %2172 = vmatprep.subr.bf16.mxu0 0
        %2173 = vmatpush1.bf16.xpose.msra.mxu0 0
        %2174 = vmatprep.subr.bf16.mxu0 0
        %2175 = vmatpush1.bf16.xpose.msra.mxu0 0
        %2176 = vmatprep.subr.bf16.mxu0 0
        %2177 = vmatpush1.bf16.xpose.msra.mxu0 0
        %2178 = vmatprep.subr.bf16.mxu0 0
        %2179 = vmatpush1.bf16.xpose.msra.mxu0 0
        %2180 = vmatprep.subr.bf16.mxu0 0
        %2181 = vmatpush1.bf16.xpose.msra.mxu0 0
        %2182 = vmatprep.mubr.bf16.mxu0 0
        %2183 = vmatmul.mubr.bf16.gmra.mrb[0].mxu0 %v2147
        %v2184 = vpop.f32.mrb[0].mxu0
        %v2185 = vadd.f32 0.0, %v2184
        %v2186 = vpop.f32.mrb[0].mxu0
        %v2187 = vpop.f32.mrb[0].mxu0
        %v2188 = vpop.f32.mrb[0].mxu0
        %2189 = vdwg.mxu0
        %v2190 = vsel %vm1481, %v2185, -inf
        %2191 = vmax.xlane.f32.xlu0 %v2190
        %v2192 = vpop.xlane.xlu0 %2191
        %v2193 = vsub.f32 %v2185, %v2192
        %v2194 = vmul.f32 %v2193, 1.442695
        %v2195 = vpow.pop %v2194
        %v2196 = vsel %vm1481, %v2195, 0.0
        %2197 = vadd.xlane.f32.xlu0 %v2196
        %v2198 = vpop.xlane.xlu0 %2197
        %v2199 = vrcp.pop %v2198
        %v2200 = vmul.f32 %v2195, %v2199
        %v2201 = vpack.c.bf16 %v2200, %v2200
        %v2203 = vsel %vm1481, %v2201, 0
        %v2206 = vsel %vm1497, %v2149, 0
        %2208 = vmatprep.subr.bf16.mxu0 0
        %2209 = vmatpush1.bf16.msra.mxu0 %v2206
        %2210 = vmatprep.subr.bf16.mxu0 0
        %2211 = vmatpush1.bf16.msra.mxu0 0
        %2212 = vmatprep.subr.bf16.mxu0 0
        %2213 = vmatpush1.bf16.msra.mxu0 0
        %2214 = vmatprep.subr.bf16.mxu0 0
        %2215 = vmatpush1.bf16.msra.mxu0 0
        %2216 = vmatprep.subr.bf16.mxu0 0
        %2217 = vmatpush1.bf16.msra.mxu0 0
        %2218 = vmatprep.subr.bf16.mxu0 0
        %2219 = vmatpush1.bf16.msra.mxu0 0
        %2220 = vmatprep.subr.bf16.mxu0 0
        %2221 = vmatpush1.bf16.msra.mxu0 0
        %2222 = vmatprep.subr.bf16.mxu0 0
        %2223 = vmatpush1.bf16.msra.mxu0 0
        %2224 = vmatprep.subr.bf16.mxu0 0
        %2225 = vmatpush1.bf16.msra.mxu0 0
        %2226 = vmatprep.subr.bf16.mxu0 0
        %2227 = vmatpush1.bf16.msra.mxu0 0
        %2228 = vmatprep.subr.bf16.mxu0 0
        %2229 = vmatpush1.bf16.msra.mxu0 0
        %2230 = vmatprep.subr.bf16.mxu0 0
        %2231 = vmatpush1.bf16.msra.mxu0 0
        %2232 = vmatprep.subr.bf16.mxu0 0
        %2233 = vmatpush1.bf16.msra.mxu0 0
        %2234 = vmatprep.subr.bf16.mxu0 0
        %2235 = vmatpush1.bf16.msra.mxu0 0
        %2236 = vmatprep.subr.bf16.mxu0 0
        %2237 = vmatpush1.bf16.msra.mxu0 0
        %2238 = vmatprep.subr.bf16.mxu0 0
        %2239 = vmatpush1.bf16.msra.mxu0 0
        %2240 = vmatprep.mubr.bf16.mxu0 0
        %2241 = vmatmul.mubr.bf16.gmra.mrb[0].mxu0 %v2203
        %v2242 = vpop.f32.mrb[0].mxu0
        %v2243 = vadd.f32 0.0, %v2242
        %v2244 = vpop.f32.mrb[0].mxu0
        %v2245 = vpop.f32.mrb[0].mxu0
        %v2246 = vpop.f32.mrb[0].mxu0
        %2247 = vdwg.mxu0
        %v2248 = vpack.c.bf16 %v1536, %v1536
        %v2249 = vpack.c.bf16 %v1637, %v1637
        %v2250 = vpack.c.bf16 %v1738, %v1738
        %v2251 = vpack.c.bf16 %v1839, %v1839
        %v2252 = vpack.c.bf16 %v1940, %v1940
        %v2253 = vpack.c.bf16 %v2041, %v2041
        %v2254 = vpack.c.bf16 %v2142, %v2142
        %v2255 = vpack.c.bf16 %v2243, %v2243
        %v2256 = vld [vmem:[%s618] sm:$0xff]
        %v2257 = vld [vmem:[%s618 + $0x8] sm:$0xff]
        %v2258 = vld [vmem:[%s618 + $0x10] sm:$0xff]
        %v2259 = vld [vmem:[%s618 + $0x18] sm:$0xff]
        %v2260 = vld [vmem:[%s618 + $0x20] sm:$0xff]
        %v2261 = vld [vmem:[%s618 + $0x28] sm:$0xff]
        %v2262 = vld [vmem:[%s618 + $0x30] sm:$0xff]
        %v2263 = vld [vmem:[%s618 + $0x38] sm:$0xff]
        %v2272 = vunpack.c.l.b16 %v2256
        %v2273 = vunpack.c.h.b16 %v2256
        %v2274 = vunpack.c.l.b16 %v2257
        %v2275 = vunpack.c.h.b16 %v2257
        %v2276 = vunpack.c.l.b16 %v2258
        %v2277 = vunpack.c.h.b16 %v2258
        %v2278 = vunpack.c.l.b16 %v2259
        %v2279 = vunpack.c.h.b16 %v2259
        %v2280 = vunpack.c.l.b16 %v2260
        %v2281 = vunpack.c.h.b16 %v2260
        %v2282 = vunpack.c.l.b16 %v2261
        %v2283 = vunpack.c.h.b16 %v2261
        %v2284 = vunpack.c.l.b16 %v2262
        %v2285 = vunpack.c.h.b16 %v2262
        %v2286 = vunpack.c.l.b16 %v2263
        %v2287 = vunpack.c.h.b16 %v2263
        %v2288 = vpack.c.b16 %v2280, %v2272
        %v2289 = vpack.c.b16 %v2281, %v2273
        %v2290 = vpack.c.b16 %v2282, %v2274
        %v2291 = vpack.c.b16 %v2283, %v2275
        %v2292 = vpack.c.b16 %v2284, %v2276
        %v2293 = vpack.c.b16 %v2285, %v2277
        %v2294 = vpack.c.b16 %v2286, %v2278
        %v2295 = vpack.c.b16 %v2287, %v2279
        %2304 = vmatprep.subr.bf16.mxu0 %v2289
        %2305 = vmatpush1.bf16.xpose.msra.mxu0 %v2288
        %2306 = vmatprep.subr.bf16.mxu0 0
        %2307 = vmatpush1.bf16.xpose.msra.mxu0 0
        %2308 = vmatprep.subr.bf16.mxu0 0
        %2309 = vmatpush1.bf16.xpose.msra.mxu0 0
        %2310 = vmatprep.subr.bf16.mxu0 0
        %2311 = vmatpush1.bf16.xpose.msra.mxu0 0
        %2312 = vmatprep.subr.bf16.mxu0 0
        %2313 = vmatpush1.bf16.xpose.msra.mxu0 0
        %2314 = vmatprep.subr.bf16.mxu0 0
        %2315 = vmatpush1.bf16.xpose.msra.mxu0 0
        %2316 = vmatprep.subr.bf16.mxu0 0
        %2317 = vmatpush1.bf16.xpose.msra.mxu0 0
        %2318 = vmatprep.subr.bf16.mxu0 0
        %2319 = vmatpush1.bf16.xpose.msra.mxu0 0
        %2320 = vmatprep.subr.bf16.mxu0 0
        %2321 = vmatpush1.bf16.xpose.msra.mxu0 0
        %2322 = vmatprep.subr.bf16.mxu0 0
        %2323 = vmatpush1.bf16.xpose.msra.mxu0 0
        %2324 = vmatprep.subr.bf16.mxu0 0
        %2325 = vmatpush1.bf16.xpose.msra.mxu0 0
        %2326 = vmatprep.subr.bf16.mxu0 0
        %2327 = vmatpush1.bf16.xpose.msra.mxu0 0
        %2328 = vmatprep.subr.bf16.mxu0 0
        %2329 = vmatpush1.bf16.xpose.msra.mxu0 0
        %2330 = vmatprep.subr.bf16.mxu0 0
        %2331 = vmatpush1.bf16.xpose.msra.mxu0 0
        %2332 = vmatprep.subr.bf16.mxu0 0
        %2333 = vmatpush1.bf16.xpose.msra.mxu0 0
        %2334 = vmatprep.subr.bf16.mxu0 0
        %2335 = vmatpush1.bf16.xpose.msra.mxu0 0
        %2336 = vmatprep.mubr.bf16.mxu0 %v2249
        %2337 = vmatmul.mubr.bf16.gmra.mrb[0].mxu0 %v2248
        %v2338 = vpop.f32.mrb[0].mxu0
        %v2339 = vadd.f32 %v772, %v2338
        %v2340 = vpop.f32.mrb[0].mxu0
        %v2341 = vpop.f32.mrb[0].mxu0
        %v2342 = vpop.f32.mrb[0].mxu0
        %2343 = vdwg.mxu0
        %2344 = vmatprep.subr.bf16.mxu0 %v2291
        %2345 = vmatpush1.bf16.xpose.msra.mxu0 %v2290
        %2346 = vmatprep.subr.bf16.mxu0 0
        %2347 = vmatpush1.bf16.xpose.msra.mxu0 0
        %2348 = vmatprep.subr.bf16.mxu0 0
        %2349 = vmatpush1.bf16.xpose.msra.mxu0 0
        %2350 = vmatprep.subr.bf16.mxu0 0
        %2351 = vmatpush1.bf16.xpose.msra.mxu0 0
        %2352 = vmatprep.subr.bf16.mxu0 0
        %2353 = vmatpush1.bf16.xpose.msra.mxu0 0
        %2354 = vmatprep.subr.bf16.mxu0 0
        %2355 = vmatpush1.bf16.xpose.msra.mxu0 0
        %2356 = vmatprep.subr.bf16.mxu0 0
        %2357 = vmatpush1.bf16.xpose.msra.mxu0 0
        %2358 = vmatprep.subr.bf16.mxu0 0
        %2359 = vmatpush1.bf16.xpose.msra.mxu0 0
        %2360 = vmatprep.subr.bf16.mxu0 0
        %2361 = vmatpush1.bf16.xpose.msra.mxu0 0
        %2362 = vmatprep.subr.bf16.mxu0 0
        %2363 = vmatpush1.bf16.xpose.msra.mxu0 0
        %2364 = vmatprep.subr.bf16.mxu0 0
        %2365 = vmatpush1.bf16.xpose.msra.mxu0 0
        %2366 = vmatprep.subr.bf16.mxu0 0
        %2367 = vmatpush1.bf16.xpose.msra.mxu0 0
        %2368 = vmatprep.subr.bf16.mxu0 0
        %2369 = vmatpush1.bf16.xpose.msra.mxu0 0
        %2370 = vmatprep.subr.bf16.mxu0 0
        %2371 = vmatpush1.bf16.xpose.msra.mxu0 0
        %2372 = vmatprep.subr.bf16.mxu0 0
        %2373 = vmatpush1.bf16.xpose.msra.mxu0 0
        %2374 = vmatprep.subr.bf16.mxu0 0
        %2375 = vmatpush1.bf16.xpose.msra.mxu0 0
        %2376 = vmatprep.mubr.bf16.mxu0 %v2251
        %2377 = vmatmul.mubr.bf16.gmra.mrb[0].mxu0 %v2250
        %v2378 = vpop.f32.mrb[0].mxu0
        %v2379 = vadd.f32 %v2339, %v2378
        %v2380 = vpop.f32.mrb[0].mxu0
        %v2381 = vpop.f32.mrb[0].mxu0
        %v2382 = vpop.f32.mrb[0].mxu0
        %2383 = vdwg.mxu0
        %2384 = vmatprep.subr.bf16.mxu0 %v2293
        %2385 = vmatpush1.bf16.xpose.msra.mxu0 %v2292
        %2386 = vmatprep.subr.bf16.mxu0 0
        %2387 = vmatpush1.bf16.xpose.msra.mxu0 0
        %2388 = vmatprep.subr.bf16.mxu0 0
        %2389 = vmatpush1.bf16.xpose.msra.mxu0 0
        %2390 = vmatprep.subr.bf16.mxu0 0
        %2391 = vmatpush1.bf16.xpose.msra.mxu0 0
        %2392 = vmatprep.subr.bf16.mxu0 0
        %2393 = vmatpush1.bf16.xpose.msra.mxu0 0
        %2394 = vmatprep.subr.bf16.mxu0 0
        %2395 = vmatpush1.bf16.xpose.msra.mxu0 0
        %2396 = vmatprep.subr.bf16.mxu0 0
        %2397 = vmatpush1.bf16.xpose.msra.mxu0 0
        %2398 = vmatprep.subr.bf16.mxu0 0
        %2399 = vmatpush1.bf16.xpose.msra.mxu0 0
        %2400 = vmatprep.subr.bf16.mxu0 0
        %2401 = vmatpush1.bf16.xpose.msra.mxu0 0
        %2402 = vmatprep.subr.bf16.mxu0 0
        %2403 = vmatpush1.bf16.xpose.msra.mxu0 0
        %2404 = vmatprep.subr.bf16.mxu0 0
        %2405 = vmatpush1.bf16.xpose.msra.mxu0 0
        %2406 = vmatprep.subr.bf16.mxu0 0
        %2407 = vmatpush1.bf16.xpose.msra.mxu0 0
        %2408 = vmatprep.subr.bf16.mxu0 0
        %2409 = vmatpush1.bf16.xpose.msra.mxu0 0
        %2410 = vmatprep.subr.bf16.mxu0 0
        %2411 = vmatpush1.bf16.xpose.msra.mxu0 0
        %2412 = vmatprep.subr.bf16.mxu0 0
        %2413 = vmatpush1.bf16.xpose.msra.mxu0 0
        %2414 = vmatprep.subr.bf16.mxu0 0
        %2415 = vmatpush1.bf16.xpose.msra.mxu0 0
        %2416 = vmatprep.mubr.bf16.mxu0 %v2253
        %2417 = vmatmul.mubr.bf16.gmra.mrb[0].mxu0 %v2252
        %v2418 = vpop.f32.mrb[0].mxu0
        %v2419 = vadd.f32 %v2379, %v2418
        %v2420 = vpop.f32.mrb[0].mxu0
        %v2421 = vpop.f32.mrb[0].mxu0
        %v2422 = vpop.f32.mrb[0].mxu0
        %2423 = vdwg.mxu0
        %2424 = vmatprep.subr.bf16.mxu0 %v2295
        %2425 = vmatpush1.bf16.xpose.msra.mxu0 %v2294
        %2426 = vmatprep.subr.bf16.mxu0 0
        %2427 = vmatpush1.bf16.xpose.msra.mxu0 0
        %2428 = vmatprep.subr.bf16.mxu0 0
        %2429 = vmatpush1.bf16.xpose.msra.mxu0 0
        %2430 = vmatprep.subr.bf16.mxu0 0
        %2431 = vmatpush1.bf16.xpose.msra.mxu0 0
        %2432 = vmatprep.subr.bf16.mxu0 0
        %2433 = vmatpush1.bf16.xpose.msra.mxu0 0
        %2434 = vmatprep.subr.bf16.mxu0 0
        %2435 = vmatpush1.bf16.xpose.msra.mxu0 0
        %2436 = vmatprep.subr.bf16.mxu0 0
        %2437 = vmatpush1.bf16.xpose.msra.mxu0 0
        %2438 = vmatprep.subr.bf16.mxu0 0
        %2439 = vmatpush1.bf16.xpose.msra.mxu0 0
        %2440 = vmatprep.subr.bf16.mxu0 0
        %2441 = vmatpush1.bf16.xpose.msra.mxu0 0
        %2442 = vmatprep.subr.bf16.mxu0 0
        %2443 = vmatpush1.bf16.xpose.msra.mxu0 0
        %2444 = vmatprep.subr.bf16.mxu0 0
        %2445 = vmatpush1.bf16.xpose.msra.mxu0 0
        %2446 = vmatprep.subr.bf16.mxu0 0
        %2447 = vmatpush1.bf16.xpose.msra.mxu0 0
        %2448 = vmatprep.subr.bf16.mxu0 0
        %2449 = vmatpush1.bf16.xpose.msra.mxu0 0
        %2450 = vmatprep.subr.bf16.mxu0 0
        %2451 = vmatpush1.bf16.xpose.msra.mxu0 0
        %2452 = vmatprep.subr.bf16.mxu0 0
        %2453 = vmatpush1.bf16.xpose.msra.mxu0 0
        %2454 = vmatprep.subr.bf16.mxu0 0
        %2455 = vmatpush1.bf16.xpose.msra.mxu0 0
        %2456 = vmatprep.mubr.bf16.mxu0 %v2255
        %2457 = vmatmul.mubr.bf16.gmra.mrb[0].mxu0 %v2254
        %v2458 = vpop.f32.mrb[0].mxu0
        %v2459 = vadd.f32 %v2419, %v2458
        %v2460 = vpop.f32.mrb[0].mxu0
        %v2461 = vpop.f32.mrb[0].mxu0
        %v2462 = vpop.f32.mrb[0].mxu0
        %2463 = vdwg.mxu0
        %v2464 = vld [vmem:[%s627] sm:$0x1]
        %v2465 = vsel %vm774, %v2459, 0.0
        %2466 = vadd.xlane.f32.xlu0 %v2465
        %v2467 = vpop.xlane.xlu0 %2466
        %v2468 = vmul.f32 %v2467, %v778
        %v2469 = vmul.f32 %v2459, %v2459
        %v2470 = vsel %vm774, %v2469, 0.0
        %2471 = vadd.xlane.f32.xlu0 %v2470
        %v2472 = vpop.xlane.xlu0 %2471
        %v2473 = vmul.f32 %v2472, %v778
        %v2474 = vmul.f32 %v2468, %v2468
        %v2475 = vsub.f32 %v2473, %v2474
        %v2476 = vsub.f32 %v2459, %v2468
        %v2477 = vadd.f32 %v2475, 1e-05
        %v2478 = vrsqrt.pop %v2477
        %v2479 = vmul.f32 %v2476, %v2478
        %v2481 = vlaneseq
        %v2482 = vshrl.u32 %v2481, 7
        %v2483 = vsub.s32 0, %v2482
        %v2484 = vrot.slane %v2464, %v2483
        %v2486 = vmul.f32 %v2479, %v2484
        %v2487 = vpack.c.bf16 %v2486, %v2486
        %v2488 = vld [vmem:[%s636] sm:$0xf]
        %v2489 = vld [vmem:[%s636 + $0x4] sm:$0xf]
        %v2490 = vld [vmem:[%s645] sm:$0x1]
        %v2492 = vlaneseq
        %v2493 = vshrl.u32 %v2492, 7
        %v2494 = vsub.s32 0, %v2493
        %v2495 = vrot.slane %v2490, %v2494
        %v2499 = vunpack.c.l.b16 %v2488
        %v2500 = vunpack.c.l.b16 %v2489
        %v2501 = vpack.c.b16 %v2500, %v2499
        %v2504 = vsel %vm774, %v2487, 0
        %2506 = vmatprep.subr.bf16.mxu0 0
        %2507 = vmatpush1.bf16.msra.mxu0 %v2501
        %2508 = vmatprep.subr.bf16.mxu0 0
        %2509 = vmatpush1.bf16.msra.mxu0 0
        %2510 = vmatprep.subr.bf16.mxu0 0
        %2511 = vmatpush1.bf16.msra.mxu0 0
        %2512 = vmatprep.subr.bf16.mxu0 0
        %2513 = vmatpush1.bf16.msra.mxu0 0
        %2514 = vmatprep.subr.bf16.mxu0 0
        %2515 = vmatpush1.bf16.msra.mxu0 0
        %2516 = vmatprep.subr.bf16.mxu0 0
        %2517 = vmatpush1.bf16.msra.mxu0 0
        %2518 = vmatprep.subr.bf16.mxu0 0
        %2519 = vmatpush1.bf16.msra.mxu0 0
        %2520 = vmatprep.subr.bf16.mxu0 0
        %2521 = vmatpush1.bf16.msra.mxu0 0
        %2522 = vmatprep.subr.bf16.mxu0 0
        %2523 = vmatpush1.bf16.msra.mxu0 0
        %2524 = vmatprep.subr.bf16.mxu0 0
        %2525 = vmatpush1.bf16.msra.mxu0 0
        %2526 = vmatprep.subr.bf16.mxu0 0
        %2527 = vmatpush1.bf16.msra.mxu0 0
        %2528 = vmatprep.subr.bf16.mxu0 0
        %2529 = vmatpush1.bf16.msra.mxu0 0
        %2530 = vmatprep.subr.bf16.mxu0 0
        %2531 = vmatpush1.bf16.msra.mxu0 0
        %2532 = vmatprep.subr.bf16.mxu0 0
        %2533 = vmatpush1.bf16.msra.mxu0 0
        %2534 = vmatprep.subr.bf16.mxu0 0
        %2535 = vmatpush1.bf16.msra.mxu0 0
        %2536 = vmatprep.subr.bf16.mxu0 0
        %2537 = vmatpush1.bf16.msra.mxu0 0
        %2538 = vmatprep.mubr.bf16.mxu0 0
        %2539 = vmatmul.mubr.bf16.gmra.mrb[0].mxu0 %v2504
        %v2540 = vpop.f32.mrb[0].mxu0
        %v2541 = vadd.f32 %v2495, %v2540
        %v2542 = vpop.f32.mrb[0].mxu0
        %v2543 = vpop.f32.mrb[0].mxu0
        %v2544 = vpop.f32.mrb[0].mxu0
        %2545 = vdwg.mxu0
        %v2546 = vmul.f32 %v2541, 0.5
        %v2547 = vmul.f32 %v2541, 0.70710677
        %v2548 = verf.f32.pop %v2547
        %v2549 = vadd.f32 %v2548, 1.0
        %v2550 = vmul.f32 %v2546, %v2549
        %v2551 = vpack.c.bf16 %v2550, %v2550
        %v2552 = vld [vmem:[%s761] sm:$0xf]
        %v2553 = vld [vmem:[%s761 + $0x4] sm:$0xf]
        %v2554 = vld [vmem:[%s761 + $0x8] sm:$0xf]
        %v2555 = vld [vmem:[%s761 + $0xc] sm:$0xf]
        %v2556 = vld [vmem:[%s654] sm:$0x1]
        %v2558 = vlaneseq
        %v2559 = vshrl.u32 %v2558, 7
        %v2560 = vsub.s32 0, %v2559
        %v2561 = vrot.slane %v2556, %v2560
        %v2567 = vunpack.c.l.b16 %v2552
        %v2568 = vunpack.c.l.b16 %v2553
        %v2569 = vunpack.c.l.b16 %v2554
        %v2570 = vunpack.c.l.b16 %v2555
        %v2571 = vpack.c.b16 %v2568, %v2567
        %v2572 = vpack.c.b16 %v2570, %v2569
        %vm2575 = vcmask 261120
        %v2577 = vsel %vm2575, %v2551, 0
        %2579 = vmatprep.subr.bf16.mxu0 0
        %2580 = vmatpush1.bf16.msra.mxu0 %v2571
        %2581 = vmatprep.subr.bf16.mxu0 0
        %2582 = vmatpush1.bf16.msra.mxu0 %v2572
        %2583 = vmatprep.subr.bf16.mxu0 0
        %2584 = vmatpush1.bf16.msra.mxu0 0
        %2585 = vmatprep.subr.bf16.mxu0 0
        %2586 = vmatpush1.bf16.msra.mxu0 0
        %2587 = vmatprep.subr.bf16.mxu0 0
        %2588 = vmatpush1.bf16.msra.mxu0 0
        %2589 = vmatprep.subr.bf16.mxu0 0
        %2590 = vmatpush1.bf16.msra.mxu0 0
        %2591 = vmatprep.subr.bf16.mxu0 0
        %2592 = vmatpush1.bf16.msra.mxu0 0
        %2593 = vmatprep.subr.bf16.mxu0 0
        %2594 = vmatpush1.bf16.msra.mxu0 0
        %2595 = vmatprep.subr.bf16.mxu0 0
        %2596 = vmatpush1.bf16.msra.mxu0 0
        %2597 = vmatprep.subr.bf16.mxu0 0
        %2598 = vmatpush1.bf16.msra.mxu0 0
        %2599 = vmatprep.subr.bf16.mxu0 0
        %2600 = vmatpush1.bf16.msra.mxu0 0
        %2601 = vmatprep.subr.bf16.mxu0 0
        %2602 = vmatpush1.bf16.msra.mxu0 0
        %2603 = vmatprep.subr.bf16.mxu0 0
        %2604 = vmatpush1.bf16.msra.mxu0 0
        %2605 = vmatprep.subr.bf16.mxu0 0
        %2606 = vmatpush1.bf16.msra.mxu0 0
        %2607 = vmatprep.subr.bf16.mxu0 0
        %2608 = vmatpush1.bf16.msra.mxu0 0
        %2609 = vmatprep.subr.bf16.mxu0 0
        %2610 = vmatpush1.bf16.msra.mxu0 0
        %2611 = vmatprep.mubr.bf16.mxu0 0
        %2612 = vmatmul.mubr.bf16.gmra.mrb[0].mxu0 %v2577
        %v2613 = vpop.f32.mrb[0].mxu0
        %v2614 = vadd.f32 %v2561, %v2613
        %v2615 = vpop.f32.mrb[0].mxu0
        %v2616 = vpop.f32.mrb[0].mxu0
        %v2617 = vpop.f32.mrb[0].mxu0
        %2618 = vdwg.mxu0
        %v2619 = vadd.f32 %v2614, %v2459
        %s2620 = scalar_lea.vmem %s600, 1 [#allocation6]
        %v2621 = vld [vmem:[%s2620] sm:$0x1]
        %v2622 = vsel %vm774, %v2619, 0.0
        %2623 = vadd.xlane.f32.xlu0 %v2622
        %v2624 = vpop.xlane.xlu0 %2623
        %v2625 = vmul.f32 %v2624, %v778
        %v2626 = vmul.f32 %v2619, %v2619
        %v2627 = vsel %vm774, %v2626, 0.0
        %2628 = vadd.xlane.f32.xlu0 %v2627
        %v2629 = vpop.xlane.xlu0 %2628
        %v2630 = vmul.f32 %v2629, %v778
        %v2631 = vmul.f32 %v2625, %v2625
        %v2632 = vsub.f32 %v2630, %v2631
        %v2633 = vsub.f32 %v2619, %v2625
        %v2634 = vadd.f32 %v2632, 1e-05
        %v2635 = vrsqrt.pop %v2634
        %v2636 = vmul.f32 %v2633, %v2635
        %v2638 = vlaneseq
        %v2639 = vshrl.u32 %v2638, 7
        %v2640 = vsub.s32 0, %v2639
        %v2641 = vrot.slane %v2621, %v2640
        %v2643 = vmul.f32 %v2636, %v2641
        %v2644 = vpack.c.bf16 %v2643, %v2643
        %s2645 = scalar_lea.vmem %s609, 192 [#allocation8]
        %v2646 = vld [vmem:[%s2645] sm:$0xff]
        %v2647 = vld [vmem:[%s2645 + $0x8] sm:$0xff]
        %v2648 = vld [vmem:[%s2645 + $0x10] sm:$0xff]
        %v2649 = vld [vmem:[%s2645 + $0x18] sm:$0xff]
        %v2650 = vld [vmem:[%s2645 + $0x20] sm:$0xff]
        %v2651 = vld [vmem:[%s2645 + $0x28] sm:$0xff]
        %v2652 = vld [vmem:[%s2645 + $0x30] sm:$0xff]
        %v2653 = vld [vmem:[%s2645 + $0x38] sm:$0xff]
        %v2654 = vld [vmem:[%s2645 + $0x40] sm:$0xff]
        %v2655 = vld [vmem:[%s2645 + $0x48] sm:$0xff]
        %v2656 = vld [vmem:[%s2645 + $0x50] sm:$0xff]
        %v2657 = vld [vmem:[%s2645 + $0x58] sm:$0xff]
        %v2658 = vld [vmem:[%s2645 + $0x60] sm:$0xff]
        %v2659 = vld [vmem:[%s2645 + $0x68] sm:$0xff]
        %v2660 = vld [vmem:[%s2645 + $0x70] sm:$0xff]
        %v2661 = vld [vmem:[%s2645 + $0x78] sm:$0xff]
        %v2662 = vld [vmem:[%s2645 + $0x80] sm:$0xff]
        %v2663 = vld [vmem:[%s2645 + $0x88] sm:$0xff]
        %v2664 = vld [vmem:[%s2645 + $0x90] sm:$0xff]
        %v2665 = vld [vmem:[%s2645 + $0x98] sm:$0xff]
        %v2666 = vld [vmem:[%s2645 + $0xa0] sm:$0xff]
        %v2667 = vld [vmem:[%s2645 + $0xa8] sm:$0xff]
        %v2668 = vld [vmem:[%s2645 + $0xb0] sm:$0xff]
        %v2669 = vld [vmem:[%s2645 + $0xb8] sm:$0xff]
        %v2694 = vunpack.c.l.b16 %v2646
        %v2695 = vunpack.c.h.b16 %v2646
        %v2696 = vunpack.c.l.b16 %v2647
        %v2697 = vunpack.c.h.b16 %v2647
        %v2698 = vunpack.c.l.b16 %v2648
        %v2699 = vunpack.c.h.b16 %v2648
        %v2700 = vunpack.c.l.b16 %v2649
        %v2701 = vunpack.c.h.b16 %v2649
        %v2702 = vunpack.c.l.b16 %v2650
        %v2703 = vunpack.c.h.b16 %v2650
        %v2704 = vunpack.c.l.b16 %v2651
        %v2705 = vunpack.c.h.b16 %v2651
        %v2706 = vunpack.c.l.b16 %v2652
        %v2707 = vunpack.c.h.b16 %v2652
        %v2708 = vunpack.c.l.b16 %v2653
        %v2709 = vunpack.c.h.b16 %v2653
        %v2710 = vunpack.c.l.b16 %v2654
        %v2711 = vunpack.c.h.b16 %v2654
        %v2712 = vunpack.c.l.b16 %v2655
        %v2713 = vunpack.c.h.b16 %v2655
        %v2714 = vunpack.c.l.b16 %v2656
        %v2715 = vunpack.c.h.b16 %v2656
        %v2716 = vunpack.c.l.b16 %v2657
        %v2717 = vunpack.c.h.b16 %v2657
        %v2718 = vunpack.c.l.b16 %v2658
        %v2719 = vunpack.c.h.b16 %v2658
        %v2720 = vunpack.c.l.b16 %v2659
        %v2721 = vunpack.c.h.b16 %v2659
        %v2722 = vunpack.c.l.b16 %v2660
        %v2723 = vunpack.c.h.b16 %v2660
        %v2724 = vunpack.c.l.b16 %v2661
        %v2725 = vunpack.c.h.b16 %v2661
        %v2726 = vunpack.c.l.b16 %v2662
        %v2727 = vunpack.c.h.b16 %v2662
        %v2728 = vunpack.c.l.b16 %v2663
        %v2729 = vunpack.c.h.b16 %v2663
        %v2730 = vunpack.c.l.b16 %v2664
        %v2731 = vunpack.c.h.b16 %v2664
        %v2732 = vunpack.c.l.b16 %v2665
        %v2733 = vunpack.c.h.b16 %v2665
        %v2734 = vunpack.c.l.b16 %v2666
        %v2735 = vunpack.c.h.b16 %v2666
        %v2736 = vunpack.c.l.b16 %v2667
        %v2737 = vunpack.c.h.b16 %v2667
        %v2738 = vunpack.c.l.b16 %v2668
        %v2739 = vunpack.c.h.b16 %v2668
        %v2740 = vunpack.c.l.b16 %v2669
        %v2741 = vunpack.c.h.b16 %v2669
        %v2742 = vpack.c.b16 %v2718, %v2694
        %v2743 = vpack.c.b16 %v2719, %v2695
        %v2744 = vpack.c.b16 %v2720, %v2696
        %v2745 = vpack.c.b16 %v2721, %v2697
        %v2746 = vpack.c.b16 %v2722, %v2698
        %v2747 = vpack.c.b16 %v2723, %v2699
        %v2748 = vpack.c.b16 %v2724, %v2700
        %v2749 = vpack.c.b16 %v2725, %v2701
        %v2750 = vpack.c.b16 %v2726, %v2702
        %v2751 = vpack.c.b16 %v2727, %v2703
        %v2752 = vpack.c.b16 %v2728, %v2704
        %v2753 = vpack.c.b16 %v2729, %v2705
        %v2754 = vpack.c.b16 %v2730, %v2706
        %v2755 = vpack.c.b16 %v2731, %v2707
        %v2756 = vpack.c.b16 %v2732, %v2708
        %v2757 = vpack.c.b16 %v2733, %v2709
        %v2758 = vpack.c.b16 %v2734, %v2710
        %v2759 = vpack.c.b16 %v2735, %v2711
        %v2760 = vpack.c.b16 %v2736, %v2712
        %v2761 = vpack.c.b16 %v2737, %v2713
        %v2762 = vpack.c.b16 %v2738, %v2714
        %v2763 = vpack.c.b16 %v2739, %v2715
        %v2764 = vpack.c.b16 %v2740, %v2716
        %v2765 = vpack.c.b16 %v2741, %v2717
        %v2791 = vsel %vm774, %v2644, 0
        %2793 = vmatprep.subr.bf16.mxu0 %v2743
        %2794 = vmatpush1.bf16.msra.mxu0 %v2742
        %2795 = vmatprep.subr.bf16.mxu0 0
        %2796 = vmatpush1.bf16.msra.mxu0 0
        %2797 = vmatprep.subr.bf16.mxu0 0
        %2798 = vmatpush1.bf16.msra.mxu0 0
        %2799 = vmatprep.subr.bf16.mxu0 0
        %2800 = vmatpush1.bf16.msra.mxu0 0
        %2801 = vmatprep.subr.bf16.mxu0 0
        %2802 = vmatpush1.bf16.msra.mxu0 0
        %2803 = vmatprep.subr.bf16.mxu0 0
        %2804 = vmatpush1.bf16.msra.mxu0 0
        %2805 = vmatprep.subr.bf16.mxu0 0
        %2806 = vmatpush1.bf16.msra.mxu0 0
        %2807 = vmatprep.subr.bf16.mxu0 0
        %2808 = vmatpush1.bf16.msra.mxu0 0
        %2809 = vmatprep.subr.bf16.mxu0 0
        %2810 = vmatpush1.bf16.msra.mxu0 0
        %2811 = vmatprep.subr.bf16.mxu0 0
        %2812 = vmatpush1.bf16.msra.mxu0 0
        %2813 = vmatprep.subr.bf16.mxu0 0
        %2814 = vmatpush1.bf16.msra.mxu0 0
        %2815 = vmatprep.subr.bf16.mxu0 0
        %2816 = vmatpush1.bf16.msra.mxu0 0
        %2817 = vmatprep.subr.bf16.mxu0 0
        %2818 = vmatpush1.bf16.msra.mxu0 0
        %2819 = vmatprep.subr.bf16.mxu0 0
        %2820 = vmatpush1.bf16.msra.mxu0 0
        %2821 = vmatprep.subr.bf16.mxu0 0
        %2822 = vmatpush1.bf16.msra.mxu0 0
        %2823 = vmatprep.subr.bf16.mxu0 0
        %2824 = vmatpush1.bf16.msra.mxu0 0
        %2825 = vmatprep.mubr.bf16.mxu0 0
        %2826 = vmatmul.mubr.bf16.gmra.mrb[0].mxu0 %v2791
        %v2827 = vpop.f32.mrb[0].mxu0
        %v2828 = vadd.f32 0.0, %v2827
        %v2829 = vpop.f32.mrb[0].mxu0
        %v2830 = vadd.f32 0.0, %v2829
        %v2831 = vpop.f32.mrb[0].mxu0
        %v2832 = vpop.f32.mrb[0].mxu0
        %2833 = vdwg.mxu0
        %2834 = vmatprep.subr.bf16.mxu0 %v2745
        %2835 = vmatpush1.bf16.msra.mxu0 %v2744
        %2836 = vmatprep.subr.bf16.mxu0 0
        %2837 = vmatpush1.bf16.msra.mxu0 0
        %2838 = vmatprep.subr.bf16.mxu0 0
        %2839 = vmatpush1.bf16.msra.mxu0 0
        %2840 = vmatprep.subr.bf16.mxu0 0
        %2841 = vmatpush1.bf16.msra.mxu0 0
        %2842 = vmatprep.subr.bf16.mxu0 0
        %2843 = vmatpush1.bf16.msra.mxu0 0
        %2844 = vmatprep.subr.bf16.mxu0 0
        %2845 = vmatpush1.bf16.msra.mxu0 0
        %2846 = vmatprep.subr.bf16.mxu0 0
        %2847 = vmatpush1.bf16.msra.mxu0 0
        %2848 = vmatprep.subr.bf16.mxu0 0
        %2849 = vmatpush1.bf16.msra.mxu0 0
        %2850 = vmatprep.subr.bf16.mxu0 0
        %2851 = vmatpush1.bf16.msra.mxu0 0
        %2852 = vmatprep.subr.bf16.mxu0 0
        %2853 = vmatpush1.bf16.msra.mxu0 0
        %2854 = vmatprep.subr.bf16.mxu0 0
        %2855 = vmatpush1.bf16.msra.mxu0 0
        %2856 = vmatprep.subr.bf16.mxu0 0
        %2857 = vmatpush1.bf16.msra.mxu0 0
        %2858 = vmatprep.subr.bf16.mxu0 0
        %2859 = vmatpush1.bf16.msra.mxu0 0
        %2860 = vmatprep.subr.bf16.mxu0 0
        %2861 = vmatpush1.bf16.msra.mxu0 0
        %2862 = vmatprep.subr.bf16.mxu0 0
        %2863 = vmatpush1.bf16.msra.mxu0 0
        %2864 = vmatprep.subr.bf16.mxu0 0
        %2865 = vmatpush1.bf16.msra.mxu0 0
        %2866 = vmatprep.mubr.bf16.mxu0 0
        %2867 = vmatmul.mubr.bf16.gmra.mrb[0].mxu0 %v2791
        %v2868 = vpop.f32.mrb[0].mxu0
        %v2869 = vadd.f32 0.0, %v2868
        %v2870 = vpop.f32.mrb[0].mxu0
        %v2871 = vadd.f32 0.0, %v2870
        %v2872 = vpop.f32.mrb[0].mxu0
        %v2873 = vpop.f32.mrb[0].mxu0
        %2874 = vdwg.mxu0
        %2875 = vmatprep.subr.bf16.mxu0 %v2747
        %2876 = vmatpush1.bf16.msra.mxu0 %v2746
        %2877 = vmatprep.subr.bf16.mxu0 0
        %2878 = vmatpush1.bf16.msra.mxu0 0
        %2879 = vmatprep.subr.bf16.mxu0 0
        %2880 = vmatpush1.bf16.msra.mxu0 0
        %2881 = vmatprep.subr.bf16.mxu0 0
        %2882 = vmatpush1.bf16.msra.mxu0 0
        %2883 = vmatprep.subr.bf16.mxu0 0
        %2884 = vmatpush1.bf16.msra.mxu0 0
        %2885 = vmatprep.subr.bf16.mxu0 0
        %2886 = vmatpush1.bf16.msra.mxu0 0
        %2887 = vmatprep.subr.bf16.mxu0 0
        %2888 = vmatpush1.bf16.msra.mxu0 0
        %2889 = vmatprep.subr.bf16.mxu0 0
        %2890 = vmatpush1.bf16.msra.mxu0 0
        %2891 = vmatprep.subr.bf16.mxu0 0
        %2892 = vmatpush1.bf16.msra.mxu0 0
        %2893 = vmatprep.subr.bf16.mxu0 0
        %2894 = vmatpush1.bf16.msra.mxu0 0
        %2895 = vmatprep.subr.bf16.mxu0 0
        %2896 = vmatpush1.bf16.msra.mxu0 0
        %2897 = vmatprep.subr.bf16.mxu0 0
        %2898 = vmatpush1.bf16.msra.mxu0 0
        %2899 = vmatprep.subr.bf16.mxu0 0
        %2900 = vmatpush1.bf16.msra.mxu0 0
        %2901 = vmatprep.subr.bf16.mxu0 0
        %2902 = vmatpush1.bf16.msra.mxu0 0
        %2903 = vmatprep.subr.bf16.mxu0 0
        %2904 = vmatpush1.bf16.msra.mxu0 0
        %2905 = vmatprep.subr.bf16.mxu0 0
        %2906 = vmatpush1.bf16.msra.mxu0 0
        %2907 = vmatprep.mubr.bf16.mxu0 0
        %2908 = vmatmul.mubr.bf16.gmra.mrb[0].mxu0 %v2791
        %v2909 = vpop.f32.mrb[0].mxu0
        %v2910 = vadd.f32 0.0, %v2909
        %v2911 = vpop.f32.mrb[0].mxu0
        %v2912 = vadd.f32 0.0, %v2911
        %v2913 = vpop.f32.mrb[0].mxu0
        %v2914 = vpop.f32.mrb[0].mxu0
        %2915 = vdwg.mxu0
        %2916 = vmatprep.subr.bf16.mxu0 %v2749
        %2917 = vmatpush1.bf16.msra.mxu0 %v2748
        %2918 = vmatprep.subr.bf16.mxu0 0
        %2919 = vmatpush1.bf16.msra.mxu0 0
        %2920 = vmatprep.subr.bf16.mxu0 0
        %2921 = vmatpush1.bf16.msra.mxu0 0
        %2922 = vmatprep.subr.bf16.mxu0 0
        %2923 = vmatpush1.bf16.msra.mxu0 0
        %2924 = vmatprep.subr.bf16.mxu0 0
        %2925 = vmatpush1.bf16.msra.mxu0 0
        %2926 = vmatprep.subr.bf16.mxu0 0
        %2927 = vmatpush1.bf16.msra.mxu0 0
        %2928 = vmatprep.subr.bf16.mxu0 0
        %2929 = vmatpush1.bf16.msra.mxu0 0
        %2930 = vmatprep.subr.bf16.mxu0 0
        %2931 = vmatpush1.bf16.msra.mxu0 0
        %2932 = vmatprep.subr.bf16.mxu0 0
        %2933 = vmatpush1.bf16.msra.mxu0 0
        %2934 = vmatprep.subr.bf16.mxu0 0
        %2935 = vmatpush1.bf16.msra.mxu0 0
        %2936 = vmatprep.subr.bf16.mxu0 0
        %2937 = vmatpush1.bf16.msra.mxu0 0
        %2938 = vmatprep.subr.bf16.mxu0 0
        %2939 = vmatpush1.bf16.msra.mxu0 0
        %2940 = vmatprep.subr.bf16.mxu0 0
        %2941 = vmatpush1.bf16.msra.mxu0 0
        %2942 = vmatprep.subr.bf16.mxu0 0
        %2943 = vmatpush1.bf16.msra.mxu0 0
        %2944 = vmatprep.subr.bf16.mxu0 0
        %2945 = vmatpush1.bf16.msra.mxu0 0
        %2946 = vmatprep.subr.bf16.mxu0 0
        %2947 = vmatpush1.bf16.msra.mxu0 0
        %2948 = vmatprep.mubr.bf16.mxu0 0
        %2949 = vmatmul.mubr.bf16.gmra.mrb[0].mxu0 %v2791
        %v2950 = vpop.f32.mrb[0].mxu0
        %v2951 = vadd.f32 0.0, %v2950
        %v2952 = vpop.f32.mrb[0].mxu0
        %v2953 = vadd.f32 0.0, %v2952
        %v2954 = vpop.f32.mrb[0].mxu0
        %v2955 = vpop.f32.mrb[0].mxu0
        %2956 = vdwg.mxu0
        %2957 = vmatprep.subr.bf16.mxu0 %v2751
        %2958 = vmatpush1.bf16.msra.mxu0 %v2750
        %2959 = vmatprep.subr.bf16.mxu0 0
        %2960 = vmatpush1.bf16.msra.mxu0 0
        %2961 = vmatprep.subr.bf16.mxu0 0
        %2962 = vmatpush1.bf16.msra.mxu0 0
        %2963 = vmatprep.subr.bf16.mxu0 0
        %2964 = vmatpush1.bf16.msra.mxu0 0
        %2965 = vmatprep.subr.bf16.mxu0 0
        %2966 = vmatpush1.bf16.msra.mxu0 0
        %2967 = vmatprep.subr.bf16.mxu0 0
        %2968 = vmatpush1.bf16.msra.mxu0 0
        %2969 = vmatprep.subr.bf16.mxu0 0
        %2970 = vmatpush1.bf16.msra.mxu0 0
        %2971 = vmatprep.subr.bf16.mxu0 0
        %2972 = vmatpush1.bf16.msra.mxu0 0
        %2973 = vmatprep.subr.bf16.mxu0 0
        %2974 = vmatpush1.bf16.msra.mxu0 0
        %2975 = vmatprep.subr.bf16.mxu0 0
        %2976 = vmatpush1.bf16.msra.mxu0 0
        %2977 = vmatprep.subr.bf16.mxu0 0
        %2978 = vmatpush1.bf16.msra.mxu0 0
        %2979 = vmatprep.subr.bf16.mxu0 0
        %2980 = vmatpush1.bf16.msra.mxu0 0
        %2981 = vmatprep.subr.bf16.mxu0 0
        %2982 = vmatpush1.bf16.msra.mxu0 0
        %2983 = vmatprep.subr.bf16.mxu0 0
        %2984 = vmatpush1.bf16.msra.mxu0 0
        %2985 = vmatprep.subr.bf16.mxu0 0
        %2986 = vmatpush1.bf16.msra.mxu0 0
        %2987 = vmatprep.subr.bf16.mxu0 0
        %2988 = vmatpush1.bf16.msra.mxu0 0
        %2989 = vmatprep.mubr.bf16.mxu0 0
        %2990 = vmatmul.mubr.bf16.gmra.mrb[0].mxu0 %v2791
        %v2991 = vpop.f32.mrb[0].mxu0
        %v2992 = vadd.f32 0.0, %v2991
        %v2993 = vpop.f32.mrb[0].mxu0
        %v2994 = vadd.f32 0.0, %v2993
        %v2995 = vpop.f32.mrb[0].mxu0
        %v2996 = vpop.f32.mrb[0].mxu0
        %2997 = vdwg.mxu0
        %2998 = vmatprep.subr.bf16.mxu0 %v2753
        %2999 = vmatpush1.bf16.msra.mxu0 %v2752
        %3000 = vmatprep.subr.bf16.mxu0 0
        %3001 = vmatpush1.bf16.msra.mxu0 0
        %3002 = vmatprep.subr.bf16.mxu0 0
        %3003 = vmatpush1.bf16.msra.mxu0 0
        %3004 = vmatprep.subr.bf16.mxu0 0
        %3005 = vmatpush1.bf16.msra.mxu0 0
        %3006 = vmatprep.subr.bf16.mxu0 0
        %3007 = vmatpush1.bf16.msra.mxu0 0
        %3008 = vmatprep.subr.bf16.mxu0 0
        %3009 = vmatpush1.bf16.msra.mxu0 0
        %3010 = vmatprep.subr.bf16.mxu0 0
        %3011 = vmatpush1.bf16.msra.mxu0 0
        %3012 = vmatprep.subr.bf16.mxu0 0
        %3013 = vmatpush1.bf16.msra.mxu0 0
        %3014 = vmatprep.subr.bf16.mxu0 0
        %3015 = vmatpush1.bf16.msra.mxu0 0
        %3016 = vmatprep.subr.bf16.mxu0 0
        %3017 = vmatpush1.bf16.msra.mxu0 0
        %3018 = vmatprep.subr.bf16.mxu0 0
        %3019 = vmatpush1.bf16.msra.mxu0 0
        %3020 = vmatprep.subr.bf16.mxu0 0
        %3021 = vmatpush1.bf16.msra.mxu0 0
        %3022 = vmatprep.subr.bf16.mxu0 0
        %3023 = vmatpush1.bf16.msra.mxu0 0
        %3024 = vmatprep.subr.bf16.mxu0 0
        %3025 = vmatpush1.bf16.msra.mxu0 0
        %3026 = vmatprep.subr.bf16.mxu0 0
        %3027 = vmatpush1.bf16.msra.mxu0 0
        %3028 = vmatprep.subr.bf16.mxu0 0
        %3029 = vmatpush1.bf16.msra.mxu0 0
        %3030 = vmatprep.mubr.bf16.mxu0 0
        %3031 = vmatmul.mubr.bf16.gmra.mrb[0].mxu0 %v2791
        %v3032 = vpop.f32.mrb[0].mxu0
        %v3033 = vadd.f32 0.0, %v3032
        %v3034 = vpop.f32.mrb[0].mxu0
        %v3035 = vadd.f32 0.0, %v3034
        %v3036 = vpop.f32.mrb[0].mxu0
        %v3037 = vpop.f32.mrb[0].mxu0
        %3038 = vdwg.mxu0
        %3039 = vmatprep.subr.bf16.mxu0 %v2755
        %3040 = vmatpush1.bf16.msra.mxu0 %v2754
        %3041 = vmatprep.subr.bf16.mxu0 0
        %3042 = vmatpush1.bf16.msra.mxu0 0
        %3043 = vmatprep.subr.bf16.mxu0 0
        %3044 = vmatpush1.bf16.msra.mxu0 0
        %3045 = vmatprep.subr.bf16.mxu0 0
        %3046 = vmatpush1.bf16.msra.mxu0 0
        %3047 = vmatprep.subr.bf16.mxu0 0
        %3048 = vmatpush1.bf16.msra.mxu0 0
        %3049 = vmatprep.subr.bf16.mxu0 0
        %3050 = vmatpush1.bf16.msra.mxu0 0
        %3051 = vmatprep.subr.bf16.mxu0 0
        %3052 = vmatpush1.bf16.msra.mxu0 0
        %3053 = vmatprep.subr.bf16.mxu0 0
        %3054 = vmatpush1.bf16.msra.mxu0 0
        %3055 = vmatprep.subr.bf16.mxu0 0
        %3056 = vmatpush1.bf16.msra.mxu0 0
        %3057 = vmatprep.subr.bf16.mxu0 0
        %3058 = vmatpush1.bf16.msra.mxu0 0
        %3059 = vmatprep.subr.bf16.mxu0 0
        %3060 = vmatpush1.bf16.msra.mxu0 0
        %3061 = vmatprep.subr.bf16.mxu0 0
        %3062 = vmatpush1.bf16.msra.mxu0 0
        %3063 = vmatprep.subr.bf16.mxu0 0
        %3064 = vmatpush1.bf16.msra.mxu0 0
        %3065 = vmatprep.subr.bf16.mxu0 0
        %3066 = vmatpush1.bf16.msra.mxu0 0
        %3067 = vmatprep.subr.bf16.mxu0 0
        %3068 = vmatpush1.bf16.msra.mxu0 0
        %3069 = vmatprep.subr.bf16.mxu0 0
        %3070 = vmatpush1.bf16.msra.mxu0 0
        %3071 = vmatprep.mubr.bf16.mxu0 0
        %3072 = vmatmul.mubr.bf16.gmra.mrb[0].mxu0 %v2791
        %v3073 = vpop.f32.mrb[0].mxu0
        %v3074 = vadd.f32 0.0, %v3073
        %v3075 = vpop.f32.mrb[0].mxu0
        %v3076 = vadd.f32 0.0, %v3075
        %v3077 = vpop.f32.mrb[0].mxu0
        %v3078 = vpop.f32.mrb[0].mxu0
        %3079 = vdwg.mxu0
        %3080 = vmatprep.subr.bf16.mxu0 %v2757
        %3081 = vmatpush1.bf16.msra.mxu0 %v2756
        %3082 = vmatprep.subr.bf16.mxu0 0
        %3083 = vmatpush1.bf16.msra.mxu0 0
        %3084 = vmatprep.subr.bf16.mxu0 0
        %3085 = vmatpush1.bf16.msra.mxu0 0
        %3086 = vmatprep.subr.bf16.mxu0 0
        %3087 = vmatpush1.bf16.msra.mxu0 0
        %3088 = vmatprep.subr.bf16.mxu0 0
        %3089 = vmatpush1.bf16.msra.mxu0 0
        %3090 = vmatprep.subr.bf16.mxu0 0
        %3091 = vmatpush1.bf16.msra.mxu0 0
        %3092 = vmatprep.subr.bf16.mxu0 0
        %3093 = vmatpush1.bf16.msra.mxu0 0
        %3094 = vmatprep.subr.bf16.mxu0 0
        %3095 = vmatpush1.bf16.msra.mxu0 0
        %3096 = vmatprep.subr.bf16.mxu0 0
        %3097 = vmatpush1.bf16.msra.mxu0 0
        %3098 = vmatprep.subr.bf16.mxu0 0
        %3099 = vmatpush1.bf16.msra.mxu0 0
        %3100 = vmatprep.subr.bf16.mxu0 0
        %3101 = vmatpush1.bf16.msra.mxu0 0
        %3102 = vmatprep.subr.bf16.mxu0 0
        %3103 = vmatpush1.bf16.msra.mxu0 0
        %3104 = vmatprep.subr.bf16.mxu0 0
        %3105 = vmatpush1.bf16.msra.mxu0 0
        %3106 = vmatprep.subr.bf16.mxu0 0
        %3107 = vmatpush1.bf16.msra.mxu0 0
        %3108 = vmatprep.subr.bf16.mxu0 0
        %3109 = vmatpush1.bf16.msra.mxu0 0
        %3110 = vmatprep.subr.bf16.mxu0 0
        %3111 = vmatpush1.bf16.msra.mxu0 0
        %3112 = vmatprep.mubr.bf16.mxu0 0
        %3113 = vmatmul.mubr.bf16.gmra.mrb[0].mxu0 %v2791
        %v3114 = vpop.f32.mrb[0].mxu0
        %v3115 = vadd.f32 0.0, %v3114
        %v3116 = vpop.f32.mrb[0].mxu0
        %v3117 = vadd.f32 0.0, %v3116
        %v3118 = vpop.f32.mrb[0].mxu0
        %v3119 = vpop.f32.mrb[0].mxu0
        %3120 = vdwg.mxu0
        %3121 = vmatprep.subr.bf16.mxu0 %v2759
        %3122 = vmatpush1.bf16.msra.mxu0 %v2758
        %3123 = vmatprep.subr.bf16.mxu0 0
        %3124 = vmatpush1.bf16.msra.mxu0 0
        %3125 = vmatprep.subr.bf16.mxu0 0
        %3126 = vmatpush1.bf16.msra.mxu0 0
        %3127 = vmatprep.subr.bf16.mxu0 0
        %3128 = vmatpush1.bf16.msra.mxu0 0
        %3129 = vmatprep.subr.bf16.mxu0 0
        %3130 = vmatpush1.bf16.msra.mxu0 0
        %3131 = vmatprep.subr.bf16.mxu0 0
        %3132 = vmatpush1.bf16.msra.mxu0 0
        %3133 = vmatprep.subr.bf16.mxu0 0
        %3134 = vmatpush1.bf16.msra.mxu0 0
        %3135 = vmatprep.subr.bf16.mxu0 0
        %3136 = vmatpush1.bf16.msra.mxu0 0
        %3137 = vmatprep.subr.bf16.mxu0 0
        %3138 = vmatpush1.bf16.msra.mxu0 0
        %3139 = vmatprep.subr.bf16.mxu0 0
        %3140 = vmatpush1.bf16.msra.mxu0 0
        %3141 = vmatprep.subr.bf16.mxu0 0
        %3142 = vmatpush1.bf16.msra.mxu0 0
        %3143 = vmatprep.subr.bf16.mxu0 0
        %3144 = vmatpush1.bf16.msra.mxu0 0
        %3145 = vmatprep.subr.bf16.mxu0 0
        %3146 = vmatpush1.bf16.msra.mxu0 0
        %3147 = vmatprep.subr.bf16.mxu0 0
        %3148 = vmatpush1.bf16.msra.mxu0 0
        %3149 = vmatprep.subr.bf16.mxu0 0
        %3150 = vmatpush1.bf16.msra.mxu0 0
        %3151 = vmatprep.subr.bf16.mxu0 0
        %3152 = vmatpush1.bf16.msra.mxu0 0
        %3153 = vmatprep.mubr.bf16.mxu0 0
        %3154 = vmatmul.mubr.bf16.gmra.mrb[0].mxu0 %v2791
        %v3155 = vpop.f32.mrb[0].mxu0
        %v3156 = vadd.f32 0.0, %v3155
        %v3157 = vpop.f32.mrb[0].mxu0
        %v3158 = vadd.f32 0.0, %v3157
        %v3159 = vpop.f32.mrb[0].mxu0
        %v3160 = vpop.f32.mrb[0].mxu0
        %3161 = vdwg.mxu0
        %3162 = vmatprep.subr.bf16.mxu0 %v2761
        %3163 = vmatpush1.bf16.msra.mxu0 %v2760
        %3164 = vmatprep.subr.bf16.mxu0 0
        %3165 = vmatpush1.bf16.msra.mxu0 0
        %3166 = vmatprep.subr.bf16.mxu0 0
        %3167 = vmatpush1.bf16.msra.mxu0 0
        %3168 = vmatprep.subr.bf16.mxu0 0
        %3169 = vmatpush1.bf16.msra.mxu0 0
        %3170 = vmatprep.subr.bf16.mxu0 0
        %3171 = vmatpush1.bf16.msra.mxu0 0
        %3172 = vmatprep.subr.bf16.mxu0 0
        %3173 = vmatpush1.bf16.msra.mxu0 0
        %3174 = vmatprep.subr.bf16.mxu0 0
        %3175 = vmatpush1.bf16.msra.mxu0 0
        %3176 = vmatprep.subr.bf16.mxu0 0
        %3177 = vmatpush1.bf16.msra.mxu0 0
        %3178 = vmatprep.subr.bf16.mxu0 0
        %3179 = vmatpush1.bf16.msra.mxu0 0
        %3180 = vmatprep.subr.bf16.mxu0 0
        %3181 = vmatpush1.bf16.msra.mxu0 0
        %3182 = vmatprep.subr.bf16.mxu0 0
        %3183 = vmatpush1.bf16.msra.mxu0 0
        %3184 = vmatprep.subr.bf16.mxu0 0
        %3185 = vmatpush1.bf16.msra.mxu0 0
        %3186 = vmatprep.subr.bf16.mxu0 0
        %3187 = vmatpush1.bf16.msra.mxu0 0
        %3188 = vmatprep.subr.bf16.mxu0 0
        %3189 = vmatpush1.bf16.msra.mxu0 0
        %3190 = vmatprep.subr.bf16.mxu0 0
        %3191 = vmatpush1.bf16.msra.mxu0 0
        %3192 = vmatprep.subr.bf16.mxu0 0
        %3193 = vmatpush1.bf16.msra.mxu0 0
        %3194 = vmatprep.mubr.bf16.mxu0 0
        %3195 = vmatmul.mubr.bf16.gmra.mrb[0].mxu0 %v2791
        %v3196 = vpop.f32.mrb[0].mxu0
        %v3197 = vadd.f32 0.0, %v3196
        %v3198 = vpop.f32.mrb[0].mxu0
        %v3199 = vadd.f32 0.0, %v3198
        %v3200 = vpop.f32.mrb[0].mxu0
        %v3201 = vpop.f32.mrb[0].mxu0
        %3202 = vdwg.mxu0
        %3203 = vmatprep.subr.bf16.mxu0 %v2763
        %3204 = vmatpush1.bf16.msra.mxu0 %v2762
        %3205 = vmatprep.subr.bf16.mxu0 0
        %3206 = vmatpush1.bf16.msra.mxu0 0
        %3207 = vmatprep.subr.bf16.mxu0 0
        %3208 = vmatpush1.bf16.msra.mxu0 0
        %3209 = vmatprep.subr.bf16.mxu0 0
        %3210 = vmatpush1.bf16.msra.mxu0 0
        %3211 = vmatprep.subr.bf16.mxu0 0
        %3212 = vmatpush1.bf16.msra.mxu0 0
        %3213 = vmatprep.subr.bf16.mxu0 0
        %3214 = vmatpush1.bf16.msra.mxu0 0
        %3215 = vmatprep.subr.bf16.mxu0 0
        %3216 = vmatpush1.bf16.msra.mxu0 0
        %3217 = vmatprep.subr.bf16.mxu0 0
        %3218 = vmatpush1.bf16.msra.mxu0 0
        %3219 = vmatprep.subr.bf16.mxu0 0
        %3220 = vmatpush1.bf16.msra.mxu0 0
        %3221 = vmatprep.subr.bf16.mxu0 0
        %3222 = vmatpush1.bf16.msra.mxu0 0
        %3223 = vmatprep.subr.bf16.mxu0 0
        %3224 = vmatpush1.bf16.msra.mxu0 0
        %3225 = vmatprep.subr.bf16.mxu0 0
        %3226 = vmatpush1.bf16.msra.mxu0 0
        %3227 = vmatprep.subr.bf16.mxu0 0
        %3228 = vmatpush1.bf16.msra.mxu0 0
        %3229 = vmatprep.subr.bf16.mxu0 0
        %3230 = vmatpush1.bf16.msra.mxu0 0
        %3231 = vmatprep.subr.bf16.mxu0 0
        %3232 = vmatpush1.bf16.msra.mxu0 0
        %3233 = vmatprep.subr.bf16.mxu0 0
        %3234 = vmatpush1.bf16.msra.mxu0 0
        %3235 = vmatprep.mubr.bf16.mxu0 0
        %3236 = vmatmul.mubr.bf16.gmra.mrb[0].mxu0 %v2791
        %v3237 = vpop.f32.mrb[0].mxu0
        %v3238 = vadd.f32 0.0, %v3237
        %v3239 = vpop.f32.mrb[0].mxu0
        %v3240 = vadd.f32 0.0, %v3239
        %v3241 = vpop.f32.mrb[0].mxu0
        %v3242 = vpop.f32.mrb[0].mxu0
        %3243 = vdwg.mxu0
        %3244 = vmatprep.subr.bf16.mxu0 %v2765
        %3245 = vmatpush1.bf16.msra.mxu0 %v2764
        %3246 = vmatprep.subr.bf16.mxu0 0
        %3247 = vmatpush1.bf16.msra.mxu0 0
        %3248 = vmatprep.subr.bf16.mxu0 0
        %3249 = vmatpush1.bf16.msra.mxu0 0
        %3250 = vmatprep.subr.bf16.mxu0 0
        %3251 = vmatpush1.bf16.msra.mxu0 0
        %3252 = vmatprep.subr.bf16.mxu0 0
        %3253 = vmatpush1.bf16.msra.mxu0 0
        %3254 = vmatprep.subr.bf16.mxu0 0
        %3255 = vmatpush1.bf16.msra.mxu0 0
        %3256 = vmatprep.subr.bf16.mxu0 0
        %3257 = vmatpush1.bf16.msra.mxu0 0
        %3258 = vmatprep.subr.bf16.mxu0 0
        %3259 = vmatpush1.bf16.msra.mxu0 0
        %3260 = vmatprep.subr.bf16.mxu0 0
        %3261 = vmatpush1.bf16.msra.mxu0 0
        %3262 = vmatprep.subr.bf16.mxu0 0
        %3263 = vmatpush1.bf16.msra.mxu0 0
        %3264 = vmatprep.subr.bf16.mxu0 0
        %3265 = vmatpush1.bf16.msra.mxu0 0
        %3266 = vmatprep.subr.bf16.mxu0 0
        %3267 = vmatpush1.bf16.msra.mxu0 0
        %3268 = vmatprep.subr.bf16.mxu0 0
        %3269 = vmatpush1.bf16.msra.mxu0 0
        %3270 = vmatprep.subr.bf16.mxu0 0
        %3271 = vmatpush1.bf16.msra.mxu0 0
        %3272 = vmatprep.subr.bf16.mxu0 0
        %3273 = vmatpush1.bf16.msra.mxu0 0
        %3274 = vmatprep.subr.bf16.mxu0 0
        %3275 = vmatpush1.bf16.msra.mxu0 0
        %3276 = vmatprep.mubr.bf16.mxu0 0
        %3277 = vmatmul.mubr.bf16.gmra.mrb[0].mxu0 %v2791
        %v3278 = vpop.f32.mrb[0].mxu0
        %v3279 = vadd.f32 0.0, %v3278
        %v3280 = vpop.f32.mrb[0].mxu0
        %v3281 = vadd.f32 0.0, %v3280
        %v3282 = vpop.f32.mrb[0].mxu0
        %v3283 = vpop.f32.mrb[0].mxu0
        %3284 = vdwg.mxu0
        %v3285 = vpack.c.bf16 %v2828, %v2828
        %v3286 = vpack.c.bf16 %v2992, %v2992
        %v3287 = vpack.c.bf16 %v3156, %v3156
        %3288 = vmatprep.subr.bf16.mxu0 0
        %3289 = vmatpush1.bf16.xpose.msra.mxu0 %v3286
        %3290 = vmatprep.subr.bf16.mxu0 0
        %3291 = vmatpush1.bf16.xpose.msra.mxu0 0
        %3292 = vmatprep.subr.bf16.mxu0 0
        %3293 = vmatpush1.bf16.xpose.msra.mxu0 0
        %3294 = vmatprep.subr.bf16.mxu0 0
        %3295 = vmatpush1.bf16.xpose.msra.mxu0 0
        %3296 = vmatprep.subr.bf16.mxu0 0
        %3297 = vmatpush1.bf16.xpose.msra.mxu0 0
        %3298 = vmatprep.subr.bf16.mxu0 0
        %3299 = vmatpush1.bf16.xpose.msra.mxu0 0
        %3300 = vmatprep.subr.bf16.mxu0 0
        %3301 = vmatpush1.bf16.xpose.msra.mxu0 0
        %3302 = vmatprep.subr.bf16.mxu0 0
        %3303 = vmatpush1.bf16.xpose.msra.mxu0 0
        %3304 = vmatprep.subr.bf16.mxu0 0
        %3305 = vmatpush1.bf16.xpose.msra.mxu0 0
        %3306 = vmatprep.subr.bf16.mxu0 0
        %3307 = vmatpush1.bf16.xpose.msra.mxu0 0
        %3308 = vmatprep.subr.bf16.mxu0 0
        %3309 = vmatpush1.bf16.xpose.msra.mxu0 0
        %3310 = vmatprep.subr.bf16.mxu0 0
        %3311 = vmatpush1.bf16.xpose.msra.mxu0 0
        %3312 = vmatprep.subr.bf16.mxu0 0
        %3313 = vmatpush1.bf16.xpose.msra.mxu0 0
        %3314 = vmatprep.subr.bf16.mxu0 0
        %3315 = vmatpush1.bf16.xpose.msra.mxu0 0
        %3316 = vmatprep.subr.bf16.mxu0 0
        %3317 = vmatpush1.bf16.xpose.msra.mxu0 0
        %3318 = vmatprep.subr.bf16.mxu0 0
        %3319 = vmatpush1.bf16.xpose.msra.mxu0 0
        %3320 = vmatprep.mubr.bf16.mxu0 0
        %3321 = vmatmul.mubr.bf16.gmra.mrb[0].mxu0 %v3285
        %v3322 = vpop.f32.mrb[0].mxu0
        %v3323 = vadd.f32 0.0, %v3322
        %v3324 = vpop.f32.mrb[0].mxu0
        %v3325 = vpop.f32.mrb[0].mxu0
        %v3326 = vpop.f32.mrb[0].mxu0
        %3327 = vdwg.mxu0
        %v3328 = vsel %vm1481, %v3323, -inf
        %3329 = vmax.xlane.f32.xlu0 %v3328
        %v3330 = vpop.xlane.xlu0 %3329
        %v3331 = vsub.f32 %v3323, %v3330
        %v3332 = vmul.f32 %v3331, 1.442695
        %v3333 = vpow.pop %v3332
        %v3334 = vsel %vm1481, %v3333, 0.0
        %3335 = vadd.xlane.f32.xlu0 %v3334
        %v3336 = vpop.xlane.xlu0 %3335
        %v3337 = vrcp.pop %v3336
        %v3338 = vmul.f32 %v3333, %v3337
        %v3339 = vpack.c.bf16 %v3338, %v3338
        %v3341 = vsel %vm1481, %v3339, 0
        %v3344 = vsel %vm1497, %v3287, 0
        %3346 = vmatprep.subr.bf16.mxu0 0
        %3347 = vmatpush1.bf16.msra.mxu0 %v3344
        %3348 = vmatprep.subr.bf16.mxu0 0
        %3349 = vmatpush1.bf16.msra.mxu0 0
        %3350 = vmatprep.subr.bf16.mxu0 0
        %3351 = vmatpush1.bf16.msra.mxu0 0
        %3352 = vmatprep.subr.bf16.mxu0 0
        %3353 = vmatpush1.bf16.msra.mxu0 0
        %3354 = vmatprep.subr.bf16.mxu0 0
        %3355 = vmatpush1.bf16.msra.mxu0 0
        %3356 = vmatprep.subr.bf16.mxu0 0
        %3357 = vmatpush1.bf16.msra.mxu0 0
        %3358 = vmatprep.subr.bf16.mxu0 0
        %3359 = vmatpush1.bf16.msra.mxu0 0
        %3360 = vmatprep.subr.bf16.mxu0 0
        %3361 = vmatpush1.bf16.msra.mxu0 0
        %3362 = vmatprep.subr.bf16.mxu0 0
        %3363 = vmatpush1.bf16.msra.mxu0 0
        %3364 = vmatprep.subr.bf16.mxu0 0
        %3365 = vmatpush1.bf16.msra.mxu0 0
        %3366 = vmatprep.subr.bf16.mxu0 0
        %3367 = vmatpush1.bf16.msra.mxu0 0
        %3368 = vmatprep.subr.bf16.mxu0 0
        %3369 = vmatpush1.bf16.msra.mxu0 0
        %3370 = vmatprep.subr.bf16.mxu0 0
        %3371 = vmatpush1.bf16.msra.mxu0 0
        %3372 = vmatprep.subr.bf16.mxu0 0
        %3373 = vmatpush1.bf16.msra.mxu0 0
        %3374 = vmatprep.subr.bf16.mxu0 0
        %3375 = vmatpush1.bf16.msra.mxu0 0
        %3376 = vmatprep.subr.bf16.mxu0 0
        %3377 = vmatpush1.bf16.msra.mxu0 0
        %3378 = vmatprep.mubr.bf16.mxu0 0
        %3379 = vmatmul.mubr.bf16.gmra.mrb[0].mxu0 %v3341
        %v3380 = vpop.f32.mrb[0].mxu0
        %v3381 = vadd.f32 0.0, %v3380
        %v3382 = vpop.f32.mrb[0].mxu0
        %v3383 = vpop.f32.mrb[0].mxu0
        %v3384 = vpop.f32.mrb[0].mxu0
        %3385 = vdwg.mxu0
        %v3386 = vpack.c.bf16 %v2830, %v2830
        %v3387 = vpack.c.bf16 %v2994, %v2994
        %v3388 = vpack.c.bf16 %v3158, %v3158
        %3389 = vmatprep.subr.bf16.mxu0 0
        %3390 = vmatpush1.bf16.xpose.msra.mxu0 %v3387
        %3391 = vmatprep.subr.bf16.mxu0 0
        %3392 = vmatpush1.bf16.xpose.msra.mxu0 0
        %3393 = vmatprep.subr.bf16.mxu0 0
        %3394 = vmatpush1.bf16.xpose.msra.mxu0 0
        %3395 = vmatprep.subr.bf16.mxu0 0
        %3396 = vmatpush1.bf16.xpose.msra.mxu0 0
        %3397 = vmatprep.subr.bf16.mxu0 0
        %3398 = vmatpush1.bf16.xpose.msra.mxu0 0
        %3399 = vmatprep.subr.bf16.mxu0 0
        %3400 = vmatpush1.bf16.xpose.msra.mxu0 0
        %3401 = vmatprep.subr.bf16.mxu0 0
        %3402 = vmatpush1.bf16.xpose.msra.mxu0 0
        %3403 = vmatprep.subr.bf16.mxu0 0
        %3404 = vmatpush1.bf16.xpose.msra.mxu0 0
        %3405 = vmatprep.subr.bf16.mxu0 0
        %3406 = vmatpush1.bf16.xpose.msra.mxu0 0
        %3407 = vmatprep.subr.bf16.mxu0 0
        %3408 = vmatpush1.bf16.xpose.msra.mxu0 0
        %3409 = vmatprep.subr.bf16.mxu0 0
        %3410 = vmatpush1.bf16.xpose.msra.mxu0 0
        %3411 = vmatprep.subr.bf16.mxu0 0
        %3412 = vmatpush1.bf16.xpose.msra.mxu0 0
        %3413 = vmatprep.subr.bf16.mxu0 0
        %3414 = vmatpush1.bf16.xpose.msra.mxu0 0
        %3415 = vmatprep.subr.bf16.mxu0 0
        %3416 = vmatpush1.bf16.xpose.msra.mxu0 0
        %3417 = vmatprep.subr.bf16.mxu0 0
        %3418 = vmatpush1.bf16.xpose.msra.mxu0 0
        %3419 = vmatprep.subr.bf16.mxu0 0
        %3420 = vmatpush1.bf16.xpose.msra.mxu0 0
        %3421 = vmatprep.mubr.bf16.mxu0 0
        %3422 = vmatmul.mubr.bf16.gmra.mrb[0].mxu0 %v3386
        %v3423 = vpop.f32.mrb[0].mxu0
        %v3424 = vadd.f32 0.0, %v3423
        %v3425 = vpop.f32.mrb[0].mxu0
        %v3426 = vpop.f32.mrb[0].mxu0
        %v3427 = vpop.f32.mrb[0].mxu0
        %3428 = vdwg.mxu0
        %v3429 = vsel %vm1481, %v3424, -inf
        %3430 = vmax.xlane.f32.xlu0 %v3429
        %v3431 = vpop.xlane.xlu0 %3430
        %v3432 = vsub.f32 %v3424, %v3431
        %v3433 = vmul.f32 %v3432, 1.442695
        %v3434 = vpow.pop %v3433
        %v3435 = vsel %vm1481, %v3434, 0.0
        %3436 = vadd.xlane.f32.xlu0 %v3435
        %v3437 = vpop.xlane.xlu0 %3436
        %v3438 = vrcp.pop %v3437
        %v3439 = vmul.f32 %v3434, %v3438
        %v3440 = vpack.c.bf16 %v3439, %v3439
        %v3442 = vsel %vm1481, %v3440, 0
        %v3445 = vsel %vm1497, %v3388, 0
        %3447 = vmatprep.subr.bf16.mxu0 0
        %3448 = vmatpush1.bf16.msra.mxu0 %v3445
        %3449 = vmatprep.subr.bf16.mxu0 0
        %3450 = vmatpush1.bf16.msra.mxu0 0
        %3451 = vmatprep.subr.bf16.mxu0 0
        %3452 = vmatpush1.bf16.msra.mxu0 0
        %3453 = vmatprep.subr.bf16.mxu0 0
        %3454 = vmatpush1.bf16.msra.mxu0 0
        %3455 = vmatprep.subr.bf16.mxu0 0
        %3456 = vmatpush1.bf16.msra.mxu0 0
        %3457 = vmatprep.subr.bf16.mxu0 0
        %3458 = vmatpush1.bf16.msra.mxu0 0
        %3459 = vmatprep.subr.bf16.mxu0 0
        %3460 = vmatpush1.bf16.msra.mxu0 0
        %3461 = vmatprep.subr.bf16.mxu0 0
        %3462 = vmatpush1.bf16.msra.mxu0 0
        %3463 = vmatprep.subr.bf16.mxu0 0
        %3464 = vmatpush1.bf16.msra.mxu0 0
        %3465 = vmatprep.subr.bf16.mxu0 0
        %3466 = vmatpush1.bf16.msra.mxu0 0
        %3467 = vmatprep.subr.bf16.mxu0 0
        %3468 = vmatpush1.bf16.msra.mxu0 0
        %3469 = vmatprep.subr.bf16.mxu0 0
        %3470 = vmatpush1.bf16.msra.mxu0 0
        %3471 = vmatprep.subr.bf16.mxu0 0
        %3472 = vmatpush1.bf16.msra.mxu0 0
        %3473 = vmatprep.subr.bf16.mxu0 0
        %3474 = vmatpush1.bf16.msra.mxu0 0
        %3475 = vmatprep.subr.bf16.mxu0 0
        %3476 = vmatpush1.bf16.msra.mxu0 0
        %3477 = vmatprep.subr.bf16.mxu0 0
        %3478 = vmatpush1.bf16.msra.mxu0 0
        %3479 = vmatprep.mubr.bf16.mxu0 0
        %3480 = vmatmul.mubr.bf16.gmra.mrb[0].mxu0 %v3442
        %v3481 = vpop.f32.mrb[0].mxu0
        %v3482 = vadd.f32 0.0, %v3481
        %v3483 = vpop.f32.mrb[0].mxu0
        %v3484 = vpop.f32.mrb[0].mxu0
        %v3485 = vpop.f32.mrb[0].mxu0
        %3486 = vdwg.mxu0
        %v3487 = vpack.c.bf16 %v2869, %v2869
        %v3488 = vpack.c.bf16 %v3033, %v3033
        %v3489 = vpack.c.bf16 %v3197, %v3197
        %3490 = vmatprep.subr.bf16.mxu0 0
        %3491 = vmatpush1.bf16.xpose.msra.mxu0 %v3488
        %3492 = vmatprep.subr.bf16.mxu0 0
        %3493 = vmatpush1.bf16.xpose.msra.mxu0 0
        %3494 = vmatprep.subr.bf16.mxu0 0
        %3495 = vmatpush1.bf16.xpose.msra.mxu0 0
        %3496 = vmatprep.subr.bf16.mxu0 0
        %3497 = vmatpush1.bf16.xpose.msra.mxu0 0
        %3498 = vmatprep.subr.bf16.mxu0 0
        %3499 = vmatpush1.bf16.xpose.msra.mxu0 0
        %3500 = vmatprep.subr.bf16.mxu0 0
        %3501 = vmatpush1.bf16.xpose.msra.mxu0 0
        %3502 = vmatprep.subr.bf16.mxu0 0
        %3503 = vmatpush1.bf16.xpose.msra.mxu0 0
        %3504 = vmatprep.subr.bf16.mxu0 0
        %3505 = vmatpush1.bf16.xpose.msra.mxu0 0
        %3506 = vmatprep.subr.bf16.mxu0 0
        %3507 = vmatpush1.bf16.xpose.msra.mxu0 0
        %3508 = vmatprep.subr.bf16.mxu0 0
        %3509 = vmatpush1.bf16.xpose.msra.mxu0 0
        %3510 = vmatprep.subr.bf16.mxu0 0
        %3511 = vmatpush1.bf16.xpose.msra.mxu0 0
        %3512 = vmatprep.subr.bf16.mxu0 0
        %3513 = vmatpush1.bf16.xpose.msra.mxu0 0
        %3514 = vmatprep.subr.bf16.mxu0 0
        %3515 = vmatpush1.bf16.xpose.msra.mxu0 0
        %3516 = vmatprep.subr.bf16.mxu0 0
        %3517 = vmatpush1.bf16.xpose.msra.mxu0 0
        %3518 = vmatprep.subr.bf16.mxu0 0
        %3519 = vmatpush1.bf16.xpose.msra.mxu0 0
        %3520 = vmatprep.subr.bf16.mxu0 0
        %3521 = vmatpush1.bf16.xpose.msra.mxu0 0
        %3522 = vmatprep.mubr.bf16.mxu0 0
        %3523 = vmatmul.mubr.bf16.gmra.mrb[0].mxu0 %v3487
        %v3524 = vpop.f32.mrb[0].mxu0
        %v3525 = vadd.f32 0.0, %v3524
        %v3526 = vpop.f32.mrb[0].mxu0
        %v3527 = vpop.f32.mrb[0].mxu0
        %v3528 = vpop.f32.mrb[0].mxu0
        %3529 = vdwg.mxu0
        %v3530 = vsel %vm1481, %v3525, -inf
        %3531 = vmax.xlane.f32.xlu0 %v3530
        %v3532 = vpop.xlane.xlu0 %3531
        %v3533 = vsub.f32 %v3525, %v3532
        %v3534 = vmul.f32 %v3533, 1.442695
        %v3535 = vpow.pop %v3534
        %v3536 = vsel %vm1481, %v3535, 0.0
        %3537 = vadd.xlane.f32.xlu0 %v3536
        %v3538 = vpop.xlane.xlu0 %3537
        %v3539 = vrcp.pop %v3538
        %v3540 = vmul.f32 %v3535, %v3539
        %v3541 = vpack.c.bf16 %v3540, %v3540
        %v3543 = vsel %vm1481, %v3541, 0
        %v3546 = vsel %vm1497, %v3489, 0
        %3548 = vmatprep.subr.bf16.mxu0 0
        %3549 = vmatpush1.bf16.msra.mxu0 %v3546
        %3550 = vmatprep.subr.bf16.mxu0 0
        %3551 = vmatpush1.bf16.msra.mxu0 0
        %3552 = vmatprep.subr.bf16.mxu0 0
        %3553 = vmatpush1.bf16.msra.mxu0 0
        %3554 = vmatprep.subr.bf16.mxu0 0
        %3555 = vmatpush1.bf16.msra.mxu0 0
        %3556 = vmatprep.subr.bf16.mxu0 0
        %3557 = vmatpush1.bf16.msra.mxu0 0
        %3558 = vmatprep.subr.bf16.mxu0 0
        %3559 = vmatpush1.bf16.msra.mxu0 0
        %3560 = vmatprep.subr.bf16.mxu0 0
        %3561 = vmatpush1.bf16.msra.mxu0 0
        %3562 = vmatprep.subr.bf16.mxu0 0
        %3563 = vmatpush1.bf16.msra.mxu0 0
        %3564 = vmatprep.subr.bf16.mxu0 0
        %3565 = vmatpush1.bf16.msra.mxu0 0
        %3566 = vmatprep.subr.bf16.mxu0 0
        %3567 = vmatpush1.bf16.msra.mxu0 0
        %3568 = vmatprep.subr.bf16.mxu0 0
        %3569 = vmatpush1.bf16.msra.mxu0 0
        %3570 = vmatprep.subr.bf16.mxu0 0
        %3571 = vmatpush1.bf16.msra.mxu0 0
        %3572 = vmatprep.subr.bf16.mxu0 0
        %3573 = vmatpush1.bf16.msra.mxu0 0
        %3574 = vmatprep.subr.bf16.mxu0 0
        %3575 = vmatpush1.bf16.msra.mxu0 0
        %3576 = vmatprep.subr.bf16.mxu0 0
        %3577 = vmatpush1.bf16.msra.mxu0 0
        %3578 = vmatprep.subr.bf16.mxu0 0
        %3579 = vmatpush1.bf16.msra.mxu0 0
        %3580 = vmatprep.mubr.bf16.mxu0 0
        %3581 = vmatmul.mubr.bf16.gmra.mrb[0].mxu0 %v3543
        %v3582 = vpop.f32.mrb[0].mxu0
        %v3583 = vadd.f32 0.0, %v3582
        %v3584 = vpop.f32.mrb[0].mxu0
        %v3585 = vpop.f32.mrb[0].mxu0
        %v3586 = vpop.f32.mrb[0].mxu0
        %3587 = vdwg.mxu0
        %v3588 = vpack.c.bf16 %v2871, %v2871
        %v3589 = vpack.c.bf16 %v3035, %v3035
        %v3590 = vpack.c.bf16 %v3199, %v3199
        %3591 = vmatprep.subr.bf16.mxu0 0
        %3592 = vmatpush1.bf16.xpose.msra.mxu0 %v3589
        %3593 = vmatprep.subr.bf16.mxu0 0
        %3594 = vmatpush1.bf16.xpose.msra.mxu0 0
        %3595 = vmatprep.subr.bf16.mxu0 0
        %3596 = vmatpush1.bf16.xpose.msra.mxu0 0
        %3597 = vmatprep.subr.bf16.mxu0 0
        %3598 = vmatpush1.bf16.xpose.msra.mxu0 0
        %3599 = vmatprep.subr.bf16.mxu0 0
        %3600 = vmatpush1.bf16.xpose.msra.mxu0 0
        %3601 = vmatprep.subr.bf16.mxu0 0
        %3602 = vmatpush1.bf16.xpose.msra.mxu0 0
        %3603 = vmatprep.subr.bf16.mxu0 0
        %3604 = vmatpush1.bf16.xpose.msra.mxu0 0
        %3605 = vmatprep.subr.bf16.mxu0 0
        %3606 = vmatpush1.bf16.xpose.msra.mxu0 0
        %3607 = vmatprep.subr.bf16.mxu0 0
        %3608 = vmatpush1.bf16.xpose.msra.mxu0 0
        %3609 = vmatprep.subr.bf16.mxu0 0
        %3610 = vmatpush1.bf16.xpose.msra.mxu0 0
        %3611 = vmatprep.subr.bf16.mxu0 0
        %3612 = vmatpush1.bf16.xpose.msra.mxu0 0
        %3613 = vmatprep.subr.bf16.mxu0 0
        %3614 = vmatpush1.bf16.xpose.msra.mxu0 0
        %3615 = vmatprep.subr.bf16.mxu0 0
        %3616 = vmatpush1.bf16.xpose.msra.mxu0 0
        %3617 = vmatprep.subr.bf16.mxu0 0
        %3618 = vmatpush1.bf16.xpose.msra.mxu0 0
        %3619 = vmatprep.subr.bf16.mxu0 0
        %3620 = vmatpush1.bf16.xpose.msra.mxu0 0
        %3621 = vmatprep.subr.bf16.mxu0 0
        %3622 = vmatpush1.bf16.xpose.msra.mxu0 0
        %3623 = vmatprep.mubr.bf16.mxu0 0
        %3624 = vmatmul.mubr.bf16.gmra.mrb[0].mxu0 %v3588
        %v3625 = vpop.f32.mrb[0].mxu0
        %v3626 = vadd.f32 0.0, %v3625
        %v3627 = vpop.f32.mrb[0].mxu0
        %v3628 = vpop.f32.mrb[0].mxu0
        %v3629 = vpop.f32.mrb[0].mxu0
        %3630 = vdwg.mxu0
        %v3631 = vsel %vm1481, %v3626, -inf
        %3632 = vmax.xlane.f32.xlu0 %v3631
        %v3633 = vpop.xlane.xlu0 %3632
        %v3634 = vsub.f32 %v3626, %v3633
        %v3635 = vmul.f32 %v3634, 1.442695
        %v3636 = vpow.pop %v3635
        %v3637 = vsel %vm1481, %v3636, 0.0
        %3638 = vadd.xlane.f32.xlu0 %v3637
        %v3639 = vpop.xlane.xlu0 %3638
        %v3640 = vrcp.pop %v3639
        %v3641 = vmul.f32 %v3636, %v3640
        %v3642 = vpack.c.bf16 %v3641, %v3641
        %v3644 = vsel %vm1481, %v3642, 0
        %v3647 = vsel %vm1497, %v3590, 0
        %3649 = vmatprep.subr.bf16.mxu0 0
        %3650 = vmatpush1.bf16.msra.mxu0 %v3647
        %3651 = vmatprep.subr.bf16.mxu0 0
        %3652 = vmatpush1.bf16.msra.mxu0 0
        %3653 = vmatprep.subr.bf16.mxu0 0
        %3654 = vmatpush1.bf16.msra.mxu0 0
        %3655 = vmatprep.subr.bf16.mxu0 0
        %3656 = vmatpush1.bf16.msra.mxu0 0
        %3657 = vmatprep.subr.bf16.mxu0 0
        %3658 = vmatpush1.bf16.msra.mxu0 0
        %3659 = vmatprep.subr.bf16.mxu0 0
        %3660 = vmatpush1.bf16.msra.mxu0 0
        %3661 = vmatprep.subr.bf16.mxu0 0
        %3662 = vmatpush1.bf16.msra.mxu0 0
        %3663 = vmatprep.subr.bf16.mxu0 0
        %3664 = vmatpush1.bf16.msra.mxu0 0
        %3665 = vmatprep.subr.bf16.mxu0 0
        %3666 = vmatpush1.bf16.msra.mxu0 0
        %3667 = vmatprep.subr.bf16.mxu0 0
        %3668 = vmatpush1.bf16.msra.mxu0 0
        %3669 = vmatprep.subr.bf16.mxu0 0
        %3670 = vmatpush1.bf16.msra.mxu0 0
        %3671 = vmatprep.subr.bf16.mxu0 0
        %3672 = vmatpush1.bf16.msra.mxu0 0
        %3673 = vmatprep.subr.bf16.mxu0 0
        %3674 = vmatpush1.bf16.msra.mxu0 0
        %3675 = vmatprep.subr.bf16.mxu0 0
        %3676 = vmatpush1.bf16.msra.mxu0 0
        %3677 = vmatprep.subr.bf16.mxu0 0
        %3678 = vmatpush1.bf16.msra.mxu0 0
        %3679 = vmatprep.subr.bf16.mxu0 0
        %3680 = vmatpush1.bf16.msra.mxu0 0
        %3681 = vmatprep.mubr.bf16.mxu0 0
        %3682 = vmatmul.mubr.bf16.gmra.mrb[0].mxu0 %v3644
        %v3683 = vpop.f32.mrb[0].mxu0
        %v3684 = vadd.f32 0.0, %v3683
        %v3685 = vpop.f32.mrb[0].mxu0
        %v3686 = vpop.f32.mrb[0].mxu0
        %v3687 = vpop.f32.mrb[0].mxu0
        %3688 = vdwg.mxu0
        %v3689 = vpack.c.bf16 %v2910, %v2910
        %v3690 = vpack.c.bf16 %v3074, %v3074
        %v3691 = vpack.c.bf16 %v3238, %v3238
        %3692 = vmatprep.subr.bf16.mxu0 0
        %3693 = vmatpush1.bf16.xpose.msra.mxu0 %v3690
        %3694 = vmatprep.subr.bf16.mxu0 0
        %3695 = vmatpush1.bf16.xpose.msra.mxu0 0
        %3696 = vmatprep.subr.bf16.mxu0 0
        %3697 = vmatpush1.bf16.xpose.msra.mxu0 0
        %3698 = vmatprep.subr.bf16.mxu0 0
        %3699 = vmatpush1.bf16.xpose.msra.mxu0 0
        %3700 = vmatprep.subr.bf16.mxu0 0
        %3701 = vmatpush1.bf16.xpose.msra.mxu0 0
        %3702 = vmatprep.subr.bf16.mxu0 0
        %3703 = vmatpush1.bf16.xpose.msra.mxu0 0
        %3704 = vmatprep.subr.bf16.mxu0 0
        %3705 = vmatpush1.bf16.xpose.msra.mxu0 0
        %3706 = vmatprep.subr.bf16.mxu0 0
        %3707 = vmatpush1.bf16.xpose.msra.mxu0 0
        %3708 = vmatprep.subr.bf16.mxu0 0
        %3709 = vmatpush1.bf16.xpose.msra.mxu0 0
        %3710 = vmatprep.subr.bf16.mxu0 0
        %3711 = vmatpush1.bf16.xpose.msra.mxu0 0
        %3712 = vmatprep.subr.bf16.mxu0 0
        %3713 = vmatpush1.bf16.xpose.msra.mxu0 0
        %3714 = vmatprep.subr.bf16.mxu0 0
        %3715 = vmatpush1.bf16.xpose.msra.mxu0 0
        %3716 = vmatprep.subr.bf16.mxu0 0
        %3717 = vmatpush1.bf16.xpose.msra.mxu0 0
        %3718 = vmatprep.subr.bf16.mxu0 0
        %3719 = vmatpush1.bf16.xpose.msra.mxu0 0
        %3720 = vmatprep.subr.bf16.mxu0 0
        %3721 = vmatpush1.bf16.xpose.msra.mxu0 0
        %3722 = vmatprep.subr.bf16.mxu0 0
        %3723 = vmatpush1.bf16.xpose.msra.mxu0 0
        %3724 = vmatprep.mubr.bf16.mxu0 0
        %3725 = vmatmul.mubr.bf16.gmra.mrb[0].mxu0 %v3689
        %v3726 = vpop.f32.mrb[0].mxu0
        %v3727 = vadd.f32 0.0, %v3726
        %v3728 = vpop.f32.mrb[0].mxu0
        %v3729 = vpop.f32.mrb[0].mxu0
        %v3730 = vpop.f32.mrb[0].mxu0
        %3731 = vdwg.mxu0
        %v3732 = vsel %vm1481, %v3727, -inf
        %3733 = vmax.xlane.f32.xlu0 %v3732
        %v3734 = vpop.xlane.xlu0 %3733
        %v3735 = vsub.f32 %v3727, %v3734
        %v3736 = vmul.f32 %v3735, 1.442695
        %v3737 = vpow.pop %v3736
        %v3738 = vsel %vm1481, %v3737, 0.0
        %3739 = vadd.xlane.f32.xlu0 %v3738
        %v3740 = vpop.xlane.xlu0 %3739
        %v3741 = vrcp.pop %v3740
        %v3742 = vmul.f32 %v3737, %v3741
        %v3743 = vpack.c.bf16 %v3742, %v3742
        %v3745 = vsel %vm1481, %v3743, 0
        %v3748 = vsel %vm1497, %v3691, 0
        %3750 = vmatprep.subr.bf16.mxu0 0
        %3751 = vmatpush1.bf16.msra.mxu0 %v3748
        %3752 = vmatprep.subr.bf16.mxu0 0
        %3753 = vmatpush1.bf16.msra.mxu0 0
        %3754 = vmatprep.subr.bf16.mxu0 0
        %3755 = vmatpush1.bf16.msra.mxu0 0
        %3756 = vmatprep.subr.bf16.mxu0 0
        %3757 = vmatpush1.bf16.msra.mxu0 0
        %3758 = vmatprep.subr.bf16.mxu0 0
        %3759 = vmatpush1.bf16.msra.mxu0 0
        %3760 = vmatprep.subr.bf16.mxu0 0
        %3761 = vmatpush1.bf16.msra.mxu0 0
        %3762 = vmatprep.subr.bf16.mxu0 0
        %3763 = vmatpush1.bf16.msra.mxu0 0
        %3764 = vmatprep.subr.bf16.mxu0 0
        %3765 = vmatpush1.bf16.msra.mxu0 0
        %3766 = vmatprep.subr.bf16.mxu0 0
        %3767 = vmatpush1.bf16.msra.mxu0 0
        %3768 = vmatprep.subr.bf16.mxu0 0
        %3769 = vmatpush1.bf16.msra.mxu0 0
        %3770 = vmatprep.subr.bf16.mxu0 0
        %3771 = vmatpush1.bf16.msra.mxu0 0
        %3772 = vmatprep.subr.bf16.mxu0 0
        %3773 = vmatpush1.bf16.msra.mxu0 0
        %3774 = vmatprep.subr.bf16.mxu0 0
        %3775 = vmatpush1.bf16.msra.mxu0 0
        %3776 = vmatprep.subr.bf16.mxu0 0
        %3777 = vmatpush1.bf16.msra.mxu0 0
        %3778 = vmatprep.subr.bf16.mxu0 0
        %3779 = vmatpush1.bf16.msra.mxu0 0
        %3780 = vmatprep.subr.bf16.mxu0 0
        %3781 = vmatpush1.bf16.msra.mxu0 0
        %3782 = vmatprep.mubr.bf16.mxu0 0
        %3783 = vmatmul.mubr.bf16.gmra.mrb[0].mxu0 %v3745
        %v3784 = vpop.f32.mrb[0].mxu0
        %v3785 = vadd.f32 0.0, %v3784
        %v3786 = vpop.f32.mrb[0].mxu0
        %v3787 = vpop.f32.mrb[0].mxu0
        %v3788 = vpop.f32.mrb[0].mxu0
        %3789 = vdwg.mxu0
        %v3790 = vpack.c.bf16 %v2912, %v2912
        %v3791 = vpack.c.bf16 %v3076, %v3076
        %v3792 = vpack.c.bf16 %v3240, %v3240
        %3793 = vmatprep.subr.bf16.mxu0 0
        %3794 = vmatpush1.bf16.xpose.msra.mxu0 %v3791
        %3795 = vmatprep.subr.bf16.mxu0 0
        %3796 = vmatpush1.bf16.xpose.msra.mxu0 0
        %3797 = vmatprep.subr.bf16.mxu0 0
        %3798 = vmatpush1.bf16.xpose.msra.mxu0 0
        %3799 = vmatprep.subr.bf16.mxu0 0
        %3800 = vmatpush1.bf16.xpose.msra.mxu0 0
        %3801 = vmatprep.subr.bf16.mxu0 0
        %3802 = vmatpush1.bf16.xpose.msra.mxu0 0
        %3803 = vmatprep.subr.bf16.mxu0 0
        %3804 = vmatpush1.bf16.xpose.msra.mxu0 0
        %3805 = vmatprep.subr.bf16.mxu0 0
        %3806 = vmatpush1.bf16.xpose.msra.mxu0 0
        %3807 = vmatprep.subr.bf16.mxu0 0
        %3808 = vmatpush1.bf16.xpose.msra.mxu0 0
        %3809 = vmatprep.subr.bf16.mxu0 0
        %3810 = vmatpush1.bf16.xpose.msra.mxu0 0
        %3811 = vmatprep.subr.bf16.mxu0 0
        %3812 = vmatpush1.bf16.xpose.msra.mxu0 0
        %3813 = vmatprep.subr.bf16.mxu0 0
        %3814 = vmatpush1.bf16.xpose.msra.mxu0 0
        %3815 = vmatprep.subr.bf16.mxu0 0
        %3816 = vmatpush1.bf16.xpose.msra.mxu0 0
        %3817 = vmatprep.subr.bf16.mxu0 0
        %3818 = vmatpush1.bf16.xpose.msra.mxu0 0
        %3819 = vmatprep.subr.bf16.mxu0 0
        %3820 = vmatpush1.bf16.xpose.msra.mxu0 0
        %3821 = vmatprep.subr.bf16.mxu0 0
        %3822 = vmatpush1.bf16.xpose.msra.mxu0 0
        %3823 = vmatprep.subr.bf16.mxu0 0
        %3824 = vmatpush1.bf16.xpose.msra.mxu0 0
        %3825 = vmatprep.mubr.bf16.mxu0 0
        %3826 = vmatmul.mubr.bf16.gmra.mrb[0].mxu0 %v3790
        %v3827 = vpop.f32.mrb[0].mxu0
        %v3828 = vadd.f32 0.0, %v3827
        %v3829 = vpop.f32.mrb[0].mxu0
        %v3830 = vpop.f32.mrb[0].mxu0
        %v3831 = vpop.f32.mrb[0].mxu0
        %3832 = vdwg.mxu0
        %v3833 = vsel %vm1481, %v3828, -inf
        %3834 = vmax.xlane.f32.xlu0 %v3833
        %v3835 = vpop.xlane.xlu0 %3834
        %v3836 = vsub.f32 %v3828, %v3835
        %v3837 = vmul.f32 %v3836, 1.442695
        %v3838 = vpow.pop %v3837
        %v3839 = vsel %vm1481, %v3838, 0.0
        %3840 = vadd.xlane.f32.xlu0 %v3839
        %v3841 = vpop.xlane.xlu0 %3840
        %v3842 = vrcp.pop %v3841
        %v3843 = vmul.f32 %v3838, %v3842
        %v3844 = vpack.c.bf16 %v3843, %v3843
        %v3846 = vsel %vm1481, %v3844, 0
        %v3849 = vsel %vm1497, %v3792, 0
        %3851 = vmatprep.subr.bf16.mxu0 0
        %3852 = vmatpush1.bf16.msra.mxu0 %v3849
        %3853 = vmatprep.subr.bf16.mxu0 0
        %3854 = vmatpush1.bf16.msra.mxu0 0
        %3855 = vmatprep.subr.bf16.mxu0 0
        %3856 = vmatpush1.bf16.msra.mxu0 0
        %3857 = vmatprep.subr.bf16.mxu0 0
        %3858 = vmatpush1.bf16.msra.mxu0 0
        %3859 = vmatprep.subr.bf16.mxu0 0
        %3860 = vmatpush1.bf16.msra.mxu0 0
        %3861 = vmatprep.subr.bf16.mxu0 0
        %3862 = vmatpush1.bf16.msra.mxu0 0
        %3863 = vmatprep.subr.bf16.mxu0 0
        %3864 = vmatpush1.bf16.msra.mxu0 0
        %3865 = vmatprep.subr.bf16.mxu0 0
        %3866 = vmatpush1.bf16.msra.mxu0 0
        %3867 = vmatprep.subr.bf16.mxu0 0
        %3868 = vmatpush1.bf16.msra.mxu0 0
        %3869 = vmatprep.subr.bf16.mxu0 0
        %3870 = vmatpush1.bf16.msra.mxu0 0
        %3871 = vmatprep.subr.bf16.mxu0 0
        %3872 = vmatpush1.bf16.msra.mxu0 0
        %3873 = vmatprep.subr.bf16.mxu0 0
        %3874 = vmatpush1.bf16.msra.mxu0 0
        %3875 = vmatprep.subr.bf16.mxu0 0
        %3876 = vmatpush1.bf16.msra.mxu0 0
        %3877 = vmatprep.subr.bf16.mxu0 0
        %3878 = vmatpush1.bf16.msra.mxu0 0
        %3879 = vmatprep.subr.bf16.mxu0 0
        %3880 = vmatpush1.bf16.msra.mxu0 0
        %3881 = vmatprep.subr.bf16.mxu0 0
        %3882 = vmatpush1.bf16.msra.mxu0 0
        %3883 = vmatprep.mubr.bf16.mxu0 0
        %3884 = vmatmul.mubr.bf16.gmra.mrb[0].mxu0 %v3846
        %v3885 = vpop.f32.mrb[0].mxu0
        %v3886 = vadd.f32 0.0, %v3885
        %v3887 = vpop.f32.mrb[0].mxu0
        %v3888 = vpop.f32.mrb[0].mxu0
        %v3889 = vpop.f32.mrb[0].mxu0
        %3890 = vdwg.mxu0
        %v3891 = vpack.c.bf16 %v2951, %v2951
        %v3892 = vpack.c.bf16 %v3115, %v3115
        %v3893 = vpack.c.bf16 %v3279, %v3279
        %3894 = vmatprep.subr.bf16.mxu0 0
        %3895 = vmatpush1.bf16.xpose.msra.mxu0 %v3892
        %3896 = vmatprep.subr.bf16.mxu0 0
        %3897 = vmatpush1.bf16.xpose.msra.mxu0 0
        %3898 = vmatprep.subr.bf16.mxu0 0
        %3899 = vmatpush1.bf16.xpose.msra.mxu0 0
        %3900 = vmatprep.subr.bf16.mxu0 0
        %3901 = vmatpush1.bf16.xpose.msra.mxu0 0
        %3902 = vmatprep.subr.bf16.mxu0 0
        %3903 = vmatpush1.bf16.xpose.msra.mxu0 0
        %3904 = vmatprep.subr.bf16.mxu0 0
        %3905 = vmatpush1.bf16.xpose.msra.mxu0 0
        %3906 = vmatprep.subr.bf16.mxu0 0
        %3907 = vmatpush1.bf16.xpose.msra.mxu0 0
        %3908 = vmatprep.subr.bf16.mxu0 0
        %3909 = vmatpush1.bf16.xpose.msra.mxu0 0
        %3910 = vmatprep.subr.bf16.mxu0 0
        %3911 = vmatpush1.bf16.xpose.msra.mxu0 0
        %3912 = vmatprep.subr.bf16.mxu0 0
        %3913 = vmatpush1.bf16.xpose.msra.mxu0 0
        %3914 = vmatprep.subr.bf16.mxu0 0
        %3915 = vmatpush1.bf16.xpose.msra.mxu0 0
        %3916 = vmatprep.subr.bf16.mxu0 0
        %3917 = vmatpush1.bf16.xpose.msra.mxu0 0
        %3918 = vmatprep.subr.bf16.mxu0 0
        %3919 = vmatpush1.bf16.xpose.msra.mxu0 0
        %3920 = vmatprep.subr.bf16.mxu0 0
        %3921 = vmatpush1.bf16.xpose.msra.mxu0 0
        %3922 = vmatprep.subr.bf16.mxu0 0
        %3923 = vmatpush1.bf16.xpose.msra.mxu0 0
        %3924 = vmatprep.subr.bf16.mxu0 0
        %3925 = vmatpush1.bf16.xpose.msra.mxu0 0
        %3926 = vmatprep.mubr.bf16.mxu0 0
        %3927 = vmatmul.mubr.bf16.gmra.mrb[0].mxu0 %v3891
        %v3928 = vpop.f32.mrb[0].mxu0
        %v3929 = vadd.f32 0.0, %v3928
        %v3930 = vpop.f32.mrb[0].mxu0
        %v3931 = vpop.f32.mrb[0].mxu0
        %v3932 = vpop.f32.mrb[0].mxu0
        %3933 = vdwg.mxu0
        %v3934 = vsel %vm1481, %v3929, -inf
        %3935 = vmax.xlane.f32.xlu0 %v3934
        %v3936 = vpop.xlane.xlu0 %3935
        %v3937 = vsub.f32 %v3929, %v3936
        %v3938 = vmul.f32 %v3937, 1.442695
        %v3939 = vpow.pop %v3938
        %v3940 = vsel %vm1481, %v3939, 0.0
        %3941 = vadd.xlane.f32.xlu0 %v3940
        %v3942 = vpop.xlane.xlu0 %3941
        %v3943 = vrcp.pop %v3942
        %v3944 = vmul.f32 %v3939, %v3943
        %v3945 = vpack.c.bf16 %v3944, %v3944
        %v3947 = vsel %vm1481, %v3945, 0
        %v3950 = vsel %vm1497, %v3893, 0
        %3952 = vmatprep.subr.bf16.mxu0 0
        %3953 = vmatpush1.bf16.msra.mxu0 %v3950
        %3954 = vmatprep.subr.bf16.mxu0 0
        %3955 = vmatpush1.bf16.msra.mxu0 0
        %3956 = vmatprep.subr.bf16.mxu0 0
        %3957 = vmatpush1.bf16.msra.mxu0 0
        %3958 = vmatprep.subr.bf16.mxu0 0
        %3959 = vmatpush1.bf16.msra.mxu0 0
        %3960 = vmatprep.subr.bf16.mxu0 0
        %3961 = vmatpush1.bf16.msra.mxu0 0
        %3962 = vmatprep.subr.bf16.mxu0 0
        %3963 = vmatpush1.bf16.msra.mxu0 0
        %3964 = vmatprep.subr.bf16.mxu0 0
        %3965 = vmatpush1.bf16.msra.mxu0 0
        %3966 = vmatprep.subr.bf16.mxu0 0
        %3967 = vmatpush1.bf16.msra.mxu0 0
        %3968 = vmatprep.subr.bf16.mxu0 0
        %3969 = vmatpush1.bf16.msra.mxu0 0
        %3970 = vmatprep.subr.bf16.mxu0 0
        %3971 = vmatpush1.bf16.msra.mxu0 0
        %3972 = vmatprep.subr.bf16.mxu0 0
        %3973 = vmatpush1.bf16.msra.mxu0 0
        %3974 = vmatprep.subr.bf16.mxu0 0
        %3975 = vmatpush1.bf16.msra.mxu0 0
        %3976 = vmatprep.subr.bf16.mxu0 0
        %3977 = vmatpush1.bf16.msra.mxu0 0
        %3978 = vmatprep.subr.bf16.mxu0 0
        %3979 = vmatpush1.bf16.msra.mxu0 0
        %3980 = vmatprep.subr.bf16.mxu0 0
        %3981 = vmatpush1.bf16.msra.mxu0 0
        %3982 = vmatprep.subr.bf16.mxu0 0
        %3983 = vmatpush1.bf16.msra.mxu0 0
        %3984 = vmatprep.mubr.bf16.mxu0 0
        %3985 = vmatmul.mubr.bf16.gmra.mrb[0].mxu0 %v3947
        %v3986 = vpop.f32.mrb[0].mxu0
        %v3987 = vadd.f32 0.0, %v3986
        %v3988 = vpop.f32.mrb[0].mxu0
        %v3989 = vpop.f32.mrb[0].mxu0
        %v3990 = vpop.f32.mrb[0].mxu0
        %3991 = vdwg.mxu0
        %v3992 = vpack.c.bf16 %v2953, %v2953
        %v3993 = vpack.c.bf16 %v3117, %v3117
        %v3994 = vpack.c.bf16 %v3281, %v3281
        %3995 = vmatprep.subr.bf16.mxu0 0
        %3996 = vmatpush1.bf16.xpose.msra.mxu0 %v3993
        %3997 = vmatprep.subr.bf16.mxu0 0
        %3998 = vmatpush1.bf16.xpose.msra.mxu0 0
        %3999 = vmatprep.subr.bf16.mxu0 0
        %4000 = vmatpush1.bf16.xpose.msra.mxu0 0
        %4001 = vmatprep.subr.bf16.mxu0 0
        %4002 = vmatpush1.bf16.xpose.msra.mxu0 0
        %4003 = vmatprep.subr.bf16.mxu0 0
        %4004 = vmatpush1.bf16.xpose.msra.mxu0 0
        %4005 = vmatprep.subr.bf16.mxu0 0
        %4006 = vmatpush1.bf16.xpose.msra.mxu0 0
        %4007 = vmatprep.subr.bf16.mxu0 0
        %4008 = vmatpush1.bf16.xpose.msra.mxu0 0
        %4009 = vmatprep.subr.bf16.mxu0 0
        %4010 = vmatpush1.bf16.xpose.msra.mxu0 0
        %4011 = vmatprep.subr.bf16.mxu0 0
        %4012 = vmatpush1.bf16.xpose.msra.mxu0 0
        %4013 = vmatprep.subr.bf16.mxu0 0
        %4014 = vmatpush1.bf16.xpose.msra.mxu0 0
        %4015 = vmatprep.subr.bf16.mxu0 0
        %4016 = vmatpush1.bf16.xpose.msra.mxu0 0
        %4017 = vmatprep.subr.bf16.mxu0 0
        %4018 = vmatpush1.bf16.xpose.msra.mxu0 0
        %4019 = vmatprep.subr.bf16.mxu0 0
        %4020 = vmatpush1.bf16.xpose.msra.mxu0 0
        %4021 = vmatprep.subr.bf16.mxu0 0
        %4022 = vmatpush1.bf16.xpose.msra.mxu0 0
        %4023 = vmatprep.subr.bf16.mxu0 0
        %4024 = vmatpush1.bf16.xpose.msra.mxu0 0
        %4025 = vmatprep.subr.bf16.mxu0 0
        %4026 = vmatpush1.bf16.xpose.msra.mxu0 0
        %4027 = vmatprep.mubr.bf16.mxu0 0
        %4028 = vmatmul.mubr.bf16.gmra.mrb[0].mxu0 %v3992
        %v4029 = vpop.f32.mrb[0].mxu0
        %v4030 = vadd.f32 0.0, %v4029
        %v4031 = vpop.f32.mrb[0].mxu0
        %v4032 = vpop.f32.mrb[0].mxu0
        %v4033 = vpop.f32.mrb[0].mxu0
        %4034 = vdwg.mxu0
        %v4035 = vsel %vm1481, %v4030, -inf
        %4036 = vmax.xlane.f32.xlu0 %v4035
        %v4037 = vpop.xlane.xlu0 %4036
        %v4038 = vsub.f32 %v4030, %v4037
        %v4039 = vmul.f32 %v4038, 1.442695
        %v4040 = vpow.pop %v4039
        %v4041 = vsel %vm1481, %v4040, 0.0
        %4042 = vadd.xlane.f32.xlu0 %v4041
        %v4043 = vpop.xlane.xlu0 %4042
        %v4044 = vrcp.pop %v4043
        %v4045 = vmul.f32 %v4040, %v4044
        %v4046 = vpack.c.bf16 %v4045, %v4045
        %v4048 = vsel %vm1481, %v4046, 0
        %v4051 = vsel %vm1497, %v3994, 0
        %4053 = vmatprep.subr.bf16.mxu0 0
        %4054 = vmatpush1.bf16.msra.mxu0 %v4051
        %4055 = vmatprep.subr.bf16.mxu0 0
        %4056 = vmatpush1.bf16.msra.mxu0 0
        %4057 = vmatprep.subr.bf16.mxu0 0
        %4058 = vmatpush1.bf16.msra.mxu0 0
        %4059 = vmatprep.subr.bf16.mxu0 0
        %4060 = vmatpush1.bf16.msra.mxu0 0
        %4061 = vmatprep.subr.bf16.mxu0 0
        %4062 = vmatpush1.bf16.msra.mxu0 0
        %4063 = vmatprep.subr.bf16.mxu0 0
        %4064 = vmatpush1.bf16.msra.mxu0 0
        %4065 = vmatprep.subr.bf16.mxu0 0
        %4066 = vmatpush1.bf16.msra.mxu0 0
        %4067 = vmatprep.subr.bf16.mxu0 0
        %4068 = vmatpush1.bf16.msra.mxu0 0
        %4069 = vmatprep.subr.bf16.mxu0 0
        %4070 = vmatpush1.bf16.msra.mxu0 0
        %4071 = vmatprep.subr.bf16.mxu0 0
        %4072 = vmatpush1.bf16.msra.mxu0 0
        %4073 = vmatprep.subr.bf16.mxu0 0
        %4074 = vmatpush1.bf16.msra.mxu0 0
        %4075 = vmatprep.subr.bf16.mxu0 0
        %4076 = vmatpush1.bf16.msra.mxu0 0
        %4077 = vmatprep.subr.bf16.mxu0 0
        %4078 = vmatpush1.bf16.msra.mxu0 0
        %4079 = vmatprep.subr.bf16.mxu0 0
        %4080 = vmatpush1.bf16.msra.mxu0 0
        %4081 = vmatprep.subr.bf16.mxu0 0
        %4082 = vmatpush1.bf16.msra.mxu0 0
        %4083 = vmatprep.subr.bf16.mxu0 0
        %4084 = vmatpush1.bf16.msra.mxu0 0
        %4085 = vmatprep.mubr.bf16.mxu0 0
        %4086 = vmatmul.mubr.bf16.gmra.mrb[0].mxu0 %v4048
        %v4087 = vpop.f32.mrb[0].mxu0
        %v4088 = vadd.f32 0.0, %v4087
        %v4089 = vpop.f32.mrb[0].mxu0
        %v4090 = vpop.f32.mrb[0].mxu0
        %v4091 = vpop.f32.mrb[0].mxu0
        %4092 = vdwg.mxu0
        %v4093 = vpack.c.bf16 %v3381, %v3381
        %v4094 = vpack.c.bf16 %v3482, %v3482
        %v4095 = vpack.c.bf16 %v3583, %v3583
        %v4096 = vpack.c.bf16 %v3684, %v3684
        %v4097 = vpack.c.bf16 %v3785, %v3785
        %v4098 = vpack.c.bf16 %v3886, %v3886
        %v4099 = vpack.c.bf16 %v3987, %v3987
        %v4100 = vpack.c.bf16 %v4088, %v4088
        %s4101 = scalar_lea.vmem %s618, 64 [#allocation9]
        %v4102 = vld [vmem:[%s4101] sm:$0xff]
        %v4103 = vld [vmem:[%s4101 + $0x8] sm:$0xff]
        %v4104 = vld [vmem:[%s4101 + $0x10] sm:$0xff]
        %v4105 = vld [vmem:[%s4101 + $0x18] sm:$0xff]
        %v4106 = vld [vmem:[%s4101 + $0x20] sm:$0xff]
        %v4107 = vld [vmem:[%s4101 + $0x28] sm:$0xff]
        %v4108 = vld [vmem:[%s4101 + $0x30] sm:$0xff]
        %v4109 = vld [vmem:[%s4101 + $0x38] sm:$0xff]
        %v4118 = vunpack.c.l.b16 %v4102
        %v4119 = vunpack.c.h.b16 %v4102
        %v4120 = vunpack.c.l.b16 %v4103
        %v4121 = vunpack.c.h.b16 %v4103
        %v4122 = vunpack.c.l.b16 %v4104
        %v4123 = vunpack.c.h.b16 %v4104
        %v4124 = vunpack.c.l.b16 %v4105
        %v4125 = vunpack.c.h.b16 %v4105
        %v4126 = vunpack.c.l.b16 %v4106
        %v4127 = vunpack.c.h.b16 %v4106
        %v4128 = vunpack.c.l.b16 %v4107
        %v4129 = vunpack.c.h.b16 %v4107
        %v4130 = vunpack.c.l.b16 %v4108
        %v4131 = vunpack.c.h.b16 %v4108
        %v4132 = vunpack.c.l.b16 %v4109
        %v4133 = vunpack.c.h.b16 %v4109
        %v4134 = vpack.c.b16 %v4126, %v4118
        %v4135 = vpack.c.b16 %v4127, %v4119
        %v4136 = vpack.c.b16 %v4128, %v4120
        %v4137 = vpack.c.b16 %v4129, %v4121
        %v4138 = vpack.c.b16 %v4130, %v4122
        %v4139 = vpack.c.b16 %v4131, %v4123
        %v4140 = vpack.c.b16 %v4132, %v4124
        %v4141 = vpack.c.b16 %v4133, %v4125
        %4150 = vmatprep.subr.bf16.mxu0 %v4135
        %4151 = vmatpush1.bf16.xpose.msra.mxu0 %v4134
        %4152 = vmatprep.subr.bf16.mxu0 0
        %4153 = vmatpush1.bf16.xpose.msra.mxu0 0
        %4154 = vmatprep.subr.bf16.mxu0 0
        %4155 = vmatpush1.bf16.xpose.msra.mxu0 0
        %4156 = vmatprep.subr.bf16.mxu0 0
        %4157 = vmatpush1.bf16.xpose.msra.mxu0 0
        %4158 = vmatprep.subr.bf16.mxu0 0
        %4159 = vmatpush1.bf16.xpose.msra.mxu0 0
        %4160 = vmatprep.subr.bf16.mxu0 0
        %4161 = vmatpush1.bf16.xpose.msra.mxu0 0
        %4162 = vmatprep.subr.bf16.mxu0 0
        %4163 = vmatpush1.bf16.xpose.msra.mxu0 0
        %4164 = vmatprep.subr.bf16.mxu0 0
        %4165 = vmatpush1.bf16.xpose.msra.mxu0 0
        %4166 = vmatprep.subr.bf16.mxu0 0
        %4167 = vmatpush1.bf16.xpose.msra.mxu0 0
        %4168 = vmatprep.subr.bf16.mxu0 0
        %4169 = vmatpush1.bf16.xpose.msra.mxu0 0
        %4170 = vmatprep.subr.bf16.mxu0 0
        %4171 = vmatpush1.bf16.xpose.msra.mxu0 0
        %4172 = vmatprep.subr.bf16.mxu0 0
        %4173 = vmatpush1.bf16.xpose.msra.mxu0 0
        %4174 = vmatprep.subr.bf16.mxu0 0
        %4175 = vmatpush1.bf16.xpose.msra.mxu0 0
        %4176 = vmatprep.subr.bf16.mxu0 0
        %4177 = vmatpush1.bf16.xpose.msra.mxu0 0
        %4178 = vmatprep.subr.bf16.mxu0 0
        %4179 = vmatpush1.bf16.xpose.msra.mxu0 0
        %4180 = vmatprep.subr.bf16.mxu0 0
        %4181 = vmatpush1.bf16.xpose.msra.mxu0 0
        %4182 = vmatprep.mubr.bf16.mxu0 %v4094
        %4183 = vmatmul.mubr.bf16.gmra.mrb[0].mxu0 %v4093
        %v4184 = vpop.f32.mrb[0].mxu0
        %v4185 = vadd.f32 %v2619, %v4184
        %v4186 = vpop.f32.mrb[0].mxu0
        %v4187 = vpop.f32.mrb[0].mxu0
        %v4188 = vpop.f32.mrb[0].mxu0
        %4189 = vdwg.mxu0
        %4190 = vmatprep.subr.bf16.mxu0 %v4137
        %4191 = vmatpush1.bf16.xpose.msra.mxu0 %v4136
        %4192 = vmatprep.subr.bf16.mxu0 0
        %4193 = vmatpush1.bf16.xpose.msra.mxu0 0
        %4194 = vmatprep.subr.bf16.mxu0 0
        %4195 = vmatpush1.bf16.xpose.msra.mxu0 0
        %4196 = vmatprep.subr.bf16.mxu0 0
        %4197 = vmatpush1.bf16.xpose.msra.mxu0 0
        %4198 = vmatprep.subr.bf16.mxu0 0
        %4199 = vmatpush1.bf16.xpose.msra.mxu0 0
        %4200 = vmatprep.subr.bf16.mxu0 0
        %4201 = vmatpush1.bf16.xpose.msra.mxu0 0
        %4202 = vmatprep.subr.bf16.mxu0 0
        %4203 = vmatpush1.bf16.xpose.msra.mxu0 0
        %4204 = vmatprep.subr.bf16.mxu0 0
        %4205 = vmatpush1.bf16.xpose.msra.mxu0 0
        %4206 = vmatprep.subr.bf16.mxu0 0
        %4207 = vmatpush1.bf16.xpose.msra.mxu0 0
        %4208 = vmatprep.subr.bf16.mxu0 0
        %4209 = vmatpush1.bf16.xpose.msra.mxu0 0
        %4210 = vmatprep.subr.bf16.mxu0 0
        %4211 = vmatpush1.bf16.xpose.msra.mxu0 0
        %4212 = vmatprep.subr.bf16.mxu0 0
        %4213 = vmatpush1.bf16.xpose.msra.mxu0 0
        %4214 = vmatprep.subr.bf16.mxu0 0
        %4215 = vmatpush1.bf16.xpose.msra.mxu0 0
        %4216 = vmatprep.subr.bf16.mxu0 0
        %4217 = vmatpush1.bf16.xpose.msra.mxu0 0
        %4218 = vmatprep.subr.bf16.mxu0 0
        %4219 = vmatpush1.bf16.xpose.msra.mxu0 0
        %4220 = vmatprep.subr.bf16.mxu0 0
        %4221 = vmatpush1.bf16.xpose.msra.mxu0 0
        %4222 = vmatprep.mubr.bf16.mxu0 %v4096
        %4223 = vmatmul.mubr.bf16.gmra.mrb[0].mxu0 %v4095
        %v4224 = vpop.f32.mrb[0].mxu0
        %v4225 = vadd.f32 %v4185, %v4224
        %v4226 = vpop.f32.mrb[0].mxu0
        %v4227 = vpop.f32.mrb[0].mxu0
        %v4228 = vpop.f32.mrb[0].mxu0
        %4229 = vdwg.mxu0
        %4230 = vmatprep.subr.bf16.mxu0 %v4139
        %4231 = vmatpush1.bf16.xpose.msra.mxu0 %v4138
        %4232 = vmatprep.subr.bf16.mxu0 0
        %4233 = vmatpush1.bf16.xpose.msra.mxu0 0
        %4234 = vmatprep.subr.bf16.mxu0 0
        %4235 = vmatpush1.bf16.xpose.msra.mxu0 0
        %4236 = vmatprep.subr.bf16.mxu0 0
        %4237 = vmatpush1.bf16.xpose.msra.mxu0 0
        %4238 = vmatprep.subr.bf16.mxu0 0
        %4239 = vmatpush1.bf16.xpose.msra.mxu0 0
        %4240 = vmatprep.subr.bf16.mxu0 0
        %4241 = vmatpush1.bf16.xpose.msra.mxu0 0
        %4242 = vmatprep.subr.bf16.mxu0 0
        %4243 = vmatpush1.bf16.xpose.msra.mxu0 0
        %4244 = vmatprep.subr.bf16.mxu0 0
        %4245 = vmatpush1.bf16.xpose.msra.mxu0 0
        %4246 = vmatprep.subr.bf16.mxu0 0
        %4247 = vmatpush1.bf16.xpose.msra.mxu0 0
        %4248 = vmatprep.subr.bf16.mxu0 0
        %4249 = vmatpush1.bf16.xpose.msra.mxu0 0
        %4250 = vmatprep.subr.bf16.mxu0 0
        %4251 = vmatpush1.bf16.xpose.msra.mxu0 0
        %4252 = vmatprep.subr.bf16.mxu0 0
        %4253 = vmatpush1.bf16.xpose.msra.mxu0 0
        %4254 = vmatprep.subr.bf16.mxu0 0
        %4255 = vmatpush1.bf16.xpose.msra.mxu0 0
        %4256 = vmatprep.subr.bf16.mxu0 0
        %4257 = vmatpush1.bf16.xpose.msra.mxu0 0
        %4258 = vmatprep.subr.bf16.mxu0 0
        %4259 = vmatpush1.bf16.xpose.msra.mxu0 0
        %4260 = vmatprep.subr.bf16.mxu0 0
        %4261 = vmatpush1.bf16.xpose.msra.mxu0 0
        %4262 = vmatprep.mubr.bf16.mxu0 %v4098
        %4263 = vmatmul.mubr.bf16.gmra.mrb[0].mxu0 %v4097
        %v4264 = vpop.f32.mrb[0].mxu0
        %v4265 = vadd.f32 %v4225, %v4264
        %v4266 = vpop.f32.mrb[0].mxu0
        %v4267 = vpop.f32.mrb[0].mxu0
        %v4268 = vpop.f32.mrb[0].mxu0
        %4269 = vdwg.mxu0
        %4270 = vmatprep.subr.bf16.mxu0 %v4141
        %4271 = vmatpush1.bf16.xpose.msra.mxu0 %v4140
        %4272 = vmatprep.subr.bf16.mxu0 0
        %4273 = vmatpush1.bf16.xpose.msra.mxu0 0
        %4274 = vmatprep.subr.bf16.mxu0 0
        %4275 = vmatpush1.bf16.xpose.msra.mxu0 0
        %4276 = vmatprep.subr.bf16.mxu0 0
        %4277 = vmatpush1.bf16.xpose.msra.mxu0 0
        %4278 = vmatprep.subr.bf16.mxu0 0
        %4279 = vmatpush1.bf16.xpose.msra.mxu0 0
        %4280 = vmatprep.subr.bf16.mxu0 0
        %4281 = vmatpush1.bf16.xpose.msra.mxu0 0
        %4282 = vmatprep.subr.bf16.mxu0 0
        %4283 = vmatpush1.bf16.xpose.msra.mxu0 0
        %4284 = vmatprep.subr.bf16.mxu0 0
        %4285 = vmatpush1.bf16.xpose.msra.mxu0 0
        %4286 = vmatprep.subr.bf16.mxu0 0
        %4287 = vmatpush1.bf16.xpose.msra.mxu0 0
        %4288 = vmatprep.subr.bf16.mxu0 0
        %4289 = vmatpush1.bf16.xpose.msra.mxu0 0
        %4290 = vmatprep.subr.bf16.mxu0 0
        %4291 = vmatpush1.bf16.xpose.msra.mxu0 0
        %4292 = vmatprep.subr.bf16.mxu0 0
        %4293 = vmatpush1.bf16.xpose.msra.mxu0 0
        %4294 = vmatprep.subr.bf16.mxu0 0
        %4295 = vmatpush1.bf16.xpose.msra.mxu0 0
        %4296 = vmatprep.subr.bf16.mxu0 0
        %4297 = vmatpush1.bf16.xpose.msra.mxu0 0
        %4298 = vmatprep.subr.bf16.mxu0 0
        %4299 = vmatpush1.bf16.xpose.msra.mxu0 0
        %4300 = vmatprep.subr.bf16.mxu0 0
        %4301 = vmatpush1.bf16.xpose.msra.mxu0 0
        %4302 = vmatprep.mubr.bf16.mxu0 %v4100
        %4303 = vmatmul.mubr.bf16.gmra.mrb[0].mxu0 %v4099
        %v4304 = vpop.f32.mrb[0].mxu0
        %v4305 = vadd.f32 %v4265, %v4304
        %v4306 = vpop.f32.mrb[0].mxu0
        %v4307 = vpop.f32.mrb[0].mxu0
        %v4308 = vpop.f32.mrb[0].mxu0
        %4309 = vdwg.mxu0
        %s4310 = scalar_lea.vmem %s600, 2 [#allocation6]
        %v4311 = vld [vmem:[%s4310] sm:$0x1]
        %v4312 = vsel %vm774, %v4305, 0.0
        %4313 = vadd.xlane.f32.xlu0 %v4312
        %v4314 = vpop.xlane.xlu0 %4313
        %v4315 = vmul.f32 %v4314, %v778
        %v4316 = vmul.f32 %v4305, %v4305
        %v4317 = vsel %vm774, %v4316, 0.0
        %4318 = vadd.xlane.f32.xlu0 %v4317
        %v4319 = vpop.xlane.xlu0 %4318
        %v4320 = vmul.f32 %v4319, %v778
        %v4321 = vmul.f32 %v4315, %v4315
        %v4322 = vsub.f32 %v4320, %v4321
        %v4323 = vsub.f32 %v4305, %v4315
        %v4324 = vadd.f32 %v4322, 1e-05
        %v4325 = vrsqrt.pop %v4324
        %v4326 = vmul.f32 %v4323, %v4325
        %v4328 = vlaneseq
        %v4329 = vshrl.u32 %v4328, 7
        %v4330 = vsub.s32 0, %v4329
        %v4331 = vrot.slane %v4311, %v4330
        %v4333 = vmul.f32 %v4326, %v4331
        %v4334 = vpack.c.bf16 %v4333, %v4333
        %s4335 = scalar_lea.vmem %s609, 384 [#allocation8]
        %v4336 = vld [vmem:[%s4335] sm:$0xff]
        %v4337 = vld [vmem:[%s4335 + $0x8] sm:$0xff]
        %v4338 = vld [vmem:[%s4335 + $0x10] sm:$0xff]
        %v4339 = vld [vmem:[%s4335 + $0x18] sm:$0xff]
        %v4340 = vld [vmem:[%s4335 + $0x20] sm:$0xff]
        %v4341 = vld [vmem:[%s4335 + $0x28] sm:$0xff]
        %v4342 = vld [vmem:[%s4335 + $0x30] sm:$0xff]
        %v4343 = vld [vmem:[%s4335 + $0x38] sm:$0xff]
        %v4344 = vld [vmem:[%s4335 + $0x40] sm:$0xff]
        %v4345 = vld [vmem:[%s4335 + $0x48] sm:$0xff]
        %v4346 = vld [vmem:[%s4335 + $0x50] sm:$0xff]
        %v4347 = vld [vmem:[%s4335 + $0x58] sm:$0xff]
        %v4348 = vld [vmem:[%s4335 + $0x60] sm:$0xff]
        %v4349 = vld [vmem:[%s4335 + $0x68] sm:$0xff]
        %v4350 = vld [vmem:[%s4335 + $0x70] sm:$0xff]
        %v4351 = vld [vmem:[%s4335 + $0x78] sm:$0xff]
        %v4352 = vld [vmem:[%s4335 + $0x80] sm:$0xff]
        %v4353 = vld [vmem:[%s4335 + $0x88] sm:$0xff]
        %v4354 = vld [vmem:[%s4335 + $0x90] sm:$0xff]
        %v4355 = vld [vmem:[%s4335 + $0x98] sm:$0xff]
        %v4356 = vld [vmem:[%s4335 + $0xa0] sm:$0xff]
        %v4357 = vld [vmem:[%s4335 + $0xa8] sm:$0xff]
        %v4358 = vld [vmem:[%s4335 + $0xb0] sm:$0xff]
        %v4359 = vld [vmem:[%s4335 + $0xb8] sm:$0xff]
        %v4384 = vunpack.c.l.b16 %v4336
        %v4385 = vunpack.c.h.b16 %v4336
        %v4386 = vunpack.c.l.b16 %v4337
        %v4387 = vunpack.c.h.b16 %v4337
        %v4388 = vunpack.c.l.b16 %v4338
        %v4389 = vunpack.c.h.b16 %v4338
        %v4390 = vunpack.c.l.b16 %v4339
        %v4391 = vunpack.c.h.b16 %v4339
        %v4392 = vunpack.c.l.b16 %v4340
        %v4393 = vunpack.c.h.b16 %v4340
        %v4394 = vunpack.c.l.b16 %v4341
        %v4395 = vunpack.c.h.b16 %v4341
        %v4396 = vunpack.c.l.b16 %v4342
        %v4397 = vunpack.c.h.b16 %v4342
        %v4398 = vunpack.c.l.b16 %v4343
        %v4399 = vunpack.c.h.b16 %v4343
        %v4400 = vunpack.c.l.b16 %v4344
        %v4401 = vunpack.c.h.b16 %v4344
        %v4402 = vunpack.c.l.b16 %v4345
        %v4403 = vunpack.c.h.b16 %v4345
        %v4404 = vunpack.c.l.b16 %v4346
        %v4405 = vunpack.c.h.b16 %v4346
        %v4406 = vunpack.c.l.b16 %v4347
        %v4407 = vunpack.c.h.b16 %v4347
        %v4408 = vunpack.c.l.b16 %v4348
        %v4409 = vunpack.c.h.b16 %v4348
        %v4410 = vunpack.c.l.b16 %v4349
        %v4411 = vunpack.c.h.b16 %v4349
        %v4412 = vunpack.c.l.b16 %v4350
        %v4413 = vunpack.c.h.b16 %v4350
        %v4414 = vunpack.c.l.b16 %v4351
        %v4415 = vunpack.c.h.b16 %v4351
        %v4416 = vunpack.c.l.b16 %v4352
        %v4417 = vunpack.c.h.b16 %v4352
        %v4418 = vunpack.c.l.b16 %v4353
        %v4419 = vunpack.c.h.b16 %v4353
        %v4420 = vunpack.c.l.b16 %v4354
        %v4421 = vunpack.c.h.b16 %v4354
        %v4422 = vunpack.c.l.b16 %v4355
        %v4423 = vunpack.c.h.b16 %v4355
        %v4424 = vunpack.c.l.b16 %v4356
        %v4425 = vunpack.c.h.b16 %v4356
        %v4426 = vunpack.c.l.b16 %v4357
        %v4427 = vunpack.c.h.b16 %v4357
        %v4428 = vunpack.c.l.b16 %v4358
        %v4429 = vunpack.c.h.b16 %v4358
        %v4430 = vunpack.c.l.b16 %v4359
        %v4431 = vunpack.c.h.b16 %v4359
        %v4432 = vpack.c.b16 %v4408, %v4384
        %v4433 = vpack.c.b16 %v4409, %v4385
        %v4434 = vpack.c.b16 %v4410, %v4386
        %v4435 = vpack.c.b16 %v4411, %v4387
        %v4436 = vpack.c.b16 %v4412, %v4388
        %v4437 = vpack.c.b16 %v4413, %v4389
        %v4438 = vpack.c.b16 %v4414, %v4390
        %v4439 = vpack.c.b16 %v4415, %v4391
        %v4440 = vpack.c.b16 %v4416, %v4392
        %v4441 = vpack.c.b16 %v4417, %v4393
        %v4442 = vpack.c.b16 %v4418, %v4394
        %v4443 = vpack.c.b16 %v4419, %v4395
        %v4444 = vpack.c.b16 %v4420, %v4396
        %v4445 = vpack.c.b16 %v4421, %v4397
        %v4446 = vpack.c.b16 %v4422, %v4398
        %v4447 = vpack.c.b16 %v4423, %v4399
        %v4448 = vpack.c.b16 %v4424, %v4400
        %v4449 = vpack.c.b16 %v4425, %v4401
        %v4450 = vpack.c.b16 %v4426, %v4402
        %v4451 = vpack.c.b16 %v4427, %v4403
        %v4452 = vpack.c.b16 %v4428, %v4404
        %v4453 = vpack.c.b16 %v4429, %v4405
        %v4454 = vpack.c.b16 %v4430, %v4406
        %v4455 = vpack.c.b16 %v4431, %v4407
        %v4481 = vsel %vm774, %v4334, 0
        %4483 = vmatprep.subr.bf16.mxu0 %v4433
        %4484 = vmatpush1.bf16.msra.mxu0 %v4432
        %4485 = vmatprep.subr.bf16.mxu0 0
        %4486 = vmatpush1.bf16.msra.mxu0 0
        %4487 = vmatprep.subr.bf16.mxu0 0
        %4488 = vmatpush1.bf16.msra.mxu0 0
        %4489 = vmatprep.subr.bf16.mxu0 0
        %4490 = vmatpush1.bf16.msra.mxu0 0
        %4491 = vmatprep.subr.bf16.mxu0 0
        %4492 = vmatpush1.bf16.msra.mxu0 0
        %4493 = vmatprep.subr.bf16.mxu0 0
        %4494 = vmatpush1.bf16.msra.mxu0 0
        %4495 = vmatprep.subr.bf16.mxu0 0
        %4496 = vmatpush1.bf16.msra.mxu0 0
        %4497 = vmatprep.subr.bf16.mxu0 0
        %4498 = vmatpush1.bf16.msra.mxu0 0
        %4499 = vmatprep.subr.bf16.mxu0 0
        %4500 = vmatpush1.bf16.msra.mxu0 0
        %4501 = vmatprep.subr.bf16.mxu0 0
        %4502 = vmatpush1.bf16.msra.mxu0 0
        %4503 = vmatprep.subr.bf16.mxu0 0
        %4504 = vmatpush1.bf16.msra.mxu0 0
        %4505 = vmatprep.subr.bf16.mxu0 0
        %4506 = vmatpush1.bf16.msra.mxu0 0
        %4507 = vmatprep.subr.bf16.mxu0 0
        %4508 = vmatpush1.bf16.msra.mxu0 0
        %4509 = vmatprep.subr.bf16.mxu0 0
        %4510 = vmatpush1.bf16.msra.mxu0 0
        %4511 = vmatprep.subr.bf16.mxu0 0
        %4512 = vmatpush1.bf16.msra.mxu0 0
        %4513 = vmatprep.subr.bf16.mxu0 0
        %4514 = vmatpush1.bf16.msra.mxu0 0
        %4515 = vmatprep.mubr.bf16.mxu0 0
        %4516 = vmatmul.mubr.bf16.gmra.mrb[0].mxu0 %v4481
        %v4517 = vpop.f32.mrb[0].mxu0
        %v4518 = vadd.f32 0.0, %v4517
        %v4519 = vpop.f32.mrb[0].mxu0
        %v4520 = vadd.f32 0.0, %v4519
        %v4521 = vpop.f32.mrb[0].mxu0
        %v4522 = vpop.f32.mrb[0].mxu0
        %4523 = vdwg.mxu0
        %4524 = vmatprep.subr.bf16.mxu0 %v4435
        %4525 = vmatpush1.bf16.msra.mxu0 %v4434
        %4526 = vmatprep.subr.bf16.mxu0 0
        %4527 = vmatpush1.bf16.msra.mxu0 0
        %4528 = vmatprep.subr.bf16.mxu0 0
        %4529 = vmatpush1.bf16.msra.mxu0 0
        %4530 = vmatprep.subr.bf16.mxu0 0
        %4531 = vmatpush1.bf16.msra.mxu0 0
        %4532 = vmatprep.subr.bf16.mxu0 0
        %4533 = vmatpush1.bf16.msra.mxu0 0
        %4534 = vmatprep.subr.bf16.mxu0 0
        %4535 = vmatpush1.bf16.msra.mxu0 0
        %4536 = vmatprep.subr.bf16.mxu0 0
        %4537 = vmatpush1.bf16.msra.mxu0 0
        %4538 = vmatprep.subr.bf16.mxu0 0
        %4539 = vmatpush1.bf16.msra.mxu0 0
        %4540 = vmatprep.subr.bf16.mxu0 0
        %4541 = vmatpush1.bf16.msra.mxu0 0
        %4542 = vmatprep.subr.bf16.mxu0 0
        %4543 = vmatpush1.bf16.msra.mxu0 0
        %4544 = vmatprep.subr.bf16.mxu0 0
        %4545 = vmatpush1.bf16.msra.mxu0 0
        %4546 = vmatprep.subr.bf16.mxu0 0
        %4547 = vmatpush1.bf16.msra.mxu0 0
        %4548 = vmatprep.subr.bf16.mxu0 0
        %4549 = vmatpush1.bf16.msra.mxu0 0
        %4550 = vmatprep.subr.bf16.mxu0 0
        %4551 = vmatpush1.bf16.msra.mxu0 0
        %4552 = vmatprep.subr.bf16.mxu0 0
        %4553 = vmatpush1.bf16.msra.mxu0 0
        %4554 = vmatprep.subr.bf16.mxu0 0
        %4555 = vmatpush1.bf16.msra.mxu0 0
        %4556 = vmatprep.mubr.bf16.mxu0 0
        %4557 = vmatmul.mubr.bf16.gmra.mrb[0].mxu0 %v4481
        %v4558 = vpop.f32.mrb[0].mxu0
        %v4559 = vadd.f32 0.0, %v4558
        %v4560 = vpop.f32.mrb[0].mxu0
        %v4561 = vadd.f32 0.0, %v4560
        %v4562 = vpop.f32.mrb[0].mxu0
        %v4563 = vpop.f32.mrb[0].mxu0
        %4564 = vdwg.mxu0
        %4565 = vmatprep.subr.bf16.mxu0 %v4437
        %4566 = vmatpush1.bf16.msra.mxu0 %v4436
        %4567 = vmatprep.subr.bf16.mxu0 0
        %4568 = vmatpush1.bf16.msra.mxu0 0
        %4569 = vmatprep.subr.bf16.mxu0 0
        %4570 = vmatpush1.bf16.msra.mxu0 0
        %4571 = vmatprep.subr.bf16.mxu0 0
        %4572 = vmatpush1.bf16.msra.mxu0 0
        %4573 = vmatprep.subr.bf16.mxu0 0
        %4574 = vmatpush1.bf16.msra.mxu0 0
        %4575 = vmatprep.subr.bf16.mxu0 0
        %4576 = vmatpush1.bf16.msra.mxu0 0
        %4577 = vmatprep.subr.bf16.mxu0 0
        %4578 = vmatpush1.bf16.msra.mxu0 0
        %4579 = vmatprep.subr.bf16.mxu0 0
        %4580 = vmatpush1.bf16.msra.mxu0 0
        %4581 = vmatprep.subr.bf16.mxu0 0
        %4582 = vmatpush1.bf16.msra.mxu0 0
        %4583 = vmatprep.subr.bf16.mxu0 0
        %4584 = vmatpush1.bf16.msra.mxu0 0
        %4585 = vmatprep.subr.bf16.mxu0 0
        %4586 = vmatpush1.bf16.msra.mxu0 0
        %4587 = vmatprep.subr.bf16.mxu0 0
        %4588 = vmatpush1.bf16.msra.mxu0 0
        %4589 = vmatprep.subr.bf16.mxu0 0
        %4590 = vmatpush1.bf16.msra.mxu0 0
        %4591 = vmatprep.subr.bf16.mxu0 0
        %4592 = vmatpush1.bf16.msra.mxu0 0
        %4593 = vmatprep.subr.bf16.mxu0 0
        %4594 = vmatpush1.bf16.msra.mxu0 0
        %4595 = vmatprep.subr.bf16.mxu0 0
        %4596 = vmatpush1.bf16.msra.mxu0 0
        %4597 = vmatprep.mubr.bf16.mxu0 0
        %4598 = vmatmul.mubr.bf16.gmra.mrb[0].mxu0 %v4481
        %v4599 = vpop.f32.mrb[0].mxu0
        %v4600 = vadd.f32 0.0, %v4599
        %v4601 = vpop.f32.mrb[0].mxu0
        %v4602 = vadd.f32 0.0, %v4601
        %v4603 = vpop.f32.mrb[0].mxu0
        %v4604 = vpop.f32.mrb[0].mxu0
        %4605 = vdwg.mxu0
        %4606 = vmatprep.subr.bf16.mxu0 %v4439
        %4607 = vmatpush1.bf16.msra.mxu0 %v4438
        %4608 = vmatprep.subr.bf16.mxu0 0
        %4609 = vmatpush1.bf16.msra.mxu0 0
        %4610 = vmatprep.subr.bf16.mxu0 0
        %4611 = vmatpush1.bf16.msra.mxu0 0
        %4612 = vmatprep.subr.bf16.mxu0 0
        %4613 = vmatpush1.bf16.msra.mxu0 0
        %4614 = vmatprep.subr.bf16.mxu0 0
        %4615 = vmatpush1.bf16.msra.mxu0 0
        %4616 = vmatprep.subr.bf16.mxu0 0
        %4617 = vmatpush1.bf16.msra.mxu0 0
        %4618 = vmatprep.subr.bf16.mxu0 0
        %4619 = vmatpush1.bf16.msra.mxu0 0
        %4620 = vmatprep.subr.bf16.mxu0 0
        %4621 = vmatpush1.bf16.msra.mxu0 0
        %4622 = vmatprep.subr.bf16.mxu0 0
        %4623 = vmatpush1.bf16.msra.mxu0 0
        %4624 = vmatprep.subr.bf16.mxu0 0
        %4625 = vmatpush1.bf16.msra.mxu0 0
        %4626 = vmatprep.subr.bf16.mxu0 0
        %4627 = vmatpush1.bf16.msra.mxu0 0
        %4628 = vmatprep.subr.bf16.mxu0 0
        %4629 = vmatpush1.bf16.msra.mxu0 0
        %4630 = vmatprep.subr.bf16.mxu0 0
        %4631 = vmatpush1.bf16.msra.mxu0 0
        %4632 = vmatprep.subr.bf16.mxu0 0
        %4633 = vmatpush1.bf16.msra.mxu0 0
        %4634 = vmatprep.subr.bf16.mxu0 0
        %4635 = vmatpush1.bf16.msra.mxu0 0
        %4636 = vmatprep.subr.bf16.mxu0 0
        %4637 = vmatpush1.bf16.msra.mxu0 0
        %4638 = vmatprep.mubr.bf16.mxu0 0
        %4639 = vmatmul.mubr.bf16.gmra.mrb[0].mxu0 %v4481
        %v4640 = vpop.f32.mrb[0].mxu0
        %v4641 = vadd.f32 0.0, %v4640
        %v4642 = vpop.f32.mrb[0].mxu0
        %v4643 = vadd.f32 0.0, %v4642
        %v4644 = vpop.f32.mrb[0].mxu0
        %v4645 = vpop.f32.mrb[0].mxu0
        %4646 = vdwg.mxu0
        %4647 = vmatprep.subr.bf16.mxu0 %v4441
        %4648 = vmatpush1.bf16.msra.mxu0 %v4440
        %4649 = vmatprep.subr.bf16.mxu0 0
        %4650 = vmatpush1.bf16.msra.mxu0 0
        %4651 = vmatprep.subr.bf16.mxu0 0
        %4652 = vmatpush1.bf16.msra.mxu0 0
        %4653 = vmatprep.subr.bf16.mxu0 0
        %4654 = vmatpush1.bf16.msra.mxu0 0
        %4655 = vmatprep.subr.bf16.mxu0 0
        %4656 = vmatpush1.bf16.msra.mxu0 0
        %4657 = vmatprep.subr.bf16.mxu0 0
        %4658 = vmatpush1.bf16.msra.mxu0 0
        %4659 = vmatprep.subr.bf16.mxu0 0
        %4660 = vmatpush1.bf16.msra.mxu0 0
        %4661 = vmatprep.subr.bf16.mxu0 0
        %4662 = vmatpush1.bf16.msra.mxu0 0
        %4663 = vmatprep.subr.bf16.mxu0 0
        %4664 = vmatpush1.bf16.msra.mxu0 0
        %4665 = vmatprep.subr.bf16.mxu0 0
        %4666 = vmatpush1.bf16.msra.mxu0 0
        %4667 = vmatprep.subr.bf16.mxu0 0
        %4668 = vmatpush1.bf16.msra.mxu0 0
        %4669 = vmatprep.subr.bf16.mxu0 0
        %4670 = vmatpush1.bf16.msra.mxu0 0
        %4671 = vmatprep.subr.bf16.mxu0 0
        %4672 = vmatpush1.bf16.msra.mxu0 0
        %4673 = vmatprep.subr.bf16.mxu0 0
        %4674 = vmatpush1.bf16.msra.mxu0 0
        %4675 = vmatprep.subr.bf16.mxu0 0
        %4676 = vmatpush1.bf16.msra.mxu0 0
        %4677 = vmatprep.subr.bf16.mxu0 0
        %4678 = vmatpush1.bf16.msra.mxu0 0
        %4679 = vmatprep.mubr.bf16.mxu0 0
        %4680 = vmatmul.mubr.bf16.gmra.mrb[0].mxu0 %v4481
        %v4681 = vpop.f32.mrb[0].mxu0
        %v4682 = vadd.f32 0.0, %v4681
        %v4683 = vpop.f32.mrb[0].mxu0
        %v4684 = vadd.f32 0.0, %v4683
        %v4685 = vpop.f32.mrb[0].mxu0
        %v4686 = vpop.f32.mrb[0].mxu0
        %4687 = vdwg.mxu0
        %4688 = vmatprep.subr.bf16.mxu0 %v4443
        %4689 = vmatpush1.bf16.msra.mxu0 %v4442
        %4690 = vmatprep.subr.bf16.mxu0 0
        %4691 = vmatpush1.bf16.msra.mxu0 0
        %4692 = vmatprep.subr.bf16.mxu0 0
        %4693 = vmatpush1.bf16.msra.mxu0 0
        %4694 = vmatprep.subr.bf16.mxu0 0
        %4695 = vmatpush1.bf16.msra.mxu0 0
        %4696 = vmatprep.subr.bf16.mxu0 0
        %4697 = vmatpush1.bf16.msra.mxu0 0
        %4698 = vmatprep.subr.bf16.mxu0 0
        %4699 = vmatpush1.bf16.msra.mxu0 0
        %4700 = vmatprep.subr.bf16.mxu0 0
        %4701 = vmatpush1.bf16.msra.mxu0 0
        %4702 = vmatprep.subr.bf16.mxu0 0
        %4703 = vmatpush1.bf16.msra.mxu0 0
        %4704 = vmatprep.subr.bf16.mxu0 0
        %4705 = vmatpush1.bf16.msra.mxu0 0
        %4706 = vmatprep.subr.bf16.mxu0 0
        %4707 = vmatpush1.bf16.msra.mxu0 0
        %4708 = vmatprep.subr.bf16.mxu0 0
        %4709 = vmatpush1.bf16.msra.mxu0 0
        %4710 = vmatprep.subr.bf16.mxu0 0
        %4711 = vmatpush1.bf16.msra.mxu0 0
        %4712 = vmatprep.subr.bf16.mxu0 0
        %4713 = vmatpush1.bf16.msra.mxu0 0
        %4714 = vmatprep.subr.bf16.mxu0 0
        %4715 = vmatpush1.bf16.msra.mxu0 0
        %4716 = vmatprep.subr.bf16.mxu0 0
        %4717 = vmatpush1.bf16.msra.mxu0 0
        %4718 = vmatprep.subr.bf16.mxu0 0
        %4719 = vmatpush1.bf16.msra.mxu0 0
        %4720 = vmatprep.mubr.bf16.mxu0 0
        %4721 = vmatmul.mubr.bf16.gmra.mrb[0].mxu0 %v4481
        %v4722 = vpop.f32.mrb[0].mxu0
        %v4723 = vadd.f32 0.0, %v4722
        %v4724 = vpop.f32.mrb[0].mxu0
        %v4725 = vadd.f32 0.0, %v4724
        %v4726 = vpop.f32.mrb[0].mxu0
        %v4727 = vpop.f32.mrb[0].mxu0
        %4728 = vdwg.mxu0
        %4729 = vmatprep.subr.bf16.mxu0 %v4445
        %4730 = vmatpush1.bf16.msra.mxu0 %v4444
        %4731 = vmatprep.subr.bf16.mxu0 0
        %4732 = vmatpush1.bf16.msra.mxu0 0
        %4733 = vmatprep.subr.bf16.mxu0 0
        %4734 = vmatpush1.bf16.msra.mxu0 0
        %4735 = vmatprep.subr.bf16.mxu0 0
        %4736 = vmatpush1.bf16.msra.mxu0 0
        %4737 = vmatprep.subr.bf16.mxu0 0
        %4738 = vmatpush1.bf16.msra.mxu0 0
        %4739 = vmatprep.subr.bf16.mxu0 0
        %4740 = vmatpush1.bf16.msra.mxu0 0
        %4741 = vmatprep.subr.bf16.mxu0 0
        %4742 = vmatpush1.bf16.msra.mxu0 0
        %4743 = vmatprep.subr.bf16.mxu0 0
        %4744 = vmatpush1.bf16.msra.mxu0 0
        %4745 = vmatprep.subr.bf16.mxu0 0
        %4746 = vmatpush1.bf16.msra.mxu0 0
        %4747 = vmatprep.subr.bf16.mxu0 0
        %4748 = vmatpush1.bf16.msra.mxu0 0
        %4749 = vmatprep.subr.bf16.mxu0 0
        %4750 = vmatpush1.bf16.msra.mxu0 0
        %4751 = vmatprep.subr.bf16.mxu0 0
        %4752 = vmatpush1.bf16.msra.mxu0 0
        %4753 = vmatprep.subr.bf16.mxu0 0
        %4754 = vmatpush1.bf16.msra.mxu0 0
        %4755 = vmatprep.subr.bf16.mxu0 0
        %4756 = vmatpush1.bf16.msra.mxu0 0
        %4757 = vmatprep.subr.bf16.mxu0 0
        %4758 = vmatpush1.bf16.msra.mxu0 0
        %4759 = vmatprep.subr.bf16.mxu0 0
        %4760 = vmatpush1.bf16.msra.mxu0 0
        %4761 = vmatprep.mubr.bf16.mxu0 0
        %4762 = vmatmul.mubr.bf16.gmra.mrb[0].mxu0 %v4481
        %v4763 = vpop.f32.mrb[0].mxu0
        %v4764 = vadd.f32 0.0, %v4763
        %v4765 = vpop.f32.mrb[0].mxu0
        %v4766 = vadd.f32 0.0, %v4765
        %v4767 = vpop.f32.mrb[0].mxu0
        %v4768 = vpop.f32.mrb[0].mxu0
        %4769 = vdwg.mxu0
        %4770 = vmatprep.subr.bf16.mxu0 %v4447
        %4771 = vmatpush1.bf16.msra.mxu0 %v4446
        %4772 = vmatprep.subr.bf16.mxu0 0
        %4773 = vmatpush1.bf16.msra.mxu0 0
        %4774 = vmatprep.subr.bf16.mxu0 0
        %4775 = vmatpush1.bf16.msra.mxu0 0
        %4776 = vmatprep.subr.bf16.mxu0 0
        %4777 = vmatpush1.bf16.msra.mxu0 0
        %4778 = vmatprep.subr.bf16.mxu0 0
        %4779 = vmatpush1.bf16.msra.mxu0 0
        %4780 = vmatprep.subr.bf16.mxu0 0
        %4781 = vmatpush1.bf16.msra.mxu0 0
        %4782 = vmatprep.subr.bf16.mxu0 0
        %4783 = vmatpush1.bf16.msra.mxu0 0
        %4784 = vmatprep.subr.bf16.mxu0 0
        %4785 = vmatpush1.bf16.msra.mxu0 0
        %4786 = vmatprep.subr.bf16.mxu0 0
        %4787 = vmatpush1.bf16.msra.mxu0 0
        %4788 = vmatprep.subr.bf16.mxu0 0
        %4789 = vmatpush1.bf16.msra.mxu0 0
        %4790 = vmatprep.subr.bf16.mxu0 0
        %4791 = vmatpush1.bf16.msra.mxu0 0
        %4792 = vmatprep.subr.bf16.mxu0 0
        %4793 = vmatpush1.bf16.msra.mxu0 0
        %4794 = vmatprep.subr.bf16.mxu0 0
        %4795 = vmatpush1.bf16.msra.mxu0 0
        %4796 = vmatprep.subr.bf16.mxu0 0
        %4797 = vmatpush1.bf16.msra.mxu0 0
        %4798 = vmatprep.subr.bf16.mxu0 0
        %4799 = vmatpush1.bf16.msra.mxu0 0
        %4800 = vmatprep.subr.bf16.mxu0 0
        %4801 = vmatpush1.bf16.msra.mxu0 0
        %4802 = vmatprep.mubr.bf16.mxu0 0
        %4803 = vmatmul.mubr.bf16.gmra.mrb[0].mxu0 %v4481
        %v4804 = vpop.f32.mrb[0].mxu0
        %v4805 = vadd.f32 0.0, %v4804
        %v4806 = vpop.f32.mrb[0].mxu0
        %v4807 = vadd.f32 0.0, %v4806
        %v4808 = vpop.f32.mrb[0].mxu0
        %v4809 = vpop.f32.mrb[0].mxu0
        %4810 = vdwg.mxu0
        %4811 = vmatprep.subr.bf16.mxu0 %v4449
        %4812 = vmatpush1.bf16.msra.mxu0 %v4448
        %4813 = vmatprep.subr.bf16.mxu0 0
        %4814 = vmatpush1.bf16.msra.mxu0 0
        %4815 = vmatprep.subr.bf16.mxu0 0
        %4816 = vmatpush1.bf16.msra.mxu0 0
        %4817 = vmatprep.subr.bf16.mxu0 0
        %4818 = vmatpush1.bf16.msra.mxu0 0
        %4819 = vmatprep.subr.bf16.mxu0 0
        %4820 = vmatpush1.bf16.msra.mxu0 0
        %4821 = vmatprep.subr.bf16.mxu0 0
        %4822 = vmatpush1.bf16.msra.mxu0 0
        %4823 = vmatprep.subr.bf16.mxu0 0
        %4824 = vmatpush1.bf16.msra.mxu0 0
        %4825 = vmatprep.subr.bf16.mxu0 0
        %4826 = vmatpush1.bf16.msra.mxu0 0
        %4827 = vmatprep.subr.bf16.mxu0 0
        %4828 = vmatpush1.bf16.msra.mxu0 0
        %4829 = vmatprep.subr.bf16.mxu0 0
        %4830 = vmatpush1.bf16.msra.mxu0 0
        %4831 = vmatprep.subr.bf16.mxu0 0
        %4832 = vmatpush1.bf16.msra.mxu0 0
        %4833 = vmatprep.subr.bf16.mxu0 0
        %4834 = vmatpush1.bf16.msra.mxu0 0
        %4835 = vmatprep.subr.bf16.mxu0 0
        %4836 = vmatpush1.bf16.msra.mxu0 0
        %4837 = vmatprep.subr.bf16.mxu0 0
        %4838 = vmatpush1.bf16.msra.mxu0 0
        %4839 = vmatprep.subr.bf16.mxu0 0
        %4840 = vmatpush1.bf16.msra.mxu0 0
        %4841 = vmatprep.subr.bf16.mxu0 0
        %4842 = vmatpush1.bf16.msra.mxu0 0
        %4843 = vmatprep.mubr.bf16.mxu0 0
        %4844 = vmatmul.mubr.bf16.gmra.mrb[0].mxu0 %v4481
        %v4845 = vpop.f32.mrb[0].mxu0
        %v4846 = vadd.f32 0.0, %v4845
        %v4847 = vpop.f32.mrb[0].mxu0
        %v4848 = vadd.f32 0.0, %v4847
        %v4849 = vpop.f32.mrb[0].mxu0
        %v4850 = vpop.f32.mrb[0].mxu0
        %4851 = vdwg.mxu0
        %4852 = vmatprep.subr.bf16.mxu0 %v4451
        %4853 = vmatpush1.bf16.msra.mxu0 %v4450
        %4854 = vmatprep.subr.bf16.mxu0 0
        %4855 = vmatpush1.bf16.msra.mxu0 0
        %4856 = vmatprep.subr.bf16.mxu0 0
        %4857 = vmatpush1.bf16.msra.mxu0 0
        %4858 = vmatprep.subr.bf16.mxu0 0
        %4859 = vmatpush1.bf16.msra.mxu0 0
        %4860 = vmatprep.subr.bf16.mxu0 0
        %4861 = vmatpush1.bf16.msra.mxu0 0
        %4862 = vmatprep.subr.bf16.mxu0 0
        %4863 = vmatpush1.bf16.msra.mxu0 0
        %4864 = vmatprep.subr.bf16.mxu0 0
        %4865 = vmatpush1.bf16.msra.mxu0 0
        %4866 = vmatprep.subr.bf16.mxu0 0
        %4867 = vmatpush1.bf16.msra.mxu0 0
        %4868 = vmatprep.subr.bf16.mxu0 0
        %4869 = vmatpush1.bf16.msra.mxu0 0
        %4870 = vmatprep.subr.bf16.mxu0 0
        %4871 = vmatpush1.bf16.msra.mxu0 0
        %4872 = vmatprep.subr.bf16.mxu0 0
        %4873 = vmatpush1.bf16.msra.mxu0 0
        %4874 = vmatprep.subr.bf16.mxu0 0
        %4875 = vmatpush1.bf16.msra.mxu0 0
        %4876 = vmatprep.subr.bf16.mxu0 0
        %4877 = vmatpush1.bf16.msra.mxu0 0
        %4878 = vmatprep.subr.bf16.mxu0 0
        %4879 = vmatpush1.bf16.msra.mxu0 0
        %4880 = vmatprep.subr.bf16.mxu0 0
        %4881 = vmatpush1.bf16.msra.mxu0 0
        %4882 = vmatprep.subr.bf16.mxu0 0
        %4883 = vmatpush1.bf16.msra.mxu0 0
        %4884 = vmatprep.mubr.bf16.mxu0 0
        %4885 = vmatmul.mubr.bf16.gmra.mrb[0].mxu0 %v4481
        %v4886 = vpop.f32.mrb[0].mxu0
        %v4887 = vadd.f32 0.0, %v4886
        %v4888 = vpop.f32.mrb[0].mxu0
        %v4889 = vadd.f32 0.0, %v4888
        %v4890 = vpop.f32.mrb[0].mxu0
        %v4891 = vpop.f32.mrb[0].mxu0
        %4892 = vdwg.mxu0
        %4893 = vmatprep.subr.bf16.mxu0 %v4453
        %4894 = vmatpush1.bf16.msra.mxu0 %v4452
        %4895 = vmatprep.subr.bf16.mxu0 0
        %4896 = vmatpush1.bf16.msra.mxu0 0
        %4897 = vmatprep.subr.bf16.mxu0 0
        %4898 = vmatpush1.bf16.msra.mxu0 0
        %4899 = vmatprep.subr.bf16.mxu0 0
        %4900 = vmatpush1.bf16.msra.mxu0 0
        %4901 = vmatprep.subr.bf16.mxu0 0
        %4902 = vmatpush1.bf16.msra.mxu0 0
        %4903 = vmatprep.subr.bf16.mxu0 0
        %4904 = vmatpush1.bf16.msra.mxu0 0
        %4905 = vmatprep.subr.bf16.mxu0 0
        %4906 = vmatpush1.bf16.msra.mxu0 0
        %4907 = vmatprep.subr.bf16.mxu0 0
        %4908 = vmatpush1.bf16.msra.mxu0 0
        %4909 = vmatprep.subr.bf16.mxu0 0
        %4910 = vmatpush1.bf16.msra.mxu0 0
        %4911 = vmatprep.subr.bf16.mxu0 0
        %4912 = vmatpush1.bf16.msra.mxu0 0
        %4913 = vmatprep.subr.bf16.mxu0 0
        %4914 = vmatpush1.bf16.msra.mxu0 0
        %4915 = vmatprep.subr.bf16.mxu0 0
        %4916 = vmatpush1.bf16.msra.mxu0 0
        %4917 = vmatprep.subr.bf16.mxu0 0
        %4918 = vmatpush1.bf16.msra.mxu0 0
        %4919 = vmatprep.subr.bf16.mxu0 0
        %4920 = vmatpush1.bf16.msra.mxu0 0
        %4921 = vmatprep.subr.bf16.mxu0 0
        %4922 = vmatpush1.bf16.msra.mxu0 0
        %4923 = vmatprep.subr.bf16.mxu0 0
        %4924 = vmatpush1.bf16.msra.mxu0 0
        %4925 = vmatprep.mubr.bf16.mxu0 0
        %4926 = vmatmul.mubr.bf16.gmra.mrb[0].mxu0 %v4481
        %v4927 = vpop.f32.mrb[0].mxu0
        %v4928 = vadd.f32 0.0, %v4927
        %v4929 = vpop.f32.mrb[0].mxu0
        %v4930 = vadd.f32 0.0, %v4929
        %v4931 = vpop.f32.mrb[0].mxu0
        %v4932 = vpop.f32.mrb[0].mxu0
        %4933 = vdwg.mxu0
        %4934 = vmatprep.subr.bf16.mxu0 %v4455
        %4935 = vmatpush1.bf16.msra.mxu0 %v4454
        %4936 = vmatprep.subr.bf16.mxu0 0
        %4937 = vmatpush1.bf16.msra.mxu0 0
        %4938 = vmatprep.subr.bf16.mxu0 0
        %4939 = vmatpush1.bf16.msra.mxu0 0
        %4940 = vmatprep.subr.bf16.mxu0 0
        %4941 = vmatpush1.bf16.msra.mxu0 0
        %4942 = vmatprep.subr.bf16.mxu0 0
        %4943 = vmatpush1.bf16.msra.mxu0 0
        %4944 = vmatprep.subr.bf16.mxu0 0
        %4945 = vmatpush1.bf16.msra.mxu0 0
        %4946 = vmatprep.subr.bf16.mxu0 0
        %4947 = vmatpush1.bf16.msra.mxu0 0
        %4948 = vmatprep.subr.bf16.mxu0 0
        %4949 = vmatpush1.bf16.msra.mxu0 0
        %4950 = vmatprep.subr.bf16.mxu0 0
        %4951 = vmatpush1.bf16.msra.mxu0 0
        %4952 = vmatprep.subr.bf16.mxu0 0
        %4953 = vmatpush1.bf16.msra.mxu0 0
        %4954 = vmatprep.subr.bf16.mxu0 0
        %4955 = vmatpush1.bf16.msra.mxu0 0
        %4956 = vmatprep.subr.bf16.mxu0 0
        %4957 = vmatpush1.bf16.msra.mxu0 0
        %4958 = vmatprep.subr.bf16.mxu0 0
        %4959 = vmatpush1.bf16.msra.mxu0 0
        %4960 = vmatprep.subr.bf16.mxu0 0
        %4961 = vmatpush1.bf16.msra.mxu0 0
        %4962 = vmatprep.subr.bf16.mxu0 0
        %4963 = vmatpush1.bf16.msra.mxu0 0
        %4964 = vmatprep.subr.bf16.mxu0 0
        %4965 = vmatpush1.bf16.msra.mxu0 0
        %4966 = vmatprep.mubr.bf16.mxu0 0
        %4967 = vmatmul.mubr.bf16.gmra.mrb[0].mxu0 %v4481
        %v4968 = vpop.f32.mrb[0].mxu0
        %v4969 = vadd.f32 0.0, %v4968
        %v4970 = vpop.f32.mrb[0].mxu0
        %v4971 = vadd.f32 0.0, %v4970
        %v4972 = vpop.f32.mrb[0].mxu0
        %v4973 = vpop.f32.mrb[0].mxu0
        %4974 = vdwg.mxu0
        %v4975 = vpack.c.bf16 %v4518, %v4518
        %v4976 = vpack.c.bf16 %v4682, %v4682
        %v4977 = vpack.c.bf16 %v4846, %v4846
        %4978 = vmatprep.subr.bf16.mxu0 0
        %4979 = vmatpush1.bf16.xpose.msra.mxu0 %v4976
        %4980 = vmatprep.subr.bf16.mxu0 0
        %4981 = vmatpush1.bf16.xpose.msra.mxu0 0
        %4982 = vmatprep.subr.bf16.mxu0 0
        %4983 = vmatpush1.bf16.xpose.msra.mxu0 0
        %4984 = vmatprep.subr.bf16.mxu0 0
        %4985 = vmatpush1.bf16.xpose.msra.mxu0 0
        %4986 = vmatprep.subr.bf16.mxu0 0
        %4987 = vmatpush1.bf16.xpose.msra.mxu0 0
        %4988 = vmatprep.subr.bf16.mxu0 0
        %4989 = vmatpush1.bf16.xpose.msra.mxu0 0
        %4990 = vmatprep.subr.bf16.mxu0 0
        %4991 = vmatpush1.bf16.xpose.msra.mxu0 0
        %4992 = vmatprep.subr.bf16.mxu0 0
        %4993 = vmatpush1.bf16.xpose.msra.mxu0 0
        %4994 = vmatprep.subr.bf16.mxu0 0
        %4995 = vmatpush1.bf16.xpose.msra.mxu0 0
        %4996 = vmatprep.subr.bf16.mxu0 0
        %4997 = vmatpush1.bf16.xpose.msra.mxu0 0
        %4998 = vmatprep.subr.bf16.mxu0 0
        %4999 = vmatpush1.bf16.xpose.msra.mxu0 0
        %5000 = vmatprep.subr.bf16.mxu0 0
        %5001 = vmatpush1.bf16.xpose.msra.mxu0 0
        %5002 = vmatprep.subr.bf16.mxu0 0
        %5003 = vmatpush1.bf16.xpose.msra.mxu0 0
        %5004 = vmatprep.subr.bf16.mxu0 0
        %5005 = vmatpush1.bf16.xpose.msra.mxu0 0
        %5006 = vmatprep.subr.bf16.mxu0 0
        %5007 = vmatpush1.bf16.xpose.msra.mxu0 0
        %5008 = vmatprep.subr.bf16.mxu0 0
        %5009 = vmatpush1.bf16.xpose.msra.mxu0 0
        %5010 = vmatprep.mubr.bf16.mxu0 0
        %5011 = vmatmul.mubr.bf16.gmra.mrb[0].mxu0 %v4975
        %v5012 = vpop.f32.mrb[0].mxu0
        %v5013 = vadd.f32 0.0, %v5012
        %v5014 = vpop.f32.mrb[0].mxu0
        %v5015 = vpop.f32.mrb[0].mxu0
        %v5016 = vpop.f32.mrb[0].mxu0
        %5017 = vdwg.mxu0
        %v5018 = vsel %vm1481, %v5013, -inf
        %5019 = vmax.xlane.f32.xlu0 %v5018
        %v5020 = vpop.xlane.xlu0 %5019
        %v5021 = vsub.f32 %v5013, %v5020
        %v5022 = vmul.f32 %v5021, 1.442695
        %v5023 = vpow.pop %v5022
        %v5024 = vsel %vm1481, %v5023, 0.0
        %5025 = vadd.xlane.f32.xlu0 %v5024
        %v5026 = vpop.xlane.xlu0 %5025
        %v5027 = vrcp.pop %v5026
        %v5028 = vmul.f32 %v5023, %v5027
        %v5029 = vpack.c.bf16 %v5028, %v5028
        %v5031 = vsel %vm1481, %v5029, 0
        %v5034 = vsel %vm1497, %v4977, 0
        %5036 = vmatprep.subr.bf16.mxu0 0
        %5037 = vmatpush1.bf16.msra.mxu0 %v5034
        %5038 = vmatprep.subr.bf16.mxu0 0
        %5039 = vmatpush1.bf16.msra.mxu0 0
        %5040 = vmatprep.subr.bf16.mxu0 0
        %5041 = vmatpush1.bf16.msra.mxu0 0
        %5042 = vmatprep.subr.bf16.mxu0 0
        %5043 = vmatpush1.bf16.msra.mxu0 0
        %5044 = vmatprep.subr.bf16.mxu0 0
        %5045 = vmatpush1.bf16.msra.mxu0 0
        %5046 = vmatprep.subr.bf16.mxu0 0
        %5047 = vmatpush1.bf16.msra.mxu0 0
        %5048 = vmatprep.subr.bf16.mxu0 0
        %5049 = vmatpush1.bf16.msra.mxu0 0
        %5050 = vmatprep.subr.bf16.mxu0 0
        %5051 = vmatpush1.bf16.msra.mxu0 0
        %5052 = vmatprep.subr.bf16.mxu0 0
        %5053 = vmatpush1.bf16.msra.mxu0 0
        %5054 = vmatprep.subr.bf16.mxu0 0
        %5055 = vmatpush1.bf16.msra.mxu0 0
        %5056 = vmatprep.subr.bf16.mxu0 0
        %5057 = vmatpush1.bf16.msra.mxu0 0
        %5058 = vmatprep.subr.bf16.mxu0 0
        %5059 = vmatpush1.bf16.msra.mxu0 0
        %5060 = vmatprep.subr.bf16.mxu0 0
        %5061 = vmatpush1.bf16.msra.mxu0 0
        %5062 = vmatprep.subr.bf16.mxu0 0
        %5063 = vmatpush1.bf16.msra.mxu0 0
        %5064 = vmatprep.subr.bf16.mxu0 0
        %5065 = vmatpush1.bf16.msra.mxu0 0
        %5066 = vmatprep.subr.bf16.mxu0 0
        %5067 = vmatpush1.bf16.msra.mxu0 0
        %5068 = vmatprep.mubr.bf16.mxu0 0
        %5069 = vmatmul.mubr.bf16.gmra.mrb[0].mxu0 %v5031
        %v5070 = vpop.f32.mrb[0].mxu0
        %v5071 = vadd.f32 0.0, %v5070
        %v5072 = vpop.f32.mrb[0].mxu0
        %v5073 = vpop.f32.mrb[0].mxu0
        %v5074 = vpop.f32.mrb[0].mxu0
        %5075 = vdwg.mxu0
        %v5076 = vpack.c.bf16 %v4520, %v4520
        %v5077 = vpack.c.bf16 %v4684, %v4684
        %v5078 = vpack.c.bf16 %v4848, %v4848
        %5079 = vmatprep.subr.bf16.mxu0 0
        %5080 = vmatpush1.bf16.xpose.msra.mxu0 %v5077
        %5081 = vmatprep.subr.bf16.mxu0 0
        %5082 = vmatpush1.bf16.xpose.msra.mxu0 0
        %5083 = vmatprep.subr.bf16.mxu0 0
        %5084 = vmatpush1.bf16.xpose.msra.mxu0 0
        %5085 = vmatprep.subr.bf16.mxu0 0
        %5086 = vmatpush1.bf16.xpose.msra.mxu0 0
        %5087 = vmatprep.subr.bf16.mxu0 0
        %5088 = vmatpush1.bf16.xpose.msra.mxu0 0
        %5089 = vmatprep.subr.bf16.mxu0 0
        %5090 = vmatpush1.bf16.xpose.msra.mxu0 0
        %5091 = vmatprep.subr.bf16.mxu0 0
        %5092 = vmatpush1.bf16.xpose.msra.mxu0 0
        %5093 = vmatprep.subr.bf16.mxu0 0
        %5094 = vmatpush1.bf16.xpose.msra.mxu0 0
        %5095 = vmatprep.subr.bf16.mxu0 0
        %5096 = vmatpush1.bf16.xpose.msra.mxu0 0
        %5097 = vmatprep.subr.bf16.mxu0 0
        %5098 = vmatpush1.bf16.xpose.msra.mxu0 0
        %5099 = vmatprep.subr.bf16.mxu0 0
        %5100 = vmatpush1.bf16.xpose.msra.mxu0 0
        %5101 = vmatprep.subr.bf16.mxu0 0
        %5102 = vmatpush1.bf16.xpose.msra.mxu0 0
        %5103 = vmatprep.subr.bf16.mxu0 0
        %5104 = vmatpush1.bf16.xpose.msra.mxu0 0
        %5105 = vmatprep.subr.bf16.mxu0 0
        %5106 = vmatpush1.bf16.xpose.msra.mxu0 0
        %5107 = vmatprep.subr.bf16.mxu0 0
        %5108 = vmatpush1.bf16.xpose.msra.mxu0 0
        %5109 = vmatprep.subr.bf16.mxu0 0
        %5110 = vmatpush1.bf16.xpose.msra.mxu0 0
        %5111 = vmatprep.mubr.bf16.mxu0 0
        %5112 = vmatmul.mubr.bf16.gmra.mrb[0].mxu0 %v5076
        %v5113 = vpop.f32.mrb[0].mxu0
        %v5114 = vadd.f32 0.0, %v5113
        %v5115 = vpop.f32.mrb[0].mxu0
        %v5116 = vpop.f32.mrb[0].mxu0
        %v5117 = vpop.f32.mrb[0].mxu0
        %5118 = vdwg.mxu0
        %v5119 = vsel %vm1481, %v5114, -inf
        %5120 = vmax.xlane.f32.xlu0 %v5119
        %v5121 = vpop.xlane.xlu0 %5120
        %v5122 = vsub.f32 %v5114, %v5121
        %v5123 = vmul.f32 %v5122, 1.442695
        %v5124 = vpow.pop %v5123
        %v5125 = vsel %vm1481, %v5124, 0.0
        %5126 = vadd.xlane.f32.xlu0 %v5125
        %v5127 = vpop.xlane.xlu0 %5126
        %v5128 = vrcp.pop %v5127
        %v5129 = vmul.f32 %v5124, %v5128
        %v5130 = vpack.c.bf16 %v5129, %v5129
        %v5132 = vsel %vm1481, %v5130, 0
        %v5135 = vsel %vm1497, %v5078, 0
        %5137 = vmatprep.subr.bf16.mxu0 0
        %5138 = vmatpush1.bf16.msra.mxu0 %v5135
        %5139 = vmatprep.subr.bf16.mxu0 0
        %5140 = vmatpush1.bf16.msra.mxu0 0
        %5141 = vmatprep.subr.bf16.mxu0 0
        %5142 = vmatpush1.bf16.msra.mxu0 0
        %5143 = vmatprep.subr.bf16.mxu0 0
        %5144 = vmatpush1.bf16.msra.mxu0 0
        %5145 = vmatprep.subr.bf16.mxu0 0
        %5146 = vmatpush1.bf16.msra.mxu0 0
        %5147 = vmatprep.subr.bf16.mxu0 0
        %5148 = vmatpush1.bf16.msra.mxu0 0
        %5149 = vmatprep.subr.bf16.mxu0 0
        %5150 = vmatpush1.bf16.msra.mxu0 0
        %5151 = vmatprep.subr.bf16.mxu0 0
        %5152 = vmatpush1.bf16.msra.mxu0 0
        %5153 = vmatprep.subr.bf16.mxu0 0
        %5154 = vmatpush1.bf16.msra.mxu0 0
        %5155 = vmatprep.subr.bf16.mxu0 0
        %5156 = vmatpush1.bf16.msra.mxu0 0
        %5157 = vmatprep.subr.bf16.mxu0 0
        %5158 = vmatpush1.bf16.msra.mxu0 0
        %5159 = vmatprep.subr.bf16.mxu0 0
        %5160 = vmatpush1.bf16.msra.mxu0 0
        %5161 = vmatprep.subr.bf16.mxu0 0
        %5162 = vmatpush1.bf16.msra.mxu0 0
        %5163 = vmatprep.subr.bf16.mxu0 0
        %5164 = vmatpush1.bf16.msra.mxu0 0
        %5165 = vmatprep.subr.bf16.mxu0 0
        %5166 = vmatpush1.bf16.msra.mxu0 0
        %5167 = vmatprep.subr.bf16.mxu0 0
        %5168 = vmatpush1.bf16.msra.mxu0 0
        %5169 = vmatprep.mubr.bf16.mxu0 0
        %5170 = vmatmul.mubr.bf16.gmra.mrb[0].mxu0 %v5132
        %v5171 = vpop.f32.mrb[0].mxu0
        %v5172 = vadd.f32 0.0, %v5171
        %v5173 = vpop.f32.mrb[0].mxu0
        %v5174 = vpop.f32.mrb[0].mxu0
        %v5175 = vpop.f32.mrb[0].mxu0
        %5176 = vdwg.mxu0
        %v5177 = vpack.c.bf16 %v4559, %v4559
        %v5178 = vpack.c.bf16 %v4723, %v4723
        %v5179 = vpack.c.bf16 %v4887, %v4887
        %5180 = vmatprep.subr.bf16.mxu0 0
        %5181 = vmatpush1.bf16.xpose.msra.mxu0 %v5178
        %5182 = vmatprep.subr.bf16.mxu0 0
        %5183 = vmatpush1.bf16.xpose.msra.mxu0 0
        %5184 = vmatprep.subr.bf16.mxu0 0
        %5185 = vmatpush1.bf16.xpose.msra.mxu0 0
        %5186 = vmatprep.subr.bf16.mxu0 0
        %5187 = vmatpush1.bf16.xpose.msra.mxu0 0
        %5188 = vmatprep.subr.bf16.mxu0 0
        %5189 = vmatpush1.bf16.xpose.msra.mxu0 0
        %5190 = vmatprep.subr.bf16.mxu0 0
        %5191 = vmatpush1.bf16.xpose.msra.mxu0 0
        %5192 = vmatprep.subr.bf16.mxu0 0
        %5193 = vmatpush1.bf16.xpose.msra.mxu0 0
        %5194 = vmatprep.subr.bf16.mxu0 0
        %5195 = vmatpush1.bf16.xpose.msra.mxu0 0
        %5196 = vmatprep.subr.bf16.mxu0 0
        %5197 = vmatpush1.bf16.xpose.msra.mxu0 0
        %5198 = vmatprep.subr.bf16.mxu0 0
        %5199 = vmatpush1.bf16.xpose.msra.mxu0 0
        %5200 = vmatprep.subr.bf16.mxu0 0
        %5201 = vmatpush1.bf16.xpose.msra.mxu0 0
        %5202 = vmatprep.subr.bf16.mxu0 0
        %5203 = vmatpush1.bf16.xpose.msra.mxu0 0
        %5204 = vmatprep.subr.bf16.mxu0 0
        %5205 = vmatpush1.bf16.xpose.msra.mxu0 0
        %5206 = vmatprep.subr.bf16.mxu0 0
        %5207 = vmatpush1.bf16.xpose.msra.mxu0 0
        %5208 = vmatprep.subr.bf16.mxu0 0
        %5209 = vmatpush1.bf16.xpose.msra.mxu0 0
        %5210 = vmatprep.subr.bf16.mxu0 0
        %5211 = vmatpush1.bf16.xpose.msra.mxu0 0
        %5212 = vmatprep.mubr.bf16.mxu0 0
        %5213 = vmatmul.mubr.bf16.gmra.mrb[0].mxu0 %v5177
        %v5214 = vpop.f32.mrb[0].mxu0
        %v5215 = vadd.f32 0.0, %v5214
        %v5216 = vpop.f32.mrb[0].mxu0
        %v5217 = vpop.f32.mrb[0].mxu0
        %v5218 = vpop.f32.mrb[0].mxu0
        %5219 = vdwg.mxu0
        %v5220 = vsel %vm1481, %v5215, -inf
        %5221 = vmax.xlane.f32.xlu0 %v5220
        %v5222 = vpop.xlane.xlu0 %5221
        %v5223 = vsub.f32 %v5215, %v5222
        %v5224 = vmul.f32 %v5223, 1.442695
        %v5225 = vpow.pop %v5224
        %v5226 = vsel %vm1481, %v5225, 0.0
        %5227 = vadd.xlane.f32.xlu0 %v5226
        %v5228 = vpop.xlane.xlu0 %5227
        %v5229 = vrcp.pop %v5228
        %v5230 = vmul.f32 %v5225, %v5229
        %v5231 = vpack.c.bf16 %v5230, %v5230
        %v5233 = vsel %vm1481, %v5231, 0
        %v5236 = vsel %vm1497, %v5179, 0
        %5238 = vmatprep.subr.bf16.mxu0 0
        %5239 = vmatpush1.bf16.msra.mxu0 %v5236
        %5240 = vmatprep.subr.bf16.mxu0 0
        %5241 = vmatpush1.bf16.msra.mxu0 0
        %5242 = vmatprep.subr.bf16.mxu0 0
        %5243 = vmatpush1.bf16.msra.mxu0 0
        %5244 = vmatprep.subr.bf16.mxu0 0
        %5245 = vmatpush1.bf16.msra.mxu0 0
        %5246 = vmatprep.subr.bf16.mxu0 0
        %5247 = vmatpush1.bf16.msra.mxu0 0
        %5248 = vmatprep.subr.bf16.mxu0 0
        %5249 = vmatpush1.bf16.msra.mxu0 0
        %5250 = vmatprep.subr.bf16.mxu0 0
        %5251 = vmatpush1.bf16.msra.mxu0 0
        %5252 = vmatprep.subr.bf16.mxu0 0
        %5253 = vmatpush1.bf16.msra.mxu0 0
        %5254 = vmatprep.subr.bf16.mxu0 0
        %5255 = vmatpush1.bf16.msra.mxu0 0
        %5256 = vmatprep.subr.bf16.mxu0 0
        %5257 = vmatpush1.bf16.msra.mxu0 0
        %5258 = vmatprep.subr.bf16.mxu0 0
        %5259 = vmatpush1.bf16.msra.mxu0 0
        %5260 = vmatprep.subr.bf16.mxu0 0
        %5261 = vmatpush1.bf16.msra.mxu0 0
        %5262 = vmatprep.subr.bf16.mxu0 0
        %5263 = vmatpush1.bf16.msra.mxu0 0
        %5264 = vmatprep.subr.bf16.mxu0 0
        %5265 = vmatpush1.bf16.msra.mxu0 0
        %5266 = vmatprep.subr.bf16.mxu0 0
        %5267 = vmatpush1.bf16.msra.mxu0 0
        %5268 = vmatprep.subr.bf16.mxu0 0
        %5269 = vmatpush1.bf16.msra.mxu0 0
        %5270 = vmatprep.mubr.bf16.mxu0 0
        %5271 = vmatmul.mubr.bf16.gmra.mrb[0].mxu0 %v5233
        %v5272 = vpop.f32.mrb[0].mxu0
        %v5273 = vadd.f32 0.0, %v5272
        %v5274 = vpop.f32.mrb[0].mxu0
        %v5275 = vpop.f32.mrb[0].mxu0
        %v5276 = vpop.f32.mrb[0].mxu0
        %5277 = vdwg.mxu0
        %v5278 = vpack.c.bf16 %v4561, %v4561
        %v5279 = vpack.c.bf16 %v4725, %v4725
        %v5280 = vpack.c.bf16 %v4889, %v4889
        %5281 = vmatprep.subr.bf16.mxu0 0
        %5282 = vmatpush1.bf16.xpose.msra.mxu0 %v5279
        %5283 = vmatprep.subr.bf16.mxu0 0
        %5284 = vmatpush1.bf16.xpose.msra.mxu0 0
        %5285 = vmatprep.subr.bf16.mxu0 0
        %5286 = vmatpush1.bf16.xpose.msra.mxu0 0
        %5287 = vmatprep.subr.bf16.mxu0 0
        %5288 = vmatpush1.bf16.xpose.msra.mxu0 0
        %5289 = vmatprep.subr.bf16.mxu0 0
        %5290 = vmatpush1.bf16.xpose.msra.mxu0 0
        %5291 = vmatprep.subr.bf16.mxu0 0
        %5292 = vmatpush1.bf16.xpose.msra.mxu0 0
        %5293 = vmatprep.subr.bf16.mxu0 0
        %5294 = vmatpush1.bf16.xpose.msra.mxu0 0
        %5295 = vmatprep.subr.bf16.mxu0 0
        %5296 = vmatpush1.bf16.xpose.msra.mxu0 0
        %5297 = vmatprep.subr.bf16.mxu0 0
        %5298 = vmatpush1.bf16.xpose.msra.mxu0 0
        %5299 = vmatprep.subr.bf16.mxu0 0
        %5300 = vmatpush1.bf16.xpose.msra.mxu0 0
        %5301 = vmatprep.subr.bf16.mxu0 0
        %5302 = vmatpush1.bf16.xpose.msra.mxu0 0
        %5303 = vmatprep.subr.bf16.mxu0 0
        %5304 = vmatpush1.bf16.xpose.msra.mxu0 0
        %5305 = vmatprep.subr.bf16.mxu0 0
        %5306 = vmatpush1.bf16.xpose.msra.mxu0 0
        %5307 = vmatprep.subr.bf16.mxu0 0
        %5308 = vmatpush1.bf16.xpose.msra.mxu0 0
        %5309 = vmatprep.subr.bf16.mxu0 0
        %5310 = vmatpush1.bf16.xpose.msra.mxu0 0
        %5311 = vmatprep.subr.bf16.mxu0 0
        %5312 = vmatpush1.bf16.xpose.msra.mxu0 0
        %5313 = vmatprep.mubr.bf16.mxu0 0
        %5314 = vmatmul.mubr.bf16.gmra.mrb[0].mxu0 %v5278
        %v5315 = vpop.f32.mrb[0].mxu0
        %v5316 = vadd.f32 0.0, %v5315
        %v5317 = vpop.f32.mrb[0].mxu0
        %v5318 = vpop.f32.mrb[0].mxu0
        %v5319 = vpop.f32.mrb[0].mxu0
        %5320 = vdwg.mxu0
        %v5321 = vsel %vm1481, %v5316, -inf
        %5322 = vmax.xlane.f32.xlu0 %v5321
        %v5323 = vpop.xlane.xlu0 %5322
        %v5324 = vsub.f32 %v5316, %v5323
        %v5325 = vmul.f32 %v5324, 1.442695
        %v5326 = vpow.pop %v5325
        %v5327 = vsel %vm1481, %v5326, 0.0
        %5328 = vadd.xlane.f32.xlu0 %v5327
        %v5329 = vpop.xlane.xlu0 %5328
        %v5330 = vrcp.pop %v5329
        %v5331 = vmul.f32 %v5326, %v5330
        %v5332 = vpack.c.bf16 %v5331, %v5331
        %v5334 = vsel %vm1481, %v5332, 0
        %v5337 = vsel %vm1497, %v5280, 0
        %5339 = vmatprep.subr.bf16.mxu0 0
        %5340 = vmatpush1.bf16.msra.mxu0 %v5337
        %5341 = vmatprep.subr.bf16.mxu0 0
        %5342 = vmatpush1.bf16.msra.mxu0 0
        %5343 = vmatprep.subr.bf16.mxu0 0
        %5344 = vmatpush1.bf16.msra.mxu0 0
        %5345 = vmatprep.subr.bf16.mxu0 0
        %5346 = vmatpush1.bf16.msra.mxu0 0
        %5347 = vmatprep.subr.bf16.mxu0 0
        %5348 = vmatpush1.bf16.msra.mxu0 0
        %5349 = vmatprep.subr.bf16.mxu0 0
        %5350 = vmatpush1.bf16.msra.mxu0 0
        %5351 = vmatprep.subr.bf16.mxu0 0
        %5352 = vmatpush1.bf16.msra.mxu0 0
        %5353 = vmatprep.subr.bf16.mxu0 0
        %5354 = vmatpush1.bf16.msra.mxu0 0
        %5355 = vmatprep.subr.bf16.mxu0 0
        %5356 = vmatpush1.bf16.msra.mxu0 0
        %5357 = vmatprep.subr.bf16.mxu0 0
        %5358 = vmatpush1.bf16.msra.mxu0 0
        %5359 = vmatprep.subr.bf16.mxu0 0
        %5360 = vmatpush1.bf16.msra.mxu0 0
        %5361 = vmatprep.subr.bf16.mxu0 0
        %5362 = vmatpush1.bf16.msra.mxu0 0
        %5363 = vmatprep.subr.bf16.mxu0 0
        %5364 = vmatpush1.bf16.msra.mxu0 0
        %5365 = vmatprep.subr.bf16.mxu0 0
        %5366 = vmatpush1.bf16.msra.mxu0 0
        %5367 = vmatprep.subr.bf16.mxu0 0
        %5368 = vmatpush1.bf16.msra.mxu0 0
        %5369 = vmatprep.subr.bf16.mxu0 0
        %5370 = vmatpush1.bf16.msra.mxu0 0
        %5371 = vmatprep.mubr.bf16.mxu0 0
        %5372 = vmatmul.mubr.bf16.gmra.mrb[0].mxu0 %v5334
        %v5373 = vpop.f32.mrb[0].mxu0
        %v5374 = vadd.f32 0.0, %v5373
        %v5375 = vpop.f32.mrb[0].mxu0
        %v5376 = vpop.f32.mrb[0].mxu0
        %v5377 = vpop.f32.mrb[0].mxu0
        %5378 = vdwg.mxu0
        %v5379 = vpack.c.bf16 %v4600, %v4600
        %v5380 = vpack.c.bf16 %v4764, %v4764
        %v5381 = vpack.c.bf16 %v4928, %v4928
        %5382 = vmatprep.subr.bf16.mxu0 0
        %5383 = vmatpush1.bf16.xpose.msra.mxu0 %v5380
        %5384 = vmatprep.subr.bf16.mxu0 0
        %5385 = vmatpush1.bf16.xpose.msra.mxu0 0
        %5386 = vmatprep.subr.bf16.mxu0 0
        %5387 = vmatpush1.bf16.xpose.msra.mxu0 0
        %5388 = vmatprep.subr.bf16.mxu0 0
        %5389 = vmatpush1.bf16.xpose.msra.mxu0 0
        %5390 = vmatprep.subr.bf16.mxu0 0
        %5391 = vmatpush1.bf16.xpose.msra.mxu0 0
        %5392 = vmatprep.subr.bf16.mxu0 0
        %5393 = vmatpush1.bf16.xpose.msra.mxu0 0
        %5394 = vmatprep.subr.bf16.mxu0 0
        %5395 = vmatpush1.bf16.xpose.msra.mxu0 0
        %5396 = vmatprep.subr.bf16.mxu0 0
        %5397 = vmatpush1.bf16.xpose.msra.mxu0 0
        %5398 = vmatprep.subr.bf16.mxu0 0
        %5399 = vmatpush1.bf16.xpose.msra.mxu0 0
        %5400 = vmatprep.subr.bf16.mxu0 0
        %5401 = vmatpush1.bf16.xpose.msra.mxu0 0
        %5402 = vmatprep.subr.bf16.mxu0 0
        %5403 = vmatpush1.bf16.xpose.msra.mxu0 0
        %5404 = vmatprep.subr.bf16.mxu0 0
        %5405 = vmatpush1.bf16.xpose.msra.mxu0 0
        %5406 = vmatprep.subr.bf16.mxu0 0
        %5407 = vmatpush1.bf16.xpose.msra.mxu0 0
        %5408 = vmatprep.subr.bf16.mxu0 0
        %5409 = vmatpush1.bf16.xpose.msra.mxu0 0
        %5410 = vmatprep.subr.bf16.mxu0 0
        %5411 = vmatpush1.bf16.xpose.msra.mxu0 0
        %5412 = vmatprep.subr.bf16.mxu0 0
        %5413 = vmatpush1.bf16.xpose.msra.mxu0 0
        %5414 = vmatprep.mubr.bf16.mxu0 0
        %5415 = vmatmul.mubr.bf16.gmra.mrb[0].mxu0 %v5379
        %v5416 = vpop.f32.mrb[0].mxu0
        %v5417 = vadd.f32 0.0, %v5416
        %v5418 = vpop.f32.mrb[0].mxu0
        %v5419 = vpop.f32.mrb[0].mxu0
        %v5420 = vpop.f32.mrb[0].mxu0
        %5421 = vdwg.mxu0
        %v5422 = vsel %vm1481, %v5417, -inf
        %5423 = vmax.xlane.f32.xlu0 %v5422
        %v5424 = vpop.xlane.xlu0 %5423
        %v5425 = vsub.f32 %v5417, %v5424
        %v5426 = vmul.f32 %v5425, 1.442695
        %v5427 = vpow.pop %v5426
        %v5428 = vsel %vm1481, %v5427, 0.0
        %5429 = vadd.xlane.f32.xlu0 %v5428
        %v5430 = vpop.xlane.xlu0 %5429
        %v5431 = vrcp.pop %v5430
        %v5432 = vmul.f32 %v5427, %v5431
        %v5433 = vpack.c.bf16 %v5432, %v5432
        %v5435 = vsel %vm1481, %v5433, 0
        %v5438 = vsel %vm1497, %v5381, 0
        %5440 = vmatprep.subr.bf16.mxu0 0
        %5441 = vmatpush1.bf16.msra.mxu0 %v5438
        %5442 = vmatprep.subr.bf16.mxu0 0
        %5443 = vmatpush1.bf16.msra.mxu0 0
        %5444 = vmatprep.subr.bf16.mxu0 0
        %5445 = vmatpush1.bf16.msra.mxu0 0
        %5446 = vmatprep.subr.bf16.mxu0 0
        %5447 = vmatpush1.bf16.msra.mxu0 0
        %5448 = vmatprep.subr.bf16.mxu0 0
        %5449 = vmatpush1.bf16.msra.mxu0 0
        %5450 = vmatprep.subr.bf16.mxu0 0
        %5451 = vmatpush1.bf16.msra.mxu0 0
        %5452 = vmatprep.subr.bf16.mxu0 0
        %5453 = vmatpush1.bf16.msra.mxu0 0
        %5454 = vmatprep.subr.bf16.mxu0 0
        %5455 = vmatpush1.bf16.msra.mxu0 0
        %5456 = vmatprep.subr.bf16.mxu0 0
        %5457 = vmatpush1.bf16.msra.mxu0 0
        %5458 = vmatprep.subr.bf16.mxu0 0
        %5459 = vmatpush1.bf16.msra.mxu0 0
        %5460 = vmatprep.subr.bf16.mxu0 0
        %5461 = vmatpush1.bf16.msra.mxu0 0
        %5462 = vmatprep.subr.bf16.mxu0 0
        %5463 = vmatpush1.bf16.msra.mxu0 0
        %5464 = vmatprep.subr.bf16.mxu0 0
        %5465 = vmatpush1.bf16.msra.mxu0 0
        %5466 = vmatprep.subr.bf16.mxu0 0
        %5467 = vmatpush1.bf16.msra.mxu0 0
        %5468 = vmatprep.subr.bf16.mxu0 0
        %5469 = vmatpush1.bf16.msra.mxu0 0
        %5470 = vmatprep.subr.bf16.mxu0 0
        %5471 = vmatpush1.bf16.msra.mxu0 0
        %5472 = vmatprep.mubr.bf16.mxu0 0
        %5473 = vmatmul.mubr.bf16.gmra.mrb[0].mxu0 %v5435
        %v5474 = vpop.f32.mrb[0].mxu0
        %v5475 = vadd.f32 0.0, %v5474
        %v5476 = vpop.f32.mrb[0].mxu0
        %v5477 = vpop.f32.mrb[0].mxu0
        %v5478 = vpop.f32.mrb[0].mxu0
        %5479 = vdwg.mxu0
        %v5480 = vpack.c.bf16 %v4602, %v4602
        %v5481 = vpack.c.bf16 %v4766, %v4766
        %v5482 = vpack.c.bf16 %v4930, %v4930
        %5483 = vmatprep.subr.bf16.mxu0 0
        %5484 = vmatpush1.bf16.xpose.msra.mxu0 %v5481
        %5485 = vmatprep.subr.bf16.mxu0 0
        %5486 = vmatpush1.bf16.xpose.msra.mxu0 0
        %5487 = vmatprep.subr.bf16.mxu0 0
        %5488 = vmatpush1.bf16.xpose.msra.mxu0 0
        %5489 = vmatprep.subr.bf16.mxu0 0
        %5490 = vmatpush1.bf16.xpose.msra.mxu0 0
        %5491 = vmatprep.subr.bf16.mxu0 0
        %5492 = vmatpush1.bf16.xpose.msra.mxu0 0
        %5493 = vmatprep.subr.bf16.mxu0 0
        %5494 = vmatpush1.bf16.xpose.msra.mxu0 0
        %5495 = vmatprep.subr.bf16.mxu0 0
        %5496 = vmatpush1.bf16.xpose.msra.mxu0 0
        %5497 = vmatprep.subr.bf16.mxu0 0
        %5498 = vmatpush1.bf16.xpose.msra.mxu0 0
        %5499 = vmatprep.subr.bf16.mxu0 0
        %5500 = vmatpush1.bf16.xpose.msra.mxu0 0
        %5501 = vmatprep.subr.bf16.mxu0 0
        %5502 = vmatpush1.bf16.xpose.msra.mxu0 0
        %5503 = vmatprep.subr.bf16.mxu0 0
        %5504 = vmatpush1.bf16.xpose.msra.mxu0 0
        %5505 = vmatprep.subr.bf16.mxu0 0
        %5506 = vmatpush1.bf16.xpose.msra.mxu0 0
        %5507 = vmatprep.subr.bf16.mxu0 0
        %5508 = vmatpush1.bf16.xpose.msra.mxu0 0
        %5509 = vmatprep.subr.bf16.mxu0 0
        %5510 = vmatpush1.bf16.xpose.msra.mxu0 0
        %5511 = vmatprep.subr.bf16.mxu0 0
        %5512 = vmatpush1.bf16.xpose.msra.mxu0 0
        %5513 = vmatprep.subr.bf16.mxu0 0
        %5514 = vmatpush1.bf16.xpose.msra.mxu0 0
        %5515 = vmatprep.mubr.bf16.mxu0 0
        %5516 = vmatmul.mubr.bf16.gmra.mrb[0].mxu0 %v5480
        %v5517 = vpop.f32.mrb[0].mxu0
        %v5518 = vadd.f32 0.0, %v5517
        %v5519 = vpop.f32.mrb[0].mxu0
        %v5520 = vpop.f32.mrb[0].mxu0
        %v5521 = vpop.f32.mrb[0].mxu0
        %5522 = vdwg.mxu0
        %v5523 = vsel %vm1481, %v5518, -inf
        %5524 = vmax.xlane.f32.xlu0 %v5523
        %v5525 = vpop.xlane.xlu0 %5524
        %v5526 = vsub.f32 %v5518, %v5525
        %v5527 = vmul.f32 %v5526, 1.442695
        %v5528 = vpow.pop %v5527
        %v5529 = vsel %vm1481, %v5528, 0.0
        %5530 = vadd.xlane.f32.xlu0 %v5529
        %v5531 = vpop.xlane.xlu0 %5530
        %v5532 = vrcp.pop %v5531
        %v5533 = vmul.f32 %v5528, %v5532
        %v5534 = vpack.c.bf16 %v5533, %v5533
        %v5536 = vsel %vm1481, %v5534, 0
        %v5539 = vsel %vm1497, %v5482, 0
        %5541 = vmatprep.subr.bf16.mxu0 0
        %5542 = vmatpush1.bf16.msra.mxu0 %v5539
        %5543 = vmatprep.subr.bf16.mxu0 0
        %5544 = vmatpush1.bf16.msra.mxu0 0
        %5545 = vmatprep.subr.bf16.mxu0 0
        %5546 = vmatpush1.bf16.msra.mxu0 0
        %5547 = vmatprep.subr.bf16.mxu0 0
        %5548 = vmatpush1.bf16.msra.mxu0 0
        %5549 = vmatprep.subr.bf16.mxu0 0
        %5550 = vmatpush1.bf16.msra.mxu0 0
        %5551 = vmatprep.subr.bf16.mxu0 0
        %5552 = vmatpush1.bf16.msra.mxu0 0
        %5553 = vmatprep.subr.bf16.mxu0 0
        %5554 = vmatpush1.bf16.msra.mxu0 0
        %5555 = vmatprep.subr.bf16.mxu0 0
        %5556 = vmatpush1.bf16.msra.mxu0 0
        %5557 = vmatprep.subr.bf16.mxu0 0
        %5558 = vmatpush1.bf16.msra.mxu0 0
        %5559 = vmatprep.subr.bf16.mxu0 0
        %5560 = vmatpush1.bf16.msra.mxu0 0
        %5561 = vmatprep.subr.bf16.mxu0 0
        %5562 = vmatpush1.bf16.msra.mxu0 0
        %5563 = vmatprep.subr.bf16.mxu0 0
        %5564 = vmatpush1.bf16.msra.mxu0 0
        %5565 = vmatprep.subr.bf16.mxu0 0
        %5566 = vmatpush1.bf16.msra.mxu0 0
        %5567 = vmatprep.subr.bf16.mxu0 0
        %5568 = vmatpush1.bf16.msra.mxu0 0
        %5569 = vmatprep.subr.bf16.mxu0 0
        %5570 = vmatpush1.bf16.msra.mxu0 0
        %5571 = vmatprep.subr.bf16.mxu0 0
        %5572 = vmatpush1.bf16.msra.mxu0 0
        %5573 = vmatprep.mubr.bf16.mxu0 0
        %5574 = vmatmul.mubr.bf16.gmra.mrb[0].mxu0 %v5536
        %v5575 = vpop.f32.mrb[0].mxu0
        %v5576 = vadd.f32 0.0, %v5575
        %v5577 = vpop.f32.mrb[0].mxu0
        %v5578 = vpop.f32.mrb[0].mxu0
        %v5579 = vpop.f32.mrb[0].mxu0
        %5580 = vdwg.mxu0
        %v5581 = vpack.c.bf16 %v4641, %v4641
        %v5582 = vpack.c.bf16 %v4805, %v4805
        %v5583 = vpack.c.bf16 %v4969, %v4969
        %5584 = vmatprep.subr.bf16.mxu0 0
        %5585 = vmatpush1.bf16.xpose.msra.mxu0 %v5582
        %5586 = vmatprep.subr.bf16.mxu0 0
        %5587 = vmatpush1.bf16.xpose.msra.mxu0 0
        %5588 = vmatprep.subr.bf16.mxu0 0
        %5589 = vmatpush1.bf16.xpose.msra.mxu0 0
        %5590 = vmatprep.subr.bf16.mxu0 0
        %5591 = vmatpush1.bf16.xpose.msra.mxu0 0
        %5592 = vmatprep.subr.bf16.mxu0 0
        %5593 = vmatpush1.bf16.xpose.msra.mxu0 0
        %5594 = vmatprep.subr.bf16.mxu0 0
        %5595 = vmatpush1.bf16.xpose.msra.mxu0 0
        %5596 = vmatprep.subr.bf16.mxu0 0
        %5597 = vmatpush1.bf16.xpose.msra.mxu0 0
        %5598 = vmatprep.subr.bf16.mxu0 0
        %5599 = vmatpush1.bf16.xpose.msra.mxu0 0
        %5600 = vmatprep.subr.bf16.mxu0 0
        %5601 = vmatpush1.bf16.xpose.msra.mxu0 0
        %5602 = vmatprep.subr.bf16.mxu0 0
        %5603 = vmatpush1.bf16.xpose.msra.mxu0 0
        %5604 = vmatprep.subr.bf16.mxu0 0
        %5605 = vmatpush1.bf16.xpose.msra.mxu0 0
        %5606 = vmatprep.subr.bf16.mxu0 0
        %5607 = vmatpush1.bf16.xpose.msra.mxu0 0
        %5608 = vmatprep.subr.bf16.mxu0 0
        %5609 = vmatpush1.bf16.xpose.msra.mxu0 0
        %5610 = vmatprep.subr.bf16.mxu0 0
        %5611 = vmatpush1.bf16.xpose.msra.mxu0 0
        %5612 = vmatprep.subr.bf16.mxu0 0
        %5613 = vmatpush1.bf16.xpose.msra.mxu0 0
        %5614 = vmatprep.subr.bf16.mxu0 0
        %5615 = vmatpush1.bf16.xpose.msra.mxu0 0
        %5616 = vmatprep.mubr.bf16.mxu0 0
        %5617 = vmatmul.mubr.bf16.gmra.mrb[0].mxu0 %v5581
        %v5618 = vpop.f32.mrb[0].mxu0
        %v5619 = vadd.f32 0.0, %v5618
        %v5620 = vpop.f32.mrb[0].mxu0
        %v5621 = vpop.f32.mrb[0].mxu0
        %v5622 = vpop.f32.mrb[0].mxu0
        %5623 = vdwg.mxu0
        %v5624 = vsel %vm1481, %v5619, -inf
        %5625 = vmax.xlane.f32.xlu0 %v5624
        %v5626 = vpop.xlane.xlu0 %5625
        %v5627 = vsub.f32 %v5619, %v5626
        %v5628 = vmul.f32 %v5627, 1.442695
        %v5629 = vpow.pop %v5628
        %v5630 = vsel %vm1481, %v5629, 0.0
        %5631 = vadd.xlane.f32.xlu0 %v5630
        %v5632 = vpop.xlane.xlu0 %5631
        %v5633 = vrcp.pop %v5632
        %v5634 = vmul.f32 %v5629, %v5633
        %v5635 = vpack.c.bf16 %v5634, %v5634
        %v5637 = vsel %vm1481, %v5635, 0
        %v5640 = vsel %vm1497, %v5583, 0
        %5642 = vmatprep.subr.bf16.mxu0 0
        %5643 = vmatpush1.bf16.msra.mxu0 %v5640
        %5644 = vmatprep.subr.bf16.mxu0 0
        %5645 = vmatpush1.bf16.msra.mxu0 0
        %5646 = vmatprep.subr.bf16.mxu0 0
        %5647 = vmatpush1.bf16.msra.mxu0 0
        %5648 = vmatprep.subr.bf16.mxu0 0
        %5649 = vmatpush1.bf16.msra.mxu0 0
        %5650 = vmatprep.subr.bf16.mxu0 0
        %5651 = vmatpush1.bf16.msra.mxu0 0
        %5652 = vmatprep.subr.bf16.mxu0 0
        %5653 = vmatpush1.bf16.msra.mxu0 0
        %5654 = vmatprep.subr.bf16.mxu0 0
        %5655 = vmatpush1.bf16.msra.mxu0 0
        %5656 = vmatprep.subr.bf16.mxu0 0
        %5657 = vmatpush1.bf16.msra.mxu0 0
        %5658 = vmatprep.subr.bf16.mxu0 0
        %5659 = vmatpush1.bf16.msra.mxu0 0
        %5660 = vmatprep.subr.bf16.mxu0 0
        %5661 = vmatpush1.bf16.msra.mxu0 0
        %5662 = vmatprep.subr.bf16.mxu0 0
        %5663 = vmatpush1.bf16.msra.mxu0 0
        %5664 = vmatprep.subr.bf16.mxu0 0
        %5665 = vmatpush1.bf16.msra.mxu0 0
        %5666 = vmatprep.subr.bf16.mxu0 0
        %5667 = vmatpush1.bf16.msra.mxu0 0
        %5668 = vmatprep.subr.bf16.mxu0 0
        %5669 = vmatpush1.bf16.msra.mxu0 0
        %5670 = vmatprep.subr.bf16.mxu0 0
        %5671 = vmatpush1.bf16.msra.mxu0 0
        %5672 = vmatprep.subr.bf16.mxu0 0
        %5673 = vmatpush1.bf16.msra.mxu0 0
        %5674 = vmatprep.mubr.bf16.mxu0 0
        %5675 = vmatmul.mubr.bf16.gmra.mrb[0].mxu0 %v5637
        %v5676 = vpop.f32.mrb[0].mxu0
        %v5677 = vadd.f32 0.0, %v5676
        %v5678 = vpop.f32.mrb[0].mxu0
        %v5679 = vpop.f32.mrb[0].mxu0
        %v5680 = vpop.f32.mrb[0].mxu0
        %5681 = vdwg.mxu0
        %v5682 = vpack.c.bf16 %v4643, %v4643
        %v5683 = vpack.c.bf16 %v4807, %v4807
        %v5684 = vpack.c.bf16 %v4971, %v4971
        %5685 = vmatprep.subr.bf16.mxu0 0
        %5686 = vmatpush1.bf16.xpose.msra.mxu0 %v5683
        %5687 = vmatprep.subr.bf16.mxu0 0
        %5688 = vmatpush1.bf16.xpose.msra.mxu0 0
        %5689 = vmatprep.subr.bf16.mxu0 0
        %5690 = vmatpush1.bf16.xpose.msra.mxu0 0
        %5691 = vmatprep.subr.bf16.mxu0 0
        %5692 = vmatpush1.bf16.xpose.msra.mxu0 0
        %5693 = vmatprep.subr.bf16.mxu0 0
        %5694 = vmatpush1.bf16.xpose.msra.mxu0 0
        %5695 = vmatprep.subr.bf16.mxu0 0
        %5696 = vmatpush1.bf16.xpose.msra.mxu0 0
        %5697 = vmatprep.subr.bf16.mxu0 0
        %5698 = vmatpush1.bf16.xpose.msra.mxu0 0
        %5699 = vmatprep.subr.bf16.mxu0 0
        %5700 = vmatpush1.bf16.xpose.msra.mxu0 0
        %5701 = vmatprep.subr.bf16.mxu0 0
        %5702 = vmatpush1.bf16.xpose.msra.mxu0 0
        %5703 = vmatprep.subr.bf16.mxu0 0
        %5704 = vmatpush1.bf16.xpose.msra.mxu0 0
        %5705 = vmatprep.subr.bf16.mxu0 0
        %5706 = vmatpush1.bf16.xpose.msra.mxu0 0
        %5707 = vmatprep.subr.bf16.mxu0 0
        %5708 = vmatpush1.bf16.xpose.msra.mxu0 0
        %5709 = vmatprep.subr.bf16.mxu0 0
        %5710 = vmatpush1.bf16.xpose.msra.mxu0 0
        %5711 = vmatprep.subr.bf16.mxu0 0
        %5712 = vmatpush1.bf16.xpose.msra.mxu0 0
        %5713 = vmatprep.subr.bf16.mxu0 0
        %5714 = vmatpush1.bf16.xpose.msra.mxu0 0
        %5715 = vmatprep.subr.bf16.mxu0 0
        %5716 = vmatpush1.bf16.xpose.msra.mxu0 0
        %5717 = vmatprep.mubr.bf16.mxu0 0
        %5718 = vmatmul.mubr.bf16.gmra.mrb[0].mxu0 %v5682
        %v5719 = vpop.f32.mrb[0].mxu0
        %v5720 = vadd.f32 0.0, %v5719
        %v5721 = vpop.f32.mrb[0].mxu0
        %v5722 = vpop.f32.mrb[0].mxu0
        %v5723 = vpop.f32.mrb[0].mxu0
        %5724 = vdwg.mxu0
        %v5725 = vsel %vm1481, %v5720, -inf
        %5726 = vmax.xlane.f32.xlu0 %v5725
        %v5727 = vpop.xlane.xlu0 %5726
        %v5728 = vsub.f32 %v5720, %v5727
        %v5729 = vmul.f32 %v5728, 1.442695
        %v5730 = vpow.pop %v5729
        %v5731 = vsel %vm1481, %v5730, 0.0
        %5732 = vadd.xlane.f32.xlu0 %v5731
        %v5733 = vpop.xlane.xlu0 %5732
        %v5734 = vrcp.pop %v5733
        %v5735 = vmul.f32 %v5730, %v5734
        %v5736 = vpack.c.bf16 %v5735, %v5735
        %v5738 = vsel %vm1481, %v5736, 0
        %v5741 = vsel %vm1497, %v5684, 0
        %5743 = vmatprep.subr.bf16.mxu0 0
        %5744 = vmatpush1.bf16.msra.mxu0 %v5741
        %5745 = vmatprep.subr.bf16.mxu0 0
        %5746 = vmatpush1.bf16.msra.mxu0 0
        %5747 = vmatprep.subr.bf16.mxu0 0
        %5748 = vmatpush1.bf16.msra.mxu0 0
        %5749 = vmatprep.subr.bf16.mxu0 0
        %5750 = vmatpush1.bf16.msra.mxu0 0
        %5751 = vmatprep.subr.bf16.mxu0 0
        %5752 = vmatpush1.bf16.msra.mxu0 0
        %5753 = vmatprep.subr.bf16.mxu0 0
        %5754 = vmatpush1.bf16.msra.mxu0 0
        %5755 = vmatprep.subr.bf16.mxu0 0
        %5756 = vmatpush1.bf16.msra.mxu0 0
        %5757 = vmatprep.subr.bf16.mxu0 0
        %5758 = vmatpush1.bf16.msra.mxu0 0
        %5759 = vmatprep.subr.bf16.mxu0 0
        %5760 = vmatpush1.bf16.msra.mxu0 0
        %5761 = vmatprep.subr.bf16.mxu0 0
        %5762 = vmatpush1.bf16.msra.mxu0 0
        %5763 = vmatprep.subr.bf16.mxu0 0
        %5764 = vmatpush1.bf16.msra.mxu0 0
        %5765 = vmatprep.subr.bf16.mxu0 0
        %5766 = vmatpush1.bf16.msra.mxu0 0
        %5767 = vmatprep.subr.bf16.mxu0 0
        %5768 = vmatpush1.bf16.msra.mxu0 0
        %5769 = vmatprep.subr.bf16.mxu0 0
        %5770 = vmatpush1.bf16.msra.mxu0 0
        %5771 = vmatprep.subr.bf16.mxu0 0
        %5772 = vmatpush1.bf16.msra.mxu0 0
        %5773 = vmatprep.subr.bf16.mxu0 0
        %5774 = vmatpush1.bf16.msra.mxu0 0
        %5775 = vmatprep.mubr.bf16.mxu0 0
        %5776 = vmatmul.mubr.bf16.gmra.mrb[0].mxu0 %v5738
        %v5777 = vpop.f32.mrb[0].mxu0
        %v5778 = vadd.f32 0.0, %v5777
        %v5779 = vpop.f32.mrb[0].mxu0
        %v5780 = vpop.f32.mrb[0].mxu0
        %v5781 = vpop.f32.mrb[0].mxu0
        %5782 = vdwg.mxu0
        %v5783 = vpack.c.bf16 %v5071, %v5071
        %v5784 = vpack.c.bf16 %v5172, %v5172
        %v5785 = vpack.c.bf16 %v5273, %v5273
        %v5786 = vpack.c.bf16 %v5374, %v5374
        %v5787 = vpack.c.bf16 %v5475, %v5475
        %v5788 = vpack.c.bf16 %v5576, %v5576
        %v5789 = vpack.c.bf16 %v5677, %v5677
        %v5790 = vpack.c.bf16 %v5778, %v5778
        %s5791 = scalar_lea.vmem %s618, 128 [#allocation9]
        %v5792 = vld [vmem:[%s5791] sm:$0xff]
        %v5793 = vld [vmem:[%s5791 + $0x8] sm:$0xff]
        %v5794 = vld [vmem:[%s5791 + $0x10] sm:$0xff]
        %v5795 = vld [vmem:[%s5791 + $0x18] sm:$0xff]
        %v5796 = vld [vmem:[%s5791 + $0x20] sm:$0xff]
        %v5797 = vld [vmem:[%s5791 + $0x28] sm:$0xff]
        %v5798 = vld [vmem:[%s5791 + $0x30] sm:$0xff]
        %v5799 = vld [vmem:[%s5791 + $0x38] sm:$0xff]
        %v5808 = vunpack.c.l.b16 %v5792
        %v5809 = vunpack.c.h.b16 %v5792
        %v5810 = vunpack.c.l.b16 %v5793
        %v5811 = vunpack.c.h.b16 %v5793
        %v5812 = vunpack.c.l.b16 %v5794
        %v5813 = vunpack.c.h.b16 %v5794
        %v5814 = vunpack.c.l.b16 %v5795
        %v5815 = vunpack.c.h.b16 %v5795
        %v5816 = vunpack.c.l.b16 %v5796
        %v5817 = vunpack.c.h.b16 %v5796
        %v5818 = vunpack.c.l.b16 %v5797
        %v5819 = vunpack.c.h.b16 %v5797
        %v5820 = vunpack.c.l.b16 %v5798
        %v5821 = vunpack.c.h.b16 %v5798
        %v5822 = vunpack.c.l.b16 %v5799
        %v5823 = vunpack.c.h.b16 %v5799
        %v5824 = vpack.c.b16 %v5816, %v5808
        %v5825 = vpack.c.b16 %v5817, %v5809
        %v5826 = vpack.c.b16 %v5818, %v5810
        %v5827 = vpack.c.b16 %v5819, %v5811
        %v5828 = vpack.c.b16 %v5820, %v5812
        %v5829 = vpack.c.b16 %v5821, %v5813
        %v5830 = vpack.c.b16 %v5822, %v5814
        %v5831 = vpack.c.b16 %v5823, %v5815
        %5840 = vmatprep.subr.bf16.mxu0 %v5825
        %5841 = vmatpush1.bf16.xpose.msra.mxu0 %v5824
        %5842 = vmatprep.subr.bf16.mxu0 0
        %5843 = vmatpush1.bf16.xpose.msra.mxu0 0
        %5844 = vmatprep.subr.bf16.mxu0 0
        %5845 = vmatpush1.bf16.xpose.msra.mxu0 0
        %5846 = vmatprep.subr.bf16.mxu0 0
        %5847 = vmatpush1.bf16.xpose.msra.mxu0 0
        %5848 = vmatprep.subr.bf16.mxu0 0
        %5849 = vmatpush1.bf16.xpose.msra.mxu0 0
        %5850 = vmatprep.subr.bf16.mxu0 0
        %5851 = vmatpush1.bf16.xpose.msra.mxu0 0
        %5852 = vmatprep.subr.bf16.mxu0 0
        %5853 = vmatpush1.bf16.xpose.msra.mxu0 0
        %5854 = vmatprep.subr.bf16.mxu0 0
        %5855 = vmatpush1.bf16.xpose.msra.mxu0 0
        %5856 = vmatprep.subr.bf16.mxu0 0
        %5857 = vmatpush1.bf16.xpose.msra.mxu0 0
        %5858 = vmatprep.subr.bf16.mxu0 0
        %5859 = vmatpush1.bf16.xpose.msra.mxu0 0
        %5860 = vmatprep.subr.bf16.mxu0 0
        %5861 = vmatpush1.bf16.xpose.msra.mxu0 0
        %5862 = vmatprep.subr.bf16.mxu0 0
        %5863 = vmatpush1.bf16.xpose.msra.mxu0 0
        %5864 = vmatprep.subr.bf16.mxu0 0
        %5865 = vmatpush1.bf16.xpose.msra.mxu0 0
        %5866 = vmatprep.subr.bf16.mxu0 0
        %5867 = vmatpush1.bf16.xpose.msra.mxu0 0
        %5868 = vmatprep.subr.bf16.mxu0 0
        %5869 = vmatpush1.bf16.xpose.msra.mxu0 0
        %5870 = vmatprep.subr.bf16.mxu0 0
        %5871 = vmatpush1.bf16.xpose.msra.mxu0 0
        %5872 = vmatprep.mubr.bf16.mxu0 %v5784
        %5873 = vmatmul.mubr.bf16.gmra.mrb[0].mxu0 %v5783
        %v5874 = vpop.f32.mrb[0].mxu0
        %v5875 = vadd.f32 %v4305, %v5874
        %v5876 = vpop.f32.mrb[0].mxu0
        %v5877 = vpop.f32.mrb[0].mxu0
        %v5878 = vpop.f32.mrb[0].mxu0
        %5879 = vdwg.mxu0
        %5880 = vmatprep.subr.bf16.mxu0 %v5827
        %5881 = vmatpush1.bf16.xpose.msra.mxu0 %v5826
        %5882 = vmatprep.subr.bf16.mxu0 0
        %5883 = vmatpush1.bf16.xpose.msra.mxu0 0
        %5884 = vmatprep.subr.bf16.mxu0 0
        %5885 = vmatpush1.bf16.xpose.msra.mxu0 0
        %5886 = vmatprep.subr.bf16.mxu0 0
        %5887 = vmatpush1.bf16.xpose.msra.mxu0 0
        %5888 = vmatprep.subr.bf16.mxu0 0
        %5889 = vmatpush1.bf16.xpose.msra.mxu0 0
        %5890 = vmatprep.subr.bf16.mxu0 0
        %5891 = vmatpush1.bf16.xpose.msra.mxu0 0
        %5892 = vmatprep.subr.bf16.mxu0 0
        %5893 = vmatpush1.bf16.xpose.msra.mxu0 0
        %5894 = vmatprep.subr.bf16.mxu0 0
        %5895 = vmatpush1.bf16.xpose.msra.mxu0 0
        %5896 = vmatprep.subr.bf16.mxu0 0
        %5897 = vmatpush1.bf16.xpose.msra.mxu0 0
        %5898 = vmatprep.subr.bf16.mxu0 0
        %5899 = vmatpush1.bf16.xpose.msra.mxu0 0
        %5900 = vmatprep.subr.bf16.mxu0 0
        %5901 = vmatpush1.bf16.xpose.msra.mxu0 0
        %5902 = vmatprep.subr.bf16.mxu0 0
        %5903 = vmatpush1.bf16.xpose.msra.mxu0 0
        %5904 = vmatprep.subr.bf16.mxu0 0
        %5905 = vmatpush1.bf16.xpose.msra.mxu0 0
        %5906 = vmatprep.subr.bf16.mxu0 0
        %5907 = vmatpush1.bf16.xpose.msra.mxu0 0
        %5908 = vmatprep.subr.bf16.mxu0 0
        %5909 = vmatpush1.bf16.xpose.msra.mxu0 0
        %5910 = vmatprep.subr.bf16.mxu0 0
        %5911 = vmatpush1.bf16.xpose.msra.mxu0 0
        %5912 = vmatprep.mubr.bf16.mxu0 %v5786
        %5913 = vmatmul.mubr.bf16.gmra.mrb[0].mxu0 %v5785
        %v5914 = vpop.f32.mrb[0].mxu0
        %v5915 = vadd.f32 %v5875, %v5914
        %v5916 = vpop.f32.mrb[0].mxu0
        %v5917 = vpop.f32.mrb[0].mxu0
        %v5918 = vpop.f32.mrb[0].mxu0
        %5919 = vdwg.mxu0
        %5920 = vmatprep.subr.bf16.mxu0 %v5829
        %5921 = vmatpush1.bf16.xpose.msra.mxu0 %v5828
        %5922 = vmatprep.subr.bf16.mxu0 0
        %5923 = vmatpush1.bf16.xpose.msra.mxu0 0
        %5924 = vmatprep.subr.bf16.mxu0 0
        %5925 = vmatpush1.bf16.xpose.msra.mxu0 0
        %5926 = vmatprep.subr.bf16.mxu0 0
        %5927 = vmatpush1.bf16.xpose.msra.mxu0 0
        %5928 = vmatprep.subr.bf16.mxu0 0
        %5929 = vmatpush1.bf16.xpose.msra.mxu0 0
        %5930 = vmatprep.subr.bf16.mxu0 0
        %5931 = vmatpush1.bf16.xpose.msra.mxu0 0
        %5932 = vmatprep.subr.bf16.mxu0 0
        %5933 = vmatpush1.bf16.xpose.msra.mxu0 0
        %5934 = vmatprep.subr.bf16.mxu0 0
        %5935 = vmatpush1.bf16.xpose.msra.mxu0 0
        %5936 = vmatprep.subr.bf16.mxu0 0
        %5937 = vmatpush1.bf16.xpose.msra.mxu0 0
        %5938 = vmatprep.subr.bf16.mxu0 0
        %5939 = vmatpush1.bf16.xpose.msra.mxu0 0
        %5940 = vmatprep.subr.bf16.mxu0 0
        %5941 = vmatpush1.bf16.xpose.msra.mxu0 0
        %5942 = vmatprep.subr.bf16.mxu0 0
        %5943 = vmatpush1.bf16.xpose.msra.mxu0 0
        %5944 = vmatprep.subr.bf16.mxu0 0
        %5945 = vmatpush1.bf16.xpose.msra.mxu0 0
        %5946 = vmatprep.subr.bf16.mxu0 0
        %5947 = vmatpush1.bf16.xpose.msra.mxu0 0
        %5948 = vmatprep.subr.bf16.mxu0 0
        %5949 = vmatpush1.bf16.xpose.msra.mxu0 0
        %5950 = vmatprep.subr.bf16.mxu0 0
        %5951 = vmatpush1.bf16.xpose.msra.mxu0 0
        %5952 = vmatprep.mubr.bf16.mxu0 %v5788
        %5953 = vmatmul.mubr.bf16.gmra.mrb[0].mxu0 %v5787
        %v5954 = vpop.f32.mrb[0].mxu0
        %v5955 = vadd.f32 %v5915, %v5954
        %v5956 = vpop.f32.mrb[0].mxu0
        %v5957 = vpop.f32.mrb[0].mxu0
        %v5958 = vpop.f32.mrb[0].mxu0
        %5959 = vdwg.mxu0
        %5960 = vmatprep.subr.bf16.mxu0 %v5831
        %5961 = vmatpush1.bf16.xpose.msra.mxu0 %v5830
        %5962 = vmatprep.subr.bf16.mxu0 0
        %5963 = vmatpush1.bf16.xpose.msra.mxu0 0
        %5964 = vmatprep.subr.bf16.mxu0 0
        %5965 = vmatpush1.bf16.xpose.msra.mxu0 0
        %5966 = vmatprep.subr.bf16.mxu0 0
        %5967 = vmatpush1.bf16.xpose.msra.mxu0 0
        %5968 = vmatprep.subr.bf16.mxu0 0
        %5969 = vmatpush1.bf16.xpose.msra.mxu0 0
        %5970 = vmatprep.subr.bf16.mxu0 0
        %5971 = vmatpush1.bf16.xpose.msra.mxu0 0
        %5972 = vmatprep.subr.bf16.mxu0 0
        %5973 = vmatpush1.bf16.xpose.msra.mxu0 0
        %5974 = vmatprep.subr.bf16.mxu0 0
        %5975 = vmatpush1.bf16.xpose.msra.mxu0 0
        %5976 = vmatprep.subr.bf16.mxu0 0
        %5977 = vmatpush1.bf16.xpose.msra.mxu0 0
        %5978 = vmatprep.subr.bf16.mxu0 0
        %5979 = vmatpush1.bf16.xpose.msra.mxu0 0
        %5980 = vmatprep.subr.bf16.mxu0 0
        %5981 = vmatpush1.bf16.xpose.msra.mxu0 0
        %5982 = vmatprep.subr.bf16.mxu0 0
        %5983 = vmatpush1.bf16.xpose.msra.mxu0 0
        %5984 = vmatprep.subr.bf16.mxu0 0
        %5985 = vmatpush1.bf16.xpose.msra.mxu0 0
        %5986 = vmatprep.subr.bf16.mxu0 0
        %5987 = vmatpush1.bf16.xpose.msra.mxu0 0
        %5988 = vmatprep.subr.bf16.mxu0 0
        %5989 = vmatpush1.bf16.xpose.msra.mxu0 0
        %5990 = vmatprep.subr.bf16.mxu0 0
        %5991 = vmatpush1.bf16.xpose.msra.mxu0 0
        %5992 = vmatprep.mubr.bf16.mxu0 %v5790
        %5993 = vmatmul.mubr.bf16.gmra.mrb[0].mxu0 %v5789
        %v5994 = vpop.f32.mrb[0].mxu0
        %v5995 = vadd.f32 %v5955, %v5994
        %v5996 = vpop.f32.mrb[0].mxu0
        %v5997 = vpop.f32.mrb[0].mxu0
        %v5998 = vpop.f32.mrb[0].mxu0
        %5999 = vdwg.mxu0
        %v6000 = vld [vmem:[%s662] sm:$0x1]
        %v6001 = vsel %vm774, %v5995, 0.0
        %6002 = vadd.xlane.f32.xlu0 %v6001
        %v6003 = vpop.xlane.xlu0 %6002
        %v6004 = vmul.f32 %v6003, %v778
        %v6005 = vmul.f32 %v5995, %v5995
        %v6006 = vsel %vm774, %v6005, 0.0
        %6007 = vadd.xlane.f32.xlu0 %v6006
        %v6008 = vpop.xlane.xlu0 %6007
        %v6009 = vmul.f32 %v6008, %v778
        %v6010 = vmul.f32 %v6004, %v6004
        %v6011 = vsub.f32 %v6009, %v6010
        %v6012 = vsub.f32 %v5995, %v6004
        %v6013 = vadd.f32 %v6011, 1e-05
        %v6014 = vrsqrt.pop %v6013
        %v6015 = vmul.f32 %v6012, %v6014
        %v6017 = vlaneseq
        %v6018 = vshrl.u32 %v6017, 7
        %v6019 = vsub.s32 0, %v6018
        %v6020 = vrot.slane %v6000, %v6019
        %v6022 = vmul.f32 %v6015, %v6020
        %s6023 = scalar_lea.vmem %s627, 1 [#allocation11]
        %v6024 = vld [vmem:[%s6023] sm:$0x1]
        %v6025 = vsel %vm774, %v6022, 0.0
        %6026 = vadd.xlane.f32.xlu0 %v6025
        %v6027 = vpop.xlane.xlu0 %6026
        %v6028 = vmul.f32 %v6027, %v778
        %v6029 = vmul.f32 %v6022, %v6022
        %v6030 = vsel %vm774, %v6029, 0.0
        %6031 = vadd.xlane.f32.xlu0 %v6030
        %v6032 = vpop.xlane.xlu0 %6031
        %v6033 = vmul.f32 %v6032, %v778
        %v6034 = vmul.f32 %v6028, %v6028
        %v6035 = vsub.f32 %v6033, %v6034
        %v6036 = vsub.f32 %v6022, %v6028
        %v6037 = vadd.f32 %v6035, 1e-05
        %v6038 = vrsqrt.pop %v6037
        %v6039 = vmul.f32 %v6036, %v6038
        %v6041 = vlaneseq
        %v6042 = vshrl.u32 %v6041, 7
        %v6043 = vsub.s32 0, %v6042
        %v6044 = vrot.slane %v6024, %v6043
        %v6046 = vmul.f32 %v6039, %v6044
        %v6047 = vpack.c.bf16 %v6046, %v6046
        %s6048 = scalar_lea.vmem %s636, 8 [#allocation12]
        %v6049 = vld [vmem:[%s6048] sm:$0xf]
        %v6050 = vld [vmem:[%s6048 + $0x4] sm:$0xf]
        %s6051 = scalar_lea.vmem %s645, 1 [#allocation14]
        %v6052 = vld [vmem:[%s6051] sm:$0x1]
        %v6054 = vlaneseq
        %v6055 = vshrl.u32 %v6054, 7
        %v6056 = vsub.s32 0, %v6055
        %v6057 = vrot.slane %v6052, %v6056
        %v6061 = vunpack.c.l.b16 %v6049
        %v6062 = vunpack.c.l.b16 %v6050
        %v6063 = vpack.c.b16 %v6062, %v6061
        %v6066 = vsel %vm774, %v6047, 0
        %6068 = vmatprep.subr.bf16.mxu0 0
        %6069 = vmatpush1.bf16.msra.mxu0 %v6063
        %6070 = vmatprep.subr.bf16.mxu0 0
        %6071 = vmatpush1.bf16.msra.mxu0 0
        %6072 = vmatprep.subr.bf16.mxu0 0
        %6073 = vmatpush1.bf16.msra.mxu0 0
        %6074 = vmatprep.subr.bf16.mxu0 0
        %6075 = vmatpush1.bf16.msra.mxu0 0
        %6076 = vmatprep.subr.bf16.mxu0 0
        %6077 = vmatpush1.bf16.msra.mxu0 0
        %6078 = vmatprep.subr.bf16.mxu0 0
        %6079 = vmatpush1.bf16.msra.mxu0 0
        %6080 = vmatprep.subr.bf16.mxu0 0
        %6081 = vmatpush1.bf16.msra.mxu0 0
        %6082 = vmatprep.subr.bf16.mxu0 0
        %6083 = vmatpush1.bf16.msra.mxu0 0
        %6084 = vmatprep.subr.bf16.mxu0 0
        %6085 = vmatpush1.bf16.msra.mxu0 0
        %6086 = vmatprep.subr.bf16.mxu0 0
        %6087 = vmatpush1.bf16.msra.mxu0 0
        %6088 = vmatprep.subr.bf16.mxu0 0
        %6089 = vmatpush1.bf16.msra.mxu0 0
        %6090 = vmatprep.subr.bf16.mxu0 0
        %6091 = vmatpush1.bf16.msra.mxu0 0
        %6092 = vmatprep.subr.bf16.mxu0 0
        %6093 = vmatpush1.bf16.msra.mxu0 0
        %6094 = vmatprep.subr.bf16.mxu0 0
        %6095 = vmatpush1.bf16.msra.mxu0 0
        %6096 = vmatprep.subr.bf16.mxu0 0
        %6097 = vmatpush1.bf16.msra.mxu0 0
        %6098 = vmatprep.subr.bf16.mxu0 0
        %6099 = vmatpush1.bf16.msra.mxu0 0
        %6100 = vmatprep.mubr.bf16.mxu0 0
        %6101 = vmatmul.mubr.bf16.gmra.mrb[0].mxu0 %v6066
        %v6102 = vpop.f32.mrb[0].mxu0
        %v6103 = vadd.f32 %v6057, %v6102
        %v6104 = vpop.f32.mrb[0].mxu0
        %v6105 = vpop.f32.mrb[0].mxu0
        %v6106 = vpop.f32.mrb[0].mxu0
        %6107 = vdwg.mxu0
        %v6108 = vmul.f32 %v6103, 0.5
        %v6109 = vmul.f32 %v6103, 0.70710677
        %v6110 = verf.f32.pop %v6109
        %v6111 = vadd.f32 %v6110, 1.0
        %v6112 = vmul.f32 %v6108, %v6111
        %v6113 = vpack.c.bf16 %v6112, %v6112
        %s6114 = scalar_lea.vmem %s761, 16
        %v6115 = vld [vmem:[%s6114] sm:$0xf]
        %v6116 = vld [vmem:[%s6114 + $0x4] sm:$0xf]
        %v6117 = vld [vmem:[%s6114 + $0x8] sm:$0xf]
        %v6118 = vld [vmem:[%s6114 + $0xc] sm:$0xf]
        %s6119 = scalar_lea.vmem %s654, 1 [#allocation15]
        %v6120 = vld [vmem:[%s6119] sm:$0x1]
        %v6122 = vlaneseq
        %v6123 = vshrl.u32 %v6122, 7
        %v6124 = vsub.s32 0, %v6123
        %v6125 = vrot.slane %v6120, %v6124
        %v6131 = vunpack.c.l.b16 %v6115
        %v6132 = vunpack.c.l.b16 %v6116
        %v6133 = vunpack.c.l.b16 %v6117
        %v6134 = vunpack.c.l.b16 %v6118
        %v6135 = vpack.c.b16 %v6132, %v6131
        %v6136 = vpack.c.b16 %v6134, %v6133
        %v6140 = vsel %vm2575, %v6113, 0
        %6142 = vmatprep.subr.bf16.mxu0 0
        %6143 = vmatpush1.bf16.msra.mxu0 %v6135
        %6144 = vmatprep.subr.bf16.mxu0 0
        %6145 = vmatpush1.bf16.msra.mxu0 %v6136
        %6146 = vmatprep.subr.bf16.mxu0 0
        %6147 = vmatpush1.bf16.msra.mxu0 0
        %6148 = vmatprep.subr.bf16.mxu0 0
        %6149 = vmatpush1.bf16.msra.mxu0 0
        %6150 = vmatprep.subr.bf16.mxu0 0
        %6151 = vmatpush1.bf16.msra.mxu0 0
        %6152 = vmatprep.subr.bf16.mxu0 0
        %6153 = vmatpush1.bf16.msra.mxu0 0
        %6154 = vmatprep.subr.bf16.mxu0 0
        %6155 = vmatpush1.bf16.msra.mxu0 0
        %6156 = vmatprep.subr.bf16.mxu0 0
        %6157 = vmatpush1.bf16.msra.mxu0 0
        %6158 = vmatprep.subr.bf16.mxu0 0
        %6159 = vmatpush1.bf16.msra.mxu0 0
        %6160 = vmatprep.subr.bf16.mxu0 0
        %6161 = vmatpush1.bf16.msra.mxu0 0
        %6162 = vmatprep.subr.bf16.mxu0 0
        %6163 = vmatpush1.bf16.msra.mxu0 0
        %6164 = vmatprep.subr.bf16.mxu0 0
        %6165 = vmatpush1.bf16.msra.mxu0 0
        %6166 = vmatprep.subr.bf16.mxu0 0
        %6167 = vmatpush1.bf16.msra.mxu0 0
        %6168 = vmatprep.subr.bf16.mxu0 0
        %6169 = vmatpush1.bf16.msra.mxu0 0
        %6170 = vmatprep.subr.bf16.mxu0 0
        %6171 = vmatpush1.bf16.msra.mxu0 0
        %6172 = vmatprep.subr.bf16.mxu0 0
        %6173 = vmatpush1.bf16.msra.mxu0 0
        %6174 = vmatprep.mubr.bf16.mxu0 0
        %6175 = vmatmul.mubr.bf16.gmra.mrb[0].mxu0 %v6140
        %v6176 = vpop.f32.mrb[0].mxu0
        %v6177 = vadd.f32 %v6125, %v6176
        %v6178 = vpop.f32.mrb[0].mxu0
        %v6179 = vpop.f32.mrb[0].mxu0
        %v6180 = vpop.f32.mrb[0].mxu0
        %6181 = vdwg.mxu0
        %v6182 = vadd.f32 %v6177, %v6022
        %6183 = vst.msk [vmem:[#allocation2] sm:$0xff] %vm774, %v6182
        %p6184 = scmp.eq.s32.totalorder %s46, 4
        // Predicated region
        $region109: #{transformer_forward.1} parent=63 // pred_check
          %p6185 = pneg %p6184
        $region110: #{transformer_forward.1} parent=63 // pred_check_branch
          %6187 = sbr.rel (%p6185) target = $region112
        $region111: #{transformer_forward.1} parent=63 // pred_region
          %v6188 = vld [vmem:[#allocation18] sm:$0x1]
          %v6189 = vsel %vm774, %v6182, 0.0
          %6190 = vadd.xlane.f32.xlu0 %v6189
          %v6191 = vpop.xlane.xlu0 %6190
          %v6192 = vmul.f32 %v6191, %v778
          %v6193 = vmul.f32 %v6182, %v6182
          %v6194 = vsel %vm774, %v6193, 0.0
          %6195 = vadd.xlane.f32.xlu0 %v6194
          %v6196 = vpop.xlane.xlu0 %6195
          %v6197 = vmul.f32 %v6196, %v778
          %v6198 = vmul.f32 %v6192, %v6192
          %v6199 = vsub.f32 %v6197, %v6198
          %v6200 = vsub.f32 %v6182, %v6192
          %v6201 = vadd.f32 %v6199, 1e-05
          %v6202 = vrsqrt.pop %v6201
          %v6203 = vmul.f32 %v6200, %v6202
          %v6205 = vlaneseq
          %v6206 = vshrl.u32 %v6205, 7
          %v6207 = vsub.s32 0, %v6206
          %v6208 = vrot.slane %v6188, %v6207
          %v6210 = vmul.f32 %v6203, %v6208
          %6211 = vst.msk [vmem:[%s749] sm:$0xff] %vm774, %v6210
        $region112: #{transformer_forward.1} parent=63 // pred_fallthru
          _
        %s6212 = sand.u32 %s342, 1
        %s6213 = scalar_lea.sflag [#allocation5], %s6212
        %s6214 = sand.u32 %s342, 1
        %s6215 = smul.addr %s6214, 8
        %s6216 = scalar_lea.vmem [#allocation20], %s6215
        // Predicated region
        $region113: #{transformer_forward.1} parent=63 // pred_check
          %p6217 = pneg %p352
        $region114: #{transformer_forward.1} parent=63 // pred_check_branch
          %6219 = sbr.rel (%p6217) target = $region116
        $region115: #{transformer_forward.1} parent=63 // pred_region
          %s6221 = ssub.s32 128, 128
          %6222 = vsyncadd %s6213, %s6221
          %s6223 = smul.addr %s45, 128
          %s6224 = scalar_lea.hbm %s11, %s6223
          %s6226 = sshll.u32 %s6216, 4
          %s6227 = int_to_ptr.vmem [resolvable:$true] %s6226
          %6229 = dma.vmem_to_hbm [thread:$0]  %s6227, 128, %s6224, %s6213
        $region116: #{transformer_forward.1} parent=63 // pred_fallthru
          _
      $region64: #{transformer_forward.1} parent=5 // pred_fallthru
        _
      %p6230 = scmp.le.s32.totalorder 2, %s36
      // Predicated region
      $region117: #{transformer_forward.1} parent=5 // pred_check
        %p6231 = pneg %p6230
      $region118: #{transformer_forward.1} parent=5 // pred_check_branch
        %6233 = sbr.rel (%p6231) target = $region120
      $region119: #{transformer_forward.1} parent=5 // pred_region
        %s6234 = ssub.s32 %s36, 2
        // Predicated region
        $region121: #{transformer_forward.1} parent=119 // pred_check
          %p6235 = pneg %p358
        $region122: #{transformer_forward.1} parent=119 // pred_check_branch
          %6237 = sbr.rel (%p6235) target = $region124
        $region123: #{transformer_forward.1} parent=119 // pred_region
          %s6238 = sand.u32 %s343, 1
          %s6239 = scalar_lea.sflag [#allocation5], %s6238
          %s6240 = sand.u32 %s343, 1
          %s6241 = smul.addr %s6240, 8
          %s6242 = scalar_lea.vmem [#allocation20], %s6241
          %6243 = dma.done %s6239, 128
        $region124: #{transformer_forward.1} parent=119 // pred_fallthru
          _
      $region120: #{transformer_forward.1} parent=5 // pred_fallthru
        _
    $region6: #{transformer_forward.1} parent=1 // loop_footer
      %s40 = sadd.s32 1, %s36
    $region7: #{transformer_forward.1} parent=1 // loop_footer_branch
      %35 = sbr.rel target = $region3
    $region8: #{transformer_forward.1} parent=1 // loop_exit
      _
    %6244 = vsyncpa [#allocation4], 1
    %s6245 = scalar_lea.sflag [#allocation4], 1
    %6246 = vsyncpa %s6245, 1
    %6247 = vsyncpa [#allocation7], 1
    %s6248 = scalar_lea.sflag [#allocation7], 1
    %6249 = vsyncpa %s6248, 1
    %6250 = vsyncpa [#allocation10], 1
    %s6251 = scalar_lea.sflag [#allocation10], 1
    %6252 = vsyncpa %s6251, 1
    %6253 = vsyncpa [#allocation13], 1
    %s6254 = scalar_lea.sflag [#allocation13], 1
    %6255 = vsyncpa %s6254, 1
    %6256 = vsyncpa [#allocation16], 1
    %s6257 = scalar_lea.sflag [#allocation16], 1
    %6258 = vsyncpa %s6257, 1
    %6259 = vsyncpa [#allocation19], 1
    %6260 = vsyncpa [#allocation5], 1
    %s6261 = scalar_lea.sflag [#allocation5], 1
    %6262 = vsyncpa %s6261, 1

</llo_original>
